<compile_context>
chip_gen: v7x
topology: tpu7x:2x2x1
jax: 0.10.0
libtpu: 0.0.40
codegen_flags: <defaults>
</compile_context>

<pallas_src>
import functools

import jax
import jax.numpy as jnp
from jax.experimental import pallas as pl
from jax.experimental.pallas import tpu as pltpu

NUM_CHANNELS = 128
NUM_LAYERS = 2
IN_DIM = 6
BN_EPS = 1e-5


# --------------------------------------------------------------------------------------
# Helpers
# --------------------------------------------------------------------------------------

def _query_tile(n, cap=256):
    """Largest tile <= cap (multiple of 16) that divides n; fall back to n (full dim)."""
    for t in (cap, 128, 64, 32, 16):
        if t <= n and n % t == 0:
            return t
    return n


def _vmem_limit(tq, n, c=NUM_CHANNELS):
    """Scoped-VMEM budget for one (batch, query-tile) attention/compat grid cell."""
    blocks = 2 * (tq * c * 2      # q block, double buffered, bf16
                  + 2 * n * c * 2  # k + v resident blocks, bf16
                  + tq * n * 2     # compat block, bf16
                  + tq * c * 2)    # output block, bf16
    temps = 4 * tq * n * 4         # f32 (tq, N) temporaries (scores / logits / exp / weights)
    return int(min(64 << 20, max(16 << 20, blocks + temps + (2 << 20))))


def _dot_nt(a, b):
    """a @ b.T without an explicit transpose: contract the LAST dim of both operands (MXU)."""
    return jax.lax.dot_general(a, b, (((1,), (1,)), ((), ())),
                               preferred_element_type=jnp.float32)


def _bn_relu(y, gamma, beta):
    """BatchNorm1d (training mode: batch stats over all rows, biased var) + ReLU.

    Mean / variance sums are computed with ones-row matmuls so the axis-0 reductions run on
    the (otherwise idle) MXU instead of the XLU sublane-reduction path.
    """
    m = y.shape[0]
    ones_row = jnp.ones((1, m), jnp.float32)
    inv_m = 1.0 / m
    mean = jnp.dot(ones_row, y, preferred_element_type=jnp.float32) * inv_m      # (1, C)
    d = y - mean
    var = jnp.dot(ones_row, d * d, preferred_element_type=jnp.float32) * inv_m   # (1, C)
    scale = gamma * jax.lax.rsqrt(var + BN_EPS)
    return jnp.maximum(d * scale + beta, 0.0)


# --------------------------------------------------------------------------------------
# Pallas kernels
# --------------------------------------------------------------------------------------

def _compat_kernel(srcq_ref, srck_ref, tgtq_ref, tgtk_ref, out_ref):
    """Spatial-consistency tile: clamp(1 - (||d_src|| - ||d_tgt||)^2 / 1.2^2, 0).

    srcq/tgtq: (1, tq, 8) query-point tile, srck/tgtk: (1, N, 8) all points
    (coords zero-padded 3->8; padding is inert in the dot).  Output (1, tq, N) bf16.
    """
    def dists(aq, ak):
        inner = _dot_nt(aq, ak)                                              # (tq, N)
        rq = jnp.sum(aq * aq, axis=-1, keepdims=True)                        # (tq, 1)
        ones = jnp.ones((1, ak.shape[-1]), jnp.float32)
        rk = _dot_nt(ones, ak * ak)                                          # (1, N) lane-major
        return jnp.sqrt(jnp.maximum(rq + rk - 2.0 * inner, 0.0))

    compat = dists(srcq_ref[0], srck_ref[0]) - dists(tgtq_ref[0], tgtk_ref[0])
    out_ref[0] = jnp.maximum(1.0 - compat * compat * (1.0 / 1.2 ** 2),
                             0.0).astype(out_ref.dtype)


def _proj_kernel(x_ref, wc_ref, bc_ref, gc_ref, bec_ref, wqkv_ref, bqkv_ref,
                 feat_ref, q_ref, k_ref, v_ref):
    """PointCN (Conv1d + BN + ReLU) fused with the stacked Q/K/V projection, whole batch.

    x_ref: (bs*N, Cin) f32 token-major.  Weights pre-transposed to (Cin, Cout) bf16;
    biases / BN params (1, Cout) f32.  Outputs: feat f32, q/k/v bf16 (q pre-scaled by
    1/sqrt(C) via its folded weights).
    """
    c = feat_ref.shape[-1]
    y = jnp.dot(x_ref[...].astype(jnp.bfloat16), wc_ref[...],
                preferred_element_type=jnp.float32) + bc_ref[...]            # (bs*N, C)
    feat = _bn_relu(y, gc_ref[...], bec_ref[...])
    feat_ref[...] = feat
    qkv = jnp.dot(feat.astype(jnp.bfloat16), wqkv_ref[...],
                  preferred_element_type=jnp.float32) + bqkv_ref[...]        # (bs*N, 3C)
    q_ref[...] = qkv[:, :c].astype(q_ref.dtype)
    k_ref[...] = qkv[:, c:2 * c].astype(k_ref.dtype)
    v_ref[...] = qkv[:, 2 * c:].astype(v_ref.dtype)


def _attn_kernel(q_ref, k_ref, v_ref, attn_ref, o_ref):
    """One (batch, query-tile) cell: scores -> compat gate -> softmax -> message.

    q: (1, tq, C) bf16; k, v: (1, N, C) bf16 (resident for the whole batch element);
    attn: (1, tq, N) bf16.  1/sqrt(C) already folded into the Q projection weights.
    """
    s = _dot_nt(q_ref[0], k_ref[0])                              # (tq, N) f32, no K^T transpose
    logits = attn_ref[0].astype(jnp.float32) * s
    m = jnp.max(logits, axis=-1, keepdims=True)
    e = jnp.exp(logits - m)
    w = e * pl.reciprocal(jnp.sum(e, axis=-1, keepdims=True), approx=True)
    o_ref[0] = jnp.dot(w.astype(jnp.bfloat16), v_ref[0],
                       preferred_element_type=jnp.float32).astype(o_ref.dtype)


def _fc_kernel(msg_ref, feat_ref, w1_ref, b1_ref, g1_ref, be1_ref,
               w2_ref, b2_ref, g2_ref, be2_ref, w3_ref, b3_ref, out_ref):
    """fc_message (Conv-BN-ReLU, Conv-BN-ReLU, Conv) + residual, whole batch in VMEM."""
    def dot_b(a, w_ref):
        return jnp.dot(a, w_ref[...], preferred_element_type=jnp.float32)

    # TODO(synk): on v6e the 64-wide hidden dim could be zero-padded to 128 for lane-dense
    # tiles; skipped (fc_message is small relative to attention).
    m1 = _bn_relu(dot_b(msg_ref[...], w1_ref) + b1_ref[...], g1_ref[...], be1_ref[...])
    m2 = _bn_relu(dot_b(m1.astype(jnp.bfloat16), w2_ref) + b2_ref[...], g2_ref[...], be2_ref[...])
    out_ref[...] = feat_ref[...] + dot_b(m2.astype(jnp.bfloat16), w3_ref) + b3_ref[...]


# --------------------------------------------------------------------------------------
# Wrappers around pallas_call
# --------------------------------------------------------------------------------------

def compute_compatibility(src, tgt):
    bs, n, _ = src.shape
    src_p = jnp.pad(src, ((0, 0), (0, 0), (0, 5)))     # xyz -> 8 (clean MXU contraction dim)
    tgt_p = jnp.pad(tgt, ((0, 0), (0, 0), (0, 5)))
    tq = _query_tile(n)
    q_spec = pl.BlockSpec((1, tq, 8), lambda b, i: (b, i, 0))
    k_spec = pl.BlockSpec((1, n, 8), lambda b, i: (b, 0, 0))
    return pl.pallas_call(
        _compat_kernel,
        out_shape=jax.ShapeDtypeStruct((bs, n, n), jnp.bfloat16),
        grid=(bs, n // tq),
        in_specs=[q_spec, k_spec, q_spec, k_spec],
        out_specs=pl.BlockSpec((1, tq, n), lambda b, i: (b, i, 0)),
        compiler_params=pltpu.CompilerParams(
            dimension_semantics=("parallel", "parallel"),
            vmem_limit_bytes=_vmem_limit(tq, n)),
    )(src_p, src_p, tgt_p, tgt_p)


def fused_pointcn_qkv(x, wc, bc, lp, bs, n):
    """PointCN conv+BN+ReLU fused with stacked Q/K/V projection (single pallas_call)."""
    c = NUM_CHANNELS
    inv_sqrt_c = 1.0 / float(c) ** 0.5
    # Fold 1/sqrt(C) into the Q projection (constant weight prep, removes an NxN VPU mul).
    wqkv = jnp.transpose(jnp.concatenate(
        [lp['wq'] * inv_sqrt_c, lp['wk'], lp['wv']], axis=0)).astype(jnp.bfloat16)   # (C, 3C)
    bqkv = jnp.concatenate([lp['bq'] * inv_sqrt_c, lp['bk'], lp['bv']]).reshape(1, 3 * c)
    m = bs * n
    feat, q, k, v = pl.pallas_call(
        _proj_kernel,
        out_shape=(jax.ShapeDtypeStruct((m, c), jnp.float32),
                   jax.ShapeDtypeStruct((m, c), jnp.bfloat16),
                   jax.ShapeDtypeStruct((m, c), jnp.bfloat16),
                   jax.ShapeDtypeStruct((m, c), jnp.bfloat16)),
        compiler_params=pltpu.CompilerParams(vmem_limit_bytes=64 << 20),
    )(x, jnp.transpose(wc).astype(jnp.bfloat16), bc.reshape(1, c),
      lp['gc'].reshape(1, c), lp['bec'].reshape(1, c), wqkv, bqkv)
    s3 = (bs, n, c)
    return feat, q.reshape(s3), k.reshape(s3), v.reshape(s3)


def attention(q, k, v, compat, bs, n):
    """Batched, query-row-tiled attention.  grid=(bs, N/tq), both axes parallel."""
    c = NUM_CHANNELS
    tq = _query_tile(n)
    msg = pl.pallas_call(
        _attn_kernel,
        out_shape=jax.ShapeDtypeStruct((bs, n, c), jnp.bfloat16),
        grid=(bs, n // tq),
        in_specs=[pl.BlockSpec((1, tq, c), lambda b, i: (b, i, 0)),
                  pl.BlockSpec((1, n, c), lambda b, i: (b, 0, 0)),
                  pl.BlockSpec((1, n, c), lambda b, i: (b, 0, 0)),
                  pl.BlockSpec((1, tq, n), lambda b, i: (b, i, 0))],
        out_specs=pl.BlockSpec((1, tq, c), lambda b, i: (b, i, 0)),
        compiler_params=pltpu.CompilerParams(
            dimension_semantics=("parallel", "parallel"),
            vmem_limit_bytes=_vmem_limit(tq, n, c)),
    )(q, k, v, compat)
    return msg.reshape(bs * n, c)


def fc_message_residual(msg, feat, lp):
    """fc_message stack + residual as one pallas_call (BN needs full-batch statistics)."""
    c = NUM_CHANNELS
    h = c // 2

    def wT(w):
        return jnp.transpose(w).astype(jnp.bfloat16)

    return pl.pallas_call(
        _fc_kernel,
        out_shape=jax.ShapeDtypeStruct(feat.shape, jnp.float32),
        compiler_params=pltpu.CompilerParams(vmem_limit_bytes=64 << 20),
    )(msg, feat,
      wT(lp['w1']), lp['b1'].reshape(1, h), lp['g1'].reshape(1, h), lp['be1'].reshape(1, h),
      wT(lp['w2']), lp['b2'].reshape(1, h), lp['g2'].reshape(1, h), lp['be2'].reshape(1, h),
      wT(lp['w3']), lp['b3'].reshape(1, c))


# --------------------------------------------------------------------------------------
# Model (parameters + forward)
# --------------------------------------------------------------------------------------

def init_params(key):
    keys = iter(jax.random.split(key, 64))

    def conv(cout, cin):
        bound = 1.0 / (cin ** 0.5)
        w = jax.random.uniform(next(keys), (cout, cin), jnp.float32, -bound, bound)
        b = jax.random.uniform(next(keys), (cout,), jnp.float32, -bound, bound)
        return w, b

    params = {}
    params['w0'], params['b0'] = conv(NUM_CHANNELS, IN_DIM)
    half = NUM_CHANNELS // 2
    for i in range(NUM_LAYERS):
        lp = {}
        # PointCN layer: Conv1d + BN + ReLU
        lp['wc'], lp['bc'] = conv(NUM_CHANNELS, NUM_CHANNELS)
        lp['gc'] = jnp.ones((NUM_CHANNELS,), jnp.float32)
        lp['bec'] = jnp.zeros((NUM_CHANNELS,), jnp.float32)
        # NonLocalBlock projections
        lp['wq'], lp['bq'] = conv(NUM_CHANNELS, NUM_CHANNELS)
        lp['wk'], lp['bk'] = conv(NUM_CHANNELS, NUM_CHANNELS)
        lp['wv'], lp['bv'] = conv(NUM_CHANNELS, NUM_CHANNELS)
        # fc_message: Conv-BN-ReLU, Conv-BN-ReLU, Conv
        lp['w1'], lp['b1'] = conv(half, NUM_CHANNELS)
        lp['g1'] = jnp.ones((half,), jnp.float32)
        lp['be1'] = jnp.zeros((half,), jnp.float32)
        lp['w2'], lp['b2'] = conv(half, half)
        lp['g2'] = jnp.ones((half,), jnp.float32)
        lp['be2'] = jnp.zeros((half,), jnp.float32)
        lp['w3'], lp['b3'] = conv(NUM_CHANNELS, half)
        params[f'layer{i}'] = lp
    return params


def nonlocal_net_cost(params, src_keypts, tgt_keypts_all):
    # src_keypts:     [bs, N, 3]    tgt_keypts_all: [bs, N, K, 3]
    bs, n, _ = src_keypts.shape
    tgt_keypts = jnp.mean(tgt_keypts_all, axis=2)                      # [bs, N, 3]
    compat = compute_compatibility(src_keypts, tgt_keypts)             # [bs, N, N] bf16

    # corr_feat = cat(src, tgt) in NCL, mean-centered over points -> token-major (bs*N, 8)
    corr = jnp.concatenate([src_keypts, tgt_keypts], axis=-1)          # [bs, N, 6]
    corr = corr - jnp.mean(corr, axis=1, keepdims=True)
    x = jnp.pad(corr.reshape(bs * n, IN_DIM), ((0, 0), (0, 2)))        # pad 6 -> 8 (inert)

    feat = x
    for i in range(NUM_LAYERS):
        lp = params[f'layer{i}']
        if i == 0:
            # layer0 conv and the first PointCN conv are both linear with nothing in
            # between: fold them into one (6->128) matmul (one fewer launch + HBM trip).
            wc = jnp.pad(lp['wc'] @ params['w0'], ((0, 0), (0, 2)))    # (128, 8)
            bc = lp['wc'] @ params['b0'] + lp['bc']
        else:
            wc, bc = lp['wc'], lp['bc']
        feat, q, k, v = fused_pointcn_qkv(feat, wc, bc, lp, bs, n)     # (bs*N, C), 3x(bs,N,C)
        msg = attention(q, k, v, compat, bs, n)                        # (bs*N, C) bf16
        feat = fc_message_residual(msg, feat, lp)                      # (bs*N, C) f32
    # back to PyTorch NCL layout [bs, C, N]
    return jnp.transpose(feat.reshape(bs, n, NUM_CHANNELS), (0, 2, 1))


# --------------------------------------------------------------------------------------

if __name__ == "__main__":
    key = jax.random.PRNGKey(0)
    kp, ks, kt = jax.random.split(key, 3)

    bs, num_corr, k_pts = 2, 128, 4
    src_keypts = jax.random.normal(ks, (bs, num_corr, 3), jnp.float32)
    tgt_keypts_all = jax.random.normal(kt, (bs, num_corr, k_pts, 3), jnp.float32)

    params = init_params(kp)

    fwd = jax.jit(functools.partial(nonlocal_net_cost, params))
    out = jax.block_until_ready(fwd(src_keypts, tgt_keypts_all))

    assert out.shape == (bs, NUM_CHANNELS, num_corr), out.shape
    assert bool(jnp.all(jnp.isfinite(out)))
    print("KERNEL_OK")
</pallas_src>

<mosaic_0001>
module attributes {stable_mosaic.version = 11 : i64} {
  func.func @_proj_kernel(%arg0: memref<256x8xf32, #tpu.memory_space<vmem>>, %arg1: memref<8x128xbf16, #tpu.memory_space<vmem>>, %arg2: memref<1x128xf32, #tpu.memory_space<vmem>>, %arg3: memref<1x128xf32, #tpu.memory_space<vmem>>, %arg4: memref<1x128xf32, #tpu.memory_space<vmem>>, %arg5: memref<128x384xbf16, #tpu.memory_space<vmem>>, %arg6: memref<1x384xf32, #tpu.memory_space<vmem>>, %arg7: memref<256x128xf32, #tpu.memory_space<vmem>>, %arg8: memref<256x128xbf16, #tpu.memory_space<vmem>>, %arg9: memref<256x128xbf16, #tpu.memory_space<vmem>>, %arg10: memref<256x128xbf16, #tpu.memory_space<vmem>>) attributes {dimension_semantics = [], scalar_prefetch = 0 : i64, scratch_operands = 0 : i64, tpu.core_type = #tpu.core_type<tc>} {
    %c0 = arith.constant 0 : index
    %c0_0 = arith.constant 0 : index
    %0 = vector.load %arg0[%c0, %c0_0] : memref<256x8xf32, #tpu.memory_space<vmem>>, vector<256x8xf32>
    %1 = arith.truncf %0 : vector<256x8xf32> to vector<256x8xbf16>
    %c0_1 = arith.constant 0 : index
    %c0_2 = arith.constant 0 : index
    %2 = vector.load %arg1[%c0_1, %c0_2] : memref<8x128xbf16, #tpu.memory_space<vmem>>, vector<8x128xbf16>
    %cst = arith.constant dense<0.000000e+00> : vector<256x128xf32>
    %3 = tpu.matmul %1, %2, %cst {dimension_numbers = #tpu.dot_dimension_numbers<[1], [0], [0], [1], [0, 0, 1, 1], [], []>} : vector<256x8xbf16>, vector<8x128xbf16>, vector<256x128xf32> -> vector<256x128xf32>
    %c0_3 = arith.constant 0 : index
    %c0_4 = arith.constant 0 : index
    %4 = vector.load %arg2[%c0_3, %c0_4] : memref<1x128xf32, #tpu.memory_space<vmem>>, vector<1x128xf32>
    %5 = vector.broadcast %4 : vector<1x128xf32> to vector<256x128xf32>
    %6 = arith.addf %3, %5 : vector<256x128xf32>
    %c0_5 = arith.constant 0 : index
    %c0_6 = arith.constant 0 : index
    %7 = vector.load %arg3[%c0_5, %c0_6] : memref<1x128xf32, #tpu.memory_space<vmem>>, vector<1x128xf32>
    %c0_7 = arith.constant 0 : index
    %c0_8 = arith.constant 0 : index
    %8 = vector.load %arg4[%c0_7, %c0_8] : memref<1x128xf32, #tpu.memory_space<vmem>>, vector<1x128xf32>
    %cst_9 = arith.constant 1.000000e+00 : f32
    %9 = vector.broadcast %cst_9 : f32 to vector<1x256xf32>
    %cst_10 = arith.constant dense<0.000000e+00> : vector<1x128xf32>
    %10 = tpu.matmul %9, %6, %cst_10 {dimension_numbers = #tpu.dot_dimension_numbers<[1], [0], [0], [1], [0, 0, 1, 1], [], []>} : vector<1x256xf32>, vector<256x128xf32>, vector<1x128xf32> -> vector<1x128xf32>
    %cst_11 = arith.constant 3.906250e-03 : f32
    %11 = vector.broadcast %cst_11 : f32 to vector<1x128xf32>
    %12 = arith.mulf %10, %11 : vector<1x128xf32>
    %13 = vector.broadcast %12 : vector<1x128xf32> to vector<256x128xf32>
    %14 = arith.subf %6, %13 : vector<256x128xf32>
    %15 = arith.mulf %14, %14 : vector<256x128xf32>
    %cst_12 = arith.constant dense<0.000000e+00> : vector<1x128xf32>
    %16 = tpu.matmul %9, %15, %cst_12 {dimension_numbers = #tpu.dot_dimension_numbers<[1], [0], [0], [1], [0, 0, 1, 1], [], []>} : vector<1x256xf32>, vector<256x128xf32>, vector<1x128xf32> -> vector<1x128xf32>
    %cst_13 = arith.constant 3.906250e-03 : f32
    %17 = vector.broadcast %cst_13 : f32 to vector<1x128xf32>
    %18 = arith.mulf %16, %17 : vector<1x128xf32>
    %cst_14 = arith.constant 9.99999974E-6 : f32
    %19 = vector.broadcast %cst_14 : f32 to vector<1x128xf32>
    %20 = arith.addf %18, %19 : vector<1x128xf32>
    %21 = math.rsqrt %20 : vector<1x128xf32>
    %22 = arith.mulf %7, %21 : vector<1x128xf32>
    %23 = vector.broadcast %22 : vector<1x128xf32> to vector<256x128xf32>
    %24 = arith.mulf %14, %23 : vector<256x128xf32>
    %25 = vector.broadcast %8 : vector<1x128xf32> to vector<256x128xf32>
    %26 = arith.addf %24, %25 : vector<256x128xf32>
    %cst_15 = arith.constant 0.000000e+00 : f32
    %27 = vector.broadcast %cst_15 : f32 to vector<256x128xf32>
    %28 = arith.maximumf %26, %27 : vector<256x128xf32>
    %c0_16 = arith.constant 0 : index
    %c0_17 = arith.constant 0 : index
    %29 = vector.load %arg7[%c0_16, %c0_17] : memref<256x128xf32, #tpu.memory_space<vmem>>, vector<256x128xf32>
    tpu.vector_store %arg7[%c0_16, %c0_17], %28 {strides = array<i32>} : memref<256x128xf32, #tpu.memory_space<vmem>>, vector<256x128xf32>,
    %30 = arith.truncf %28 : vector<256x128xf32> to vector<256x128xbf16>
    %c0_18 = arith.constant 0 : index
    %c0_19 = arith.constant 0 : index
    %31 = vector.load %arg5[%c0_18, %c0_19] : memref<128x384xbf16, #tpu.memory_space<vmem>>, vector<128x384xbf16>
    %cst_20 = arith.constant dense<0.000000e+00> : vector<256x384xf32>
    %32 = tpu.matmul %30, %31, %cst_20 {dimension_numbers = #tpu.dot_dimension_numbers<[1], [0], [0], [1], [0, 0, 1, 1], [], []>} : vector<256x128xbf16>, vector<128x384xbf16>, vector<256x384xf32> -> vector<256x384xf32>
    %c0_21 = arith.constant 0 : index
    %c0_22 = arith.constant 0 : index
    %33 = vector.load %arg6[%c0_21, %c0_22] : memref<1x384xf32, #tpu.memory_space<vmem>>, vector<1x384xf32>
    %34 = vector.broadcast %33 : vector<1x384xf32> to vector<256x384xf32>
    %35 = arith.addf %32, %34 : vector<256x384xf32>
    %36 = vector.extract_strided_slice %35 {offsets = [0, 0], sizes = [256, 128], strides = [1, 1]} : vector<256x384xf32> to vector<256x128xf32>
    %37 = arith.truncf %36 : vector<256x128xf32> to vector<256x128xbf16>
    %c0_23 = arith.constant 0 : index
    %c0_24 = arith.constant 0 : index
    %38 = vector.load %arg8[%c0_23, %c0_24] : memref<256x128xbf16, #tpu.memory_space<vmem>>, vector<256x128xbf16>
    tpu.vector_store %arg8[%c0_23, %c0_24], %37 {strides = array<i32>} : memref<256x128xbf16, #tpu.memory_space<vmem>>, vector<256x128xbf16>,
    %39 = vector.extract_strided_slice %35 {offsets = [0, 128], sizes = [256, 128], strides = [1, 1]} : vector<256x384xf32> to vector<256x128xf32>
    %40 = arith.truncf %39 : vector<256x128xf32> to vector<256x128xbf16>
    %c0_25 = arith.constant 0 : index
    %c0_26 = arith.constant 0 : index
    %41 = vector.load %arg9[%c0_25, %c0_26] : memref<256x128xbf16, #tpu.memory_space<vmem>>, vector<256x128xbf16>
    tpu.vector_store %arg9[%c0_25, %c0_26], %40 {strides = array<i32>} : memref<256x128xbf16, #tpu.memory_space<vmem>>, vector<256x128xbf16>,
    %42 = vector.extract_strided_slice %35 {offsets = [0, 256], sizes = [256, 128], strides = [1, 1]} : vector<256x384xf32> to vector<256x128xf32>
    %43 = arith.truncf %42 : vector<256x128xf32> to vector<256x128xbf16>
    %c0_27 = arith.constant 0 : index
    %c0_28 = arith.constant 0 : index
    %44 = vector.load %arg10[%c0_27, %c0_28] : memref<256x128xbf16, #tpu.memory_space<vmem>>, vector<256x128xbf16>
    tpu.vector_store %arg10[%c0_27, %c0_28], %43 {strides = array<i32>} : memref<256x128xbf16, #tpu.memory_space<vmem>>, vector<256x128xbf16>,
    return
  }
}

module attributes {stable_mosaic.version = 11 : i64} {
  func.func @_compat_kernel(%arg0: i32, %arg1: i32, %arg2: memref<1x128x8xf32, #tpu.memory_space<vmem>>, %arg3: memref<1x128x8xf32, #tpu.memory_space<vmem>>, %arg4: memref<1x128x8xf32, #tpu.memory_space<vmem>>, %arg5: memref<1x128x8xf32, #tpu.memory_space<vmem>>, %arg6: memref<1x128x128xbf16, #tpu.memory_space<vmem>>) attributes {dimension_semantics = [#tpu.dimension_semantics<parallel>, #tpu.dimension_semantics<parallel>], iteration_bounds = array<i64: 2, 1>, scalar_prefetch = 0 : i64, scratch_operands = 0 : i64, tpu.core_type = #tpu.core_type<tc>, window_params = [{transform_indices = @transform_0, window_bounds = array<i64: 1, 128, 8>}, {transform_indices = @transform_1, window_bounds = array<i64: 1, 128, 8>}, {transform_indices = @transform_2, window_bounds = array<i64: 1, 128, 8>}, {transform_indices = @transform_3, window_bounds = array<i64: 1, 128, 8>}, {transform_indices = @transform_4, window_bounds = array<i64: 1, 128, 128>}]} {
    %c0 = arith.constant 0 : index
    %c0_0 = arith.constant 0 : index
    %c0_1 = arith.constant 0 : index
    %0 = vector.load %arg2[%c0, %c0_0, %c0_1] : memref<1x128x8xf32, #tpu.memory_space<vmem>>, vector<1x128x8xf32>
    %1 = vector.shape_cast %0 : vector<1x128x8xf32> to vector<128x8xf32>
    %c0_2 = arith.constant 0 : index
    %c0_3 = arith.constant 0 : index
    %c0_4 = arith.constant 0 : index
    %2 = vector.load %arg3[%c0_2, %c0_3, %c0_4] : memref<1x128x8xf32, #tpu.memory_space<vmem>>, vector<1x128x8xf32>
    %3 = vector.shape_cast %2 : vector<1x128x8xf32> to vector<128x8xf32>
    %cst = arith.constant dense<0.000000e+00> : vector<128x128xf32>
    %4 = tpu.matmul %1, %3, %cst {dimension_numbers = #tpu.dot_dimension_numbers<[1], [1], [0], [0], [0, 0, 1, 0], [], []>} : vector<128x8xf32>, vector<128x8xf32>, vector<128x128xf32> -> vector<128x128xf32>
    %5 = arith.mulf %1, %1 : vector<128x8xf32>
    %cst_5 = arith.constant dense<0.000000e+00> : vector<128xf32>
    %6 = vector.multi_reduction <add>, %5, %cst_5 [1] : vector<128x8xf32> to vector<128xf32>
    %7 = vector.shape_cast %6 : vector<128xf32> to vector<128x1xf32>
    %cst_6 = arith.constant 1.000000e+00 : f32
    %8 = vector.broadcast %cst_6 : f32 to vector<1x8xf32>
    %9 = arith.mulf %3, %3 : vector<128x8xf32>
    %cst_7 = arith.constant dense<0.000000e+00> : vector<1x128xf32>
    %10 = tpu.matmul %8, %9, %cst_7 {dimension_numbers = #tpu.dot_dimension_numbers<[1], [1], [0], [0], [0, 0, 1, 0], [], []>} : vector<1x8xf32>, vector<128x8xf32>, vector<1x128xf32> -> vector<1x128xf32>
    %11 = vector.broadcast %7 : vector<128x1xf32> to vector<128x128xf32>
    %12 = vector.broadcast %10 : vector<1x128xf32> to vector<128x128xf32>
    %13 = arith.addf %11, %12 : vector<128x128xf32>
    %cst_8 = arith.constant 2.000000e+00 : f32
    %14 = vector.broadcast %cst_8 : f32 to vector<128x128xf32>
    %15 = arith.mulf %14, %4 : vector<128x128xf32>
    %16 = arith.subf %13, %15 : vector<128x128xf32>
    %cst_9 = arith.constant 0.000000e+00 : f32
    %17 = vector.broadcast %cst_9 : f32 to vector<128x128xf32>
    %18 = arith.maximumf %16, %17 : vector<128x128xf32>
    %19 = math.sqrt %18 : vector<128x128xf32>
    %c0_10 = arith.constant 0 : index
    %c0_11 = arith.constant 0 : index
    %c0_12 = arith.constant 0 : index
    %20 = vector.load %arg4[%c0_10, %c0_11, %c0_12] : memref<1x128x8xf32, #tpu.memory_space<vmem>>, vector<1x128x8xf32>
    %21 = vector.shape_cast %20 : vector<1x128x8xf32> to vector<128x8xf32>
    %c0_13 = arith.constant 0 : index
    %c0_14 = arith.constant 0 : index
    %c0_15 = arith.constant 0 : index
    %22 = vector.load %arg5[%c0_13, %c0_14, %c0_15] : memref<1x128x8xf32, #tpu.memory_space<vmem>>, vector<1x128x8xf32>
    %23 = vector.shape_cast %22 : vector<1x128x8xf32> to vector<128x8xf32>
    %cst_16 = arith.constant dense<0.000000e+00> : vector<128x128xf32>
    %24 = tpu.matmul %21, %23, %cst_16 {dimension_numbers = #tpu.dot_dimension_numbers<[1], [1], [0], [0], [0, 0, 1, 0], [], []>} : vector<128x8xf32>, vector<128x8xf32>, vector<128x128xf32> -> vector<128x128xf32>
    %25 = arith.mulf %21, %21 : vector<128x8xf32>
    %cst_17 = arith.constant dense<0.000000e+00> : vector<128xf32>
    %26 = vector.multi_reduction <add>, %25, %cst_17 [1] : vector<128x8xf32> to vector<128xf32>
    %27 = vector.shape_cast %26 : vector<128xf32> to vector<128x1xf32>
    %cst_18 = arith.constant 1.000000e+00 : f32
    %28 = vector.broadcast %cst_18 : f32 to vector<1x8xf32>
    %29 = arith.mulf %23, %23 : vector<128x8xf32>
    %cst_19 = arith.constant dense<0.000000e+00> : vector<1x128xf32>
    %30 = tpu.matmul %28, %29, %cst_19 {dimension_numbers = #tpu.dot_dimension_numbers<[1], [1], [0], [0], [0, 0, 1, 0], [], []>} : vector<1x8xf32>, vector<128x8xf32>, vector<1x128xf32> -> vector<1x128xf32>
    %31 = vector.broadcast %27 : vector<128x1xf32> to vector<128x128xf32>
    %32 = vector.broadcast %30 : vector<1x128xf32> to vector<128x128xf32>
    %33 = arith.addf %31, %32 : vector<128x128xf32>
    %cst_20 = arith.constant 2.000000e+00 : f32
    %34 = vector.broadcast %cst_20 : f32 to vector<128x128xf32>
    %35 = arith.mulf %34, %24 : vector<128x128xf32>
    %36 = arith.subf %33, %35 : vector<128x128xf32>
    %cst_21 = arith.constant 0.000000e+00 : f32
    %37 = vector.broadcast %cst_21 : f32 to vector<128x128xf32>
    %38 = arith.maximumf %36, %37 : vector<128x128xf32>
    %39 = math.sqrt %38 : vector<128x128xf32>
    %40 = arith.subf %19, %39 : vector<128x128xf32>
    %41 = arith.mulf %40, %40 : vector<128x128xf32>
    %cst_22 = arith.constant 0.694444418 : f32
    %42 = vector.broadcast %cst_22 : f32 to vector<128x128xf32>
    %43 = arith.mulf %41, %42 : vector<128x128xf32>
    %cst_23 = arith.constant 1.000000e+00 : f32
    %44 = vector.broadcast %cst_23 : f32 to vector<128x128xf32>
    %45 = arith.subf %44, %43 : vector<128x128xf32>
    %cst_24 = arith.constant 0.000000e+00 : f32
    %46 = vector.broadcast %cst_24 : f32 to vector<128x128xf32>
    %47 = arith.maximumf %45, %46 : vector<128x128xf32>
    %48 = arith.truncf %47 : vector<128x128xf32> to vector<128x128xbf16>
    %c0_25 = arith.constant 0 : index
    %c0_26 = arith.constant 0 : index
    %c0_27 = arith.constant 0 : index
    %49 = vector.load %arg6[%c0_25, %c0_26, %c0_27] : memref<1x128x128xbf16, #tpu.memory_space<vmem>>, vector<1x128x128xbf16>
    %50 = vector.shape_cast %49 : vector<1x128x128xbf16> to vector<128x128xbf16>
    %51 = vector.shape_cast %48 : vector<128x128xbf16> to vector<1x128x128xbf16>
    tpu.vector_store %arg6[%c0_25, %c0_26, %c0_27], %51 {strides = array<i32>} : memref<1x128x128xbf16, #tpu.memory_space<vmem>>, vector<1x128x128xbf16>,
    return
  }
  func.func @transform_0(%arg0: i32, %arg1: i32) -> (i32, i32, i32) {
    %c0_i32 = arith.constant 0 : i32
    %c0_i32_0 = arith.constant 0 : i32
    return %arg0, %arg1, %c0_i32 : i32, i32, i32
  }
  func.func @transform_1(%arg0: i32, %arg1: i32) -> (i32, i32, i32) {
    %c0_i32 = arith.constant 0 : i32
    %c0_i32_0 = arith.constant 0 : i32
    %c0_i32_1 = arith.constant 0 : i32
    return %arg0, %c0_i32, %c0_i32_0 : i32, i32, i32
  }
  func.func @transform_2(%arg0: i32, %arg1: i32) -> (i32, i32, i32) {
    %c0_i32 = arith.constant 0 : i32
    %c0_i32_0 = arith.constant 0 : i32
    return %arg0, %arg1, %c0_i32 : i32, i32, i32
  }
  func.func @transform_3(%arg0: i32, %arg1: i32) -> (i32, i32, i32) {
    %c0_i32 = arith.constant 0 : i32
    %c0_i32_0 = arith.constant 0 : i32
    %c0_i32_1 = arith.constant 0 : i32
    return %arg0, %c0_i32, %c0_i32_0 : i32, i32, i32
  }
  func.func @transform_4(%arg0: i32, %arg1: i32) -> (i32, i32, i32) {
    %c0_i32 = arith.constant 0 : i32
    %c0_i32_0 = arith.constant 0 : i32
    return %arg0, %arg1, %c0_i32 : i32, i32, i32
  }
}

module attributes {stable_mosaic.version = 11 : i64} {
  func.func @_attn_kernel(%arg0: i32, %arg1: i32, %arg2: memref<1x128x128xbf16, #tpu.memory_space<vmem>>, %arg3: memref<1x128x128xbf16, #tpu.memory_space<vmem>>, %arg4: memref<1x128x128xbf16, #tpu.memory_space<vmem>>, %arg5: memref<1x128x128xbf16, #tpu.memory_space<vmem>>, %arg6: memref<1x128x128xbf16, #tpu.memory_space<vmem>>) attributes {dimension_semantics = [#tpu.dimension_semantics<parallel>, #tpu.dimension_semantics<parallel>], iteration_bounds = array<i64: 2, 1>, scalar_prefetch = 0 : i64, scratch_operands = 0 : i64, tpu.core_type = #tpu.core_type<tc>, window_params = [{transform_indices = @transform_0, window_bounds = array<i64: 1, 128, 128>}, {transform_indices = @transform_1, window_bounds = array<i64: 1, 128, 128>}, {transform_indices = @transform_2, window_bounds = array<i64: 1, 128, 128>}, {transform_indices = @transform_3, window_bounds = array<i64: 1, 128, 128>}, {transform_indices = @transform_4, window_bounds = array<i64: 1, 128, 128>}]} {
    %c0 = arith.constant 0 : index
    %c0_0 = arith.constant 0 : index
    %c0_1 = arith.constant 0 : index
    %0 = vector.load %arg2[%c0, %c0_0, %c0_1] : memref<1x128x128xbf16, #tpu.memory_space<vmem>>, vector<1x128x128xbf16>
    %1 = vector.shape_cast %0 : vector<1x128x128xbf16> to vector<128x128xbf16>
    %c0_2 = arith.constant 0 : index
    %c0_3 = arith.constant 0 : index
    %c0_4 = arith.constant 0 : index
    %2 = vector.load %arg3[%c0_2, %c0_3, %c0_4] : memref<1x128x128xbf16, #tpu.memory_space<vmem>>, vector<1x128x128xbf16>
    %3 = vector.shape_cast %2 : vector<1x128x128xbf16> to vector<128x128xbf16>
    %cst = arith.constant dense<0.000000e+00> : vector<128x128xf32>
    %4 = tpu.matmul %1, %3, %cst {dimension_numbers = #tpu.dot_dimension_numbers<[1], [1], [0], [0], [0, 0, 1, 0], [], []>} : vector<128x128xbf16>, vector<128x128xbf16>, vector<128x128xf32> -> vector<128x128xf32>
    %c0_5 = arith.constant 0 : index
    %c0_6 = arith.constant 0 : index
    %c0_7 = arith.constant 0 : index
    %5 = vector.load %arg5[%c0_5, %c0_6, %c0_7] : memref<1x128x128xbf16, #tpu.memory_space<vmem>>, vector<1x128x128xbf16>
    %6 = vector.shape_cast %5 : vector<1x128x128xbf16> to vector<128x128xbf16>
    %7 = arith.extf %6 : vector<128x128xbf16> to vector<128x128xf32>
    %8 = arith.mulf %7, %4 : vector<128x128xf32>
    %cst_8 = arith.constant dense<0xFF800000> : vector<128xf32>
    %9 = vector.multi_reduction <maximumf>, %8, %cst_8 [1] : vector<128x128xf32> to vector<128xf32>
    %10 = vector.shape_cast %9 : vector<128xf32> to vector<128x1xf32>
    %11 = vector.broadcast %10 : vector<128x1xf32> to vector<128x128xf32>
    %12 = arith.subf %8, %11 : vector<128x128xf32>
    %13 = math.exp %12 : vector<128x128xf32>
    %cst_9 = arith.constant dense<0.000000e+00> : vector<128xf32>
    %14 = vector.multi_reduction <add>, %13, %cst_9 [1] : vector<128x128xf32> to vector<128xf32>
    %15 = vector.shape_cast %14 : vector<128xf32> to vector<128x1xf32>
    %16 = tpu.reciprocal %15 {approx = true} : vector<128x1xf32> -> vector<128x1xf32>
    %17 = vector.broadcast %16 : vector<128x1xf32> to vector<128x128xf32>
    %18 = arith.mulf %13, %17 : vector<128x128xf32>
    %19 = arith.truncf %18 : vector<128x128xf32> to vector<128x128xbf16>
    %c0_10 = arith.constant 0 : index
    %c0_11 = arith.constant 0 : index
    %c0_12 = arith.constant 0 : index
    %20 = vector.load %arg4[%c0_10, %c0_11, %c0_12] : memref<1x128x128xbf16, #tpu.memory_space<vmem>>, vector<1x128x128xbf16>
    %21 = vector.shape_cast %20 : vector<1x128x128xbf16> to vector<128x128xbf16>
    %cst_13 = arith.constant dense<0.000000e+00> : vector<128x128xf32>
    %22 = tpu.matmul %19, %21, %cst_13 {dimension_numbers = #tpu.dot_dimension_numbers<[1], [0], [0], [1], [0, 0, 1, 1], [], []>} : vector<128x128xbf16>, vector<128x128xbf16>, vector<128x128xf32> -> vector<128x128xf32>
    %23 = arith.truncf %22 : vector<128x128xf32> to vector<128x128xbf16>
    %c0_14 = arith.constant 0 : index
    %c0_15 = arith.constant 0 : index
    %c0_16 = arith.constant 0 : index
    %24 = vector.load %arg6[%c0_14, %c0_15, %c0_16] : memref<1x128x128xbf16, #tpu.memory_space<vmem>>, vector<1x128x128xbf16>
    %25 = vector.shape_cast %24 : vector<1x128x128xbf16> to vector<128x128xbf16>
    %26 = vector.shape_cast %23 : vector<128x128xbf16> to vector<1x128x128xbf16>
    tpu.vector_store %arg6[%c0_14, %c0_15, %c0_16], %26 {strides = array<i32>} : memref<1x128x128xbf16, #tpu.memory_space<vmem>>, vector<1x128x128xbf16>,
    return
  }
  func.func @transform_0(%arg0: i32, %arg1: i32) -> (i32, i32, i32) {
    %c0_i32 = arith.constant 0 : i32
    %c0_i32_0 = arith.constant 0 : i32
    return %arg0, %arg1, %c0_i32 : i32, i32, i32
  }
  func.func @transform_1(%arg0: i32, %arg1: i32) -> (i32, i32, i32) {
    %c0_i32 = arith.constant 0 : i32
    %c0_i32_0 = arith.constant 0 : i32
    %c0_i32_1 = arith.constant 0 : i32
    return %arg0, %c0_i32, %c0_i32_0 : i32, i32, i32
  }
  func.func @transform_2(%arg0: i32, %arg1: i32) -> (i32, i32, i32) {
    %c0_i32 = arith.constant 0 : i32
    %c0_i32_0 = arith.constant 0 : i32
    %c0_i32_1 = arith.constant 0 : i32
    return %arg0, %c0_i32, %c0_i32_0 : i32, i32, i32
  }
  func.func @transform_3(%arg0: i32, %arg1: i32) -> (i32, i32, i32) {
    %c0_i32 = arith.constant 0 : i32
    %c0_i32_0 = arith.constant 0 : i32
    return %arg0, %arg1, %c0_i32 : i32, i32, i32
  }
  func.func @transform_4(%arg0: i32, %arg1: i32) -> (i32, i32, i32) {
    %c0_i32 = arith.constant 0 : i32
    %c0_i32_0 = arith.constant 0 : i32
    return %arg0, %arg1, %c0_i32 : i32, i32, i32
  }
}

module attributes {stable_mosaic.version = 11 : i64} {
  func.func @_fc_kernel(%arg0: memref<256x128xbf16, #tpu.memory_space<vmem>>, %arg1: memref<256x128xf32, #tpu.memory_space<vmem>>, %arg2: memref<128x64xbf16, #tpu.memory_space<vmem>>, %arg3: memref<1x64xf32, #tpu.memory_space<vmem>>, %arg4: memref<1x64xf32, #tpu.memory_space<vmem>>, %arg5: memref<1x64xf32, #tpu.memory_space<vmem>>, %arg6: memref<64x64xbf16, #tpu.memory_space<vmem>>, %arg7: memref<1x64xf32, #tpu.memory_space<vmem>>, %arg8: memref<1x64xf32, #tpu.memory_space<vmem>>, %arg9: memref<1x64xf32, #tpu.memory_space<vmem>>, %arg10: memref<64x128xbf16, #tpu.memory_space<vmem>>, %arg11: memref<1x128xf32, #tpu.memory_space<vmem>>, %arg12: memref<256x128xf32, #tpu.memory_space<vmem>>) attributes {dimension_semantics = [], scalar_prefetch = 0 : i64, scratch_operands = 0 : i64, tpu.core_type = #tpu.core_type<tc>} {
    %c0 = arith.constant 0 : index
    %c0_0 = arith.constant 0 : index
    %0 = vector.load %arg0[%c0, %c0_0] : memref<256x128xbf16, #tpu.memory_space<vmem>>, vector<256x128xbf16>
    %c0_1 = arith.constant 0 : index
    %c0_2 = arith.constant 0 : index
    %1 = vector.load %arg2[%c0_1, %c0_2] : memref<128x64xbf16, #tpu.memory_space<vmem>>, vector<128x64xbf16>
    %cst = arith.constant dense<0.000000e+00> : vector<256x64xf32>
    %2 = tpu.matmul %0, %1, %cst {dimension_numbers = #tpu.dot_dimension_numbers<[1], [0], [0], [1], [0, 0, 1, 1], [], []>} : vector<256x128xbf16>, vector<128x64xbf16>, vector<256x64xf32> -> vector<256x64xf32>
    %c0_3 = arith.constant 0 : index
    %c0_4 = arith.constant 0 : index
    %3 = vector.load %arg3[%c0_3, %c0_4] : memref<1x64xf32, #tpu.memory_space<vmem>>, vector<1x64xf32>
    %4 = vector.broadcast %3 : vector<1x64xf32> to vector<256x64xf32>
    %5 = arith.addf %2, %4 : vector<256x64xf32>
    %c0_5 = arith.constant 0 : index
    %c0_6 = arith.constant 0 : index
    %6 = vector.load %arg4[%c0_5, %c0_6] : memref<1x64xf32, #tpu.memory_space<vmem>>, vector<1x64xf32>
    %c0_7 = arith.constant 0 : index
    %c0_8 = arith.constant 0 : index
    %7 = vector.load %arg5[%c0_7, %c0_8] : memref<1x64xf32, #tpu.memory_space<vmem>>, vector<1x64xf32>
    %cst_9 = arith.constant 1.000000e+00 : f32
    %8 = vector.broadcast %cst_9 : f32 to vector<1x256xf32>
    %cst_10 = arith.constant dense<0.000000e+00> : vector<1x64xf32>
    %9 = tpu.matmul %8, %5, %cst_10 {dimension_numbers = #tpu.dot_dimension_numbers<[1], [0], [0], [1], [0, 0, 1, 1], [], []>} : vector<1x256xf32>, vector<256x64xf32>, vector<1x64xf32> -> vector<1x64xf32>
    %cst_11 = arith.constant 3.906250e-03 : f32
    %10 = vector.broadcast %cst_11 : f32 to vector<1x64xf32>
    %11 = arith.mulf %9, %10 : vector<1x64xf32>
    %12 = vector.broadcast %11 : vector<1x64xf32> to vector<256x64xf32>
    %13 = arith.subf %5, %12 : vector<256x64xf32>
    %14 = arith.mulf %13, %13 : vector<256x64xf32>
    %cst_12 = arith.constant dense<0.000000e+00> : vector<1x64xf32>
    %15 = tpu.matmul %8, %14, %cst_12 {dimension_numbers = #tpu.dot_dimension_numbers<[1], [0], [0], [1], [0, 0, 1, 1], [], []>} : vector<1x256xf32>, vector<256x64xf32>, vector<1x64xf32> -> vector<1x64xf32>
    %cst_13 = arith.constant 3.906250e-03 : f32
    %16 = vector.broadcast %cst_13 : f32 to vector<1x64xf32>
    %17 = arith.mulf %15, %16 : vector<1x64xf32>
    %cst_14 = arith.constant 9.99999974E-6 : f32
    %18 = vector.broadcast %cst_14 : f32 to vector<1x64xf32>
    %19 = arith.addf %17, %18 : vector<1x64xf32>
    %20 = math.rsqrt %19 : vector<1x64xf32>
    %21 = arith.mulf %6, %20 : vector<1x64xf32>
    %22 = vector.broadcast %21 : vector<1x64xf32> to vector<256x64xf32>
    %23 = arith.mulf %13, %22 : vector<256x64xf32>
    %24 = vector.broadcast %7 : vector<1x64xf32> to vector<256x64xf32>
    %25 = arith.addf %23, %24 : vector<256x64xf32>
    %cst_15 = arith.constant 0.000000e+00 : f32
    %26 = vector.broadcast %cst_15 : f32 to vector<256x64xf32>
    %27 = arith.maximumf %25, %26 : vector<256x64xf32>
    %28 = arith.truncf %27 : vector<256x64xf32> to vector<256x64xbf16>
    %c0_16 = arith.constant 0 : index
    %c0_17 = arith.constant 0 : index
    %29 = vector.load %arg6[%c0_16, %c0_17] : memref<64x64xbf16, #tpu.memory_space<vmem>>, vector<64x64xbf16>
    %cst_18 = arith.constant dense<0.000000e+00> : vector<256x64xf32>
    %30 = tpu.matmul %28, %29, %cst_18 {dimension_numbers = #tpu.dot_dimension_numbers<[1], [0], [0], [1], [0, 0, 1, 1], [], []>} : vector<256x64xbf16>, vector<64x64xbf16>, vector<256x64xf32> -> vector<256x64xf32>
    %c0_19 = arith.constant 0 : index
    %c0_20 = arith.constant 0 : index
    %31 = vector.load %arg7[%c0_19, %c0_20] : memref<1x64xf32, #tpu.memory_space<vmem>>, vector<1x64xf32>
    %32 = vector.broadcast %31 : vector<1x64xf32> to vector<256x64xf32>
    %33 = arith.addf %30, %32 : vector<256x64xf32>
    %c0_21 = arith.constant 0 : index
    %c0_22 = arith.constant 0 : index
    %34 = vector.load %arg8[%c0_21, %c0_22] : memref<1x64xf32, #tpu.memory_space<vmem>>, vector<1x64xf32>
    %c0_23 = arith.constant 0 : index
    %c0_24 = arith.constant 0 : index
    %35 = vector.load %arg9[%c0_23, %c0_24] : memref<1x64xf32, #tpu.memory_space<vmem>>, vector<1x64xf32>
    %cst_25 = arith.constant 1.000000e+00 : f32
    %36 = vector.broadcast %cst_25 : f32 to vector<1x256xf32>
    %cst_26 = arith.constant dense<0.000000e+00> : vector<1x64xf32>
    %37 = tpu.matmul %36, %33, %cst_26 {dimension_numbers = #tpu.dot_dimension_numbers<[1], [0], [0], [1], [0, 0, 1, 1], [], []>} : vector<1x256xf32>, vector<256x64xf32>, vector<1x64xf32> -> vector<1x64xf32>
    %cst_27 = arith.constant 3.906250e-03 : f32
    %38 = vector.broadcast %cst_27 : f32 to vector<1x64xf32>
    %39 = arith.mulf %37, %38 : vector<1x64xf32>
    %40 = vector.broadcast %39 : vector<1x64xf32> to vector<256x64xf32>
    %41 = arith.subf %33, %40 : vector<256x64xf32>
    %42 = arith.mulf %41, %41 : vector<256x64xf32>
    %cst_28 = arith.constant dense<0.000000e+00> : vector<1x64xf32>
    %43 = tpu.matmul %36, %42, %cst_28 {dimension_numbers = #tpu.dot_dimension_numbers<[1], [0], [0], [1], [0, 0, 1, 1], [], []>} : vector<1x256xf32>, vector<256x64xf32>, vector<1x64xf32> -> vector<1x64xf32>
    %cst_29 = arith.constant 3.906250e-03 : f32
    %44 = vector.broadcast %cst_29 : f32 to vector<1x64xf32>
    %45 = arith.mulf %43, %44 : vector<1x64xf32>
    %cst_30 = arith.constant 9.99999974E-6 : f32
    %46 = vector.broadcast %cst_30 : f32 to vector<1x64xf32>
    %47 = arith.addf %45, %46 : vector<1x64xf32>
    %48 = math.rsqrt %47 : vector<1x64xf32>
    %49 = arith.mulf %34, %48 : vector<1x64xf32>
    %50 = vector.broadcast %49 : vector<1x64xf32> to vector<256x64xf32>
    %51 = arith.mulf %41, %50 : vector<256x64xf32>
    %52 = vector.broadcast %35 : vector<1x64xf32> to vector<256x64xf32>
    %53 = arith.addf %51, %52 : vector<256x64xf32>
    %cst_31 = arith.constant 0.000000e+00 : f32
    %54 = vector.broadcast %cst_31 : f32 to vector<256x64xf32>
    %55 = arith.maximumf %53, %54 : vector<256x64xf32>
    %c0_32 = arith.constant 0 : index
    %c0_33 = arith.constant 0 : index
    %56 = vector.load %arg1[%c0_32, %c0_33] : memref<256x128xf32, #tpu.memory_space<vmem>>, vector<256x128xf32>
    %57 = arith.truncf %55 : vector<256x64xf32> to vector<256x64xbf16>
    %c0_34 = arith.constant 0 : index
    %c0_35 = arith.constant 0 : index
    %58 = vector.load %arg10[%c0_34, %c0_35] : memref<64x128xbf16, #tpu.memory_space<vmem>>, vector<64x128xbf16>
    %cst_36 = arith.constant dense<0.000000e+00> : vector<256x128xf32>
    %59 = tpu.matmul %57, %58, %cst_36 {dimension_numbers = #tpu.dot_dimension_numbers<[1], [0], [0], [1], [0, 0, 1, 1], [], []>} : vector<256x64xbf16>, vector<64x128xbf16>, vector<256x128xf32> -> vector<256x128xf32>
    %60 = arith.addf %56, %59 : vector<256x128xf32>
    %c0_37 = arith.constant 0 : index
    %c0_38 = arith.constant 0 : index
    %61 = vector.load %arg11[%c0_37, %c0_38] : memref<1x128xf32, #tpu.memory_space<vmem>>, vector<1x128xf32>
    %62 = vector.broadcast %61 : vector<1x128xf32> to vector<256x128xf32>
    %63 = arith.addf %60, %62 : vector<256x128xf32>
    %c0_39 = arith.constant 0 : index
    %c0_40 = arith.constant 0 : index
    %64 = vector.load %arg12[%c0_39, %c0_40] : memref<256x128xf32, #tpu.memory_space<vmem>>, vector<256x128xf32>
    tpu.vector_store %arg12[%c0_39, %c0_40], %63 {strides = array<i32>} : memref<256x128xf32, #tpu.memory_space<vmem>>, vector<256x128xf32>,
    return
  }
}

module attributes {stable_mosaic.version = 11 : i64} {
  func.func @_proj_kernel(%arg0: memref<256x128xf32, #tpu.memory_space<vmem>>, %arg1: memref<128x128xbf16, #tpu.memory_space<vmem>>, %arg2: memref<1x128xf32, #tpu.memory_space<vmem>>, %arg3: memref<1x128xf32, #tpu.memory_space<vmem>>, %arg4: memref<1x128xf32, #tpu.memory_space<vmem>>, %arg5: memref<128x384xbf16, #tpu.memory_space<vmem>>, %arg6: memref<1x384xf32, #tpu.memory_space<vmem>>, %arg7: memref<256x128xf32, #tpu.memory_space<vmem>>, %arg8: memref<256x128xbf16, #tpu.memory_space<vmem>>, %arg9: memref<256x128xbf16, #tpu.memory_space<vmem>>, %arg10: memref<256x128xbf16, #tpu.memory_space<vmem>>) attributes {dimension_semantics = [], scalar_prefetch = 0 : i64, scratch_operands = 0 : i64, tpu.core_type = #tpu.core_type<tc>} {
    %c0 = arith.constant 0 : index
    %c0_0 = arith.constant 0 : index
    %0 = vector.load %arg0[%c0, %c0_0] : memref<256x128xf32, #tpu.memory_space<vmem>>, vector<256x128xf32>
    %1 = arith.truncf %0 : vector<256x128xf32> to vector<256x128xbf16>
    %c0_1 = arith.constant 0 : index
    %c0_2 = arith.constant 0 : index
    %2 = vector.load %arg1[%c0_1, %c0_2] : memref<128x128xbf16, #tpu.memory_space<vmem>>, vector<128x128xbf16>
    %cst = arith.constant dense<0.000000e+00> : vector<256x128xf32>
    %3 = tpu.matmul %1, %2, %cst {dimension_numbers = #tpu.dot_dimension_numbers<[1], [0], [0], [1], [0, 0, 1, 1], [], []>} : vector<256x128xbf16>, vector<128x128xbf16>, vector<256x128xf32> -> vector<256x128xf32>
    %c0_3 = arith.constant 0 : index
    %c0_4 = arith.constant 0 : index
    %4 = vector.load %arg2[%c0_3, %c0_4] : memref<1x128xf32, #tpu.memory_space<vmem>>, vector<1x128xf32>
    %5 = vector.broadcast %4 : vector<1x128xf32> to vector<256x128xf32>
    %6 = arith.addf %3, %5 : vector<256x128xf32>
    %c0_5 = arith.constant 0 : index
    %c0_6 = arith.constant 0 : index
    %7 = vector.load %arg3[%c0_5, %c0_6] : memref<1x128xf32, #tpu.memory_space<vmem>>, vector<1x128xf32>
    %c0_7 = arith.constant 0 : index
    %c0_8 = arith.constant 0 : index
    %8 = vector.load %arg4[%c0_7, %c0_8] : memref<1x128xf32, #tpu.memory_space<vmem>>, vector<1x128xf32>
    %cst_9 = arith.constant 1.000000e+00 : f32
    %9 = vector.broadcast %cst_9 : f32 to vector<1x256xf32>
    %cst_10 = arith.constant dense<0.000000e+00> : vector<1x128xf32>
    %10 = tpu.matmul %9, %6, %cst_10 {dimension_numbers = #tpu.dot_dimension_numbers<[1], [0], [0], [1], [0, 0, 1, 1], [], []>} : vector<1x256xf32>, vector<256x128xf32>, vector<1x128xf32> -> vector<1x128xf32>
    %cst_11 = arith.constant 3.906250e-03 : f32
    %11 = vector.broadcast %cst_11 : f32 to vector<1x128xf32>
    %12 = arith.mulf %10, %11 : vector<1x128xf32>
    %13 = vector.broadcast %12 : vector<1x128xf32> to vector<256x128xf32>
    %14 = arith.subf %6, %13 : vector<256x128xf32>
    %15 = arith.mulf %14, %14 : vector<256x128xf32>
    %cst_12 = arith.constant dense<0.000000e+00> : vector<1x128xf32>
    %16 = tpu.matmul %9, %15, %cst_12 {dimension_numbers = #tpu.dot_dimension_numbers<[1], [0], [0], [1], [0, 0, 1, 1], [], []>} : vector<1x256xf32>, vector<256x128xf32>, vector<1x128xf32> -> vector<1x128xf32>
    %cst_13 = arith.constant 3.906250e-03 : f32
    %17 = vector.broadcast %cst_13 : f32 to vector<1x128xf32>
    %18 = arith.mulf %16, %17 : vector<1x128xf32>
    %cst_14 = arith.constant 9.99999974E-6 : f32
    %19 = vector.broadcast %cst_14 : f32 to vector<1x128xf32>
    %20 = arith.addf %18, %19 : vector<1x128xf32>
    %21 = math.rsqrt %20 : vector<1x128xf32>
    %22 = arith.mulf %7, %21 : vector<1x128xf32>
    %23 = vector.broadcast %22 : vector<1x128xf32> to vector<256x128xf32>
    %24 = arith.mulf %14, %23 : vector<256x128xf32>
    %25 = vector.broadcast %8 : vector<1x128xf32> to vector<256x128xf32>
    %26 = arith.addf %24, %25 : vector<256x128xf32>
    %cst_15 = arith.constant 0.000000e+00 : f32
    %27 = vector.broadcast %cst_15 : f32 to vector<256x128xf32>
    %28 = arith.maximumf %26, %27 : vector<256x128xf32>
    %c0_16 = arith.constant 0 : index
    %c0_17 = arith.constant 0 : index
    %29 = vector.load %arg7[%c0_16, %c0_17] : memref<256x128xf32, #tpu.memory_space<vmem>>, vector<256x128xf32>
    tpu.vector_store %arg7[%c0_16, %c0_17], %28 {strides = array<i32>} : memref<256x128xf32, #tpu.memory_space<vmem>>, vector<256x128xf32>,
    %30 = arith.truncf %28 : vector<256x128xf32> to vector<256x128xbf16>
    %c0_18 = arith.constant 0 : index
    %c0_19 = arith.constant 0 : index
    %31 = vector.load %arg5[%c0_18, %c0_19] : memref<128x384xbf16, #tpu.memory_space<vmem>>, vector<128x384xbf16>
    %cst_20 = arith.constant dense<0.000000e+00> : vector<256x384xf32>
    %32 = tpu.matmul %30, %31, %cst_20 {dimension_numbers = #tpu.dot_dimension_numbers<[1], [0], [0], [1], [0, 0, 1, 1], [], []>} : vector<256x128xbf16>, vector<128x384xbf16>, vector<256x384xf32> -> vector<256x384xf32>
    %c0_21 = arith.constant 0 : index
    %c0_22 = arith.constant 0 : index
    %33 = vector.load %arg6[%c0_21, %c0_22] : memref<1x384xf32, #tpu.memory_space<vmem>>, vector<1x384xf32>
    %34 = vector.broadcast %33 : vector<1x384xf32> to vector<256x384xf32>
    %35 = arith.addf %32, %34 : vector<256x384xf32>
    %36 = vector.extract_strided_slice %35 {offsets = [0, 0], sizes = [256, 128], strides = [1, 1]} : vector<256x384xf32> to vector<256x128xf32>
    %37 = arith.truncf %36 : vector<256x128xf32> to vector<256x128xbf16>
    %c0_23 = arith.constant 0 : index
    %c0_24 = arith.constant 0 : index
    %38 = vector.load %arg8[%c0_23, %c0_24] : memref<256x128xbf16, #tpu.memory_space<vmem>>, vector<256x128xbf16>
    tpu.vector_store %arg8[%c0_23, %c0_24], %37 {strides = array<i32>} : memref<256x128xbf16, #tpu.memory_space<vmem>>, vector<256x128xbf16>,
    %39 = vector.extract_strided_slice %35 {offsets = [0, 128], sizes = [256, 128], strides = [1, 1]} : vector<256x384xf32> to vector<256x128xf32>
    %40 = arith.truncf %39 : vector<256x128xf32> to vector<256x128xbf16>
    %c0_25 = arith.constant 0 : index
    %c0_26 = arith.constant 0 : index
    %41 = vector.load %arg9[%c0_25, %c0_26] : memref<256x128xbf16, #tpu.memory_space<vmem>>, vector<256x128xbf16>
    tpu.vector_store %arg9[%c0_25, %c0_26], %40 {strides = array<i32>} : memref<256x128xbf16, #tpu.memory_space<vmem>>, vector<256x128xbf16>,
    %42 = vector.extract_strided_slice %35 {offsets = [0, 256], sizes = [256, 128], strides = [1, 1]} : vector<256x384xf32> to vector<256x128xf32>
    %43 = arith.truncf %42 : vector<256x128xf32> to vector<256x128xbf16>
    %c0_27 = arith.constant 0 : index
    %c0_28 = arith.constant 0 : index
    %44 = vector.load %arg10[%c0_27, %c0_28] : memref<256x128xbf16, #tpu.memory_space<vmem>>, vector<256x128xbf16>
    tpu.vector_store %arg10[%c0_27, %c0_28], %43 {strides = array<i32>} : memref<256x128xbf16, #tpu.memory_space<vmem>>, vector<256x128xbf16>,
    return
  }
}

module attributes {stable_mosaic.version = 11 : i64} {
  func.func @_attn_kernel(%arg0: i32, %arg1: i32, %arg2: memref<1x128x128xbf16, #tpu.memory_space<vmem>>, %arg3: memref<1x128x128xbf16, #tpu.memory_space<vmem>>, %arg4: memref<1x128x128xbf16, #tpu.memory_space<vmem>>, %arg5: memref<1x128x128xbf16, #tpu.memory_space<vmem>>, %arg6: memref<1x128x128xbf16, #tpu.memory_space<vmem>>) attributes {dimension_semantics = [#tpu.dimension_semantics<parallel>, #tpu.dimension_semantics<parallel>], iteration_bounds = array<i64: 2, 1>, scalar_prefetch = 0 : i64, scratch_operands = 0 : i64, tpu.core_type = #tpu.core_type<tc>, window_params = [{transform_indices = @transform_0, window_bounds = array<i64: 1, 128, 128>}, {transform_indices = @transform_1, window_bounds = array<i64: 1, 128, 128>}, {transform_indices = @transform_2, window_bounds = array<i64: 1, 128, 128>}, {transform_indices = @transform_3, window_bounds = array<i64: 1, 128, 128>}, {transform_indices = @transform_4, window_bounds = array<i64: 1, 128, 128>}]} {
    %c0 = arith.constant 0 : index
    %c0_0 = arith.constant 0 : index
    %c0_1 = arith.constant 0 : index
    %0 = vector.load %arg2[%c0, %c0_0, %c0_1] : memref<1x128x128xbf16, #tpu.memory_space<vmem>>, vector<1x128x128xbf16>
    %1 = vector.shape_cast %0 : vector<1x128x128xbf16> to vector<128x128xbf16>
    %c0_2 = arith.constant 0 : index
    %c0_3 = arith.constant 0 : index
    %c0_4 = arith.constant 0 : index
    %2 = vector.load %arg3[%c0_2, %c0_3, %c0_4] : memref<1x128x128xbf16, #tpu.memory_space<vmem>>, vector<1x128x128xbf16>
    %3 = vector.shape_cast %2 : vector<1x128x128xbf16> to vector<128x128xbf16>
    %cst = arith.constant dense<0.000000e+00> : vector<128x128xf32>
    %4 = tpu.matmul %1, %3, %cst {dimension_numbers = #tpu.dot_dimension_numbers<[1], [1], [0], [0], [0, 0, 1, 0], [], []>} : vector<128x128xbf16>, vector<128x128xbf16>, vector<128x128xf32> -> vector<128x128xf32>
    %c0_5 = arith.constant 0 : index
    %c0_6 = arith.constant 0 : index
    %c0_7 = arith.constant 0 : index
    %5 = vector.load %arg5[%c0_5, %c0_6, %c0_7] : memref<1x128x128xbf16, #tpu.memory_space<vmem>>, vector<1x128x128xbf16>
    %6 = vector.shape_cast %5 : vector<1x128x128xbf16> to vector<128x128xbf16>
    %7 = arith.extf %6 : vector<128x128xbf16> to vector<128x128xf32>
    %8 = arith.mulf %7, %4 : vector<128x128xf32>
    %cst_8 = arith.constant dense<0xFF800000> : vector<128xf32>
    %9 = vector.multi_reduction <maximumf>, %8, %cst_8 [1] : vector<128x128xf32> to vector<128xf32>
    %10 = vector.shape_cast %9 : vector<128xf32> to vector<128x1xf32>
    %11 = vector.broadcast %10 : vector<128x1xf32> to vector<128x128xf32>
    %12 = arith.subf %8, %11 : vector<128x128xf32>
    %13 = math.exp %12 : vector<128x128xf32>
    %cst_9 = arith.constant dense<0.000000e+00> : vector<128xf32>
    %14 = vector.multi_reduction <add>, %13, %cst_9 [1] : vector<128x128xf32> to vector<128xf32>
    %15 = vector.shape_cast %14 : vector<128xf32> to vector<128x1xf32>
    %16 = tpu.reciprocal %15 {approx = true} : vector<128x1xf32> -> vector<128x1xf32>
    %17 = vector.broadcast %16 : vector<128x1xf32> to vector<128x128xf32>
    %18 = arith.mulf %13, %17 : vector<128x128xf32>
    %19 = arith.truncf %18 : vector<128x128xf32> to vector<128x128xbf16>
    %c0_10 = arith.constant 0 : index
    %c0_11 = arith.constant 0 : index
    %c0_12 = arith.constant 0 : index
    %20 = vector.load %arg4[%c0_10, %c0_11, %c0_12] : memref<1x128x128xbf16, #tpu.memory_space<vmem>>, vector<1x128x128xbf16>
    %21 = vector.shape_cast %20 : vector<1x128x128xbf16> to vector<128x128xbf16>
    %cst_13 = arith.constant dense<0.000000e+00> : vector<128x128xf32>
    %22 = tpu.matmul %19, %21, %cst_13 {dimension_numbers = #tpu.dot_dimension_numbers<[1], [0], [0], [1], [0, 0, 1, 1], [], []>} : vector<128x128xbf16>, vector<128x128xbf16>, vector<128x128xf32> -> vector<128x128xf32>
    %23 = arith.truncf %22 : vector<128x128xf32> to vector<128x128xbf16>
    %c0_14 = arith.constant 0 : index
    %c0_15 = arith.constant 0 : index
    %c0_16 = arith.constant 0 : index
    %24 = vector.load %arg6[%c0_14, %c0_15, %c0_16] : memref<1x128x128xbf16, #tpu.memory_space<vmem>>, vector<1x128x128xbf16>
    %25 = vector.shape_cast %24 : vector<1x128x128xbf16> to vector<128x128xbf16>
    %26 = vector.shape_cast %23 : vector<128x128xbf16> to vector<1x128x128xbf16>
    tpu.vector_store %arg6[%c0_14, %c0_15, %c0_16], %26 {strides = array<i32>} : memref<1x128x128xbf16, #tpu.memory_space<vmem>>, vector<1x128x128xbf16>,
    return
  }
  func.func @transform_0(%arg0: i32, %arg1: i32) -> (i32, i32, i32) {
    %c0_i32 = arith.constant 0 : i32
    %c0_i32_0 = arith.constant 0 : i32
    return %arg0, %arg1, %c0_i32 : i32, i32, i32
  }
  func.func @transform_1(%arg0: i32, %arg1: i32) -> (i32, i32, i32) {
    %c0_i32 = arith.constant 0 : i32
    %c0_i32_0 = arith.constant 0 : i32
    %c0_i32_1 = arith.constant 0 : i32
    return %arg0, %c0_i32, %c0_i32_0 : i32, i32, i32
  }
  func.func @transform_2(%arg0: i32, %arg1: i32) -> (i32, i32, i32) {
    %c0_i32 = arith.constant 0 : i32
    %c0_i32_0 = arith.constant 0 : i32
    %c0_i32_1 = arith.constant 0 : i32
    return %arg0, %c0_i32, %c0_i32_0 : i32, i32, i32
  }
  func.func @transform_3(%arg0: i32, %arg1: i32) -> (i32, i32, i32) {
    %c0_i32 = arith.constant 0 : i32
    %c0_i32_0 = arith.constant 0 : i32
    return %arg0, %arg1, %c0_i32 : i32, i32, i32
  }
  func.func @transform_4(%arg0: i32, %arg1: i32) -> (i32, i32, i32) {
    %c0_i32 = arith.constant 0 : i32
    %c0_i32_0 = arith.constant 0 : i32
    return %arg0, %arg1, %c0_i32 : i32, i32, i32
  }
}

</mosaic_0001>

<llo_original>
// kernel: nonlocal_net_cost.9
$region0: #{nonlocal_net_cost.9}
  #allocation0 [shape = 'u32[]', space=smem, size = 0x4, offset = 0x4, fixed_abs, tag = 'smem constant byte address 0x4 - core index']
  #allocation1 [shape = 'u32[144,128]{1,0:T(1,128)}', space=vmem, size = 0x12000, scoped, tag = 'internal scratch']
  %s0 = inlined_call_operand.vmem [shape: bf16[2,128,128], index: 0, kind: input, shape index: {}]
  %s1 = inlined_call_operand.vmem [shape: bf16[2,128,128], index: 1, kind: input, shape index: {}]
  %s2 = inlined_call_operand.vmem [shape: bf16[2,128,128], index: 2, kind: input, shape index: {}]
  %s3 = inlined_call_operand.vmem [shape: bf16[2,128,128], index: 3, kind: input, shape index: {}]
  %s4 = inlined_call_operand.hbm [shape: bf16[2,128,128], index: 4, kind: output, shape index: {}]
  %s5 = sld [smem:[#allocation0]]
  $region49: #{nonlocal_net_cost.9} parent=0
    _
  %s7 = ssub.s32 1, %s5
  %s8 = scalar_select 0, %s7, %s5
  $region1: #{nonlocal_net_cost.9} parent=0
    #allocation2 [shape = 'u8[65536]{0}', space=vmem, size = 0x10000, scoped, tag = 'output window, operand 0']
    #allocation3 [shape = 's32[2]{0}', space=sflag, size = 0x8, scoped, tag = 'scoped memory for nonlocal_net_cost.9']
    %9 = vsyncpa [#allocation3], 0
    %s10 = scalar_lea.sflag [#allocation3], 1
    %11 = vsyncpa %s10, 0
    loop: start=0, step=1, limit=4
    $region2: #{nonlocal_net_cost.9} parent=1 // loop_pre_header
      _
    $region3: #{nonlocal_net_cost.9} parent=1 // loop_header
      %s13 = sphi 0, %s17
      %p14 = scmp.ge.s32.totalorder %s13, 4
      %s20 = sphi 0, %s32
      %s21 = sphi 0, %s28
      %s22 = sphi 0, %s20
      %s23 = sphi 0, %s21
      %s24 = sphi 0, %s22
      %s25 = sphi 0, %s23
      %s37 = sphi 0, %s39
      %s40 = sphi 0, %s37
      %s41 = sphi 0, %s40
      %s57 = sphi 0, %s41
      %s63 = sphi 0, %s65
      %s66 = sphi 0, %s63
      %s67 = sphi 0, %s66
      %s83 = sphi 0, %s67
      %s89 = sphi 0, %s91
      %s92 = sphi 0, %s89
      %s93 = sphi 0, %s92
      %s109 = sphi 0, %s93
      %s117 = sphi 0, %s119
      %s120 = sphi 0, %s117
      %s121 = sphi 0, %s120
      %s137 = sphi 0, %s121
      %s145 = sphi 0, %s147
      %s148 = sphi 0, %s145
      %s149 = sphi 0, %s148
      %s165 = sphi 0, %s149
    $region4: #{nonlocal_net_cost.9} parent=1 // loop_header_branch
      %16 = sbr.rel (%p14) target = $region8
    $region5: #{nonlocal_net_cost.9} parent=1 // loop_body
      %s18 = ssub.s32 %s13, 1
      %s19 = ssub.s32 %s13, 2
      %s26 = sadd.s32 1, %s21
      %p27 = scmp.ge.s32.totalorder %s26, 1
      %s28 = scalar_select %p27, 0, %s26
      %s29 = sadd.s32 1, %s20
      %s30 = scalar_select %p27, %s29, %s20
      %p31 = scmp.ge.s32.totalorder %s30, 2
      %s32 = scalar_select %p31, 0, %s30
      %s33 = ssub.s32 %s20, %s32
      %s34 = ssub.s32 %s21, %s28
      %s35 = sor.u32 %s33, %s34
      %p36 = scmp.eq.s32.totalorder %s35, 0
      %s38 = sadd.s32 %s37, 1
      %s39 = scalar_select %p36, %s37, %s38
      %p42 = pneg %p36
      %p43 = scmp.eq.s32.totalorder %s13, 1
      %p44 = por %p42, %p43
      %p45 = scmp.ne.s32.totalorder %s37, %s40
      %p46 = scmp.eq.s32.totalorder %s13, 0
      %p47 = por %p45, %p46
      %p48 = scmp.ne.s32.totalorder %s37, %s40
      %p49 = scmp.eq.s32.totalorder %s18, 1
      %p50 = por %p48, %p49
      %p51 = scmp.ne.s32.totalorder %s40, %s41
      %p52 = scmp.eq.s32.totalorder %s18, 0
      %p53 = por %p51, %p52
      %p54 = scmp.ne.s32.totalorder %s40, %s41
      %p55 = scmp.eq.s32.totalorder %s19, 1
      %p56 = por %p54, %p55
      %p58 = scmp.ne.s32.totalorder %s41, %s57
      %p59 = scmp.eq.s32.totalorder %s19, 0
      %p60 = por %p58, %p59
      %s61 = ssub.s32 %s20, %s32
      %p62 = scmp.eq.s32.totalorder %s61, 0
      %s64 = sadd.s32 %s63, 1
      %s65 = scalar_select %p62, %s63, %s64
      %p68 = pneg %p62
      %p69 = scmp.eq.s32.totalorder %s13, 1
      %p70 = por %p68, %p69
      %p71 = scmp.ne.s32.totalorder %s63, %s66
      %p72 = scmp.eq.s32.totalorder %s13, 0
      %p73 = por %p71, %p72
      %p74 = scmp.ne.s32.totalorder %s63, %s66
      %p75 = scmp.eq.s32.totalorder %s18, 1
      %p76 = por %p74, %p75
      %p77 = scmp.ne.s32.totalorder %s66, %s67
      %p78 = scmp.eq.s32.totalorder %s18, 0
      %p79 = por %p77, %p78
      %p80 = scmp.ne.s32.totalorder %s66, %s67
      %p81 = scmp.eq.s32.totalorder %s19, 1
      %p82 = por %p80, %p81
      %p84 = scmp.ne.s32.totalorder %s67, %s83
      %p85 = scmp.eq.s32.totalorder %s19, 0
      %p86 = por %p84, %p85
      %s87 = ssub.s32 %s20, %s32
      %p88 = scmp.eq.s32.totalorder %s87, 0
      %s90 = sadd.s32 %s89, 1
      %s91 = scalar_select %p88, %s89, %s90
      %p94 = pneg %p88
      %p95 = scmp.eq.s32.totalorder %s13, 1
      %p96 = por %p94, %p95
      %p97 = scmp.ne.s32.totalorder %s89, %s92
      %p98 = scmp.eq.s32.totalorder %s13, 0
      %p99 = por %p97, %p98
      %p100 = scmp.ne.s32.totalorder %s89, %s92
      %p101 = scmp.eq.s32.totalorder %s18, 1
      %p102 = por %p100, %p101
      %p103 = scmp.ne.s32.totalorder %s92, %s93
      %p104 = scmp.eq.s32.totalorder %s18, 0
      %p105 = por %p103, %p104
      %p106 = scmp.ne.s32.totalorder %s92, %s93
      %p107 = scmp.eq.s32.totalorder %s19, 1
      %p108 = por %p106, %p107
      %p110 = scmp.ne.s32.totalorder %s93, %s109
      %p111 = scmp.eq.s32.totalorder %s19, 0
      %p112 = por %p110, %p111
      %s113 = ssub.s32 %s20, %s32
      %s114 = ssub.s32 %s21, %s28
      %s115 = sor.u32 %s113, %s114
      %p116 = scmp.eq.s32.totalorder %s115, 0
      %s118 = sadd.s32 %s117, 1
      %s119 = scalar_select %p116, %s117, %s118
      %p122 = pneg %p116
      %p123 = scmp.eq.s32.totalorder %s13, 1
      %p124 = por %p122, %p123
      %p125 = scmp.ne.s32.totalorder %s117, %s120
      %p126 = scmp.eq.s32.totalorder %s13, 0
      %p127 = por %p125, %p126
      %p128 = scmp.ne.s32.totalorder %s117, %s120
      %p129 = scmp.eq.s32.totalorder %s18, 1
      %p130 = por %p128, %p129
      %p131 = scmp.ne.s32.totalorder %s120, %s121
      %p132 = scmp.eq.s32.totalorder %s18, 0
      %p133 = por %p131, %p132
      %p134 = scmp.ne.s32.totalorder %s120, %s121
      %p135 = scmp.eq.s32.totalorder %s19, 1
      %p136 = por %p134, %p135
      %p138 = scmp.ne.s32.totalorder %s121, %s137
      %p139 = scmp.eq.s32.totalorder %s19, 0
      %p140 = por %p138, %p139
      %s141 = ssub.s32 %s20, %s32
      %s142 = ssub.s32 %s21, %s28
      %s143 = sor.u32 %s141, %s142
      %p144 = scmp.eq.s32.totalorder %s143, 0
      %s146 = sadd.s32 %s145, 1
      %s147 = scalar_select %p144, %s145, %s146
      %p150 = pneg %p144
      %p151 = scmp.eq.s32.totalorder %s13, 1
      %p152 = por %p150, %p151
      %p153 = scmp.ne.s32.totalorder %s145, %s148
      %p154 = scmp.eq.s32.totalorder %s13, 0
      %p155 = por %p153, %p154
      %p156 = scmp.ne.s32.totalorder %s145, %s148
      %p157 = scmp.eq.s32.totalorder %s18, 1
      %p158 = por %p156, %p157
      %p159 = scmp.ne.s32.totalorder %s148, %s149
      %p160 = scmp.eq.s32.totalorder %s18, 0
      %p161 = por %p159, %p160
      %p162 = scmp.ne.s32.totalorder %s148, %s149
      %p163 = scmp.eq.s32.totalorder %s19, 1
      %p164 = por %p162, %p163
      %p166 = scmp.ne.s32.totalorder %s149, %s165
      %p167 = scmp.eq.s32.totalorder %s19, 0
      %p168 = por %p166, %p167
      %p169 = scmp.le.s32.totalorder 1, %s13
      %p170 = scmp.lt.s32.totalorder %s13, 3
      %p171 = pnand %p169, %p170
      %p172 = pneg %p171
      // Predicated region
      $region9: #{nonlocal_net_cost.9} parent=5 // pred_check
        _
      $region10: #{nonlocal_net_cost.9} parent=5 // pred_check_branch
        %174 = sbr.rel (%p171) target = $region12
      $region11: #{nonlocal_net_cost.9} parent=5 // pred_region
        %s175 = ssub.s32 %s13, 1
      $region12: #{nonlocal_net_cost.9} parent=5 // pred_fallthru
        _
      %p176 = scmp.lt.s32.totalorder %s13, 2
      // Predicated region
      $region13: #{nonlocal_net_cost.9} parent=5 // pred_check
        %p177 = pneg %p176
      $region14: #{nonlocal_net_cost.9} parent=5 // pred_check_branch
        %179 = sbr.rel (%p177) target = $region16
      $region15: #{nonlocal_net_cost.9} parent=5 // pred_region
        // Predicated region
        $region17: #{nonlocal_net_cost.9} parent=15 // pred_check
          %p180 = pneg %p47
        $region18: #{nonlocal_net_cost.9} parent=15 // pred_check_branch
          %182 = sbr.rel (%p180) target = $region20
        $region19: #{nonlocal_net_cost.9} parent=15 // pred_region
          %s183 = smul.u32 16, %s21
          %p184 = scmp.lt.s32.totalorder %s20, 1
          %s185 = scalar_select %p184, %s20, 1
          %p186 = scmp.lt.s32.totalorder %s183, 15
          %s187 = scalar_select %p186, %s183, 15
          %s188 = smul.addr %s185, 16
          %s189 = sadd.s32 %s187, %s188
          %s190 = smul.addr %s189, 4
          %s191 = scalar_lea.vmem %s0, %s190
          %s192 = smul.u32 16, %s21
        $region20: #{nonlocal_net_cost.9} parent=15 // pred_fallthru
          _
        // Predicated region
        $region21: #{nonlocal_net_cost.9} parent=15 // pred_check
          %p193 = pneg %p73
        $region22: #{nonlocal_net_cost.9} parent=15 // pred_check_branch
          %195 = sbr.rel (%p193) target = $region24
        $region23: #{nonlocal_net_cost.9} parent=15 // pred_region
          %p196 = scmp.lt.s32.totalorder %s20, 1
          %s197 = scalar_select %p196, %s20, 1
          %s198 = smul.addr %s197, 16
          %s199 = smul.addr %s198, 4
          %s200 = scalar_lea.vmem %s1, %s199
        $region24: #{nonlocal_net_cost.9} parent=15 // pred_fallthru
          _
        // Predicated region
        $region25: #{nonlocal_net_cost.9} parent=15 // pred_check
          %p201 = pneg %p99
        $region26: #{nonlocal_net_cost.9} parent=15 // pred_check_branch
          %203 = sbr.rel (%p201) target = $region28
        $region27: #{nonlocal_net_cost.9} parent=15 // pred_region
          %p204 = scmp.lt.s32.totalorder %s20, 1
          %s205 = scalar_select %p204, %s20, 1
          %s206 = smul.addr %s205, 16
          %s207 = smul.addr %s206, 4
          %s208 = scalar_lea.vmem %s2, %s207
        $region28: #{nonlocal_net_cost.9} parent=15 // pred_fallthru
          _
        // Predicated region
        $region29: #{nonlocal_net_cost.9} parent=15 // pred_check
          %p209 = pneg %p127
        $region30: #{nonlocal_net_cost.9} parent=15 // pred_check_branch
          %211 = sbr.rel (%p209) target = $region32
        $region31: #{nonlocal_net_cost.9} parent=15 // pred_region
          %s212 = smul.u32 16, %s21
          %p213 = scmp.lt.s32.totalorder %s20, 1
          %s214 = scalar_select %p213, %s20, 1
          %p215 = scmp.lt.s32.totalorder %s212, 15
          %s216 = scalar_select %p215, %s212, 15
          %s217 = smul.addr %s214, 16
          %s218 = sadd.s32 %s216, %s217
          %s219 = smul.addr %s218, 4
          %s220 = scalar_lea.vmem %s3, %s219
          %s221 = smul.u32 16, %s21
        $region32: #{nonlocal_net_cost.9} parent=15 // pred_fallthru
          _
      $region16: #{nonlocal_net_cost.9} parent=5 // pred_fallthru
        _
      %p222 = scmp.le.s32.totalorder 1, %s13
      %p223 = scmp.lt.s32.totalorder %s13, 3
      %p224 = pnand %p222, %p223
      %p225 = pneg %p224
      // Predicated region
      $region33: #{nonlocal_net_cost.9} parent=5 // pred_check
        _
      $region34: #{nonlocal_net_cost.9} parent=5 // pred_check_branch
        %227 = sbr.rel (%p224) target = $region36
      $region35: #{nonlocal_net_cost.9} parent=5 // pred_region
        %s228 = ssub.s32 %s13, 1
        %s229 = smul.u32 16, %s23
        %p230 = scmp.lt.s32.totalorder %s22, 1
        %s231 = scalar_select %p230, %s22, 1
        %p232 = scmp.lt.s32.totalorder %s229, 15
        %s233 = scalar_select %p232, %s229, 15
        %s234 = smul.addr %s231, 16
        %s235 = sadd.s32 %s233, %s234
        %s236 = smul.addr %s235, 4
        %s237 = scalar_lea.vmem %s0, %s236
        %p238 = pneg %p53
        %p239 = pneg %p50
        %p240 = scmp.lt.s32.totalorder %s22, 1
        %s241 = scalar_select %p240, %s22, 1
        %s242 = smul.addr %s241, 16
        %s243 = smul.addr %s242, 4
        %s244 = scalar_lea.vmem %s1, %s243
        %p245 = pneg %p79
        %p246 = pneg %p76
        %p247 = scmp.lt.s32.totalorder %s22, 1
        %s248 = scalar_select %p247, %s22, 1
        %s249 = smul.addr %s248, 16
        %s250 = smul.addr %s249, 4
        %s251 = scalar_lea.vmem %s2, %s250
        %p252 = pneg %p105
        %p253 = pneg %p102
        %s254 = smul.u32 16, %s23
        %p255 = scmp.lt.s32.totalorder %s22, 1
        %s256 = scalar_select %p255, %s22, 1
        %p257 = scmp.lt.s32.totalorder %s254, 15
        %s258 = scalar_select %p257, %s254, 15
        %s259 = smul.addr %s256, 16
        %s260 = sadd.s32 %s258, %s259
        %s261 = smul.addr %s260, 4
        %s262 = scalar_lea.vmem %s3, %s261
        %p263 = pneg %p133
        %p264 = pneg %p130
        %p265 = pneg %p161
        %p266 = pneg %p158
        %s267 = sand.u32 %s148, 1
        %s268 = scalar_lea.sflag [#allocation3], %s267
        %s269 = sand.u32 %s148, 1
        %s270 = smul.addr %s269, 64
        %s271 = scalar_lea.vmem [#allocation2], %s270
        %s272 = smul.u32 16, %s23
        %p273 = scmp.lt.s32.totalorder %s22, 1
        %s274 = scalar_select %p273, %s22, 1
        %p275 = scmp.lt.s32.totalorder %s272, 15
        %s276 = scalar_select %p275, %s272, 15
        %s277 = smul.addr %s274, 16
        %s278 = sadd.s32 %s276, %s277
        %s279 = smul.addr %s278, 4
        %s280 = scalar_lea.vmem %s0, %s279
        %s281 = smul.u32 16, %s23
        %p282 = scmp.lt.s32.totalorder %s22, 1
        %s283 = scalar_select %p282, %s22, 1
        %s284 = smul.addr %s283, 16
        %s285 = smul.addr %s284, 4
        %s286 = scalar_lea.vmem %s1, %s285
        %p287 = scmp.lt.s32.totalorder %s22, 1
        %s288 = scalar_select %p287, %s22, 1
        %s289 = smul.addr %s288, 16
        %s290 = smul.addr %s289, 4
        %s291 = scalar_lea.vmem %s2, %s290
        %s292 = smul.u32 16, %s23
        %p293 = scmp.lt.s32.totalorder %s22, 1
        %s294 = scalar_select %p293, %s22, 1
        %p295 = scmp.lt.s32.totalorder %s292, 15
        %s296 = scalar_select %p295, %s292, 15
        %s297 = smul.addr %s294, 16
        %s298 = sadd.s32 %s296, %s297
        %s299 = smul.addr %s298, 4
        %s300 = scalar_lea.vmem %s3, %s299
        %s301 = smul.u32 16, %s23
        %s302 = smul.u32 16, %s23
        %v304 = vld [vmem:[%s280] sm:$0xf]
        %v305 = vld [vmem:[%s280 + $0x4] sm:$0xf]
        %v306 = vld [vmem:[%s280 + $0x8] sm:$0xf]
        %v307 = vld [vmem:[%s280 + $0xc] sm:$0xf]
        %v308 = vld [vmem:[%s280 + $0x10] sm:$0xf]
        %v309 = vld [vmem:[%s280 + $0x14] sm:$0xf]
        %v310 = vld [vmem:[%s280 + $0x18] sm:$0xf]
        %v311 = vld [vmem:[%s280 + $0x1c] sm:$0xf]
        %v312 = vld [vmem:[%s280 + $0x20] sm:$0xf]
        %v313 = vld [vmem:[%s280 + $0x24] sm:$0xf]
        %v314 = vld [vmem:[%s280 + $0x28] sm:$0xf]
        %v315 = vld [vmem:[%s280 + $0x2c] sm:$0xf]
        %v316 = vld [vmem:[%s280 + $0x30] sm:$0xf]
        %v317 = vld [vmem:[%s280 + $0x34] sm:$0xf]
        %v318 = vld [vmem:[%s280 + $0x38] sm:$0xf]
        %v319 = vld [vmem:[%s280 + $0x3c] sm:$0xf]
        %v320 = vld [vmem:[%s286] sm:$0xf]
        %v321 = vld [vmem:[%s286 + $0x4] sm:$0xf]
        %v322 = vld [vmem:[%s286 + $0x8] sm:$0xf]
        %v323 = vld [vmem:[%s286 + $0xc] sm:$0xf]
        %v324 = vld [vmem:[%s286 + $0x10] sm:$0xf]
        %v325 = vld [vmem:[%s286 + $0x14] sm:$0xf]
        %v326 = vld [vmem:[%s286 + $0x18] sm:$0xf]
        %v327 = vld [vmem:[%s286 + $0x1c] sm:$0xf]
        %v328 = vld [vmem:[%s286 + $0x20] sm:$0xf]
        %v329 = vld [vmem:[%s286 + $0x24] sm:$0xf]
        %v330 = vld [vmem:[%s286 + $0x28] sm:$0xf]
        %v331 = vld [vmem:[%s286 + $0x2c] sm:$0xf]
        %v332 = vld [vmem:[%s286 + $0x30] sm:$0xf]
        %v333 = vld [vmem:[%s286 + $0x34] sm:$0xf]
        %v334 = vld [vmem:[%s286 + $0x38] sm:$0xf]
        %v335 = vld [vmem:[%s286 + $0x3c] sm:$0xf]
        %v352 = vunpack.c.l.b16 %v304
        %v353 = vunpack.c.l.b16 %v305
        %v354 = vunpack.c.l.b16 %v306
        %v355 = vunpack.c.l.b16 %v307
        %v356 = vunpack.c.l.b16 %v308
        %v357 = vunpack.c.l.b16 %v309
        %v358 = vunpack.c.l.b16 %v310
        %v359 = vunpack.c.l.b16 %v311
        %v360 = vunpack.c.l.b16 %v312
        %v361 = vunpack.c.l.b16 %v313
        %v362 = vunpack.c.l.b16 %v314
        %v363 = vunpack.c.l.b16 %v315
        %v364 = vunpack.c.l.b16 %v316
        %v365 = vunpack.c.l.b16 %v317
        %v366 = vunpack.c.l.b16 %v318
        %v367 = vunpack.c.l.b16 %v319
        %v368 = vpack.c.b16 %v353, %v352
        %v369 = vpack.c.b16 %v355, %v354
        %v370 = vpack.c.b16 %v357, %v356
        %v371 = vpack.c.b16 %v359, %v358
        %v372 = vpack.c.b16 %v361, %v360
        %v373 = vpack.c.b16 %v363, %v362
        %v374 = vpack.c.b16 %v365, %v364
        %v375 = vpack.c.b16 %v367, %v366
        %v400 = vunpack.c.l.b16 %v320
        %v401 = vunpack.c.l.b16 %v321
        %v402 = vunpack.c.l.b16 %v322
        %v403 = vunpack.c.l.b16 %v323
        %v404 = vunpack.c.l.b16 %v324
        %v405 = vunpack.c.l.b16 %v325
        %v406 = vunpack.c.l.b16 %v326
        %v407 = vunpack.c.l.b16 %v327
        %v408 = vunpack.c.l.b16 %v328
        %v409 = vunpack.c.l.b16 %v329
        %v410 = vunpack.c.l.b16 %v330
        %v411 = vunpack.c.l.b16 %v331
        %v412 = vunpack.c.l.b16 %v332
        %v413 = vunpack.c.l.b16 %v333
        %v414 = vunpack.c.l.b16 %v334
        %v415 = vunpack.c.l.b16 %v335
        %v416 = vpack.c.b16 %v401, %v400
        %v417 = vpack.c.b16 %v403, %v402
        %v418 = vpack.c.b16 %v405, %v404
        %v419 = vpack.c.b16 %v407, %v406
        %v420 = vpack.c.b16 %v409, %v408
        %v421 = vpack.c.b16 %v411, %v410
        %v422 = vpack.c.b16 %v413, %v412
        %v423 = vpack.c.b16 %v415, %v414
        %432 = vmatprep.subr.bf16.mxu0 0
        %433 = vmatpush1.bf16.xpose.msra.mxu0 %v416
        %434 = vmatprep.subr.bf16.mxu0 0
        %435 = vmatpush1.bf16.xpose.msra.mxu0 %v417
        %436 = vmatprep.subr.bf16.mxu0 0
        %437 = vmatpush1.bf16.xpose.msra.mxu0 %v418
        %438 = vmatprep.subr.bf16.mxu0 0
        %439 = vmatpush1.bf16.xpose.msra.mxu0 %v419
        %440 = vmatprep.subr.bf16.mxu0 0
        %441 = vmatpush1.bf16.xpose.msra.mxu0 %v420
        %442 = vmatprep.subr.bf16.mxu0 0
        %443 = vmatpush1.bf16.xpose.msra.mxu0 %v421
        %444 = vmatprep.subr.bf16.mxu0 0
        %445 = vmatpush1.bf16.xpose.msra.mxu0 %v422
        %446 = vmatprep.subr.bf16.mxu0 0
        %447 = vmatpush1.bf16.xpose.msra.mxu0 %v423
        %448 = vmatprep.subr.bf16.mxu0 0
        %449 = vmatpush1.bf16.xpose.msra.mxu0 0
        %450 = vmatprep.subr.bf16.mxu0 0
        %451 = vmatpush1.bf16.xpose.msra.mxu0 0
        %452 = vmatprep.subr.bf16.mxu0 0
        %453 = vmatpush1.bf16.xpose.msra.mxu0 0
        %454 = vmatprep.subr.bf16.mxu0 0
        %455 = vmatpush1.bf16.xpose.msra.mxu0 0
        %456 = vmatprep.subr.bf16.mxu0 0
        %457 = vmatpush1.bf16.xpose.msra.mxu0 0
        %458 = vmatprep.subr.bf16.mxu0 0
        %459 = vmatpush1.bf16.xpose.msra.mxu0 0
        %460 = vmatprep.subr.bf16.mxu0 0
        %461 = vmatpush1.bf16.xpose.msra.mxu0 0
        %462 = vmatprep.subr.bf16.mxu0 0
        %463 = vmatpush1.bf16.xpose.msra.mxu0 0
        %464 = vmatprep.mubr.bf16.mxu0 0
        %465 = vmatmul.mubr.bf16.gmra.mrb[0].mxu0 %v368
        %v466 = vpop.f32.mrb[0].mxu0
        %v467 = vadd.f32 0.0, %v466
        %v468 = vpop.f32.mrb[0].mxu0
        %v469 = vpop.f32.mrb[0].mxu0
        %v470 = vadd.f32 0.0, %v469
        %v471 = vpop.f32.mrb[0].mxu0
        %472 = vmatprep.mubr.bf16.mxu0 0
        %473 = vmatmul.mubr.bf16.gmra.mrb[0].mxu0 %v369
        %v474 = vpop.f32.mrb[0].mxu0
        %v475 = vadd.f32 0.0, %v474
        %v476 = vpop.f32.mrb[0].mxu0
        %v477 = vpop.f32.mrb[0].mxu0
        %v478 = vadd.f32 0.0, %v477
        %v479 = vpop.f32.mrb[0].mxu0
        %480 = vmatprep.mubr.bf16.mxu0 0
        %481 = vmatmul.mubr.bf16.gmra.mrb[0].mxu0 %v370
        %v482 = vpop.f32.mrb[0].mxu0
        %v483 = vadd.f32 0.0, %v482
        %v484 = vpop.f32.mrb[0].mxu0
        %v485 = vpop.f32.mrb[0].mxu0
        %v486 = vadd.f32 0.0, %v485
        %v487 = vpop.f32.mrb[0].mxu0
        %488 = vmatprep.mubr.bf16.mxu0 0
        %489 = vmatmul.mubr.bf16.gmra.mrb[0].mxu0 %v371
        %v490 = vpop.f32.mrb[0].mxu0
        %v491 = vadd.f32 0.0, %v490
        %v492 = vpop.f32.mrb[0].mxu0
        %v493 = vpop.f32.mrb[0].mxu0
        %v494 = vadd.f32 0.0, %v493
        %v495 = vpop.f32.mrb[0].mxu0
        %496 = vmatprep.mubr.bf16.mxu0 0
        %497 = vmatmul.mubr.bf16.gmra.mrb[0].mxu0 %v372
        %v498 = vpop.f32.mrb[0].mxu0
        %v499 = vadd.f32 0.0, %v498
        %v500 = vpop.f32.mrb[0].mxu0
        %v501 = vpop.f32.mrb[0].mxu0
        %v502 = vadd.f32 0.0, %v501
        %v503 = vpop.f32.mrb[0].mxu0
        %504 = vmatprep.mubr.bf16.mxu0 0
        %505 = vmatmul.mubr.bf16.gmra.mrb[0].mxu0 %v373
        %v506 = vpop.f32.mrb[0].mxu0
        %v507 = vadd.f32 0.0, %v506
        %v508 = vpop.f32.mrb[0].mxu0
        %v509 = vpop.f32.mrb[0].mxu0
        %v510 = vadd.f32 0.0, %v509
        %v511 = vpop.f32.mrb[0].mxu0
        %512 = vmatprep.mubr.bf16.mxu0 0
        %513 = vmatmul.mubr.bf16.gmra.mrb[0].mxu0 %v374
        %v514 = vpop.f32.mrb[0].mxu0
        %v515 = vadd.f32 0.0, %v514
        %v516 = vpop.f32.mrb[0].mxu0
        %v517 = vpop.f32.mrb[0].mxu0
        %v518 = vadd.f32 0.0, %v517
        %v519 = vpop.f32.mrb[0].mxu0
        %520 = vmatprep.mubr.bf16.mxu0 0
        %521 = vmatmul.mubr.bf16.gmra.mrb[0].mxu0 %v375
        %v522 = vpop.f32.mrb[0].mxu0
        %v523 = vadd.f32 0.0, %v522
        %v524 = vpop.f32.mrb[0].mxu0
        %v525 = vpop.f32.mrb[0].mxu0
        %v526 = vadd.f32 0.0, %v525
        %v527 = vpop.f32.mrb[0].mxu0
        %528 = vdwg.mxu0
        %v529 = vld [vmem:[%s300] sm:$0xf]
        %v530 = vld [vmem:[%s300 + $0x4] sm:$0xf]
        %v531 = vld [vmem:[%s300 + $0x8] sm:$0xf]
        %v532 = vld [vmem:[%s300 + $0xc] sm:$0xf]
        %v533 = vld [vmem:[%s300 + $0x10] sm:$0xf]
        %v534 = vld [vmem:[%s300 + $0x14] sm:$0xf]
        %v535 = vld [vmem:[%s300 + $0x18] sm:$0xf]
        %v536 = vld [vmem:[%s300 + $0x1c] sm:$0xf]
        %v537 = vld [vmem:[%s300 + $0x20] sm:$0xf]
        %v538 = vld [vmem:[%s300 + $0x24] sm:$0xf]
        %v539 = vld [vmem:[%s300 + $0x28] sm:$0xf]
        %v540 = vld [vmem:[%s300 + $0x2c] sm:$0xf]
        %v541 = vld [vmem:[%s300 + $0x30] sm:$0xf]
        %v542 = vld [vmem:[%s300 + $0x34] sm:$0xf]
        %v543 = vld [vmem:[%s300 + $0x38] sm:$0xf]
        %v544 = vld [vmem:[%s300 + $0x3c] sm:$0xf]
        %v545 = vunpack.c.l.bf16 %v529
        %v546 = vunpack.c.l.bf16 %v530
        %v547 = vunpack.c.l.bf16 %v531
        %v548 = vunpack.c.l.bf16 %v532
        %v549 = vunpack.c.l.bf16 %v533
        %v550 = vunpack.c.l.bf16 %v534
        %v551 = vunpack.c.l.bf16 %v535
        %v552 = vunpack.c.l.bf16 %v536
        %v553 = vunpack.c.l.bf16 %v537
        %v554 = vunpack.c.l.bf16 %v538
        %v555 = vunpack.c.l.bf16 %v539
        %v556 = vunpack.c.l.bf16 %v540
        %v557 = vunpack.c.l.bf16 %v541
        %v558 = vunpack.c.l.bf16 %v542
        %v559 = vunpack.c.l.bf16 %v543
        %v560 = vunpack.c.l.bf16 %v544
        %v561 = vmul.f32 %v545, %v467
        %v562 = vmul.f32 %v546, %v470
        %v563 = vmul.f32 %v547, %v475
        %v564 = vmul.f32 %v548, %v478
        %v565 = vmul.f32 %v549, %v483
        %v566 = vmul.f32 %v550, %v486
        %v567 = vmul.f32 %v551, %v491
        %v568 = vmul.f32 %v552, %v494
        %v569 = vmul.f32 %v553, %v499
        %v570 = vmul.f32 %v554, %v502
        %v571 = vmul.f32 %v555, %v507
        %v572 = vmul.f32 %v556, %v510
        %v573 = vmul.f32 %v557, %v515
        %v574 = vmul.f32 %v558, %v518
        %v575 = vmul.f32 %v559, %v523
        %v576 = vmul.f32 %v560, %v526
        %577 = vmax.xlane.f32.xlu0 %v561
        %v578 = vpop.xlane.xlu0 %577
        %579 = vmax.xlane.f32.xlu0 %v562
        %v580 = vpop.xlane.xlu0 %579
        %581 = vmax.xlane.f32.xlu0 %v563
        %v582 = vpop.xlane.xlu0 %581
        %583 = vmax.xlane.f32.xlu0 %v564
        %v584 = vpop.xlane.xlu0 %583
        %585 = vmax.xlane.f32.xlu0 %v565
        %v586 = vpop.xlane.xlu0 %585
        %587 = vmax.xlane.f32.xlu0 %v566
        %v588 = vpop.xlane.xlu0 %587
        %589 = vmax.xlane.f32.xlu0 %v567
        %v590 = vpop.xlane.xlu0 %589
        %591 = vmax.xlane.f32.xlu0 %v568
        %v592 = vpop.xlane.xlu0 %591
        %593 = vmax.xlane.f32.xlu0 %v569
        %v594 = vpop.xlane.xlu0 %593
        %595 = vmax.xlane.f32.xlu0 %v570
        %v596 = vpop.xlane.xlu0 %595
        %597 = vmax.xlane.f32.xlu0 %v571
        %v598 = vpop.xlane.xlu0 %597
        %599 = vmax.xlane.f32.xlu0 %v572
        %v600 = vpop.xlane.xlu0 %599
        %601 = vmax.xlane.f32.xlu0 %v573
        %v602 = vpop.xlane.xlu0 %601
        %603 = vmax.xlane.f32.xlu0 %v574
        %v604 = vpop.xlane.xlu0 %603
        %605 = vmax.xlane.f32.xlu0 %v575
        %v606 = vpop.xlane.xlu0 %605
        %607 = vmax.xlane.f32.xlu0 %v576
        %v608 = vpop.xlane.xlu0 %607
        %v609 = vsub.f32 %v561, %v578
        %v610 = vsub.f32 %v562, %v580
        %v611 = vsub.f32 %v563, %v582
        %v612 = vsub.f32 %v564, %v584
        %v613 = vsub.f32 %v565, %v586
        %v614 = vsub.f32 %v566, %v588
        %v615 = vsub.f32 %v567, %v590
        %v616 = vsub.f32 %v568, %v592
        %v617 = vsub.f32 %v569, %v594
        %v618 = vsub.f32 %v570, %v596
        %v619 = vsub.f32 %v571, %v598
        %v620 = vsub.f32 %v572, %v600
        %v621 = vsub.f32 %v573, %v602
        %v622 = vsub.f32 %v574, %v604
        %v623 = vsub.f32 %v575, %v606
        %v624 = vsub.f32 %v576, %v608
        %v625 = vmul.f32 %v609, 1.442695
        %v626 = vpow.pop %v625
        %v627 = vmul.f32 %v610, 1.442695
        %v628 = vpow.pop %v627
        %v629 = vmul.f32 %v611, 1.442695
        %v630 = vpow.pop %v629
        %v631 = vmul.f32 %v612, 1.442695
        %v632 = vpow.pop %v631
        %v633 = vmul.f32 %v613, 1.442695
        %v634 = vpow.pop %v633
        %v635 = vmul.f32 %v614, 1.442695
        %v636 = vpow.pop %v635
        %v637 = vmul.f32 %v615, 1.442695
        %v638 = vpow.pop %v637
        %v639 = vmul.f32 %v616, 1.442695
        %v640 = vpow.pop %v639
        %v641 = vmul.f32 %v617, 1.442695
        %v642 = vpow.pop %v641
        %v643 = vmul.f32 %v618, 1.442695
        %v644 = vpow.pop %v643
        %v645 = vmul.f32 %v619, 1.442695
        %v646 = vpow.pop %v645
        %v647 = vmul.f32 %v620, 1.442695
        %v648 = vpow.pop %v647
        %v649 = vmul.f32 %v621, 1.442695
        %v650 = vpow.pop %v649
        %v651 = vmul.f32 %v622, 1.442695
        %v652 = vpow.pop %v651
        %v653 = vmul.f32 %v623, 1.442695
        %v654 = vpow.pop %v653
        %v655 = vmul.f32 %v624, 1.442695
        %v656 = vpow.pop %v655
        %657 = vadd.xlane.f32.xlu0 %v626
        %v658 = vpop.xlane.xlu0 %657
        %659 = vadd.xlane.f32.xlu0 %v628
        %v660 = vpop.xlane.xlu0 %659
        %661 = vadd.xlane.f32.xlu0 %v630
        %v662 = vpop.xlane.xlu0 %661
        %663 = vadd.xlane.f32.xlu0 %v632
        %v664 = vpop.xlane.xlu0 %663
        %665 = vadd.xlane.f32.xlu0 %v634
        %v666 = vpop.xlane.xlu0 %665
        %667 = vadd.xlane.f32.xlu0 %v636
        %v668 = vpop.xlane.xlu0 %667
        %669 = vadd.xlane.f32.xlu0 %v638
        %v670 = vpop.xlane.xlu0 %669
        %671 = vadd.xlane.f32.xlu0 %v640
        %v672 = vpop.xlane.xlu0 %671
        %673 = vadd.xlane.f32.xlu0 %v642
        %v674 = vpop.xlane.xlu0 %673
        %675 = vadd.xlane.f32.xlu0 %v644
        %v676 = vpop.xlane.xlu0 %675
        %677 = vadd.xlane.f32.xlu0 %v646
        %v678 = vpop.xlane.xlu0 %677
        %679 = vadd.xlane.f32.xlu0 %v648
        %v680 = vpop.xlane.xlu0 %679
        %681 = vadd.xlane.f32.xlu0 %v650
        %v682 = vpop.xlane.xlu0 %681
        %683 = vadd.xlane.f32.xlu0 %v652
        %v684 = vpop.xlane.xlu0 %683
        %685 = vadd.xlane.f32.xlu0 %v654
        %v686 = vpop.xlane.xlu0 %685
        %687 = vadd.xlane.f32.xlu0 %v656
        %v688 = vpop.xlane.xlu0 %687
        %v689 = vrcp.pop %v658
        %v690 = vrcp.pop %v660
        %v691 = vrcp.pop %v662
        %v692 = vrcp.pop %v664
        %v693 = vrcp.pop %v666
        %v694 = vrcp.pop %v668
        %v695 = vrcp.pop %v670
        %v696 = vrcp.pop %v672
        %v697 = vrcp.pop %v674
        %v698 = vrcp.pop %v676
        %v699 = vrcp.pop %v678
        %v700 = vrcp.pop %v680
        %v701 = vrcp.pop %v682
        %v702 = vrcp.pop %v684
        %v703 = vrcp.pop %v686
        %v704 = vrcp.pop %v688
        %v705 = vmul.f32 %v626, %v689
        %v706 = vmul.f32 %v628, %v690
        %v707 = vmul.f32 %v630, %v691
        %v708 = vmul.f32 %v632, %v692
        %v709 = vmul.f32 %v634, %v693
        %v710 = vmul.f32 %v636, %v694
        %v711 = vmul.f32 %v638, %v695
        %v712 = vmul.f32 %v640, %v696
        %v713 = vmul.f32 %v642, %v697
        %v714 = vmul.f32 %v644, %v698
        %v715 = vmul.f32 %v646, %v699
        %v716 = vmul.f32 %v648, %v700
        %v717 = vmul.f32 %v650, %v701
        %v718 = vmul.f32 %v652, %v702
        %v719 = vmul.f32 %v654, %v703
        %v720 = vmul.f32 %v656, %v704
        %v721 = vpack.c.bf16 %v706, %v705
        %v722 = vpack.c.bf16 %v708, %v707
        %v723 = vpack.c.bf16 %v710, %v709
        %v724 = vpack.c.bf16 %v712, %v711
        %v725 = vpack.c.bf16 %v714, %v713
        %v726 = vpack.c.bf16 %v716, %v715
        %v727 = vpack.c.bf16 %v718, %v717
        %v728 = vpack.c.bf16 %v720, %v719
        %v729 = vld [vmem:[%s291] sm:$0xf]
        %v730 = vld [vmem:[%s291 + $0x4] sm:$0xf]
        %v731 = vld [vmem:[%s291 + $0x8] sm:$0xf]
        %v732 = vld [vmem:[%s291 + $0xc] sm:$0xf]
        %v733 = vld [vmem:[%s291 + $0x10] sm:$0xf]
        %v734 = vld [vmem:[%s291 + $0x14] sm:$0xf]
        %v735 = vld [vmem:[%s291 + $0x18] sm:$0xf]
        %v736 = vld [vmem:[%s291 + $0x1c] sm:$0xf]
        %v737 = vld [vmem:[%s291 + $0x20] sm:$0xf]
        %v738 = vld [vmem:[%s291 + $0x24] sm:$0xf]
        %v739 = vld [vmem:[%s291 + $0x28] sm:$0xf]
        %v740 = vld [vmem:[%s291 + $0x2c] sm:$0xf]
        %v741 = vld [vmem:[%s291 + $0x30] sm:$0xf]
        %v742 = vld [vmem:[%s291 + $0x34] sm:$0xf]
        %v743 = vld [vmem:[%s291 + $0x38] sm:$0xf]
        %v744 = vld [vmem:[%s291 + $0x3c] sm:$0xf]
        %v761 = vunpack.c.l.b16 %v729
        %v762 = vunpack.c.l.b16 %v730
        %v763 = vunpack.c.l.b16 %v731
        %v764 = vunpack.c.l.b16 %v732
        %v765 = vunpack.c.l.b16 %v733
        %v766 = vunpack.c.l.b16 %v734
        %v767 = vunpack.c.l.b16 %v735
        %v768 = vunpack.c.l.b16 %v736
        %v769 = vunpack.c.l.b16 %v737
        %v770 = vunpack.c.l.b16 %v738
        %v771 = vunpack.c.l.b16 %v739
        %v772 = vunpack.c.l.b16 %v740
        %v773 = vunpack.c.l.b16 %v741
        %v774 = vunpack.c.l.b16 %v742
        %v775 = vunpack.c.l.b16 %v743
        %v776 = vunpack.c.l.b16 %v744
        %v777 = vpack.c.b16 %v762, %v761
        %v778 = vpack.c.b16 %v764, %v763
        %v779 = vpack.c.b16 %v766, %v765
        %v780 = vpack.c.b16 %v768, %v767
        %v781 = vpack.c.b16 %v770, %v769
        %v782 = vpack.c.b16 %v772, %v771
        %v783 = vpack.c.b16 %v774, %v773
        %v784 = vpack.c.b16 %v776, %v775
        %793 = vmatprep.subr.bf16.mxu0 0
        %794 = vmatpush1.bf16.msra.mxu0 %v777
        %795 = vmatprep.subr.bf16.mxu0 0
        %796 = vmatpush1.bf16.msra.mxu0 %v778
        %797 = vmatprep.subr.bf16.mxu0 0
        %798 = vmatpush1.bf16.msra.mxu0 %v779
        %799 = vmatprep.subr.bf16.mxu0 0
        %800 = vmatpush1.bf16.msra.mxu0 %v780
        %801 = vmatprep.subr.bf16.mxu0 0
        %802 = vmatpush1.bf16.msra.mxu0 %v781
        %803 = vmatprep.subr.bf16.mxu0 0
        %804 = vmatpush1.bf16.msra.mxu0 %v782
        %805 = vmatprep.subr.bf16.mxu0 0
        %806 = vmatpush1.bf16.msra.mxu0 %v783
        %807 = vmatprep.subr.bf16.mxu0 0
        %808 = vmatpush1.bf16.msra.mxu0 %v784
        %809 = vmatprep.subr.bf16.mxu0 0
        %810 = vmatpush1.bf16.msra.mxu0 0
        %811 = vmatprep.subr.bf16.mxu0 0
        %812 = vmatpush1.bf16.msra.mxu0 0
        %813 = vmatprep.subr.bf16.mxu0 0
        %814 = vmatpush1.bf16.msra.mxu0 0
        %815 = vmatprep.subr.bf16.mxu0 0
        %816 = vmatpush1.bf16.msra.mxu0 0
        %817 = vmatprep.subr.bf16.mxu0 0
        %818 = vmatpush1.bf16.msra.mxu0 0
        %819 = vmatprep.subr.bf16.mxu0 0
        %820 = vmatpush1.bf16.msra.mxu0 0
        %821 = vmatprep.subr.bf16.mxu0 0
        %822 = vmatpush1.bf16.msra.mxu0 0
        %823 = vmatprep.subr.bf16.mxu0 0
        %824 = vmatpush1.bf16.msra.mxu0 0
        %825 = vmatprep.mubr.bf16.mxu0 0
        %826 = vmatmul.mubr.bf16.gmra.mrb[0].mxu0 %v721
        %v827 = vpop.f32.mrb[0].mxu0
        %v828 = vadd.f32 0.0, %v827
        %v829 = vpop.f32.mrb[0].mxu0
        %v830 = vpop.f32.mrb[0].mxu0
        %v831 = vadd.f32 0.0, %v830
        %v832 = vpop.f32.mrb[0].mxu0
        %833 = vmatprep.mubr.bf16.mxu0 0
        %834 = vmatmul.mubr.bf16.gmra.mrb[0].mxu0 %v722
        %v835 = vpop.f32.mrb[0].mxu0
        %v836 = vadd.f32 0.0, %v835
        %v837 = vpop.f32.mrb[0].mxu0
        %v838 = vpop.f32.mrb[0].mxu0
        %v839 = vadd.f32 0.0, %v838
        %v840 = vpop.f32.mrb[0].mxu0
        %841 = vmatprep.mubr.bf16.mxu0 0
        %842 = vmatmul.mubr.bf16.gmra.mrb[0].mxu0 %v723
        %v843 = vpop.f32.mrb[0].mxu0
        %v844 = vadd.f32 0.0, %v843
        %v845 = vpop.f32.mrb[0].mxu0
        %v846 = vpop.f32.mrb[0].mxu0
        %v847 = vadd.f32 0.0, %v846
        %v848 = vpop.f32.mrb[0].mxu0
        %849 = vmatprep.mubr.bf16.mxu0 0
        %850 = vmatmul.mubr.bf16.gmra.mrb[0].mxu0 %v724
        %v851 = vpop.f32.mrb[0].mxu0
        %v852 = vadd.f32 0.0, %v851
        %v853 = vpop.f32.mrb[0].mxu0
        %v854 = vpop.f32.mrb[0].mxu0
        %v855 = vadd.f32 0.0, %v854
        %v856 = vpop.f32.mrb[0].mxu0
        %857 = vmatprep.mubr.bf16.mxu0 0
        %858 = vmatmul.mubr.bf16.gmra.mrb[0].mxu0 %v725
        %v859 = vpop.f32.mrb[0].mxu0
        %v860 = vadd.f32 0.0, %v859
        %v861 = vpop.f32.mrb[0].mxu0
        %v862 = vpop.f32.mrb[0].mxu0
        %v863 = vadd.f32 0.0, %v862
        %v864 = vpop.f32.mrb[0].mxu0
        %865 = vmatprep.mubr.bf16.mxu0 0
        %866 = vmatmul.mubr.bf16.gmra.mrb[0].mxu0 %v726
        %v867 = vpop.f32.mrb[0].mxu0
        %v868 = vadd.f32 0.0, %v867
        %v869 = vpop.f32.mrb[0].mxu0
        %v870 = vpop.f32.mrb[0].mxu0
        %v871 = vadd.f32 0.0, %v870
        %v872 = vpop.f32.mrb[0].mxu0
        %873 = vmatprep.mubr.bf16.mxu0 0
        %874 = vmatmul.mubr.bf16.gmra.mrb[0].mxu0 %v727
        %v875 = vpop.f32.mrb[0].mxu0
        %v876 = vadd.f32 0.0, %v875
        %v877 = vpop.f32.mrb[0].mxu0
        %v878 = vpop.f32.mrb[0].mxu0
        %v879 = vadd.f32 0.0, %v878
        %v880 = vpop.f32.mrb[0].mxu0
        %881 = vmatprep.mubr.bf16.mxu0 0
        %882 = vmatmul.mubr.bf16.gmra.mrb[0].mxu0 %v728
        %v883 = vpop.f32.mrb[0].mxu0
        %v884 = vadd.f32 0.0, %v883
        %v885 = vpop.f32.mrb[0].mxu0
        %v886 = vpop.f32.mrb[0].mxu0
        %v887 = vadd.f32 0.0, %v886
        %v888 = vpop.f32.mrb[0].mxu0
        %889 = vdwg.mxu0
        %v890 = vpack.c.bf16 %v831, %v828
        %v891 = vpack.c.bf16 %v839, %v836
        %v892 = vpack.c.bf16 %v847, %v844
        %v893 = vpack.c.bf16 %v855, %v852
        %v894 = vpack.c.bf16 %v863, %v860
        %v895 = vpack.c.bf16 %v871, %v868
        %v896 = vpack.c.bf16 %v879, %v876
        %v897 = vpack.c.bf16 %v887, %v884
        %v906 = vunpack.c.l.b16 %v890
        %v907 = vunpack.c.h.b16 %v890
        %v908 = vunpack.c.l.b16 %v891
        %v909 = vunpack.c.h.b16 %v891
        %v910 = vunpack.c.l.b16 %v892
        %v911 = vunpack.c.h.b16 %v892
        %v912 = vunpack.c.l.b16 %v893
        %v913 = vunpack.c.h.b16 %v893
        %v914 = vunpack.c.l.b16 %v894
        %v915 = vunpack.c.h.b16 %v894
        %v916 = vunpack.c.l.b16 %v895
        %v917 = vunpack.c.h.b16 %v895
        %v918 = vunpack.c.l.b16 %v896
        %v919 = vunpack.c.h.b16 %v896
        %v920 = vunpack.c.l.b16 %v897
        %v921 = vunpack.c.h.b16 %v897
        %v922 = vpack.c.b16 %v906, %v906
        %v923 = vpack.c.b16 %v907, %v907
        %v924 = vpack.c.b16 %v908, %v908
        %v925 = vpack.c.b16 %v909, %v909
        %v926 = vpack.c.b16 %v910, %v910
        %v927 = vpack.c.b16 %v911, %v911
        %v928 = vpack.c.b16 %v912, %v912
        %v929 = vpack.c.b16 %v913, %v913
        %v930 = vpack.c.b16 %v914, %v914
        %v931 = vpack.c.b16 %v915, %v915
        %v932 = vpack.c.b16 %v916, %v916
        %v933 = vpack.c.b16 %v917, %v917
        %v934 = vpack.c.b16 %v918, %v918
        %v935 = vpack.c.b16 %v919, %v919
        %v936 = vpack.c.b16 %v920, %v920
        %v937 = vpack.c.b16 %v921, %v921
        %954 = vst [vmem:[%s271] sm:$0xf] %v922
        %955 = vst [vmem:[%s271 + $0x4] sm:$0xf] %v923
        %956 = vst [vmem:[%s271 + $0x8] sm:$0xf] %v924
        %957 = vst [vmem:[%s271 + $0xc] sm:$0xf] %v925
        %958 = vst [vmem:[%s271 + $0x10] sm:$0xf] %v926
        %959 = vst [vmem:[%s271 + $0x14] sm:$0xf] %v927
        %960 = vst [vmem:[%s271 + $0x18] sm:$0xf] %v928
        %961 = vst [vmem:[%s271 + $0x1c] sm:$0xf] %v929
        %962 = vst [vmem:[%s271 + $0x20] sm:$0xf] %v930
        %963 = vst [vmem:[%s271 + $0x24] sm:$0xf] %v931
        %964 = vst [vmem:[%s271 + $0x28] sm:$0xf] %v932
        %965 = vst [vmem:[%s271 + $0x2c] sm:$0xf] %v933
        %966 = vst [vmem:[%s271 + $0x30] sm:$0xf] %v934
        %967 = vst [vmem:[%s271 + $0x34] sm:$0xf] %v935
        %968 = vst [vmem:[%s271 + $0x38] sm:$0xf] %v936
        %969 = vst [vmem:[%s271 + $0x3c] sm:$0xf] %v937
        %s970 = sand.u32 %s148, 1
        %s971 = scalar_lea.sflag [#allocation3], %s970
        %s972 = sand.u32 %s148, 1
        %s973 = smul.addr %s972, 64
        %s974 = scalar_lea.vmem [#allocation2], %s973
        // Predicated region
        $region37: #{nonlocal_net_cost.9} parent=35 // pred_check
          %p975 = pneg %p158
        $region38: #{nonlocal_net_cost.9} parent=35 // pred_check_branch
          %977 = sbr.rel (%p975) target = $region40
        $region39: #{nonlocal_net_cost.9} parent=35 // pred_region
          %s978 = smul.u32 16, %s23
          %s980 = ssub.s32 1024, 1024
          %981 = vsyncadd %s971, %s980
          %s982 = smul.addr %s22, 16
          %s983 = sadd.s32 %s978, %s982
          %s984 = smul.addr %s983, 64
          %s985 = scalar_lea.hbm %s4, %s984
          %s986 = sshll.u32 %s974, 4
          %s987 = int_to_ptr.vmem [resolvable:$true] %s986
          %992 = dma.vmem_to_hbm [thread:$0]  %s987, 1024, %s985, %s971, 64, 64, 4
        $region40: #{nonlocal_net_cost.9} parent=35 // pred_fallthru
          _
      $region36: #{nonlocal_net_cost.9} parent=5 // pred_fallthru
        _
      %p993 = scmp.le.s32.totalorder 2, %s13
      // Predicated region
      $region41: #{nonlocal_net_cost.9} parent=5 // pred_check
        %p994 = pneg %p993
      $region42: #{nonlocal_net_cost.9} parent=5 // pred_check_branch
        %996 = sbr.rel (%p994) target = $region44
      $region43: #{nonlocal_net_cost.9} parent=5 // pred_region
        %s997 = ssub.s32 %s13, 2
        // Predicated region
        $region45: #{nonlocal_net_cost.9} parent=43 // pred_check
          %p998 = pneg %p164
        $region46: #{nonlocal_net_cost.9} parent=43 // pred_check_branch
          %1000 = sbr.rel (%p998) target = $region48
        $region47: #{nonlocal_net_cost.9} parent=43 // pred_region
          %s1001 = sand.u32 %s149, 1
          %s1002 = scalar_lea.sflag [#allocation3], %s1001
          %s1003 = sand.u32 %s149, 1
          %s1004 = smul.addr %s1003, 64
          %s1005 = scalar_lea.vmem [#allocation2], %s1004
          %1006 = dma.done %s1002, 1024
        $region48: #{nonlocal_net_cost.9} parent=43 // pred_fallthru
          _
      $region44: #{nonlocal_net_cost.9} parent=5 // pred_fallthru
        _
    $region6: #{nonlocal_net_cost.9} parent=1 // loop_footer
      %s17 = sadd.s32 1, %s13
    $region7: #{nonlocal_net_cost.9} parent=1 // loop_footer_branch
      %12 = sbr.rel target = $region3
    $region8: #{nonlocal_net_cost.9} parent=1 // loop_exit
      _
    %1007 = vsyncpa [#allocation3], 1
    %s1008 = scalar_lea.sflag [#allocation3], 1
    %1009 = vsyncpa %s1008, 1

// kernel: nonlocal_net_cost.7
$region0: #{nonlocal_net_cost.7}
  #allocation0 [shape = 'u32[]', space=smem, size = 0x4, offset = 0x4, fixed_abs, tag = 'smem constant byte address 0x4 - core index']
  #allocation1 [shape = 'u32[144,128]{1,0:T(1,128)}', space=vmem, size = 0x12000, scoped, tag = 'internal scratch']
  %s0 = inlined_call_operand.vmem [shape: f32[2,128,8], index: 0, kind: input, shape index: {}, may-alias: {0,1}]
  %s1 = inlined_call_operand.vmem [shape: f32[2,128,8], index: 1, kind: input, shape index: {}, may-alias: {0,1}]
  %s2 = inlined_call_operand.vmem [shape: f32[2,128,8], index: 2, kind: input, shape index: {}, may-alias: {2,3}]
  %s3 = inlined_call_operand.vmem [shape: f32[2,128,8], index: 3, kind: input, shape index: {}, may-alias: {2,3}]
  %s4 = inlined_call_operand.vmem [shape: bf16[2,128,128], index: 4, kind: output, shape index: {}]
  %s5 = sld [smem:[#allocation0]]
  $region49: #{nonlocal_net_cost.7} parent=0
    _
  %s7 = ssub.s32 1, %s5
  %s8 = scalar_select 0, %s7, %s5
  loop: start=0, step=1, limit=4
  $region2: #{nonlocal_net_cost.7} parent=0 // loop_pre_header
    _
  $region3: #{nonlocal_net_cost.7} parent=0 // loop_header
    %s10 = sphi 0, %s14
    %p11 = scmp.ge.s32.totalorder %s10, 4
    %s17 = sphi 0, %s29
    %s18 = sphi 0, %s25
    %s19 = sphi 0, %s17
    %s20 = sphi 0, %s18
    %s21 = sphi 0, %s19
    %s22 = sphi 0, %s20
    %s34 = sphi 0, %s36
    %s37 = sphi 0, %s34
    %s38 = sphi 0, %s37
    %s54 = sphi 0, %s38
    %s60 = sphi 0, %s62
    %s63 = sphi 0, %s60
    %s64 = sphi 0, %s63
    %s80 = sphi 0, %s64
    %s88 = sphi 0, %s90
    %s91 = sphi 0, %s88
    %s92 = sphi 0, %s91
    %s108 = sphi 0, %s92
    %s114 = sphi 0, %s116
    %s117 = sphi 0, %s114
    %s118 = sphi 0, %s117
    %s134 = sphi 0, %s118
    %s142 = sphi 0, %s144
    %s145 = sphi 0, %s142
    %s146 = sphi 0, %s145
    %s162 = sphi 0, %s146
  $region4: #{nonlocal_net_cost.7} parent=0 // loop_header_branch
    %13 = sbr.rel (%p11) target = $region8
  $region5: #{nonlocal_net_cost.7} parent=0 // loop_body
    %s15 = ssub.s32 %s10, 1
    %s16 = ssub.s32 %s10, 2
    %s23 = sadd.s32 1, %s18
    %p24 = scmp.ge.s32.totalorder %s23, 1
    %s25 = scalar_select %p24, 0, %s23
    %s26 = sadd.s32 1, %s17
    %s27 = scalar_select %p24, %s26, %s17
    %p28 = scmp.ge.s32.totalorder %s27, 2
    %s29 = scalar_select %p28, 0, %s27
    %s30 = ssub.s32 %s17, %s29
    %s31 = ssub.s32 %s18, %s25
    %s32 = sor.u32 %s30, %s31
    %p33 = scmp.eq.s32.totalorder %s32, 0
    %s35 = sadd.s32 %s34, 1
    %s36 = scalar_select %p33, %s34, %s35
    %p39 = pneg %p33
    %p40 = scmp.eq.s32.totalorder %s10, 1
    %p41 = por %p39, %p40
    %p42 = scmp.ne.s32.totalorder %s34, %s37
    %p43 = scmp.eq.s32.totalorder %s10, 0
    %p44 = por %p42, %p43
    %p45 = scmp.ne.s32.totalorder %s34, %s37
    %p46 = scmp.eq.s32.totalorder %s15, 1
    %p47 = por %p45, %p46
    %p48 = scmp.ne.s32.totalorder %s37, %s38
    %p49 = scmp.eq.s32.totalorder %s15, 0
    %p50 = por %p48, %p49
    %p51 = scmp.ne.s32.totalorder %s37, %s38
    %p52 = scmp.eq.s32.totalorder %s16, 1
    %p53 = por %p51, %p52
    %p55 = scmp.ne.s32.totalorder %s38, %s54
    %p56 = scmp.eq.s32.totalorder %s16, 0
    %p57 = por %p55, %p56
    %s58 = ssub.s32 %s17, %s29
    %p59 = scmp.eq.s32.totalorder %s58, 0
    %s61 = sadd.s32 %s60, 1
    %s62 = scalar_select %p59, %s60, %s61
    %p65 = pneg %p59
    %p66 = scmp.eq.s32.totalorder %s10, 1
    %p67 = por %p65, %p66
    %p68 = scmp.ne.s32.totalorder %s60, %s63
    %p69 = scmp.eq.s32.totalorder %s10, 0
    %p70 = por %p68, %p69
    %p71 = scmp.ne.s32.totalorder %s60, %s63
    %p72 = scmp.eq.s32.totalorder %s15, 1
    %p73 = por %p71, %p72
    %p74 = scmp.ne.s32.totalorder %s63, %s64
    %p75 = scmp.eq.s32.totalorder %s15, 0
    %p76 = por %p74, %p75
    %p77 = scmp.ne.s32.totalorder %s63, %s64
    %p78 = scmp.eq.s32.totalorder %s16, 1
    %p79 = por %p77, %p78
    %p81 = scmp.ne.s32.totalorder %s64, %s80
    %p82 = scmp.eq.s32.totalorder %s16, 0
    %p83 = por %p81, %p82
    %s84 = ssub.s32 %s17, %s29
    %s85 = ssub.s32 %s18, %s25
    %s86 = sor.u32 %s84, %s85
    %p87 = scmp.eq.s32.totalorder %s86, 0
    %s89 = sadd.s32 %s88, 1
    %s90 = scalar_select %p87, %s88, %s89
    %p93 = pneg %p87
    %p94 = scmp.eq.s32.totalorder %s10, 1
    %p95 = por %p93, %p94
    %p96 = scmp.ne.s32.totalorder %s88, %s91
    %p97 = scmp.eq.s32.totalorder %s10, 0
    %p98 = por %p96, %p97
    %p99 = scmp.ne.s32.totalorder %s88, %s91
    %p100 = scmp.eq.s32.totalorder %s15, 1
    %p101 = por %p99, %p100
    %p102 = scmp.ne.s32.totalorder %s91, %s92
    %p103 = scmp.eq.s32.totalorder %s15, 0
    %p104 = por %p102, %p103
    %p105 = scmp.ne.s32.totalorder %s91, %s92
    %p106 = scmp.eq.s32.totalorder %s16, 1
    %p107 = por %p105, %p106
    %p109 = scmp.ne.s32.totalorder %s92, %s108
    %p110 = scmp.eq.s32.totalorder %s16, 0
    %p111 = por %p109, %p110
    %s112 = ssub.s32 %s17, %s29
    %p113 = scmp.eq.s32.totalorder %s112, 0
    %s115 = sadd.s32 %s114, 1
    %s116 = scalar_select %p113, %s114, %s115
    %p119 = pneg %p113
    %p120 = scmp.eq.s32.totalorder %s10, 1
    %p121 = por %p119, %p120
    %p122 = scmp.ne.s32.totalorder %s114, %s117
    %p123 = scmp.eq.s32.totalorder %s10, 0
    %p124 = por %p122, %p123
    %p125 = scmp.ne.s32.totalorder %s114, %s117
    %p126 = scmp.eq.s32.totalorder %s15, 1
    %p127 = por %p125, %p126
    %p128 = scmp.ne.s32.totalorder %s117, %s118
    %p129 = scmp.eq.s32.totalorder %s15, 0
    %p130 = por %p128, %p129
    %p131 = scmp.ne.s32.totalorder %s117, %s118
    %p132 = scmp.eq.s32.totalorder %s16, 1
    %p133 = por %p131, %p132
    %p135 = scmp.ne.s32.totalorder %s118, %s134
    %p136 = scmp.eq.s32.totalorder %s16, 0
    %p137 = por %p135, %p136
    %s138 = ssub.s32 %s17, %s29
    %s139 = ssub.s32 %s18, %s25
    %s140 = sor.u32 %s138, %s139
    %p141 = scmp.eq.s32.totalorder %s140, 0
    %s143 = sadd.s32 %s142, 1
    %s144 = scalar_select %p141, %s142, %s143
    %p147 = pneg %p141
    %p148 = scmp.eq.s32.totalorder %s10, 1
    %p149 = por %p147, %p148
    %p150 = scmp.ne.s32.totalorder %s142, %s145
    %p151 = scmp.eq.s32.totalorder %s10, 0
    %p152 = por %p150, %p151
    %p153 = scmp.ne.s32.totalorder %s142, %s145
    %p154 = scmp.eq.s32.totalorder %s15, 1
    %p155 = por %p153, %p154
    %p156 = scmp.ne.s32.totalorder %s145, %s146
    %p157 = scmp.eq.s32.totalorder %s15, 0
    %p158 = por %p156, %p157
    %p159 = scmp.ne.s32.totalorder %s145, %s146
    %p160 = scmp.eq.s32.totalorder %s16, 1
    %p161 = por %p159, %p160
    %p163 = scmp.ne.s32.totalorder %s146, %s162
    %p164 = scmp.eq.s32.totalorder %s16, 0
    %p165 = por %p163, %p164
    %p166 = scmp.le.s32.totalorder 1, %s10
    %p167 = scmp.lt.s32.totalorder %s10, 3
    %p168 = pnand %p166, %p167
    %p169 = pneg %p168
    // Predicated region
    $region9: #{nonlocal_net_cost.7} parent=5 // pred_check
      _
    $region10: #{nonlocal_net_cost.7} parent=5 // pred_check_branch
      %171 = sbr.rel (%p168) target = $region12
    $region11: #{nonlocal_net_cost.7} parent=5 // pred_region
      %s172 = ssub.s32 %s10, 1
    $region12: #{nonlocal_net_cost.7} parent=5 // pred_fallthru
      _
    %p173 = scmp.lt.s32.totalorder %s10, 2
    // Predicated region
    $region13: #{nonlocal_net_cost.7} parent=5 // pred_check
      %p174 = pneg %p173
    $region14: #{nonlocal_net_cost.7} parent=5 // pred_check_branch
      %176 = sbr.rel (%p174) target = $region16
    $region15: #{nonlocal_net_cost.7} parent=5 // pred_region
      // Predicated region
      $region17: #{nonlocal_net_cost.7} parent=15 // pred_check
        %p177 = pneg %p44
      $region18: #{nonlocal_net_cost.7} parent=15 // pred_check_branch
        %179 = sbr.rel (%p177) target = $region20
      $region19: #{nonlocal_net_cost.7} parent=15 // pred_region
        %s180 = smul.u32 16, %s18
        %p181 = scmp.lt.s32.totalorder %s17, 1
        %s182 = scalar_select %p181, %s17, 1
        %p183 = scmp.lt.s32.totalorder %s180, 15
        %s184 = scalar_select %p183, %s180, 15
        %s185 = smul.addr %s182, 16
        %s186 = sadd.s32 %s184, %s185
        %s187 = smul.addr %s186, 8
        %s188 = scalar_lea.vmem %s0, %s187
        %s189 = smul.u32 16, %s18
      $region20: #{nonlocal_net_cost.7} parent=15 // pred_fallthru
        _
      // Predicated region
      $region21: #{nonlocal_net_cost.7} parent=15 // pred_check
        %p190 = pneg %p70
      $region22: #{nonlocal_net_cost.7} parent=15 // pred_check_branch
        %192 = sbr.rel (%p190) target = $region24
      $region23: #{nonlocal_net_cost.7} parent=15 // pred_region
        %p193 = scmp.lt.s32.totalorder %s17, 1
        %s194 = scalar_select %p193, %s17, 1
        %s195 = smul.addr %s194, 16
        %s196 = smul.addr %s195, 8
        %s197 = scalar_lea.vmem %s1, %s196
      $region24: #{nonlocal_net_cost.7} parent=15 // pred_fallthru
        _
      // Predicated region
      $region25: #{nonlocal_net_cost.7} parent=15 // pred_check
        %p198 = pneg %p98
      $region26: #{nonlocal_net_cost.7} parent=15 // pred_check_branch
        %200 = sbr.rel (%p198) target = $region28
      $region27: #{nonlocal_net_cost.7} parent=15 // pred_region
        %s201 = smul.u32 16, %s18
        %p202 = scmp.lt.s32.totalorder %s17, 1
        %s203 = scalar_select %p202, %s17, 1
        %p204 = scmp.lt.s32.totalorder %s201, 15
        %s205 = scalar_select %p204, %s201, 15
        %s206 = smul.addr %s203, 16
        %s207 = sadd.s32 %s205, %s206
        %s208 = smul.addr %s207, 8
        %s209 = scalar_lea.vmem %s2, %s208
        %s210 = smul.u32 16, %s18
      $region28: #{nonlocal_net_cost.7} parent=15 // pred_fallthru
        _
      // Predicated region
      $region29: #{nonlocal_net_cost.7} parent=15 // pred_check
        %p211 = pneg %p124
      $region30: #{nonlocal_net_cost.7} parent=15 // pred_check_branch
        %213 = sbr.rel (%p211) target = $region32
      $region31: #{nonlocal_net_cost.7} parent=15 // pred_region
        %p214 = scmp.lt.s32.totalorder %s17, 1
        %s215 = scalar_select %p214, %s17, 1
        %s216 = smul.addr %s215, 16
        %s217 = smul.addr %s216, 8
        %s218 = scalar_lea.vmem %s3, %s217
      $region32: #{nonlocal_net_cost.7} parent=15 // pred_fallthru
        _
    $region16: #{nonlocal_net_cost.7} parent=5 // pred_fallthru
      _
    %p219 = scmp.le.s32.totalorder 1, %s10
    %p220 = scmp.lt.s32.totalorder %s10, 3
    %p221 = pnand %p219, %p220
    %p222 = pneg %p221
    // Predicated region
    $region33: #{nonlocal_net_cost.7} parent=5 // pred_check
      _
    $region34: #{nonlocal_net_cost.7} parent=5 // pred_check_branch
      %224 = sbr.rel (%p221) target = $region36
    $region35: #{nonlocal_net_cost.7} parent=5 // pred_region
      %s225 = ssub.s32 %s10, 1
      %s226 = smul.u32 16, %s20
      %p227 = scmp.lt.s32.totalorder %s19, 1
      %s228 = scalar_select %p227, %s19, 1
      %p229 = scmp.lt.s32.totalorder %s226, 15
      %s230 = scalar_select %p229, %s226, 15
      %s231 = smul.addr %s228, 16
      %s232 = sadd.s32 %s230, %s231
      %s233 = smul.addr %s232, 8
      %s234 = scalar_lea.vmem %s0, %s233
      %p235 = pneg %p50
      %p236 = pneg %p47
      %p237 = scmp.lt.s32.totalorder %s19, 1
      %s238 = scalar_select %p237, %s19, 1
      %s239 = smul.addr %s238, 16
      %s240 = smul.addr %s239, 8
      %s241 = scalar_lea.vmem %s1, %s240
      %p242 = pneg %p76
      %p243 = pneg %p73
      %s244 = smul.u32 16, %s20
      %p245 = scmp.lt.s32.totalorder %s19, 1
      %s246 = scalar_select %p245, %s19, 1
      %p247 = scmp.lt.s32.totalorder %s244, 15
      %s248 = scalar_select %p247, %s244, 15
      %s249 = smul.addr %s246, 16
      %s250 = sadd.s32 %s248, %s249
      %s251 = smul.addr %s250, 8
      %s252 = scalar_lea.vmem %s2, %s251
      %p253 = pneg %p104
      %p254 = pneg %p101
      %p255 = scmp.lt.s32.totalorder %s19, 1
      %s256 = scalar_select %p255, %s19, 1
      %s257 = smul.addr %s256, 16
      %s258 = smul.addr %s257, 8
      %s259 = scalar_lea.vmem %s3, %s258
      %p260 = pneg %p130
      %p261 = pneg %p127
      %p262 = pneg %p158
      %p263 = pneg %p155
      %s264 = smul.u32 16, %s20
      %p265 = scmp.lt.s32.totalorder %s19, 1
      %s266 = scalar_select %p265, %s19, 1
      %p267 = scmp.lt.s32.totalorder %s264, 15
      %s268 = scalar_select %p267, %s264, 15
      %s269 = smul.addr %s266, 16
      %s270 = sadd.s32 %s268, %s269
      %s271 = smul.addr %s270, 4
      %s272 = scalar_lea.vmem %s4, %s271
      %s273 = smul.u32 16, %s20
      %p274 = scmp.lt.s32.totalorder %s19, 1
      %s275 = scalar_select %p274, %s19, 1
      %p276 = scmp.lt.s32.totalorder %s273, 15
      %s277 = scalar_select %p276, %s273, 15
      %s278 = smul.addr %s275, 16
      %s279 = sadd.s32 %s277, %s278
      %s280 = smul.addr %s279, 8
      %s281 = scalar_lea.vmem %s0, %s280
      %s282 = smul.u32 16, %s20
      %p283 = scmp.lt.s32.totalorder %s19, 1
      %s284 = scalar_select %p283, %s19, 1
      %s285 = smul.addr %s284, 16
      %s286 = smul.addr %s285, 8
      %s287 = scalar_lea.vmem %s1, %s286
      %s288 = smul.u32 16, %s20
      %p289 = scmp.lt.s32.totalorder %s19, 1
      %s290 = scalar_select %p289, %s19, 1
      %p291 = scmp.lt.s32.totalorder %s288, 15
      %s292 = scalar_select %p291, %s288, 15
      %s293 = smul.addr %s290, 16
      %s294 = sadd.s32 %s292, %s293
      %s295 = smul.addr %s294, 8
      %s296 = scalar_lea.vmem %s2, %s295
      %s297 = smul.u32 16, %s20
      %p298 = scmp.lt.s32.totalorder %s19, 1
      %s299 = scalar_select %p298, %s19, 1
      %s300 = smul.addr %s299, 16
      %s301 = smul.addr %s300, 8
      %s302 = scalar_lea.vmem %s3, %s301
      %s303 = smul.u32 16, %s20
      %p304 = scmp.lt.s32.totalorder %s19, 1
      %s305 = scalar_select %p304, %s19, 1
      %p306 = scmp.lt.s32.totalorder %s303, 15
      %s307 = scalar_select %p306, %s303, 15
      %s308 = smul.addr %s305, 16
      %s309 = sadd.s32 %s307, %s308
      %s310 = smul.addr %s309, 4
      %s311 = scalar_lea.vmem %s4, %s310
      %s312 = smul.u32 16, %s20
      %v313 = vld [vmem:[%s281] sm:$0xff]
      %v314 = vld [vmem:[%s281 + $0x8] sm:$0xff]
      %v315 = vld [vmem:[%s281 + $0x10] sm:$0xff]
      %v316 = vld [vmem:[%s281 + $0x18] sm:$0xff]
      %v317 = vld [vmem:[%s281 + $0x20] sm:$0xff]
      %v318 = vld [vmem:[%s281 + $0x28] sm:$0xff]
      %v319 = vld [vmem:[%s281 + $0x30] sm:$0xff]
      %v320 = vld [vmem:[%s281 + $0x38] sm:$0xff]
      %v321 = vld [vmem:[%s281 + $0x40] sm:$0xff]
      %v322 = vld [vmem:[%s281 + $0x48] sm:$0xff]
      %v323 = vld [vmem:[%s281 + $0x50] sm:$0xff]
      %v324 = vld [vmem:[%s281 + $0x58] sm:$0xff]
      %v325 = vld [vmem:[%s281 + $0x60] sm:$0xff]
      %v326 = vld [vmem:[%s281 + $0x68] sm:$0xff]
      %v327 = vld [vmem:[%s281 + $0x70] sm:$0xff]
      %v328 = vld [vmem:[%s281 + $0x78] sm:$0xff]
      %v329 = vld [vmem:[%s287] sm:$0xff]
      %v330 = vld [vmem:[%s287 + $0x8] sm:$0xff]
      %v331 = vld [vmem:[%s287 + $0x10] sm:$0xff]
      %v332 = vld [vmem:[%s287 + $0x18] sm:$0xff]
      %v333 = vld [vmem:[%s287 + $0x20] sm:$0xff]
      %v334 = vld [vmem:[%s287 + $0x28] sm:$0xff]
      %v335 = vld [vmem:[%s287 + $0x30] sm:$0xff]
      %v336 = vld [vmem:[%s287 + $0x38] sm:$0xff]
      %v337 = vld [vmem:[%s287 + $0x40] sm:$0xff]
      %v338 = vld [vmem:[%s287 + $0x48] sm:$0xff]
      %v339 = vld [vmem:[%s287 + $0x50] sm:$0xff]
      %v340 = vld [vmem:[%s287 + $0x58] sm:$0xff]
      %v341 = vld [vmem:[%s287 + $0x60] sm:$0xff]
      %v342 = vld [vmem:[%s287 + $0x68] sm:$0xff]
      %v343 = vld [vmem:[%s287 + $0x70] sm:$0xff]
      %v344 = vld [vmem:[%s287 + $0x78] sm:$0xff]
      %vm345 = vcmask 64512
      %v347 = vsel %vm345, %v313, 0
      %v350 = vsel %vm345, %v314, 0
      %v353 = vsel %vm345, %v315, 0
      %v356 = vsel %vm345, %v316, 0
      %v359 = vsel %vm345, %v317, 0
      %v362 = vsel %vm345, %v318, 0
      %v365 = vsel %vm345, %v319, 0
      %v368 = vsel %vm345, %v320, 0
      %v371 = vsel %vm345, %v321, 0
      %v374 = vsel %vm345, %v322, 0
      %v377 = vsel %vm345, %v323, 0
      %v380 = vsel %vm345, %v324, 0
      %v383 = vsel %vm345, %v325, 0
      %v386 = vsel %vm345, %v326, 0
      %v389 = vsel %vm345, %v327, 0
      %v392 = vsel %vm345, %v328, 0
      %v395 = vsel %vm345, %v329, 0
      %v398 = vsel %vm345, %v330, 0
      %v401 = vsel %vm345, %v331, 0
      %v404 = vsel %vm345, %v332, 0
      %v407 = vsel %vm345, %v333, 0
      %v410 = vsel %vm345, %v334, 0
      %v413 = vsel %vm345, %v335, 0
      %v416 = vsel %vm345, %v336, 0
      %v419 = vsel %vm345, %v337, 0
      %v422 = vsel %vm345, %v338, 0
      %v425 = vsel %vm345, %v339, 0
      %v428 = vsel %vm345, %v340, 0
      %v431 = vsel %vm345, %v341, 0
      %v434 = vsel %vm345, %v342, 0
      %v437 = vsel %vm345, %v343, 0
      %v440 = vsel %vm345, %v344, 0
      %442 = vmatprep.subr.mxu0 0.0
      %443 = vmatpush1.xpose.msra.mxu0 %v395
      %444 = vmatprep.subr.mxu0 0.0
      %445 = vmatpush1.xpose.msra.mxu0 %v398
      %446 = vmatprep.subr.mxu0 0.0
      %447 = vmatpush1.xpose.msra.mxu0 %v401
      %448 = vmatprep.subr.mxu0 0.0
      %449 = vmatpush1.xpose.msra.mxu0 %v404
      %450 = vmatprep.subr.mxu0 0.0
      %451 = vmatpush1.xpose.msra.mxu0 %v407
      %452 = vmatprep.subr.mxu0 0.0
      %453 = vmatpush1.xpose.msra.mxu0 %v410
      %454 = vmatprep.subr.mxu0 0.0
      %455 = vmatpush1.xpose.msra.mxu0 %v413
      %456 = vmatprep.subr.mxu0 0.0
      %457 = vmatpush1.xpose.msra.mxu0 %v416
      %458 = vmatprep.subr.mxu0 0.0
      %459 = vmatpush1.xpose.msra.mxu0 %v419
      %460 = vmatprep.subr.mxu0 0.0
      %461 = vmatpush1.xpose.msra.mxu0 %v422
      %462 = vmatprep.subr.mxu0 0.0
      %463 = vmatpush1.xpose.msra.mxu0 %v425
      %464 = vmatprep.subr.mxu0 0.0
      %465 = vmatpush1.xpose.msra.mxu0 %v428
      %466 = vmatprep.subr.mxu0 0.0
      %467 = vmatpush1.xpose.msra.mxu0 %v431
      %468 = vmatprep.subr.mxu0 0.0
      %469 = vmatpush1.xpose.msra.mxu0 %v434
      %470 = vmatprep.subr.mxu0 0.0
      %471 = vmatpush1.xpose.msra.mxu0 %v437
      %472 = vmatprep.subr.mxu0 0.0
      %473 = vmatpush1.xpose.msra.mxu0 %v440
      %474 = vmatprep.subr.mxu0 0.0
      %475 = vmatpush1.xpose.msra.mxu0 0.0
      %476 = vmatprep.subr.mxu0 0.0
      %477 = vmatpush1.xpose.msra.mxu0 0.0
      %478 = vmatprep.subr.mxu0 0.0
      %479 = vmatpush1.xpose.msra.mxu0 0.0
      %480 = vmatprep.subr.mxu0 0.0
      %481 = vmatpush1.xpose.msra.mxu0 0.0
      %482 = vmatprep.subr.mxu0 0.0
      %483 = vmatpush1.xpose.msra.mxu0 0.0
      %484 = vmatprep.subr.mxu0 0.0
      %485 = vmatpush1.xpose.msra.mxu0 0.0
      %486 = vmatprep.subr.mxu0 0.0
      %487 = vmatpush1.xpose.msra.mxu0 0.0
      %488 = vmatprep.subr.mxu0 0.0
      %489 = vmatpush1.xpose.msra.mxu0 0.0
      %490 = vmatprep.subr.mxu0 0.0
      %491 = vmatpush1.xpose.msra.mxu0 0.0
      %492 = vmatprep.subr.mxu0 0.0
      %493 = vmatpush1.xpose.msra.mxu0 0.0
      %494 = vmatprep.subr.mxu0 0.0
      %495 = vmatpush1.xpose.msra.mxu0 0.0
      %496 = vmatprep.subr.mxu0 0.0
      %497 = vmatpush1.xpose.msra.mxu0 0.0
      %498 = vmatprep.subr.mxu0 0.0
      %499 = vmatpush1.xpose.msra.mxu0 0.0
      %500 = vmatprep.subr.mxu0 0.0
      %501 = vmatpush1.xpose.msra.mxu0 0.0
      %502 = vmatprep.subr.mxu0 0.0
      %503 = vmatpush1.xpose.msra.mxu0 0.0
      %504 = vmatprep.subr.mxu0 0.0
      %505 = vmatpush1.xpose.msra.mxu0 0.0
      %506 = vmatprep.mubr.f32.mxu0 0.0
      %507 = vmatmul.mubr.f32.gmra.mrb[0].mxu0 %v347
      %v508 = vpop.f32.mrb[0].mxu0
      %v509 = vadd.f32 0.0, %v508
      %v510 = vpop.f32.mrb[0].mxu0
      %511 = vmatprep.mubr.f32.mxu0 0.0
      %512 = vmatmul.mubr.f32.gmra.mrb[0].mxu0 %v350
      %v513 = vpop.f32.mrb[0].mxu0
      %v514 = vadd.f32 0.0, %v513
      %v515 = vpop.f32.mrb[0].mxu0
      %516 = vmatprep.mubr.f32.mxu0 0.0
      %517 = vmatmul.mubr.f32.gmra.mrb[0].mxu0 %v353
      %v518 = vpop.f32.mrb[0].mxu0
      %v519 = vadd.f32 0.0, %v518
      %v520 = vpop.f32.mrb[0].mxu0
      %521 = vmatprep.mubr.f32.mxu0 0.0
      %522 = vmatmul.mubr.f32.gmra.mrb[0].mxu0 %v356
      %v523 = vpop.f32.mrb[0].mxu0
      %v524 = vadd.f32 0.0, %v523
      %v525 = vpop.f32.mrb[0].mxu0
      %526 = vmatprep.mubr.f32.mxu0 0.0
      %527 = vmatmul.mubr.f32.gmra.mrb[0].mxu0 %v359
      %v528 = vpop.f32.mrb[0].mxu0
      %v529 = vadd.f32 0.0, %v528
      %v530 = vpop.f32.mrb[0].mxu0
      %531 = vmatprep.mubr.f32.mxu0 0.0
      %532 = vmatmul.mubr.f32.gmra.mrb[0].mxu0 %v362
      %v533 = vpop.f32.mrb[0].mxu0
      %v534 = vadd.f32 0.0, %v533
      %v535 = vpop.f32.mrb[0].mxu0
      %536 = vmatprep.mubr.f32.mxu0 0.0
      %537 = vmatmul.mubr.f32.gmra.mrb[0].mxu0 %v365
      %v538 = vpop.f32.mrb[0].mxu0
      %v539 = vadd.f32 0.0, %v538
      %v540 = vpop.f32.mrb[0].mxu0
      %541 = vmatprep.mubr.f32.mxu0 0.0
      %542 = vmatmul.mubr.f32.gmra.mrb[0].mxu0 %v368
      %v543 = vpop.f32.mrb[0].mxu0
      %v544 = vadd.f32 0.0, %v543
      %v545 = vpop.f32.mrb[0].mxu0
      %546 = vmatprep.mubr.f32.mxu0 0.0
      %547 = vmatmul.mubr.f32.gmra.mrb[0].mxu0 %v371
      %v548 = vpop.f32.mrb[0].mxu0
      %v549 = vadd.f32 0.0, %v548
      %v550 = vpop.f32.mrb[0].mxu0
      %551 = vmatprep.mubr.f32.mxu0 0.0
      %552 = vmatmul.mubr.f32.gmra.mrb[0].mxu0 %v374
      %v553 = vpop.f32.mrb[0].mxu0
      %v554 = vadd.f32 0.0, %v553
      %v555 = vpop.f32.mrb[0].mxu0
      %556 = vmatprep.mubr.f32.mxu0 0.0
      %557 = vmatmul.mubr.f32.gmra.mrb[0].mxu0 %v377
      %v558 = vpop.f32.mrb[0].mxu0
      %v559 = vadd.f32 0.0, %v558
      %v560 = vpop.f32.mrb[0].mxu0
      %561 = vmatprep.mubr.f32.mxu0 0.0
      %562 = vmatmul.mubr.f32.gmra.mrb[0].mxu0 %v380
      %v563 = vpop.f32.mrb[0].mxu0
      %v564 = vadd.f32 0.0, %v563
      %v565 = vpop.f32.mrb[0].mxu0
      %566 = vmatprep.mubr.f32.mxu0 0.0
      %567 = vmatmul.mubr.f32.gmra.mrb[0].mxu0 %v383
      %v568 = vpop.f32.mrb[0].mxu0
      %v569 = vadd.f32 0.0, %v568
      %v570 = vpop.f32.mrb[0].mxu0
      %571 = vmatprep.mubr.f32.mxu0 0.0
      %572 = vmatmul.mubr.f32.gmra.mrb[0].mxu0 %v386
      %v573 = vpop.f32.mrb[0].mxu0
      %v574 = vadd.f32 0.0, %v573
      %v575 = vpop.f32.mrb[0].mxu0
      %576 = vmatprep.mubr.f32.mxu0 0.0
      %577 = vmatmul.mubr.f32.gmra.mrb[0].mxu0 %v389
      %v578 = vpop.f32.mrb[0].mxu0
      %v579 = vadd.f32 0.0, %v578
      %v580 = vpop.f32.mrb[0].mxu0
      %581 = vmatprep.mubr.f32.mxu0 0.0
      %582 = vmatmul.mubr.f32.gmra.mrb[0].mxu0 %v392
      %v583 = vpop.f32.mrb[0].mxu0
      %v584 = vadd.f32 0.0, %v583
      %v585 = vpop.f32.mrb[0].mxu0
      %586 = vdwg.mxu0
      %v587 = vmul.f32 %v313, %v313
      %v588 = vmul.f32 %v314, %v314
      %v589 = vmul.f32 %v315, %v315
      %v590 = vmul.f32 %v316, %v316
      %v591 = vmul.f32 %v317, %v317
      %v592 = vmul.f32 %v318, %v318
      %v593 = vmul.f32 %v319, %v319
      %v594 = vmul.f32 %v320, %v320
      %v595 = vmul.f32 %v321, %v321
      %v596 = vmul.f32 %v322, %v322
      %v597 = vmul.f32 %v323, %v323
      %v598 = vmul.f32 %v324, %v324
      %v599 = vmul.f32 %v325, %v325
      %v600 = vmul.f32 %v326, %v326
      %v601 = vmul.f32 %v327, %v327
      %v602 = vmul.f32 %v328, %v328
      %v603 = vsel %vm345, %v587, 0.0
      %604 = vadd.xlane.f32.xlu0 %v603
      %v605 = vpop.xlane.xlu0 %604
      %v606 = vsel %vm345, %v588, 0.0
      %607 = vadd.xlane.f32.xlu0 %v606
      %v608 = vpop.xlane.xlu0 %607
      %v609 = vsel %vm345, %v589, 0.0
      %610 = vadd.xlane.f32.xlu0 %v609
      %v611 = vpop.xlane.xlu0 %610
      %v612 = vsel %vm345, %v590, 0.0
      %613 = vadd.xlane.f32.xlu0 %v612
      %v614 = vpop.xlane.xlu0 %613
      %v615 = vsel %vm345, %v591, 0.0
      %616 = vadd.xlane.f32.xlu0 %v615
      %v617 = vpop.xlane.xlu0 %616
      %v618 = vsel %vm345, %v592, 0.0
      %619 = vadd.xlane.f32.xlu0 %v618
      %v620 = vpop.xlane.xlu0 %619
      %v621 = vsel %vm345, %v593, 0.0
      %622 = vadd.xlane.f32.xlu0 %v621
      %v623 = vpop.xlane.xlu0 %622
      %v624 = vsel %vm345, %v594, 0.0
      %625 = vadd.xlane.f32.xlu0 %v624
      %v626 = vpop.xlane.xlu0 %625
      %v627 = vsel %vm345, %v595, 0.0
      %628 = vadd.xlane.f32.xlu0 %v627
      %v629 = vpop.xlane.xlu0 %628
      %v630 = vsel %vm345, %v596, 0.0
      %631 = vadd.xlane.f32.xlu0 %v630
      %v632 = vpop.xlane.xlu0 %631
      %v633 = vsel %vm345, %v597, 0.0
      %634 = vadd.xlane.f32.xlu0 %v633
      %v635 = vpop.xlane.xlu0 %634
      %v636 = vsel %vm345, %v598, 0.0
      %637 = vadd.xlane.f32.xlu0 %v636
      %v638 = vpop.xlane.xlu0 %637
      %v639 = vsel %vm345, %v599, 0.0
      %640 = vadd.xlane.f32.xlu0 %v639
      %v641 = vpop.xlane.xlu0 %640
      %v642 = vsel %vm345, %v600, 0.0
      %643 = vadd.xlane.f32.xlu0 %v642
      %v644 = vpop.xlane.xlu0 %643
      %v645 = vsel %vm345, %v601, 0.0
      %646 = vadd.xlane.f32.xlu0 %v645
      %v647 = vpop.xlane.xlu0 %646
      %v648 = vsel %vm345, %v602, 0.0
      %649 = vadd.xlane.f32.xlu0 %v648
      %v650 = vpop.xlane.xlu0 %649
      %v651 = vmul.f32 %v329, %v329
      %v652 = vmul.f32 %v330, %v330
      %v653 = vmul.f32 %v331, %v331
      %v654 = vmul.f32 %v332, %v332
      %v655 = vmul.f32 %v333, %v333
      %v656 = vmul.f32 %v334, %v334
      %v657 = vmul.f32 %v335, %v335
      %v658 = vmul.f32 %v336, %v336
      %v659 = vmul.f32 %v337, %v337
      %v660 = vmul.f32 %v338, %v338
      %v661 = vmul.f32 %v339, %v339
      %v662 = vmul.f32 %v340, %v340
      %v663 = vmul.f32 %v341, %v341
      %v664 = vmul.f32 %v342, %v342
      %v665 = vmul.f32 %v343, %v343
      %v666 = vmul.f32 %v344, %v344
      %v668 = vsel %vm345, 1.0, 0
      %v671 = vsel %vm345, %v651, 0
      %v674 = vsel %vm345, %v652, 0
      %v677 = vsel %vm345, %v653, 0
      %v680 = vsel %vm345, %v654, 0
      %v683 = vsel %vm345, %v655, 0
      %v686 = vsel %vm345, %v656, 0
      %v689 = vsel %vm345, %v657, 0
      %v692 = vsel %vm345, %v658, 0
      %v695 = vsel %vm345, %v659, 0
      %v698 = vsel %vm345, %v660, 0
      %v701 = vsel %vm345, %v661, 0
      %v704 = vsel %vm345, %v662, 0
      %v707 = vsel %vm345, %v663, 0
      %v710 = vsel %vm345, %v664, 0
      %v713 = vsel %vm345, %v665, 0
      %v716 = vsel %vm345, %v666, 0
      %718 = vmatprep.subr.mxu0 0.0
      %719 = vmatpush1.xpose.msra.mxu0 %v671
      %720 = vmatprep.subr.mxu0 0.0
      %721 = vmatpush1.xpose.msra.mxu0 %v674
      %722 = vmatprep.subr.mxu0 0.0
      %723 = vmatpush1.xpose.msra.mxu0 %v677
      %724 = vmatprep.subr.mxu0 0.0
      %725 = vmatpush1.xpose.msra.mxu0 %v680
      %726 = vmatprep.subr.mxu0 0.0
      %727 = vmatpush1.xpose.msra.mxu0 %v683
      %728 = vmatprep.subr.mxu0 0.0
      %729 = vmatpush1.xpose.msra.mxu0 %v686
      %730 = vmatprep.subr.mxu0 0.0
      %731 = vmatpush1.xpose.msra.mxu0 %v689
      %732 = vmatprep.subr.mxu0 0.0
      %733 = vmatpush1.xpose.msra.mxu0 %v692
      %734 = vmatprep.subr.mxu0 0.0
      %735 = vmatpush1.xpose.msra.mxu0 %v695
      %736 = vmatprep.subr.mxu0 0.0
      %737 = vmatpush1.xpose.msra.mxu0 %v698
      %738 = vmatprep.subr.mxu0 0.0
      %739 = vmatpush1.xpose.msra.mxu0 %v701
      %740 = vmatprep.subr.mxu0 0.0
      %741 = vmatpush1.xpose.msra.mxu0 %v704
      %742 = vmatprep.subr.mxu0 0.0
      %743 = vmatpush1.xpose.msra.mxu0 %v707
      %744 = vmatprep.subr.mxu0 0.0
      %745 = vmatpush1.xpose.msra.mxu0 %v710
      %746 = vmatprep.subr.mxu0 0.0
      %747 = vmatpush1.xpose.msra.mxu0 %v713
      %748 = vmatprep.subr.mxu0 0.0
      %749 = vmatpush1.xpose.msra.mxu0 %v716
      %750 = vmatprep.subr.mxu0 0.0
      %751 = vmatpush1.xpose.msra.mxu0 0.0
      %752 = vmatprep.subr.mxu0 0.0
      %753 = vmatpush1.xpose.msra.mxu0 0.0
      %754 = vmatprep.subr.mxu0 0.0
      %755 = vmatpush1.xpose.msra.mxu0 0.0
      %756 = vmatprep.subr.mxu0 0.0
      %757 = vmatpush1.xpose.msra.mxu0 0.0
      %758 = vmatprep.subr.mxu0 0.0
      %759 = vmatpush1.xpose.msra.mxu0 0.0
      %760 = vmatprep.subr.mxu0 0.0
      %761 = vmatpush1.xpose.msra.mxu0 0.0
      %762 = vmatprep.subr.mxu0 0.0
      %763 = vmatpush1.xpose.msra.mxu0 0.0
      %764 = vmatprep.subr.mxu0 0.0
      %765 = vmatpush1.xpose.msra.mxu0 0.0
      %766 = vmatprep.subr.mxu0 0.0
      %767 = vmatpush1.xpose.msra.mxu0 0.0
      %768 = vmatprep.subr.mxu0 0.0
      %769 = vmatpush1.xpose.msra.mxu0 0.0
      %770 = vmatprep.subr.mxu0 0.0
      %771 = vmatpush1.xpose.msra.mxu0 0.0
      %772 = vmatprep.subr.mxu0 0.0
      %773 = vmatpush1.xpose.msra.mxu0 0.0
      %774 = vmatprep.subr.mxu0 0.0
      %775 = vmatpush1.xpose.msra.mxu0 0.0
      %776 = vmatprep.subr.mxu0 0.0
      %777 = vmatpush1.xpose.msra.mxu0 0.0
      %778 = vmatprep.subr.mxu0 0.0
      %779 = vmatpush1.xpose.msra.mxu0 0.0
      %780 = vmatprep.subr.mxu0 0.0
      %781 = vmatpush1.xpose.msra.mxu0 0.0
      %782 = vmatprep.mubr.f32.mxu0 0.0
      %783 = vmatmul.mubr.f32.gmra.mrb[0].mxu0 %v668
      %v784 = vpop.f32.mrb[0].mxu0
      %v785 = vadd.f32 0.0, %v784
      %v786 = vpop.f32.mrb[0].mxu0
      %787 = vdwg.mxu0
      %v788 = vlaneseq
      %v789 = vshrl.u32 %v788, 7
      %v790 = vsub.s32 0, %v789
      %v791 = vrot.slane %v785, %v790
      %v792 = vadd.f32 %v605, %v791
      %v793 = vadd.f32 %v608, %v791
      %v794 = vadd.f32 %v611, %v791
      %v795 = vadd.f32 %v614, %v791
      %v796 = vadd.f32 %v617, %v791
      %v797 = vadd.f32 %v620, %v791
      %v798 = vadd.f32 %v623, %v791
      %v799 = vadd.f32 %v626, %v791
      %v800 = vadd.f32 %v629, %v791
      %v801 = vadd.f32 %v632, %v791
      %v802 = vadd.f32 %v635, %v791
      %v803 = vadd.f32 %v638, %v791
      %v804 = vadd.f32 %v641, %v791
      %v805 = vadd.f32 %v644, %v791
      %v806 = vadd.f32 %v647, %v791
      %v807 = vadd.f32 %v650, %v791
      %v808 = vmul.f32 %v509, 2.0
      %v809 = vmul.f32 %v514, 2.0
      %v810 = vmul.f32 %v519, 2.0
      %v811 = vmul.f32 %v524, 2.0
      %v812 = vmul.f32 %v529, 2.0
      %v813 = vmul.f32 %v534, 2.0
      %v814 = vmul.f32 %v539, 2.0
      %v815 = vmul.f32 %v544, 2.0
      %v816 = vmul.f32 %v549, 2.0
      %v817 = vmul.f32 %v554, 2.0
      %v818 = vmul.f32 %v559, 2.0
      %v819 = vmul.f32 %v564, 2.0
      %v820 = vmul.f32 %v569, 2.0
      %v821 = vmul.f32 %v574, 2.0
      %v822 = vmul.f32 %v579, 2.0
      %v823 = vmul.f32 %v584, 2.0
      %v824 = vsub.f32 %v792, %v808
      %v825 = vsub.f32 %v793, %v809
      %v826 = vsub.f32 %v794, %v810
      %v827 = vsub.f32 %v795, %v811
      %v828 = vsub.f32 %v796, %v812
      %v829 = vsub.f32 %v797, %v813
      %v830 = vsub.f32 %v798, %v814
      %v831 = vsub.f32 %v799, %v815
      %v832 = vsub.f32 %v800, %v816
      %v833 = vsub.f32 %v801, %v817
      %v834 = vsub.f32 %v802, %v818
      %v835 = vsub.f32 %v803, %v819
      %v836 = vsub.f32 %v804, %v820
      %v837 = vsub.f32 %v805, %v821
      %v838 = vsub.f32 %v806, %v822
      %v839 = vsub.f32 %v807, %v823
      %v840 = vmax.f32 %v824, 0.0
      %v841 = vmax.f32 %v825, 0.0
      %v842 = vmax.f32 %v826, 0.0
      %v843 = vmax.f32 %v827, 0.0
      %v844 = vmax.f32 %v828, 0.0
      %v845 = vmax.f32 %v829, 0.0
      %v846 = vmax.f32 %v830, 0.0
      %v847 = vmax.f32 %v831, 0.0
      %v848 = vmax.f32 %v832, 0.0
      %v849 = vmax.f32 %v833, 0.0
      %v850 = vmax.f32 %v834, 0.0
      %v851 = vmax.f32 %v835, 0.0
      %v852 = vmax.f32 %v836, 0.0
      %v853 = vmax.f32 %v837, 0.0
      %v854 = vmax.f32 %v838, 0.0
      %v855 = vmax.f32 %v839, 0.0
      %v856 = vrsqrt.pop %v840
      %v857 = vmul.f32 %v840, %v856
      %vm858 = vcmp.eq.f32.partialorder %v840, inf
      %v859 = vsel %vm858, %v840, %v857
      %vm860 = vcmp.eq.f32.partialorder %v840, 0.0
      %v861 = vand.u32 %v840, 2147483648
      %v862 = vsel %vm860, %v861, %v859
      %v863 = vrsqrt.pop %v841
      %v864 = vmul.f32 %v841, %v863
      %vm865 = vcmp.eq.f32.partialorder %v841, inf
      %v866 = vsel %vm865, %v841, %v864
      %vm867 = vcmp.eq.f32.partialorder %v841, 0.0
      %v868 = vand.u32 %v841, 2147483648
      %v869 = vsel %vm867, %v868, %v866
      %v870 = vrsqrt.pop %v842
      %v871 = vmul.f32 %v842, %v870
      %vm872 = vcmp.eq.f32.partialorder %v842, inf
      %v873 = vsel %vm872, %v842, %v871
      %vm874 = vcmp.eq.f32.partialorder %v842, 0.0
      %v875 = vand.u32 %v842, 2147483648
      %v876 = vsel %vm874, %v875, %v873
      %v877 = vrsqrt.pop %v843
      %v878 = vmul.f32 %v843, %v877
      %vm879 = vcmp.eq.f32.partialorder %v843, inf
      %v880 = vsel %vm879, %v843, %v878
      %vm881 = vcmp.eq.f32.partialorder %v843, 0.0
      %v882 = vand.u32 %v843, 2147483648
      %v883 = vsel %vm881, %v882, %v880
      %v884 = vrsqrt.pop %v844
      %v885 = vmul.f32 %v844, %v884
      %vm886 = vcmp.eq.f32.partialorder %v844, inf
      %v887 = vsel %vm886, %v844, %v885
      %vm888 = vcmp.eq.f32.partialorder %v844, 0.0
      %v889 = vand.u32 %v844, 2147483648
      %v890 = vsel %vm888, %v889, %v887
      %v891 = vrsqrt.pop %v845
      %v892 = vmul.f32 %v845, %v891
      %vm893 = vcmp.eq.f32.partialorder %v845, inf
      %v894 = vsel %vm893, %v845, %v892
      %vm895 = vcmp.eq.f32.partialorder %v845, 0.0
      %v896 = vand.u32 %v845, 2147483648
      %v897 = vsel %vm895, %v896, %v894
      %v898 = vrsqrt.pop %v846
      %v899 = vmul.f32 %v846, %v898
      %vm900 = vcmp.eq.f32.partialorder %v846, inf
      %v901 = vsel %vm900, %v846, %v899
      %vm902 = vcmp.eq.f32.partialorder %v846, 0.0
      %v903 = vand.u32 %v846, 2147483648
      %v904 = vsel %vm902, %v903, %v901
      %v905 = vrsqrt.pop %v847
      %v906 = vmul.f32 %v847, %v905
      %vm907 = vcmp.eq.f32.partialorder %v847, inf
      %v908 = vsel %vm907, %v847, %v906
      %vm909 = vcmp.eq.f32.partialorder %v847, 0.0
      %v910 = vand.u32 %v847, 2147483648
      %v911 = vsel %vm909, %v910, %v908
      %v912 = vrsqrt.pop %v848
      %v913 = vmul.f32 %v848, %v912
      %vm914 = vcmp.eq.f32.partialorder %v848, inf
      %v915 = vsel %vm914, %v848, %v913
      %vm916 = vcmp.eq.f32.partialorder %v848, 0.0
      %v917 = vand.u32 %v848, 2147483648
      %v918 = vsel %vm916, %v917, %v915
      %v919 = vrsqrt.pop %v849
      %v920 = vmul.f32 %v849, %v919
      %vm921 = vcmp.eq.f32.partialorder %v849, inf
      %v922 = vsel %vm921, %v849, %v920
      %vm923 = vcmp.eq.f32.partialorder %v849, 0.0
      %v924 = vand.u32 %v849, 2147483648
      %v925 = vsel %vm923, %v924, %v922
      %v926 = vrsqrt.pop %v850
      %v927 = vmul.f32 %v850, %v926
      %vm928 = vcmp.eq.f32.partialorder %v850, inf
      %v929 = vsel %vm928, %v850, %v927
      %vm930 = vcmp.eq.f32.partialorder %v850, 0.0
      %v931 = vand.u32 %v850, 2147483648
      %v932 = vsel %vm930, %v931, %v929
      %v933 = vrsqrt.pop %v851
      %v934 = vmul.f32 %v851, %v933
      %vm935 = vcmp.eq.f32.partialorder %v851, inf
      %v936 = vsel %vm935, %v851, %v934
      %vm937 = vcmp.eq.f32.partialorder %v851, 0.0
      %v938 = vand.u32 %v851, 2147483648
      %v939 = vsel %vm937, %v938, %v936
      %v940 = vrsqrt.pop %v852
      %v941 = vmul.f32 %v852, %v940
      %vm942 = vcmp.eq.f32.partialorder %v852, inf
      %v943 = vsel %vm942, %v852, %v941
      %vm944 = vcmp.eq.f32.partialorder %v852, 0.0
      %v945 = vand.u32 %v852, 2147483648
      %v946 = vsel %vm944, %v945, %v943
      %v947 = vrsqrt.pop %v853
      %v948 = vmul.f32 %v853, %v947
      %vm949 = vcmp.eq.f32.partialorder %v853, inf
      %v950 = vsel %vm949, %v853, %v948
      %vm951 = vcmp.eq.f32.partialorder %v853, 0.0
      %v952 = vand.u32 %v853, 2147483648
      %v953 = vsel %vm951, %v952, %v950
      %v954 = vrsqrt.pop %v854
      %v955 = vmul.f32 %v854, %v954
      %vm956 = vcmp.eq.f32.partialorder %v854, inf
      %v957 = vsel %vm956, %v854, %v955
      %vm958 = vcmp.eq.f32.partialorder %v854, 0.0
      %v959 = vand.u32 %v854, 2147483648
      %v960 = vsel %vm958, %v959, %v957
      %v961 = vrsqrt.pop %v855
      %v962 = vmul.f32 %v855, %v961
      %vm963 = vcmp.eq.f32.partialorder %v855, inf
      %v964 = vsel %vm963, %v855, %v962
      %vm965 = vcmp.eq.f32.partialorder %v855, 0.0
      %v966 = vand.u32 %v855, 2147483648
      %v967 = vsel %vm965, %v966, %v964
      %v968 = vld [vmem:[%s296] sm:$0xff]
      %v969 = vld [vmem:[%s296 + $0x8] sm:$0xff]
      %v970 = vld [vmem:[%s296 + $0x10] sm:$0xff]
      %v971 = vld [vmem:[%s296 + $0x18] sm:$0xff]
      %v972 = vld [vmem:[%s296 + $0x20] sm:$0xff]
      %v973 = vld [vmem:[%s296 + $0x28] sm:$0xff]
      %v974 = vld [vmem:[%s296 + $0x30] sm:$0xff]
      %v975 = vld [vmem:[%s296 + $0x38] sm:$0xff]
      %v976 = vld [vmem:[%s296 + $0x40] sm:$0xff]
      %v977 = vld [vmem:[%s296 + $0x48] sm:$0xff]
      %v978 = vld [vmem:[%s296 + $0x50] sm:$0xff]
      %v979 = vld [vmem:[%s296 + $0x58] sm:$0xff]
      %v980 = vld [vmem:[%s296 + $0x60] sm:$0xff]
      %v981 = vld [vmem:[%s296 + $0x68] sm:$0xff]
      %v982 = vld [vmem:[%s296 + $0x70] sm:$0xff]
      %v983 = vld [vmem:[%s296 + $0x78] sm:$0xff]
      %v984 = vld [vmem:[%s302] sm:$0xff]
      %v985 = vld [vmem:[%s302 + $0x8] sm:$0xff]
      %v986 = vld [vmem:[%s302 + $0x10] sm:$0xff]
      %v987 = vld [vmem:[%s302 + $0x18] sm:$0xff]
      %v988 = vld [vmem:[%s302 + $0x20] sm:$0xff]
      %v989 = vld [vmem:[%s302 + $0x28] sm:$0xff]
      %v990 = vld [vmem:[%s302 + $0x30] sm:$0xff]
      %v991 = vld [vmem:[%s302 + $0x38] sm:$0xff]
      %v992 = vld [vmem:[%s302 + $0x40] sm:$0xff]
      %v993 = vld [vmem:[%s302 + $0x48] sm:$0xff]
      %v994 = vld [vmem:[%s302 + $0x50] sm:$0xff]
      %v995 = vld [vmem:[%s302 + $0x58] sm:$0xff]
      %v996 = vld [vmem:[%s302 + $0x60] sm:$0xff]
      %v997 = vld [vmem:[%s302 + $0x68] sm:$0xff]
      %v998 = vld [vmem:[%s302 + $0x70] sm:$0xff]
      %v999 = vld [vmem:[%s302 + $0x78] sm:$0xff]
      %v1001 = vsel %vm345, %v968, 0
      %v1004 = vsel %vm345, %v969, 0
      %v1007 = vsel %vm345, %v970, 0
      %v1010 = vsel %vm345, %v971, 0
      %v1013 = vsel %vm345, %v972, 0
      %v1016 = vsel %vm345, %v973, 0
      %v1019 = vsel %vm345, %v974, 0
      %v1022 = vsel %vm345, %v975, 0
      %v1025 = vsel %vm345, %v976, 0
      %v1028 = vsel %vm345, %v977, 0
      %v1031 = vsel %vm345, %v978, 0
      %v1034 = vsel %vm345, %v979, 0
      %v1037 = vsel %vm345, %v980, 0
      %v1040 = vsel %vm345, %v981, 0
      %v1043 = vsel %vm345, %v982, 0
      %v1046 = vsel %vm345, %v983, 0
      %v1049 = vsel %vm345, %v984, 0
      %v1052 = vsel %vm345, %v985, 0
      %v1055 = vsel %vm345, %v986, 0
      %v1058 = vsel %vm345, %v987, 0
      %v1061 = vsel %vm345, %v988, 0
      %v1064 = vsel %vm345, %v989, 0
      %v1067 = vsel %vm345, %v990, 0
      %v1070 = vsel %vm345, %v991, 0
      %v1073 = vsel %vm345, %v992, 0
      %v1076 = vsel %vm345, %v993, 0
      %v1079 = vsel %vm345, %v994, 0
      %v1082 = vsel %vm345, %v995, 0
      %v1085 = vsel %vm345, %v996, 0
      %v1088 = vsel %vm345, %v997, 0
      %v1091 = vsel %vm345, %v998, 0
      %v1094 = vsel %vm345, %v999, 0
      %1096 = vmatprep.subr.mxu0 0.0
      %1097 = vmatpush1.xpose.msra.mxu0 %v1049
      %1098 = vmatprep.subr.mxu0 0.0
      %1099 = vmatpush1.xpose.msra.mxu0 %v1052
      %1100 = vmatprep.subr.mxu0 0.0
      %1101 = vmatpush1.xpose.msra.mxu0 %v1055
      %1102 = vmatprep.subr.mxu0 0.0
      %1103 = vmatpush1.xpose.msra.mxu0 %v1058
      %1104 = vmatprep.subr.mxu0 0.0
      %1105 = vmatpush1.xpose.msra.mxu0 %v1061
      %1106 = vmatprep.subr.mxu0 0.0
      %1107 = vmatpush1.xpose.msra.mxu0 %v1064
      %1108 = vmatprep.subr.mxu0 0.0
      %1109 = vmatpush1.xpose.msra.mxu0 %v1067
      %1110 = vmatprep.subr.mxu0 0.0
      %1111 = vmatpush1.xpose.msra.mxu0 %v1070
      %1112 = vmatprep.subr.mxu0 0.0
      %1113 = vmatpush1.xpose.msra.mxu0 %v1073
      %1114 = vmatprep.subr.mxu0 0.0
      %1115 = vmatpush1.xpose.msra.mxu0 %v1076
      %1116 = vmatprep.subr.mxu0 0.0
      %1117 = vmatpush1.xpose.msra.mxu0 %v1079
      %1118 = vmatprep.subr.mxu0 0.0
      %1119 = vmatpush1.xpose.msra.mxu0 %v1082
      %1120 = vmatprep.subr.mxu0 0.0
      %1121 = vmatpush1.xpose.msra.mxu0 %v1085
      %1122 = vmatprep.subr.mxu0 0.0
      %1123 = vmatpush1.xpose.msra.mxu0 %v1088
      %1124 = vmatprep.subr.mxu0 0.0
      %1125 = vmatpush1.xpose.msra.mxu0 %v1091
      %1126 = vmatprep.subr.mxu0 0.0
      %1127 = vmatpush1.xpose.msra.mxu0 %v1094
      %1128 = vmatprep.subr.mxu0 0.0
      %1129 = vmatpush1.xpose.msra.mxu0 0.0
      %1130 = vmatprep.subr.mxu0 0.0
      %1131 = vmatpush1.xpose.msra.mxu0 0.0
      %1132 = vmatprep.subr.mxu0 0.0
      %1133 = vmatpush1.xpose.msra.mxu0 0.0
      %1134 = vmatprep.subr.mxu0 0.0
      %1135 = vmatpush1.xpose.msra.mxu0 0.0
      %1136 = vmatprep.subr.mxu0 0.0
      %1137 = vmatpush1.xpose.msra.mxu0 0.0
      %1138 = vmatprep.subr.mxu0 0.0
      %1139 = vmatpush1.xpose.msra.mxu0 0.0
      %1140 = vmatprep.subr.mxu0 0.0
      %1141 = vmatpush1.xpose.msra.mxu0 0.0
      %1142 = vmatprep.subr.mxu0 0.0
      %1143 = vmatpush1.xpose.msra.mxu0 0.0
      %1144 = vmatprep.subr.mxu0 0.0
      %1145 = vmatpush1.xpose.msra.mxu0 0.0
      %1146 = vmatprep.subr.mxu0 0.0
      %1147 = vmatpush1.xpose.msra.mxu0 0.0
      %1148 = vmatprep.subr.mxu0 0.0
      %1149 = vmatpush1.xpose.msra.mxu0 0.0
      %1150 = vmatprep.subr.mxu0 0.0
      %1151 = vmatpush1.xpose.msra.mxu0 0.0
      %1152 = vmatprep.subr.mxu0 0.0
      %1153 = vmatpush1.xpose.msra.mxu0 0.0
      %1154 = vmatprep.subr.mxu0 0.0
      %1155 = vmatpush1.xpose.msra.mxu0 0.0
      %1156 = vmatprep.subr.mxu0 0.0
      %1157 = vmatpush1.xpose.msra.mxu0 0.0
      %1158 = vmatprep.subr.mxu0 0.0
      %1159 = vmatpush1.xpose.msra.mxu0 0.0
      %1160 = vmatprep.mubr.f32.mxu0 0.0
      %1161 = vmatmul.mubr.f32.gmra.mrb[0].mxu0 %v1001
      %v1162 = vpop.f32.mrb[0].mxu0
      %v1163 = vadd.f32 0.0, %v1162
      %v1164 = vpop.f32.mrb[0].mxu0
      %1165 = vmatprep.mubr.f32.mxu0 0.0
      %1166 = vmatmul.mubr.f32.gmra.mrb[0].mxu0 %v1004
      %v1167 = vpop.f32.mrb[0].mxu0
      %v1168 = vadd.f32 0.0, %v1167
      %v1169 = vpop.f32.mrb[0].mxu0
      %1170 = vmatprep.mubr.f32.mxu0 0.0
      %1171 = vmatmul.mubr.f32.gmra.mrb[0].mxu0 %v1007
      %v1172 = vpop.f32.mrb[0].mxu0
      %v1173 = vadd.f32 0.0, %v1172
      %v1174 = vpop.f32.mrb[0].mxu0
      %1175 = vmatprep.mubr.f32.mxu0 0.0
      %1176 = vmatmul.mubr.f32.gmra.mrb[0].mxu0 %v1010
      %v1177 = vpop.f32.mrb[0].mxu0
      %v1178 = vadd.f32 0.0, %v1177
      %v1179 = vpop.f32.mrb[0].mxu0
      %1180 = vmatprep.mubr.f32.mxu0 0.0
      %1181 = vmatmul.mubr.f32.gmra.mrb[0].mxu0 %v1013
      %v1182 = vpop.f32.mrb[0].mxu0
      %v1183 = vadd.f32 0.0, %v1182
      %v1184 = vpop.f32.mrb[0].mxu0
      %1185 = vmatprep.mubr.f32.mxu0 0.0
      %1186 = vmatmul.mubr.f32.gmra.mrb[0].mxu0 %v1016
      %v1187 = vpop.f32.mrb[0].mxu0
      %v1188 = vadd.f32 0.0, %v1187
      %v1189 = vpop.f32.mrb[0].mxu0
      %1190 = vmatprep.mubr.f32.mxu0 0.0
      %1191 = vmatmul.mubr.f32.gmra.mrb[0].mxu0 %v1019
      %v1192 = vpop.f32.mrb[0].mxu0
      %v1193 = vadd.f32 0.0, %v1192
      %v1194 = vpop.f32.mrb[0].mxu0
      %1195 = vmatprep.mubr.f32.mxu0 0.0
      %1196 = vmatmul.mubr.f32.gmra.mrb[0].mxu0 %v1022
      %v1197 = vpop.f32.mrb[0].mxu0
      %v1198 = vadd.f32 0.0, %v1197
      %v1199 = vpop.f32.mrb[0].mxu0
      %1200 = vmatprep.mubr.f32.mxu0 0.0
      %1201 = vmatmul.mubr.f32.gmra.mrb[0].mxu0 %v1025
      %v1202 = vpop.f32.mrb[0].mxu0
      %v1203 = vadd.f32 0.0, %v1202
      %v1204 = vpop.f32.mrb[0].mxu0
      %1205 = vmatprep.mubr.f32.mxu0 0.0
      %1206 = vmatmul.mubr.f32.gmra.mrb[0].mxu0 %v1028
      %v1207 = vpop.f32.mrb[0].mxu0
      %v1208 = vadd.f32 0.0, %v1207
      %v1209 = vpop.f32.mrb[0].mxu0
      %1210 = vmatprep.mubr.f32.mxu0 0.0
      %1211 = vmatmul.mubr.f32.gmra.mrb[0].mxu0 %v1031
      %v1212 = vpop.f32.mrb[0].mxu0
      %v1213 = vadd.f32 0.0, %v1212
      %v1214 = vpop.f32.mrb[0].mxu0
      %1215 = vmatprep.mubr.f32.mxu0 0.0
      %1216 = vmatmul.mubr.f32.gmra.mrb[0].mxu0 %v1034
      %v1217 = vpop.f32.mrb[0].mxu0
      %v1218 = vadd.f32 0.0, %v1217
      %v1219 = vpop.f32.mrb[0].mxu0
      %1220 = vmatprep.mubr.f32.mxu0 0.0
      %1221 = vmatmul.mubr.f32.gmra.mrb[0].mxu0 %v1037
      %v1222 = vpop.f32.mrb[0].mxu0
      %v1223 = vadd.f32 0.0, %v1222
      %v1224 = vpop.f32.mrb[0].mxu0
      %1225 = vmatprep.mubr.f32.mxu0 0.0
      %1226 = vmatmul.mubr.f32.gmra.mrb[0].mxu0 %v1040
      %v1227 = vpop.f32.mrb[0].mxu0
      %v1228 = vadd.f32 0.0, %v1227
      %v1229 = vpop.f32.mrb[0].mxu0
      %1230 = vmatprep.mubr.f32.mxu0 0.0
      %1231 = vmatmul.mubr.f32.gmra.mrb[0].mxu0 %v1043
      %v1232 = vpop.f32.mrb[0].mxu0
      %v1233 = vadd.f32 0.0, %v1232
      %v1234 = vpop.f32.mrb[0].mxu0
      %1235 = vmatprep.mubr.f32.mxu0 0.0
      %1236 = vmatmul.mubr.f32.gmra.mrb[0].mxu0 %v1046
      %v1237 = vpop.f32.mrb[0].mxu0
      %v1238 = vadd.f32 0.0, %v1237
      %v1239 = vpop.f32.mrb[0].mxu0
      %1240 = vdwg.mxu0
      %v1241 = vmul.f32 %v968, %v968
      %v1242 = vmul.f32 %v969, %v969
      %v1243 = vmul.f32 %v970, %v970
      %v1244 = vmul.f32 %v971, %v971
      %v1245 = vmul.f32 %v972, %v972
      %v1246 = vmul.f32 %v973, %v973
      %v1247 = vmul.f32 %v974, %v974
      %v1248 = vmul.f32 %v975, %v975
      %v1249 = vmul.f32 %v976, %v976
      %v1250 = vmul.f32 %v977, %v977
      %v1251 = vmul.f32 %v978, %v978
      %v1252 = vmul.f32 %v979, %v979
      %v1253 = vmul.f32 %v980, %v980
      %v1254 = vmul.f32 %v981, %v981
      %v1255 = vmul.f32 %v982, %v982
      %v1256 = vmul.f32 %v983, %v983
      %v1257 = vsel %vm345, %v1241, 0.0
      %1258 = vadd.xlane.f32.xlu0 %v1257
      %v1259 = vpop.xlane.xlu0 %1258
      %v1260 = vsel %vm345, %v1242, 0.0
      %1261 = vadd.xlane.f32.xlu0 %v1260
      %v1262 = vpop.xlane.xlu0 %1261
      %v1263 = vsel %vm345, %v1243, 0.0
      %1264 = vadd.xlane.f32.xlu0 %v1263
      %v1265 = vpop.xlane.xlu0 %1264
      %v1266 = vsel %vm345, %v1244, 0.0
      %1267 = vadd.xlane.f32.xlu0 %v1266
      %v1268 = vpop.xlane.xlu0 %1267
      %v1269 = vsel %vm345, %v1245, 0.0
      %1270 = vadd.xlane.f32.xlu0 %v1269
      %v1271 = vpop.xlane.xlu0 %1270
      %v1272 = vsel %vm345, %v1246, 0.0
      %1273 = vadd.xlane.f32.xlu0 %v1272
      %v1274 = vpop.xlane.xlu0 %1273
      %v1275 = vsel %vm345, %v1247, 0.0
      %1276 = vadd.xlane.f32.xlu0 %v1275
      %v1277 = vpop.xlane.xlu0 %1276
      %v1278 = vsel %vm345, %v1248, 0.0
      %1279 = vadd.xlane.f32.xlu0 %v1278
      %v1280 = vpop.xlane.xlu0 %1279
      %v1281 = vsel %vm345, %v1249, 0.0
      %1282 = vadd.xlane.f32.xlu0 %v1281
      %v1283 = vpop.xlane.xlu0 %1282
      %v1284 = vsel %vm345, %v1250, 0.0
      %1285 = vadd.xlane.f32.xlu0 %v1284
      %v1286 = vpop.xlane.xlu0 %1285
      %v1287 = vsel %vm345, %v1251, 0.0
      %1288 = vadd.xlane.f32.xlu0 %v1287
      %v1289 = vpop.xlane.xlu0 %1288
      %v1290 = vsel %vm345, %v1252, 0.0
      %1291 = vadd.xlane.f32.xlu0 %v1290
      %v1292 = vpop.xlane.xlu0 %1291
      %v1293 = vsel %vm345, %v1253, 0.0
      %1294 = vadd.xlane.f32.xlu0 %v1293
      %v1295 = vpop.xlane.xlu0 %1294
      %v1296 = vsel %vm345, %v1254, 0.0
      %1297 = vadd.xlane.f32.xlu0 %v1296
      %v1298 = vpop.xlane.xlu0 %1297
      %v1299 = vsel %vm345, %v1255, 0.0
      %1300 = vadd.xlane.f32.xlu0 %v1299
      %v1301 = vpop.xlane.xlu0 %1300
      %v1302 = vsel %vm345, %v1256, 0.0
      %1303 = vadd.xlane.f32.xlu0 %v1302
      %v1304 = vpop.xlane.xlu0 %1303
      %v1305 = vmul.f32 %v984, %v984
      %v1306 = vmul.f32 %v985, %v985
      %v1307 = vmul.f32 %v986, %v986
      %v1308 = vmul.f32 %v987, %v987
      %v1309 = vmul.f32 %v988, %v988
      %v1310 = vmul.f32 %v989, %v989
      %v1311 = vmul.f32 %v990, %v990
      %v1312 = vmul.f32 %v991, %v991
      %v1313 = vmul.f32 %v992, %v992
      %v1314 = vmul.f32 %v993, %v993
      %v1315 = vmul.f32 %v994, %v994
      %v1316 = vmul.f32 %v995, %v995
      %v1317 = vmul.f32 %v996, %v996
      %v1318 = vmul.f32 %v997, %v997
      %v1319 = vmul.f32 %v998, %v998
      %v1320 = vmul.f32 %v999, %v999
      %v1322 = vsel %vm345, %v1305, 0
      %v1325 = vsel %vm345, %v1306, 0
      %v1328 = vsel %vm345, %v1307, 0
      %v1331 = vsel %vm345, %v1308, 0
      %v1334 = vsel %vm345, %v1309, 0
      %v1337 = vsel %vm345, %v1310, 0
      %v1340 = vsel %vm345, %v1311, 0
      %v1343 = vsel %vm345, %v1312, 0
      %v1346 = vsel %vm345, %v1313, 0
      %v1349 = vsel %vm345, %v1314, 0
      %v1352 = vsel %vm345, %v1315, 0
      %v1355 = vsel %vm345, %v1316, 0
      %v1358 = vsel %vm345, %v1317, 0
      %v1361 = vsel %vm345, %v1318, 0
      %v1364 = vsel %vm345, %v1319, 0
      %v1367 = vsel %vm345, %v1320, 0
      %1369 = vmatprep.subr.mxu0 0.0
      %1370 = vmatpush1.xpose.msra.mxu0 %v1322
      %1371 = vmatprep.subr.mxu0 0.0
      %1372 = vmatpush1.xpose.msra.mxu0 %v1325
      %1373 = vmatprep.subr.mxu0 0.0
      %1374 = vmatpush1.xpose.msra.mxu0 %v1328
      %1375 = vmatprep.subr.mxu0 0.0
      %1376 = vmatpush1.xpose.msra.mxu0 %v1331
      %1377 = vmatprep.subr.mxu0 0.0
      %1378 = vmatpush1.xpose.msra.mxu0 %v1334
      %1379 = vmatprep.subr.mxu0 0.0
      %1380 = vmatpush1.xpose.msra.mxu0 %v1337
      %1381 = vmatprep.subr.mxu0 0.0
      %1382 = vmatpush1.xpose.msra.mxu0 %v1340
      %1383 = vmatprep.subr.mxu0 0.0
      %1384 = vmatpush1.xpose.msra.mxu0 %v1343
      %1385 = vmatprep.subr.mxu0 0.0
      %1386 = vmatpush1.xpose.msra.mxu0 %v1346
      %1387 = vmatprep.subr.mxu0 0.0
      %1388 = vmatpush1.xpose.msra.mxu0 %v1349
      %1389 = vmatprep.subr.mxu0 0.0
      %1390 = vmatpush1.xpose.msra.mxu0 %v1352
      %1391 = vmatprep.subr.mxu0 0.0
      %1392 = vmatpush1.xpose.msra.mxu0 %v1355
      %1393 = vmatprep.subr.mxu0 0.0
      %1394 = vmatpush1.xpose.msra.mxu0 %v1358
      %1395 = vmatprep.subr.mxu0 0.0
      %1396 = vmatpush1.xpose.msra.mxu0 %v1361
      %1397 = vmatprep.subr.mxu0 0.0
      %1398 = vmatpush1.xpose.msra.mxu0 %v1364
      %1399 = vmatprep.subr.mxu0 0.0
      %1400 = vmatpush1.xpose.msra.mxu0 %v1367
      %1401 = vmatprep.subr.mxu0 0.0
      %1402 = vmatpush1.xpose.msra.mxu0 0.0
      %1403 = vmatprep.subr.mxu0 0.0
      %1404 = vmatpush1.xpose.msra.mxu0 0.0
      %1405 = vmatprep.subr.mxu0 0.0
      %1406 = vmatpush1.xpose.msra.mxu0 0.0
      %1407 = vmatprep.subr.mxu0 0.0
      %1408 = vmatpush1.xpose.msra.mxu0 0.0
      %1409 = vmatprep.subr.mxu0 0.0
      %1410 = vmatpush1.xpose.msra.mxu0 0.0
      %1411 = vmatprep.subr.mxu0 0.0
      %1412 = vmatpush1.xpose.msra.mxu0 0.0
      %1413 = vmatprep.subr.mxu0 0.0
      %1414 = vmatpush1.xpose.msra.mxu0 0.0
      %1415 = vmatprep.subr.mxu0 0.0
      %1416 = vmatpush1.xpose.msra.mxu0 0.0
      %1417 = vmatprep.subr.mxu0 0.0
      %1418 = vmatpush1.xpose.msra.mxu0 0.0
      %1419 = vmatprep.subr.mxu0 0.0
      %1420 = vmatpush1.xpose.msra.mxu0 0.0
      %1421 = vmatprep.subr.mxu0 0.0
      %1422 = vmatpush1.xpose.msra.mxu0 0.0
      %1423 = vmatprep.subr.mxu0 0.0
      %1424 = vmatpush1.xpose.msra.mxu0 0.0
      %1425 = vmatprep.subr.mxu0 0.0
      %1426 = vmatpush1.xpose.msra.mxu0 0.0
      %1427 = vmatprep.subr.mxu0 0.0
      %1428 = vmatpush1.xpose.msra.mxu0 0.0
      %1429 = vmatprep.subr.mxu0 0.0
      %1430 = vmatpush1.xpose.msra.mxu0 0.0
      %1431 = vmatprep.subr.mxu0 0.0
      %1432 = vmatpush1.xpose.msra.mxu0 0.0
      %1433 = vmatprep.mubr.f32.mxu0 0.0
      %1434 = vmatmul.mubr.f32.gmra.mrb[0].mxu0 %v668
      %v1435 = vpop.f32.mrb[0].mxu0
      %v1436 = vadd.f32 0.0, %v1435
      %v1437 = vpop.f32.mrb[0].mxu0
      %1438 = vdwg.mxu0
      %v1439 = vlaneseq
      %v1440 = vshrl.u32 %v1439, 7
      %v1441 = vsub.s32 0, %v1440
      %v1442 = vrot.slane %v1436, %v1441
      %v1443 = vadd.f32 %v1259, %v1442
      %v1444 = vadd.f32 %v1262, %v1442
      %v1445 = vadd.f32 %v1265, %v1442
      %v1446 = vadd.f32 %v1268, %v1442
      %v1447 = vadd.f32 %v1271, %v1442
      %v1448 = vadd.f32 %v1274, %v1442
      %v1449 = vadd.f32 %v1277, %v1442
      %v1450 = vadd.f32 %v1280, %v1442
      %v1451 = vadd.f32 %v1283, %v1442
      %v1452 = vadd.f32 %v1286, %v1442
      %v1453 = vadd.f32 %v1289, %v1442
      %v1454 = vadd.f32 %v1292, %v1442
      %v1455 = vadd.f32 %v1295, %v1442
      %v1456 = vadd.f32 %v1298, %v1442
      %v1457 = vadd.f32 %v1301, %v1442
      %v1458 = vadd.f32 %v1304, %v1442
      %v1459 = vmul.f32 %v1163, 2.0
      %v1460 = vmul.f32 %v1168, 2.0
      %v1461 = vmul.f32 %v1173, 2.0
      %v1462 = vmul.f32 %v1178, 2.0
      %v1463 = vmul.f32 %v1183, 2.0
      %v1464 = vmul.f32 %v1188, 2.0
      %v1465 = vmul.f32 %v1193, 2.0
      %v1466 = vmul.f32 %v1198, 2.0
      %v1467 = vmul.f32 %v1203, 2.0
      %v1468 = vmul.f32 %v1208, 2.0
      %v1469 = vmul.f32 %v1213, 2.0
      %v1470 = vmul.f32 %v1218, 2.0
      %v1471 = vmul.f32 %v1223, 2.0
      %v1472 = vmul.f32 %v1228, 2.0
      %v1473 = vmul.f32 %v1233, 2.0
      %v1474 = vmul.f32 %v1238, 2.0
      %v1475 = vsub.f32 %v1443, %v1459
      %v1476 = vsub.f32 %v1444, %v1460
      %v1477 = vsub.f32 %v1445, %v1461
      %v1478 = vsub.f32 %v1446, %v1462
      %v1479 = vsub.f32 %v1447, %v1463
      %v1480 = vsub.f32 %v1448, %v1464
      %v1481 = vsub.f32 %v1449, %v1465
      %v1482 = vsub.f32 %v1450, %v1466
      %v1483 = vsub.f32 %v1451, %v1467
      %v1484 = vsub.f32 %v1452, %v1468
      %v1485 = vsub.f32 %v1453, %v1469
      %v1486 = vsub.f32 %v1454, %v1470
      %v1487 = vsub.f32 %v1455, %v1471
      %v1488 = vsub.f32 %v1456, %v1472
      %v1489 = vsub.f32 %v1457, %v1473
      %v1490 = vsub.f32 %v1458, %v1474
      %v1491 = vmax.f32 %v1475, 0.0
      %v1492 = vmax.f32 %v1476, 0.0
      %v1493 = vmax.f32 %v1477, 0.0
      %v1494 = vmax.f32 %v1478, 0.0
      %v1495 = vmax.f32 %v1479, 0.0
      %v1496 = vmax.f32 %v1480, 0.0
      %v1497 = vmax.f32 %v1481, 0.0
      %v1498 = vmax.f32 %v1482, 0.0
      %v1499 = vmax.f32 %v1483, 0.0
      %v1500 = vmax.f32 %v1484, 0.0
      %v1501 = vmax.f32 %v1485, 0.0
      %v1502 = vmax.f32 %v1486, 0.0
      %v1503 = vmax.f32 %v1487, 0.0
      %v1504 = vmax.f32 %v1488, 0.0
      %v1505 = vmax.f32 %v1489, 0.0
      %v1506 = vmax.f32 %v1490, 0.0
      %v1507 = vrsqrt.pop %v1491
      %v1508 = vmul.f32 %v1491, %v1507
      %vm1509 = vcmp.eq.f32.partialorder %v1491, inf
      %v1510 = vsel %vm1509, %v1491, %v1508
      %vm1511 = vcmp.eq.f32.partialorder %v1491, 0.0
      %v1512 = vand.u32 %v1491, 2147483648
      %v1513 = vsel %vm1511, %v1512, %v1510
      %v1514 = vrsqrt.pop %v1492
      %v1515 = vmul.f32 %v1492, %v1514
      %vm1516 = vcmp.eq.f32.partialorder %v1492, inf
      %v1517 = vsel %vm1516, %v1492, %v1515
      %vm1518 = vcmp.eq.f32.partialorder %v1492, 0.0
      %v1519 = vand.u32 %v1492, 2147483648
      %v1520 = vsel %vm1518, %v1519, %v1517
      %v1521 = vrsqrt.pop %v1493
      %v1522 = vmul.f32 %v1493, %v1521
      %vm1523 = vcmp.eq.f32.partialorder %v1493, inf
      %v1524 = vsel %vm1523, %v1493, %v1522
      %vm1525 = vcmp.eq.f32.partialorder %v1493, 0.0
      %v1526 = vand.u32 %v1493, 2147483648
      %v1527 = vsel %vm1525, %v1526, %v1524
      %v1528 = vrsqrt.pop %v1494
      %v1529 = vmul.f32 %v1494, %v1528
      %vm1530 = vcmp.eq.f32.partialorder %v1494, inf
      %v1531 = vsel %vm1530, %v1494, %v1529
      %vm1532 = vcmp.eq.f32.partialorder %v1494, 0.0
      %v1533 = vand.u32 %v1494, 2147483648
      %v1534 = vsel %vm1532, %v1533, %v1531
      %v1535 = vrsqrt.pop %v1495
      %v1536 = vmul.f32 %v1495, %v1535
      %vm1537 = vcmp.eq.f32.partialorder %v1495, inf
      %v1538 = vsel %vm1537, %v1495, %v1536
      %vm1539 = vcmp.eq.f32.partialorder %v1495, 0.0
      %v1540 = vand.u32 %v1495, 2147483648
      %v1541 = vsel %vm1539, %v1540, %v1538
      %v1542 = vrsqrt.pop %v1496
      %v1543 = vmul.f32 %v1496, %v1542
      %vm1544 = vcmp.eq.f32.partialorder %v1496, inf
      %v1545 = vsel %vm1544, %v1496, %v1543
      %vm1546 = vcmp.eq.f32.partialorder %v1496, 0.0
      %v1547 = vand.u32 %v1496, 2147483648
      %v1548 = vsel %vm1546, %v1547, %v1545
      %v1549 = vrsqrt.pop %v1497
      %v1550 = vmul.f32 %v1497, %v1549
      %vm1551 = vcmp.eq.f32.partialorder %v1497, inf
      %v1552 = vsel %vm1551, %v1497, %v1550
      %vm1553 = vcmp.eq.f32.partialorder %v1497, 0.0
      %v1554 = vand.u32 %v1497, 2147483648
      %v1555 = vsel %vm1553, %v1554, %v1552
      %v1556 = vrsqrt.pop %v1498
      %v1557 = vmul.f32 %v1498, %v1556
      %vm1558 = vcmp.eq.f32.partialorder %v1498, inf
      %v1559 = vsel %vm1558, %v1498, %v1557
      %vm1560 = vcmp.eq.f32.partialorder %v1498, 0.0
      %v1561 = vand.u32 %v1498, 2147483648
      %v1562 = vsel %vm1560, %v1561, %v1559
      %v1563 = vrsqrt.pop %v1499
      %v1564 = vmul.f32 %v1499, %v1563
      %vm1565 = vcmp.eq.f32.partialorder %v1499, inf
      %v1566 = vsel %vm1565, %v1499, %v1564
      %vm1567 = vcmp.eq.f32.partialorder %v1499, 0.0
      %v1568 = vand.u32 %v1499, 2147483648
      %v1569 = vsel %vm1567, %v1568, %v1566
      %v1570 = vrsqrt.pop %v1500
      %v1571 = vmul.f32 %v1500, %v1570
      %vm1572 = vcmp.eq.f32.partialorder %v1500, inf
      %v1573 = vsel %vm1572, %v1500, %v1571
      %vm1574 = vcmp.eq.f32.partialorder %v1500, 0.0
      %v1575 = vand.u32 %v1500, 2147483648
      %v1576 = vsel %vm1574, %v1575, %v1573
      %v1577 = vrsqrt.pop %v1501
      %v1578 = vmul.f32 %v1501, %v1577
      %vm1579 = vcmp.eq.f32.partialorder %v1501, inf
      %v1580 = vsel %vm1579, %v1501, %v1578
      %vm1581 = vcmp.eq.f32.partialorder %v1501, 0.0
      %v1582 = vand.u32 %v1501, 2147483648
      %v1583 = vsel %vm1581, %v1582, %v1580
      %v1584 = vrsqrt.pop %v1502
      %v1585 = vmul.f32 %v1502, %v1584
      %vm1586 = vcmp.eq.f32.partialorder %v1502, inf
      %v1587 = vsel %vm1586, %v1502, %v1585
      %vm1588 = vcmp.eq.f32.partialorder %v1502, 0.0
      %v1589 = vand.u32 %v1502, 2147483648
      %v1590 = vsel %vm1588, %v1589, %v1587
      %v1591 = vrsqrt.pop %v1503
      %v1592 = vmul.f32 %v1503, %v1591
      %vm1593 = vcmp.eq.f32.partialorder %v1503, inf
      %v1594 = vsel %vm1593, %v1503, %v1592
      %vm1595 = vcmp.eq.f32.partialorder %v1503, 0.0
      %v1596 = vand.u32 %v1503, 2147483648
      %v1597 = vsel %vm1595, %v1596, %v1594
      %v1598 = vrsqrt.pop %v1504
      %v1599 = vmul.f32 %v1504, %v1598
      %vm1600 = vcmp.eq.f32.partialorder %v1504, inf
      %v1601 = vsel %vm1600, %v1504, %v1599
      %vm1602 = vcmp.eq.f32.partialorder %v1504, 0.0
      %v1603 = vand.u32 %v1504, 2147483648
      %v1604 = vsel %vm1602, %v1603, %v1601
      %v1605 = vrsqrt.pop %v1505
      %v1606 = vmul.f32 %v1505, %v1605
      %vm1607 = vcmp.eq.f32.partialorder %v1505, inf
      %v1608 = vsel %vm1607, %v1505, %v1606
      %vm1609 = vcmp.eq.f32.partialorder %v1505, 0.0
      %v1610 = vand.u32 %v1505, 2147483648
      %v1611 = vsel %vm1609, %v1610, %v1608
      %v1612 = vrsqrt.pop %v1506
      %v1613 = vmul.f32 %v1506, %v1612
      %vm1614 = vcmp.eq.f32.partialorder %v1506, inf
      %v1615 = vsel %vm1614, %v1506, %v1613
      %vm1616 = vcmp.eq.f32.partialorder %v1506, 0.0
      %v1617 = vand.u32 %v1506, 2147483648
      %v1618 = vsel %vm1616, %v1617, %v1615
      %v1619 = vsub.f32 %v862, %v1513
      %v1620 = vsub.f32 %v869, %v1520
      %v1621 = vsub.f32 %v876, %v1527
      %v1622 = vsub.f32 %v883, %v1534
      %v1623 = vsub.f32 %v890, %v1541
      %v1624 = vsub.f32 %v897, %v1548
      %v1625 = vsub.f32 %v904, %v1555
      %v1626 = vsub.f32 %v911, %v1562
      %v1627 = vsub.f32 %v918, %v1569
      %v1628 = vsub.f32 %v925, %v1576
      %v1629 = vsub.f32 %v932, %v1583
      %v1630 = vsub.f32 %v939, %v1590
      %v1631 = vsub.f32 %v946, %v1597
      %v1632 = vsub.f32 %v953, %v1604
      %v1633 = vsub.f32 %v960, %v1611
      %v1634 = vsub.f32 %v967, %v1618
      %v1635 = vmul.f32 %v1619, %v1619
      %v1636 = vmul.f32 %v1620, %v1620
      %v1637 = vmul.f32 %v1621, %v1621
      %v1638 = vmul.f32 %v1622, %v1622
      %v1639 = vmul.f32 %v1623, %v1623
      %v1640 = vmul.f32 %v1624, %v1624
      %v1641 = vmul.f32 %v1625, %v1625
      %v1642 = vmul.f32 %v1626, %v1626
      %v1643 = vmul.f32 %v1627, %v1627
      %v1644 = vmul.f32 %v1628, %v1628
      %v1645 = vmul.f32 %v1629, %v1629
      %v1646 = vmul.f32 %v1630, %v1630
      %v1647 = vmul.f32 %v1631, %v1631
      %v1648 = vmul.f32 %v1632, %v1632
      %v1649 = vmul.f32 %v1633, %v1633
      %v1650 = vmul.f32 %v1634, %v1634
      %v1651 = vmul.f32 %v1635, 0.6944444
      %v1652 = vmul.f32 %v1636, 0.6944444
      %v1653 = vmul.f32 %v1637, 0.6944444
      %v1654 = vmul.f32 %v1638, 0.6944444
      %v1655 = vmul.f32 %v1639, 0.6944444
      %v1656 = vmul.f32 %v1640, 0.6944444
      %v1657 = vmul.f32 %v1641, 0.6944444
      %v1658 = vmul.f32 %v1642, 0.6944444
      %v1659 = vmul.f32 %v1643, 0.6944444
      %v1660 = vmul.f32 %v1644, 0.6944444
      %v1661 = vmul.f32 %v1645, 0.6944444
      %v1662 = vmul.f32 %v1646, 0.6944444
      %v1663 = vmul.f32 %v1647, 0.6944444
      %v1664 = vmul.f32 %v1648, 0.6944444
      %v1665 = vmul.f32 %v1649, 0.6944444
      %v1666 = vmul.f32 %v1650, 0.6944444
      %v1667 = vsub.f32 1.0, %v1651
      %v1668 = vsub.f32 1.0, %v1652
      %v1669 = vsub.f32 1.0, %v1653
      %v1670 = vsub.f32 1.0, %v1654
      %v1671 = vsub.f32 1.0, %v1655
      %v1672 = vsub.f32 1.0, %v1656
      %v1673 = vsub.f32 1.0, %v1657
      %v1674 = vsub.f32 1.0, %v1658
      %v1675 = vsub.f32 1.0, %v1659
      %v1676 = vsub.f32 1.0, %v1660
      %v1677 = vsub.f32 1.0, %v1661
      %v1678 = vsub.f32 1.0, %v1662
      %v1679 = vsub.f32 1.0, %v1663
      %v1680 = vsub.f32 1.0, %v1664
      %v1681 = vsub.f32 1.0, %v1665
      %v1682 = vsub.f32 1.0, %v1666
      %v1683 = vmax.f32 %v1667, 0.0
      %v1684 = vmax.f32 %v1668, 0.0
      %v1685 = vmax.f32 %v1669, 0.0
      %v1686 = vmax.f32 %v1670, 0.0
      %v1687 = vmax.f32 %v1671, 0.0
      %v1688 = vmax.f32 %v1672, 0.0
      %v1689 = vmax.f32 %v1673, 0.0
      %v1690 = vmax.f32 %v1674, 0.0
      %v1691 = vmax.f32 %v1675, 0.0
      %v1692 = vmax.f32 %v1676, 0.0
      %v1693 = vmax.f32 %v1677, 0.0
      %v1694 = vmax.f32 %v1678, 0.0
      %v1695 = vmax.f32 %v1679, 0.0
      %v1696 = vmax.f32 %v1680, 0.0
      %v1697 = vmax.f32 %v1681, 0.0
      %v1698 = vmax.f32 %v1682, 0.0
      %v1699 = vpack.c.bf16 %v1684, %v1683
      %v1700 = vpack.c.bf16 %v1686, %v1685
      %v1701 = vpack.c.bf16 %v1688, %v1687
      %v1702 = vpack.c.bf16 %v1690, %v1689
      %v1703 = vpack.c.bf16 %v1692, %v1691
      %v1704 = vpack.c.bf16 %v1694, %v1693
      %v1705 = vpack.c.bf16 %v1696, %v1695
      %v1706 = vpack.c.bf16 %v1698, %v1697
      %v1715 = vunpack.c.l.b16 %v1699
      %v1716 = vunpack.c.h.b16 %v1699
      %v1717 = vunpack.c.l.b16 %v1700
      %v1718 = vunpack.c.h.b16 %v1700
      %v1719 = vunpack.c.l.b16 %v1701
      %v1720 = vunpack.c.h.b16 %v1701
      %v1721 = vunpack.c.l.b16 %v1702
      %v1722 = vunpack.c.h.b16 %v1702
      %v1723 = vunpack.c.l.b16 %v1703
      %v1724 = vunpack.c.h.b16 %v1703
      %v1725 = vunpack.c.l.b16 %v1704
      %v1726 = vunpack.c.h.b16 %v1704
      %v1727 = vunpack.c.l.b16 %v1705
      %v1728 = vunpack.c.h.b16 %v1705
      %v1729 = vunpack.c.l.b16 %v1706
      %v1730 = vunpack.c.h.b16 %v1706
      %v1731 = vpack.c.b16 %v1715, %v1715
      %v1732 = vpack.c.b16 %v1716, %v1716
      %v1733 = vpack.c.b16 %v1717, %v1717
      %v1734 = vpack.c.b16 %v1718, %v1718
      %v1735 = vpack.c.b16 %v1719, %v1719
      %v1736 = vpack.c.b16 %v1720, %v1720
      %v1737 = vpack.c.b16 %v1721, %v1721
      %v1738 = vpack.c.b16 %v1722, %v1722
      %v1739 = vpack.c.b16 %v1723, %v1723
      %v1740 = vpack.c.b16 %v1724, %v1724
      %v1741 = vpack.c.b16 %v1725, %v1725
      %v1742 = vpack.c.b16 %v1726, %v1726
      %v1743 = vpack.c.b16 %v1727, %v1727
      %v1744 = vpack.c.b16 %v1728, %v1728
      %v1745 = vpack.c.b16 %v1729, %v1729
      %v1746 = vpack.c.b16 %v1730, %v1730
      %1763 = vst [vmem:[%s311] sm:$0xf] %v1731
      %1764 = vst [vmem:[%s311 + $0x4] sm:$0xf] %v1732
      %1765 = vst [vmem:[%s311 + $0x8] sm:$0xf] %v1733
      %1766 = vst [vmem:[%s311 + $0xc] sm:$0xf] %v1734
      %1767 = vst [vmem:[%s311 + $0x10] sm:$0xf] %v1735
      %1768 = vst [vmem:[%s311 + $0x14] sm:$0xf] %v1736
      %1769 = vst [vmem:[%s311 + $0x18] sm:$0xf] %v1737
      %1770 = vst [vmem:[%s311 + $0x1c] sm:$0xf] %v1738
      %1771 = vst [vmem:[%s311 + $0x20] sm:$0xf] %v1739
      %1772 = vst [vmem:[%s311 + $0x24] sm:$0xf] %v1740
      %1773 = vst [vmem:[%s311 + $0x28] sm:$0xf] %v1741
      %1774 = vst [vmem:[%s311 + $0x2c] sm:$0xf] %v1742
      %1775 = vst [vmem:[%s311 + $0x30] sm:$0xf] %v1743
      %1776 = vst [vmem:[%s311 + $0x34] sm:$0xf] %v1744
      %1777 = vst [vmem:[%s311 + $0x38] sm:$0xf] %v1745
      %1778 = vst [vmem:[%s311 + $0x3c] sm:$0xf] %v1746
      %s1779 = smul.u32 16, %s20
      %p1780 = scmp.lt.s32.totalorder %s19, 1
      %s1781 = scalar_select %p1780, %s19, 1
      %p1782 = scmp.lt.s32.totalorder %s1779, 15
      %s1783 = scalar_select %p1782, %s1779, 15
      %s1784 = smul.addr %s1781, 16
      %s1785 = sadd.s32 %s1783, %s1784
      %s1786 = smul.addr %s1785, 4
      %s1787 = scalar_lea.vmem %s4, %s1786
      // Predicated region
      $region37: #{nonlocal_net_cost.7} parent=35 // pred_check
        %p1788 = pneg %p155
      $region38: #{nonlocal_net_cost.7} parent=35 // pred_check_branch
        %1790 = sbr.rel (%p1788) target = $region40
      $region39: #{nonlocal_net_cost.7} parent=35 // pred_region
        %s1791 = smul.u32 16, %s20
      $region40: #{nonlocal_net_cost.7} parent=35 // pred_fallthru
        _
    $region36: #{nonlocal_net_cost.7} parent=5 // pred_fallthru
      _
    %p1792 = scmp.le.s32.totalorder 2, %s10
    // Predicated region
    $region41: #{nonlocal_net_cost.7} parent=5 // pred_check
      %p1793 = pneg %p1792
    $region42: #{nonlocal_net_cost.7} parent=5 // pred_check_branch
      %1795 = sbr.rel (%p1793) target = $region44
    $region43: #{nonlocal_net_cost.7} parent=5 // pred_region
      %s1796 = ssub.s32 %s10, 2
      // Predicated region
      $region45: #{nonlocal_net_cost.7} parent=43 // pred_check
        %p1797 = pneg %p161
      $region46: #{nonlocal_net_cost.7} parent=43 // pred_check_branch
        %1799 = sbr.rel (%p1797) target = $region48
      $region47: #{nonlocal_net_cost.7} parent=43 // pred_region
        %s1800 = smul.u32 16, %s22
        %p1801 = scmp.lt.s32.totalorder %s21, 1
        %s1802 = scalar_select %p1801, %s21, 1
        %p1803 = scmp.lt.s32.totalorder %s1800, 15
        %s1804 = scalar_select %p1803, %s1800, 15
        %s1805 = smul.addr %s1802, 16
        %s1806 = sadd.s32 %s1804, %s1805
        %s1807 = smul.addr %s1806, 4
        %s1808 = scalar_lea.vmem %s4, %s1807
      $region48: #{nonlocal_net_cost.7} parent=43 // pred_fallthru
        _
    $region44: #{nonlocal_net_cost.7} parent=5 // pred_fallthru
      _
  $region6: #{nonlocal_net_cost.7} parent=0 // loop_footer
    %s14 = sadd.s32 1, %s10
  $region7: #{nonlocal_net_cost.7} parent=0 // loop_footer_branch
    %9 = sbr.rel target = $region3
  $region8: #{nonlocal_net_cost.7} parent=0 // loop_exit
    _

// kernel: nonlocal_net_cost.8
$region0: #{nonlocal_net_cost.8}
  #allocation0 [shape = 'u32[]', space=smem, size = 0x4, offset = 0x4, fixed_abs, tag = 'smem constant byte address 0x4 - core index']
  #allocation1 [shape = 'u32[144,128]{1,0:T(1,128)}', space=vmem, size = 0x12000, scoped, tag = 'internal scratch']
  %s0 = inlined_call_operand.hbm [shape: f32[256,8], index: 0, kind: input, shape index: {}]
  %s1 = inlined_call_operand.hbm [shape: bf16[8,128], index: 1, kind: input, shape index: {}]
  %s2 = inlined_call_operand.hbm [shape: f32[1,128], index: 2, kind: input, shape index: {}]
  %s3 = inlined_call_operand.hbm [shape: f32[1,128], index: 3, kind: input, shape index: {}]
  %s4 = inlined_call_operand.hbm [shape: f32[1,128], index: 4, kind: input, shape index: {}]
  %s5 = inlined_call_operand.hbm [shape: bf16[128,384], index: 5, kind: input, shape index: {}]
  %s6 = inlined_call_operand.hbm [shape: f32[1,384], index: 6, kind: input, shape index: {}]
  %s7 = inlined_call_operand.hbm [shape: f32[256,128], index: 7, kind: output, shape index: {0}]
  %s8 = inlined_call_operand.hbm [shape: bf16[256,128], index: 8, kind: output, shape index: {1}]
  %s9 = inlined_call_operand.hbm [shape: bf16[256,128], index: 9, kind: output, shape index: {2}]
  %s10 = inlined_call_operand.hbm [shape: bf16[256,128], index: 10, kind: output, shape index: {3}]
  %11 = xla_tuple %s7, %s8, %s9, %s10
  %s12 = sld [smem:[#allocation0]]
  $region90: #{nonlocal_net_cost.8} parent=0
    _
  %s14 = ssub.s32 1, %s12
  %s15 = scalar_select 0, %s14, %s12
  $region1: #{nonlocal_net_cost.8} parent=0
    #allocation2 [shape = 'u8[131072]{0}', space=vmem, size = 0x20000, scoped, tag = 'input window, operand 0, single buffered']
    #allocation3 [shape = 's32[1]{0}', space=sflag, size = 0x4, scoped, tag = 'scoped memory for nonlocal_net_cost.8']
    #allocation4 [shape = 's32[1]{0}', space=sflag, size = 0x4, scoped, tag = 'scoped memory for nonlocal_net_cost.8']
    #allocation5 [shape = 'u8[2048]{0}', space=vmem, size = 0x800, scoped, tag = 'input window, operand 1, single buffered']
    #allocation6 [shape = 's32[1]{0}', space=sflag, size = 0x4, scoped, tag = 'scoped memory for nonlocal_net_cost.8']
    #allocation7 [shape = 'u8[512]{0}', space=vmem, size = 0x400, scoped, tag = 'input window, operand 2, single buffered']
    #allocation8 [shape = 'u8[512]{0}', space=vmem, size = 0x400, scoped, tag = 'input window, operand 3, single buffered']
    #allocation9 [shape = 's32[1]{0}', space=sflag, size = 0x4, scoped, tag = 'scoped memory for nonlocal_net_cost.8']
    #allocation10 [shape = 'u8[512]{0}', space=vmem, size = 0x400, scoped, tag = 'input window, operand 4, single buffered']
    #allocation11 [shape = 'u8[98304]{0}', space=vmem, size = 0x18000, scoped, tag = 'input window, operand 5, single buffered']
    #allocation12 [shape = 's32[1]{0}', space=sflag, size = 0x4, scoped, tag = 'scoped memory for nonlocal_net_cost.8']
    #allocation13 [shape = 'u8[1536]{0}', space=vmem, size = 0x800, scoped, tag = 'input window, operand 6, single buffered']
    #allocation14 [shape = 'u8[131072]{0}', space=vmem, size = 0x20000, scoped, tag = 'output window, operand 0, single buffered']
    #allocation15 [shape = 'u8[65536]{0}', space=vmem, size = 0x10000, scoped, tag = 'output window, operand 1, single buffered']
    #allocation16 [shape = 's32[1]{0}', space=sflag, size = 0x4, scoped, tag = 'scoped memory for nonlocal_net_cost.8']
    #allocation17 [shape = 'u8[65536]{0}', space=vmem, size = 0x10000, scoped, tag = 'output window, operand 2, single buffered']
    #allocation18 [shape = 'u8[65536]{0}', space=vmem, size = 0x10000, scoped, tag = 'output window, operand 3, single buffered']
    #allocation19 [shape = 's32[1]{0}', space=sflag, size = 0x4, scoped, tag = 'scoped memory for nonlocal_net_cost.8']
    %16 = vsyncpa [#allocation3], 0
    %17 = vsyncpa [#allocation6], 0
    %18 = vsyncpa [#allocation9], 0
    %19 = vsyncpa [#allocation12], 0
    %20 = vsyncpa [#allocation4], 0
    %21 = vsyncpa [#allocation16], 0
    %22 = vsyncpa [#allocation19], 0
    // Predicated region
    $region2: #{nonlocal_net_cost.8} parent=1 // pred_check
      _
    $region3: #{nonlocal_net_cost.8} parent=1 // pred_check_branch
      %24 = sbr.rel (0) target = $region5
    $region4: #{nonlocal_net_cost.8} parent=1 // pred_region
      %s26 = ssub.s32 4096, 4096
      %27 = vsyncadd [#allocation3], %s26
      %s28 = sshll.u32 [#allocation2], 4
      %s29 = int_to_ptr.vmem [resolvable:$true] %s28
      %34 = dma.hbm_to_vmem [thread:$0]  %s0, 4096, %s29, [#allocation3], 128, 128, 8
    $region5: #{nonlocal_net_cost.8} parent=1 // pred_fallthru
      _
    // Predicated region
    $region6: #{nonlocal_net_cost.8} parent=1 // pred_check
      _
    $region7: #{nonlocal_net_cost.8} parent=1 // pred_check_branch
      %36 = sbr.rel (0) target = $region9
    $region8: #{nonlocal_net_cost.8} parent=1 // pred_region
      %s38 = ssub.s32 64, 64
      %39 = vsyncadd [#allocation6], %s38
      %s41 = sshll.u32 [#allocation5], 4
      %s42 = int_to_ptr.vmem [resolvable:$true] %s41
      %44 = dma.hbm_to_vmem [thread:$0]  %s1, 64, %s42, [#allocation6]
    $region9: #{nonlocal_net_cost.8} parent=1 // pred_fallthru
      _
    // Predicated region
    $region10: #{nonlocal_net_cost.8} parent=1 // pred_check
      _
    $region11: #{nonlocal_net_cost.8} parent=1 // pred_check_branch
      %46 = sbr.rel (0) target = $region13
    $region12: #{nonlocal_net_cost.8} parent=1 // pred_region
      %s48 = ssub.s32 16, 16
      %49 = vsyncadd [#allocation6], %s48
      %s51 = sshll.u32 [#allocation7], 4
      %s52 = int_to_ptr.vmem [resolvable:$true] %s51
      %54 = dma.hbm_to_vmem [thread:$0]  %s2, 16, %s52, [#allocation6]
    $region13: #{nonlocal_net_cost.8} parent=1 // pred_fallthru
      _
    // Predicated region
    $region14: #{nonlocal_net_cost.8} parent=1 // pred_check
      _
    $region15: #{nonlocal_net_cost.8} parent=1 // pred_check_branch
      %56 = sbr.rel (0) target = $region17
    $region16: #{nonlocal_net_cost.8} parent=1 // pred_region
      %s58 = ssub.s32 16, 16
      %59 = vsyncadd [#allocation9], %s58
      %s61 = sshll.u32 [#allocation8], 4
      %s62 = int_to_ptr.vmem [resolvable:$true] %s61
      %64 = dma.hbm_to_vmem [thread:$0]  %s3, 16, %s62, [#allocation9]
    $region17: #{nonlocal_net_cost.8} parent=1 // pred_fallthru
      _
    // Predicated region
    $region18: #{nonlocal_net_cost.8} parent=1 // pred_check
      _
    $region19: #{nonlocal_net_cost.8} parent=1 // pred_check_branch
      %66 = sbr.rel (0) target = $region21
    $region20: #{nonlocal_net_cost.8} parent=1 // pred_region
      %s68 = ssub.s32 16, 16
      %69 = vsyncadd [#allocation9], %s68
      %s71 = sshll.u32 [#allocation10], 4
      %s72 = int_to_ptr.vmem [resolvable:$true] %s71
      %74 = dma.hbm_to_vmem [thread:$0]  %s4, 16, %s72, [#allocation9]
    $region21: #{nonlocal_net_cost.8} parent=1 // pred_fallthru
      _
    // Predicated region
    $region22: #{nonlocal_net_cost.8} parent=1 // pred_check
      _
    $region23: #{nonlocal_net_cost.8} parent=1 // pred_check_branch
      %76 = sbr.rel (0) target = $region25
    $region24: #{nonlocal_net_cost.8} parent=1 // pred_region
      %s78 = ssub.s32 3072, 3072
      %79 = vsyncadd [#allocation12], %s78
      %s80 = sshll.u32 [#allocation11], 4
      %s81 = int_to_ptr.vmem [resolvable:$true] %s80
      %86 = dma.hbm_to_vmem [thread:$0]  %s5, 3072, %s81, [#allocation12], 192, 192, 12
    $region25: #{nonlocal_net_cost.8} parent=1 // pred_fallthru
      _
    // Predicated region
    $region26: #{nonlocal_net_cost.8} parent=1 // pred_check
      _
    $region27: #{nonlocal_net_cost.8} parent=1 // pred_check_branch
      %88 = sbr.rel (0) target = $region29
    $region28: #{nonlocal_net_cost.8} parent=1 // pred_region
      %s90 = ssub.s32 48, 48
      %91 = vsyncadd [#allocation12], %s90
      %s93 = sshll.u32 [#allocation13], 4
      %s94 = int_to_ptr.vmem [resolvable:$true] %s93
      %96 = dma.hbm_to_vmem [thread:$0]  %s6, 48, %s94, [#allocation12]
    $region29: #{nonlocal_net_cost.8} parent=1 // pred_fallthru
      _
    // Predicated region
    $region30: #{nonlocal_net_cost.8} parent=1 // pred_check
      _
    $region31: #{nonlocal_net_cost.8} parent=1 // pred_check_branch
      %98 = sbr.rel (0) target = $region33
    $region32: #{nonlocal_net_cost.8} parent=1 // pred_region
      %99 = dma.done [#allocation3], 4096
    $region33: #{nonlocal_net_cost.8} parent=1 // pred_fallthru
      _
    // Predicated region
    $region34: #{nonlocal_net_cost.8} parent=1 // pred_check
      _
    $region35: #{nonlocal_net_cost.8} parent=1 // pred_check_branch
      %101 = sbr.rel (0) target = $region37
    $region36: #{nonlocal_net_cost.8} parent=1 // pred_region
      %102 = dma.done [#allocation6], 64
    $region37: #{nonlocal_net_cost.8} parent=1 // pred_fallthru
      _
    // Predicated region
    $region38: #{nonlocal_net_cost.8} parent=1 // pred_check
      _
    $region39: #{nonlocal_net_cost.8} parent=1 // pred_check_branch
      %104 = sbr.rel (0) target = $region41
    $region40: #{nonlocal_net_cost.8} parent=1 // pred_region
      %105 = dma.done [#allocation6], 16
    $region41: #{nonlocal_net_cost.8} parent=1 // pred_fallthru
      _
    // Predicated region
    $region42: #{nonlocal_net_cost.8} parent=1 // pred_check
      _
    $region43: #{nonlocal_net_cost.8} parent=1 // pred_check_branch
      %107 = sbr.rel (0) target = $region45
    $region44: #{nonlocal_net_cost.8} parent=1 // pred_region
      %108 = dma.done [#allocation9], 16
    $region45: #{nonlocal_net_cost.8} parent=1 // pred_fallthru
      _
    // Predicated region
    $region46: #{nonlocal_net_cost.8} parent=1 // pred_check
      _
    $region47: #{nonlocal_net_cost.8} parent=1 // pred_check_branch
      %110 = sbr.rel (0) target = $region49
    $region48: #{nonlocal_net_cost.8} parent=1 // pred_region
      %111 = dma.done [#allocation9], 16
    $region49: #{nonlocal_net_cost.8} parent=1 // pred_fallthru
      _
    // Predicated region
    $region50: #{nonlocal_net_cost.8} parent=1 // pred_check
      _
    $region51: #{nonlocal_net_cost.8} parent=1 // pred_check_branch
      %113 = sbr.rel (0) target = $region53
    $region52: #{nonlocal_net_cost.8} parent=1 // pred_region
      %114 = dma.done [#allocation12], 3072
    $region53: #{nonlocal_net_cost.8} parent=1 // pred_fallthru
      _
    // Predicated region
    $region54: #{nonlocal_net_cost.8} parent=1 // pred_check
      _
    $region55: #{nonlocal_net_cost.8} parent=1 // pred_check_branch
      %116 = sbr.rel (0) target = $region57
    $region56: #{nonlocal_net_cost.8} parent=1 // pred_region
      %117 = dma.done [#allocation12], 48
    $region57: #{nonlocal_net_cost.8} parent=1 // pred_fallthru
      _
    %v119 = vld [vmem:[#allocation2] sm:$0xff]
    %v120 = vld [vmem:[#allocation2 + $0x8] sm:$0xff]
    %v121 = vld [vmem:[#allocation2 + $0x10] sm:$0xff]
    %v122 = vld [vmem:[#allocation2 + $0x18] sm:$0xff]
    %v123 = vld [vmem:[#allocation2 + $0x20] sm:$0xff]
    %v124 = vld [vmem:[#allocation2 + $0x28] sm:$0xff]
    %v125 = vld [vmem:[#allocation2 + $0x30] sm:$0xff]
    %v126 = vld [vmem:[#allocation2 + $0x38] sm:$0xff]
    %v127 = vld [vmem:[#allocation2 + $0x40] sm:$0xff]
    %v128 = vld [vmem:[#allocation2 + $0x48] sm:$0xff]
    %v129 = vld [vmem:[#allocation2 + $0x50] sm:$0xff]
    %v130 = vld [vmem:[#allocation2 + $0x58] sm:$0xff]
    %v131 = vld [vmem:[#allocation2 + $0x60] sm:$0xff]
    %v132 = vld [vmem:[#allocation2 + $0x68] sm:$0xff]
    %v133 = vld [vmem:[#allocation2 + $0x70] sm:$0xff]
    %v134 = vld [vmem:[#allocation2 + $0x78] sm:$0xff]
    %v135 = vld [vmem:[#allocation2 + $0x80] sm:$0xff]
    %v136 = vld [vmem:[#allocation2 + $0x88] sm:$0xff]
    %v137 = vld [vmem:[#allocation2 + $0x90] sm:$0xff]
    %v138 = vld [vmem:[#allocation2 + $0x98] sm:$0xff]
    %v139 = vld [vmem:[#allocation2 + $0xa0] sm:$0xff]
    %v140 = vld [vmem:[#allocation2 + $0xa8] sm:$0xff]
    %v141 = vld [vmem:[#allocation2 + $0xb0] sm:$0xff]
    %v142 = vld [vmem:[#allocation2 + $0xb8] sm:$0xff]
    %v143 = vld [vmem:[#allocation2 + $0xc0] sm:$0xff]
    %v144 = vld [vmem:[#allocation2 + $0xc8] sm:$0xff]
    %v145 = vld [vmem:[#allocation2 + $0xd0] sm:$0xff]
    %v146 = vld [vmem:[#allocation2 + $0xd8] sm:$0xff]
    %v147 = vld [vmem:[#allocation2 + $0xe0] sm:$0xff]
    %v148 = vld [vmem:[#allocation2 + $0xe8] sm:$0xff]
    %v149 = vld [vmem:[#allocation2 + $0xf0] sm:$0xff]
    %v150 = vld [vmem:[#allocation2 + $0xf8] sm:$0xff]
    %v151 = vpack.c.bf16 %v120, %v119
    %v152 = vpack.c.bf16 %v122, %v121
    %v153 = vpack.c.bf16 %v124, %v123
    %v154 = vpack.c.bf16 %v126, %v125
    %v155 = vpack.c.bf16 %v128, %v127
    %v156 = vpack.c.bf16 %v130, %v129
    %v157 = vpack.c.bf16 %v132, %v131
    %v158 = vpack.c.bf16 %v134, %v133
    %v159 = vpack.c.bf16 %v136, %v135
    %v160 = vpack.c.bf16 %v138, %v137
    %v161 = vpack.c.bf16 %v140, %v139
    %v162 = vpack.c.bf16 %v142, %v141
    %v163 = vpack.c.bf16 %v144, %v143
    %v164 = vpack.c.bf16 %v146, %v145
    %v165 = vpack.c.bf16 %v148, %v147
    %v166 = vpack.c.bf16 %v150, %v149
    %v167 = vld [vmem:[#allocation5] sm:$0xf]
    %v168 = vld [vmem:[#allocation7] sm:$0x1]
    %v170 = vlaneseq
    %v171 = vshrl.u32 %v170, 7
    %v172 = vsub.s32 0, %v171
    %v173 = vrot.slane %v168, %v172
    %vm175 = vcmask 64512
    %v177 = vsel %vm175, %v151, 0
    %v180 = vsel %vm175, %v152, 0
    %v183 = vsel %vm175, %v153, 0
    %v186 = vsel %vm175, %v154, 0
    %v189 = vsel %vm175, %v155, 0
    %v192 = vsel %vm175, %v156, 0
    %v195 = vsel %vm175, %v157, 0
    %v198 = vsel %vm175, %v158, 0
    %v201 = vsel %vm175, %v159, 0
    %v204 = vsel %vm175, %v160, 0
    %v207 = vsel %vm175, %v161, 0
    %v210 = vsel %vm175, %v162, 0
    %v213 = vsel %vm175, %v163, 0
    %v216 = vsel %vm175, %v164, 0
    %v219 = vsel %vm175, %v165, 0
    %v222 = vsel %vm175, %v166, 0
    %vm224 = vcmask 1043456
    %v226 = vsel %vm224, %v167, 0
    %228 = vmatprep.subr.bf16.mxu0 0
    %229 = vmatpush1.bf16.msra.mxu0 %v226
    %230 = vmatprep.subr.bf16.mxu0 0
    %231 = vmatpush1.bf16.msra.mxu0 0
    %232 = vmatprep.subr.bf16.mxu0 0
    %233 = vmatpush1.bf16.msra.mxu0 0
    %234 = vmatprep.subr.bf16.mxu0 0
    %235 = vmatpush1.bf16.msra.mxu0 0
    %236 = vmatprep.subr.bf16.mxu0 0
    %237 = vmatpush1.bf16.msra.mxu0 0
    %238 = vmatprep.subr.bf16.mxu0 0
    %239 = vmatpush1.bf16.msra.mxu0 0
    %240 = vmatprep.subr.bf16.mxu0 0
    %241 = vmatpush1.bf16.msra.mxu0 0
    %242 = vmatprep.subr.bf16.mxu0 0
    %243 = vmatpush1.bf16.msra.mxu0 0
    %244 = vmatprep.subr.bf16.mxu0 0
    %245 = vmatpush1.bf16.msra.mxu0 0
    %246 = vmatprep.subr.bf16.mxu0 0
    %247 = vmatpush1.bf16.msra.mxu0 0
    %248 = vmatprep.subr.bf16.mxu0 0
    %249 = vmatpush1.bf16.msra.mxu0 0
    %250 = vmatprep.subr.bf16.mxu0 0
    %251 = vmatpush1.bf16.msra.mxu0 0
    %252 = vmatprep.subr.bf16.mxu0 0
    %253 = vmatpush1.bf16.msra.mxu0 0
    %254 = vmatprep.subr.bf16.mxu0 0
    %255 = vmatpush1.bf16.msra.mxu0 0
    %256 = vmatprep.subr.bf16.mxu0 0
    %257 = vmatpush1.bf16.msra.mxu0 0
    %258 = vmatprep.subr.bf16.mxu0 0
    %259 = vmatpush1.bf16.msra.mxu0 0
    %260 = vmatprep.mubr.bf16.mxu0 0
    %261 = vmatmul.mubr.bf16.gmra.mrb[0].mxu0 %v177
    %v262 = vpop.f32.mrb[0].mxu0
    %v263 = vadd.f32 %v173, %v262
    %v264 = vpop.f32.mrb[0].mxu0
    %v265 = vpop.f32.mrb[0].mxu0
    %v266 = vadd.f32 %v173, %v265
    %v267 = vpop.f32.mrb[0].mxu0
    %268 = vmatprep.mubr.bf16.mxu0 0
    %269 = vmatmul.mubr.bf16.gmra.mrb[0].mxu0 %v180
    %v270 = vpop.f32.mrb[0].mxu0
    %v271 = vadd.f32 %v173, %v270
    %v272 = vpop.f32.mrb[0].mxu0
    %v273 = vpop.f32.mrb[0].mxu0
    %v274 = vadd.f32 %v173, %v273
    %v275 = vpop.f32.mrb[0].mxu0
    %276 = vmatprep.mubr.bf16.mxu0 0
    %277 = vmatmul.mubr.bf16.gmra.mrb[0].mxu0 %v183
    %v278 = vpop.f32.mrb[0].mxu0
    %v279 = vadd.f32 %v173, %v278
    %v280 = vpop.f32.mrb[0].mxu0
    %v281 = vpop.f32.mrb[0].mxu0
    %v282 = vadd.f32 %v173, %v281
    %v283 = vpop.f32.mrb[0].mxu0
    %284 = vmatprep.mubr.bf16.mxu0 0
    %285 = vmatmul.mubr.bf16.gmra.mrb[0].mxu0 %v186
    %v286 = vpop.f32.mrb[0].mxu0
    %v287 = vadd.f32 %v173, %v286
    %v288 = vpop.f32.mrb[0].mxu0
    %v289 = vpop.f32.mrb[0].mxu0
    %v290 = vadd.f32 %v173, %v289
    %v291 = vpop.f32.mrb[0].mxu0
    %292 = vmatprep.mubr.bf16.mxu0 0
    %293 = vmatmul.mubr.bf16.gmra.mrb[0].mxu0 %v189
    %v294 = vpop.f32.mrb[0].mxu0
    %v295 = vadd.f32 %v173, %v294
    %v296 = vpop.f32.mrb[0].mxu0
    %v297 = vpop.f32.mrb[0].mxu0
    %v298 = vadd.f32 %v173, %v297
    %v299 = vpop.f32.mrb[0].mxu0
    %300 = vmatprep.mubr.bf16.mxu0 0
    %301 = vmatmul.mubr.bf16.gmra.mrb[0].mxu0 %v192
    %v302 = vpop.f32.mrb[0].mxu0
    %v303 = vadd.f32 %v173, %v302
    %v304 = vpop.f32.mrb[0].mxu0
    %v305 = vpop.f32.mrb[0].mxu0
    %v306 = vadd.f32 %v173, %v305
    %v307 = vpop.f32.mrb[0].mxu0
    %308 = vmatprep.mubr.bf16.mxu0 0
    %309 = vmatmul.mubr.bf16.gmra.mrb[0].mxu0 %v195
    %v310 = vpop.f32.mrb[0].mxu0
    %v311 = vadd.f32 %v173, %v310
    %v312 = vpop.f32.mrb[0].mxu0
    %v313 = vpop.f32.mrb[0].mxu0
    %v314 = vadd.f32 %v173, %v313
    %v315 = vpop.f32.mrb[0].mxu0
    %316 = vmatprep.mubr.bf16.mxu0 0
    %317 = vmatmul.mubr.bf16.gmra.mrb[0].mxu0 %v198
    %v318 = vpop.f32.mrb[0].mxu0
    %v319 = vadd.f32 %v173, %v318
    %v320 = vpop.f32.mrb[0].mxu0
    %v321 = vpop.f32.mrb[0].mxu0
    %v322 = vadd.f32 %v173, %v321
    %v323 = vpop.f32.mrb[0].mxu0
    %324 = vmatprep.mubr.bf16.mxu0 0
    %325 = vmatmul.mubr.bf16.gmra.mrb[0].mxu0 %v201
    %v326 = vpop.f32.mrb[0].mxu0
    %v327 = vadd.f32 %v173, %v326
    %v328 = vpop.f32.mrb[0].mxu0
    %v329 = vpop.f32.mrb[0].mxu0
    %v330 = vadd.f32 %v173, %v329
    %v331 = vpop.f32.mrb[0].mxu0
    %332 = vmatprep.mubr.bf16.mxu0 0
    %333 = vmatmul.mubr.bf16.gmra.mrb[0].mxu0 %v204
    %v334 = vpop.f32.mrb[0].mxu0
    %v335 = vadd.f32 %v173, %v334
    %v336 = vpop.f32.mrb[0].mxu0
    %v337 = vpop.f32.mrb[0].mxu0
    %v338 = vadd.f32 %v173, %v337
    %v339 = vpop.f32.mrb[0].mxu0
    %340 = vmatprep.mubr.bf16.mxu0 0
    %341 = vmatmul.mubr.bf16.gmra.mrb[0].mxu0 %v207
    %v342 = vpop.f32.mrb[0].mxu0
    %v343 = vadd.f32 %v173, %v342
    %v344 = vpop.f32.mrb[0].mxu0
    %v345 = vpop.f32.mrb[0].mxu0
    %v346 = vadd.f32 %v173, %v345
    %v347 = vpop.f32.mrb[0].mxu0
    %348 = vmatprep.mubr.bf16.mxu0 0
    %349 = vmatmul.mubr.bf16.gmra.mrb[0].mxu0 %v210
    %v350 = vpop.f32.mrb[0].mxu0
    %v351 = vadd.f32 %v173, %v350
    %v352 = vpop.f32.mrb[0].mxu0
    %v353 = vpop.f32.mrb[0].mxu0
    %v354 = vadd.f32 %v173, %v353
    %v355 = vpop.f32.mrb[0].mxu0
    %356 = vmatprep.mubr.bf16.mxu0 0
    %357 = vmatmul.mubr.bf16.gmra.mrb[0].mxu0 %v213
    %v358 = vpop.f32.mrb[0].mxu0
    %v359 = vadd.f32 %v173, %v358
    %v360 = vpop.f32.mrb[0].mxu0
    %v361 = vpop.f32.mrb[0].mxu0
    %v362 = vadd.f32 %v173, %v361
    %v363 = vpop.f32.mrb[0].mxu0
    %364 = vmatprep.mubr.bf16.mxu0 0
    %365 = vmatmul.mubr.bf16.gmra.mrb[0].mxu0 %v216
    %v366 = vpop.f32.mrb[0].mxu0
    %v367 = vadd.f32 %v173, %v366
    %v368 = vpop.f32.mrb[0].mxu0
    %v369 = vpop.f32.mrb[0].mxu0
    %v370 = vadd.f32 %v173, %v369
    %v371 = vpop.f32.mrb[0].mxu0
    %372 = vmatprep.mubr.bf16.mxu0 0
    %373 = vmatmul.mubr.bf16.gmra.mrb[0].mxu0 %v219
    %v374 = vpop.f32.mrb[0].mxu0
    %v375 = vadd.f32 %v173, %v374
    %v376 = vpop.f32.mrb[0].mxu0
    %v377 = vpop.f32.mrb[0].mxu0
    %v378 = vadd.f32 %v173, %v377
    %v379 = vpop.f32.mrb[0].mxu0
    %380 = vmatprep.mubr.bf16.mxu0 0
    %381 = vmatmul.mubr.bf16.gmra.mrb[0].mxu0 %v222
    %v382 = vpop.f32.mrb[0].mxu0
    %v383 = vadd.f32 %v173, %v382
    %v384 = vpop.f32.mrb[0].mxu0
    %v385 = vpop.f32.mrb[0].mxu0
    %v386 = vadd.f32 %v173, %v385
    %v387 = vpop.f32.mrb[0].mxu0
    %388 = vdwg.mxu0
    %v389 = vld [vmem:[#allocation8] sm:$0x1]
    %v390 = vld [vmem:[#allocation10] sm:$0x1]
    %391 = vmatprep.subr.mxu0 0.0
    %392 = vmatpush1.msra.mxu0 %v263
    %393 = vmatprep.subr.mxu0 0.0
    %394 = vmatpush1.msra.mxu0 %v266
    %395 = vmatprep.subr.mxu0 0.0
    %396 = vmatpush1.msra.mxu0 %v271
    %397 = vmatprep.subr.mxu0 0.0
    %398 = vmatpush1.msra.mxu0 %v274
    %399 = vmatprep.subr.mxu0 0.0
    %400 = vmatpush1.msra.mxu0 %v279
    %401 = vmatprep.subr.mxu0 0.0
    %402 = vmatpush1.msra.mxu0 %v282
    %403 = vmatprep.subr.mxu0 0.0
    %404 = vmatpush1.msra.mxu0 %v287
    %405 = vmatprep.subr.mxu0 0.0
    %406 = vmatpush1.msra.mxu0 %v290
    %407 = vmatprep.subr.mxu0 0.0
    %408 = vmatpush1.msra.mxu0 %v295
    %409 = vmatprep.subr.mxu0 0.0
    %410 = vmatpush1.msra.mxu0 %v298
    %411 = vmatprep.subr.mxu0 0.0
    %412 = vmatpush1.msra.mxu0 %v303
    %413 = vmatprep.subr.mxu0 0.0
    %414 = vmatpush1.msra.mxu0 %v306
    %415 = vmatprep.subr.mxu0 0.0
    %416 = vmatpush1.msra.mxu0 %v311
    %417 = vmatprep.subr.mxu0 0.0
    %418 = vmatpush1.msra.mxu0 %v314
    %419 = vmatprep.subr.mxu0 0.0
    %420 = vmatpush1.msra.mxu0 %v319
    %421 = vmatprep.subr.mxu0 0.0
    %422 = vmatpush1.msra.mxu0 %v322
    %423 = vmatprep.subr.mxu0 0.0
    %424 = vmatpush1.msra.mxu0 %v327
    %425 = vmatprep.subr.mxu0 0.0
    %426 = vmatpush1.msra.mxu0 %v330
    %427 = vmatprep.subr.mxu0 0.0
    %428 = vmatpush1.msra.mxu0 %v335
    %429 = vmatprep.subr.mxu0 0.0
    %430 = vmatpush1.msra.mxu0 %v338
    %431 = vmatprep.subr.mxu0 0.0
    %432 = vmatpush1.msra.mxu0 %v343
    %433 = vmatprep.subr.mxu0 0.0
    %434 = vmatpush1.msra.mxu0 %v346
    %435 = vmatprep.subr.mxu0 0.0
    %436 = vmatpush1.msra.mxu0 %v351
    %437 = vmatprep.subr.mxu0 0.0
    %438 = vmatpush1.msra.mxu0 %v354
    %439 = vmatprep.subr.mxu0 0.0
    %440 = vmatpush1.msra.mxu0 %v359
    %441 = vmatprep.subr.mxu0 0.0
    %442 = vmatpush1.msra.mxu0 %v362
    %443 = vmatprep.subr.mxu0 0.0
    %444 = vmatpush1.msra.mxu0 %v367
    %445 = vmatprep.subr.mxu0 0.0
    %446 = vmatpush1.msra.mxu0 %v370
    %447 = vmatprep.subr.mxu0 0.0
    %448 = vmatpush1.msra.mxu0 %v375
    %449 = vmatprep.subr.mxu0 0.0
    %450 = vmatpush1.msra.mxu0 %v378
    %451 = vmatprep.subr.mxu0 0.0
    %452 = vmatpush1.msra.mxu0 %v383
    %453 = vmatprep.subr.mxu0 0.0
    %454 = vmatpush1.msra.mxu0 %v386
    %455 = vmatprep.mubr.f32.mxu0 1.0
    %456 = vmatmul.mubr.f32.gmra.mrb[0].mxu0 1.0
    %v457 = vpop.f32.mrb[0].mxu0
    %v458 = vadd.f32 0.0, %v457
    %v459 = vpop.f32.mrb[0].mxu0
    %460 = vdwg.mxu0
    %v461 = vmul.f32 %v458, 0.00390625
    %v462 = vlaneseq
    %v463 = vshrl.u32 %v462, 7
    %v464 = vsub.s32 0, %v463
    %v465 = vrot.slane %v461, %v464
    %v466 = vsub.f32 %v263, %v465
    %v467 = vsub.f32 %v266, %v465
    %v468 = vsub.f32 %v271, %v465
    %v469 = vsub.f32 %v274, %v465
    %v470 = vsub.f32 %v279, %v465
    %v471 = vsub.f32 %v282, %v465
    %v472 = vsub.f32 %v287, %v465
    %v473 = vsub.f32 %v290, %v465
    %v474 = vsub.f32 %v295, %v465
    %v475 = vsub.f32 %v298, %v465
    %v476 = vsub.f32 %v303, %v465
    %v477 = vsub.f32 %v306, %v465
    %v478 = vsub.f32 %v311, %v465
    %v479 = vsub.f32 %v314, %v465
    %v480 = vsub.f32 %v319, %v465
    %v481 = vsub.f32 %v322, %v465
    %v482 = vsub.f32 %v327, %v465
    %v483 = vsub.f32 %v330, %v465
    %v484 = vsub.f32 %v335, %v465
    %v485 = vsub.f32 %v338, %v465
    %v486 = vsub.f32 %v343, %v465
    %v487 = vsub.f32 %v346, %v465
    %v488 = vsub.f32 %v351, %v465
    %v489 = vsub.f32 %v354, %v465
    %v490 = vsub.f32 %v359, %v465
    %v491 = vsub.f32 %v362, %v465
    %v492 = vsub.f32 %v367, %v465
    %v493 = vsub.f32 %v370, %v465
    %v494 = vsub.f32 %v375, %v465
    %v495 = vsub.f32 %v378, %v465
    %v496 = vsub.f32 %v383, %v465
    %v497 = vsub.f32 %v386, %v465
    %v498 = vmul.f32 %v466, %v466
    %v499 = vmul.f32 %v467, %v467
    %v500 = vmul.f32 %v468, %v468
    %v501 = vmul.f32 %v469, %v469
    %v502 = vmul.f32 %v470, %v470
    %v503 = vmul.f32 %v471, %v471
    %v504 = vmul.f32 %v472, %v472
    %v505 = vmul.f32 %v473, %v473
    %v506 = vmul.f32 %v474, %v474
    %v507 = vmul.f32 %v475, %v475
    %v508 = vmul.f32 %v476, %v476
    %v509 = vmul.f32 %v477, %v477
    %v510 = vmul.f32 %v478, %v478
    %v511 = vmul.f32 %v479, %v479
    %v512 = vmul.f32 %v480, %v480
    %v513 = vmul.f32 %v481, %v481
    %v514 = vmul.f32 %v482, %v482
    %v515 = vmul.f32 %v483, %v483
    %v516 = vmul.f32 %v484, %v484
    %v517 = vmul.f32 %v485, %v485
    %v518 = vmul.f32 %v486, %v486
    %v519 = vmul.f32 %v487, %v487
    %v520 = vmul.f32 %v488, %v488
    %v521 = vmul.f32 %v489, %v489
    %v522 = vmul.f32 %v490, %v490
    %v523 = vmul.f32 %v491, %v491
    %v524 = vmul.f32 %v492, %v492
    %v525 = vmul.f32 %v493, %v493
    %v526 = vmul.f32 %v494, %v494
    %v527 = vmul.f32 %v495, %v495
    %v528 = vmul.f32 %v496, %v496
    %v529 = vmul.f32 %v497, %v497
    %530 = vmatprep.subr.mxu0 0.0
    %531 = vmatpush1.msra.mxu0 %v498
    %532 = vmatprep.subr.mxu0 0.0
    %533 = vmatpush1.msra.mxu0 %v499
    %534 = vmatprep.subr.mxu0 0.0
    %535 = vmatpush1.msra.mxu0 %v500
    %536 = vmatprep.subr.mxu0 0.0
    %537 = vmatpush1.msra.mxu0 %v501
    %538 = vmatprep.subr.mxu0 0.0
    %539 = vmatpush1.msra.mxu0 %v502
    %540 = vmatprep.subr.mxu0 0.0
    %541 = vmatpush1.msra.mxu0 %v503
    %542 = vmatprep.subr.mxu0 0.0
    %543 = vmatpush1.msra.mxu0 %v504
    %544 = vmatprep.subr.mxu0 0.0
    %545 = vmatpush1.msra.mxu0 %v505
    %546 = vmatprep.subr.mxu0 0.0
    %547 = vmatpush1.msra.mxu0 %v506
    %548 = vmatprep.subr.mxu0 0.0
    %549 = vmatpush1.msra.mxu0 %v507
    %550 = vmatprep.subr.mxu0 0.0
    %551 = vmatpush1.msra.mxu0 %v508
    %552 = vmatprep.subr.mxu0 0.0
    %553 = vmatpush1.msra.mxu0 %v509
    %554 = vmatprep.subr.mxu0 0.0
    %555 = vmatpush1.msra.mxu0 %v510
    %556 = vmatprep.subr.mxu0 0.0
    %557 = vmatpush1.msra.mxu0 %v511
    %558 = vmatprep.subr.mxu0 0.0
    %559 = vmatpush1.msra.mxu0 %v512
    %560 = vmatprep.subr.mxu0 0.0
    %561 = vmatpush1.msra.mxu0 %v513
    %562 = vmatprep.subr.mxu0 0.0
    %563 = vmatpush1.msra.mxu0 %v514
    %564 = vmatprep.subr.mxu0 0.0
    %565 = vmatpush1.msra.mxu0 %v515
    %566 = vmatprep.subr.mxu0 0.0
    %567 = vmatpush1.msra.mxu0 %v516
    %568 = vmatprep.subr.mxu0 0.0
    %569 = vmatpush1.msra.mxu0 %v517
    %570 = vmatprep.subr.mxu0 0.0
    %571 = vmatpush1.msra.mxu0 %v518
    %572 = vmatprep.subr.mxu0 0.0
    %573 = vmatpush1.msra.mxu0 %v519
    %574 = vmatprep.subr.mxu0 0.0
    %575 = vmatpush1.msra.mxu0 %v520
    %576 = vmatprep.subr.mxu0 0.0
    %577 = vmatpush1.msra.mxu0 %v521
    %578 = vmatprep.subr.mxu0 0.0
    %579 = vmatpush1.msra.mxu0 %v522
    %580 = vmatprep.subr.mxu0 0.0
    %581 = vmatpush1.msra.mxu0 %v523
    %582 = vmatprep.subr.mxu0 0.0
    %583 = vmatpush1.msra.mxu0 %v524
    %584 = vmatprep.subr.mxu0 0.0
    %585 = vmatpush1.msra.mxu0 %v525
    %586 = vmatprep.subr.mxu0 0.0
    %587 = vmatpush1.msra.mxu0 %v526
    %588 = vmatprep.subr.mxu0 0.0
    %589 = vmatpush1.msra.mxu0 %v527
    %590 = vmatprep.subr.mxu0 0.0
    %591 = vmatpush1.msra.mxu0 %v528
    %592 = vmatprep.subr.mxu0 0.0
    %593 = vmatpush1.msra.mxu0 %v529
    %594 = vmatprep.mubr.f32.mxu0 1.0
    %595 = vmatmul.mubr.f32.gmra.mrb[0].mxu0 1.0
    %v596 = vpop.f32.mrb[0].mxu0
    %v597 = vadd.f32 0.0, %v596
    %v598 = vpop.f32.mrb[0].mxu0
    %599 = vdwg.mxu0
    %v600 = vmul.f32 %v597, 0.00390625
    %v601 = vadd.f32 %v600, 1e-05
    %v602 = vrsqrt.pop %v601
    %v603 = vmul.f32 %v389, %v602
    %v605 = vlaneseq
    %v606 = vshrl.u32 %v605, 7
    %v607 = vsub.s32 0, %v606
    %v608 = vrot.slane %v603, %v607
    %v610 = vmul.f32 %v466, %v608
    %v611 = vmul.f32 %v467, %v608
    %v612 = vmul.f32 %v468, %v608
    %v613 = vmul.f32 %v469, %v608
    %v614 = vmul.f32 %v470, %v608
    %v615 = vmul.f32 %v471, %v608
    %v616 = vmul.f32 %v472, %v608
    %v617 = vmul.f32 %v473, %v608
    %v618 = vmul.f32 %v474, %v608
    %v619 = vmul.f32 %v475, %v608
    %v620 = vmul.f32 %v476, %v608
    %v621 = vmul.f32 %v477, %v608
    %v622 = vmul.f32 %v478, %v608
    %v623 = vmul.f32 %v479, %v608
    %v624 = vmul.f32 %v480, %v608
    %v625 = vmul.f32 %v481, %v608
    %v626 = vmul.f32 %v482, %v608
    %v627 = vmul.f32 %v483, %v608
    %v628 = vmul.f32 %v484, %v608
    %v629 = vmul.f32 %v485, %v608
    %v630 = vmul.f32 %v486, %v608
    %v631 = vmul.f32 %v487, %v608
    %v632 = vmul.f32 %v488, %v608
    %v633 = vmul.f32 %v489, %v608
    %v634 = vmul.f32 %v490, %v608
    %v635 = vmul.f32 %v491, %v608
    %v636 = vmul.f32 %v492, %v608
    %v637 = vmul.f32 %v493, %v608
    %v638 = vmul.f32 %v494, %v608
    %v639 = vmul.f32 %v495, %v608
    %v640 = vmul.f32 %v496, %v608
    %v641 = vmul.f32 %v497, %v608
    %v643 = vlaneseq
    %v644 = vshrl.u32 %v643, 7
    %v645 = vsub.s32 0, %v644
    %v646 = vrot.slane %v390, %v645
    %v648 = vadd.f32 %v610, %v646
    %v649 = vadd.f32 %v611, %v646
    %v650 = vadd.f32 %v612, %v646
    %v651 = vadd.f32 %v613, %v646
    %v652 = vadd.f32 %v614, %v646
    %v653 = vadd.f32 %v615, %v646
    %v654 = vadd.f32 %v616, %v646
    %v655 = vadd.f32 %v617, %v646
    %v656 = vadd.f32 %v618, %v646
    %v657 = vadd.f32 %v619, %v646
    %v658 = vadd.f32 %v620, %v646
    %v659 = vadd.f32 %v621, %v646
    %v660 = vadd.f32 %v622, %v646
    %v661 = vadd.f32 %v623, %v646
    %v662 = vadd.f32 %v624, %v646
    %v663 = vadd.f32 %v625, %v646
    %v664 = vadd.f32 %v626, %v646
    %v665 = vadd.f32 %v627, %v646
    %v666 = vadd.f32 %v628, %v646
    %v667 = vadd.f32 %v629, %v646
    %v668 = vadd.f32 %v630, %v646
    %v669 = vadd.f32 %v631, %v646
    %v670 = vadd.f32 %v632, %v646
    %v671 = vadd.f32 %v633, %v646
    %v672 = vadd.f32 %v634, %v646
    %v673 = vadd.f32 %v635, %v646
    %v674 = vadd.f32 %v636, %v646
    %v675 = vadd.f32 %v637, %v646
    %v676 = vadd.f32 %v638, %v646
    %v677 = vadd.f32 %v639, %v646
    %v678 = vadd.f32 %v640, %v646
    %v679 = vadd.f32 %v641, %v646
    %v680 = vmax.f32 %v648, 0.0
    %v681 = vmax.f32 %v649, 0.0
    %v682 = vmax.f32 %v650, 0.0
    %v683 = vmax.f32 %v651, 0.0
    %v684 = vmax.f32 %v652, 0.0
    %v685 = vmax.f32 %v653, 0.0
    %v686 = vmax.f32 %v654, 0.0
    %v687 = vmax.f32 %v655, 0.0
    %v688 = vmax.f32 %v656, 0.0
    %v689 = vmax.f32 %v657, 0.0
    %v690 = vmax.f32 %v658, 0.0
    %v691 = vmax.f32 %v659, 0.0
    %v692 = vmax.f32 %v660, 0.0
    %v693 = vmax.f32 %v661, 0.0
    %v694 = vmax.f32 %v662, 0.0
    %v695 = vmax.f32 %v663, 0.0
    %v696 = vmax.f32 %v664, 0.0
    %v697 = vmax.f32 %v665, 0.0
    %v698 = vmax.f32 %v666, 0.0
    %v699 = vmax.f32 %v667, 0.0
    %v700 = vmax.f32 %v668, 0.0
    %v701 = vmax.f32 %v669, 0.0
    %v702 = vmax.f32 %v670, 0.0
    %v703 = vmax.f32 %v671, 0.0
    %v704 = vmax.f32 %v672, 0.0
    %v705 = vmax.f32 %v673, 0.0
    %v706 = vmax.f32 %v674, 0.0
    %v707 = vmax.f32 %v675, 0.0
    %v708 = vmax.f32 %v676, 0.0
    %v709 = vmax.f32 %v677, 0.0
    %v710 = vmax.f32 %v678, 0.0
    %v711 = vmax.f32 %v679, 0.0
    %712 = vst [vmem:[#allocation14] sm:$0xff] %v680
    %713 = vst [vmem:[#allocation14 + $0x8] sm:$0xff] %v681
    %714 = vst [vmem:[#allocation14 + $0x10] sm:$0xff] %v682
    %715 = vst [vmem:[#allocation14 + $0x18] sm:$0xff] %v683
    %716 = vst [vmem:[#allocation14 + $0x20] sm:$0xff] %v684
    %717 = vst [vmem:[#allocation14 + $0x28] sm:$0xff] %v685
    %718 = vst [vmem:[#allocation14 + $0x30] sm:$0xff] %v686
    %719 = vst [vmem:[#allocation14 + $0x38] sm:$0xff] %v687
    %720 = vst [vmem:[#allocation14 + $0x40] sm:$0xff] %v688
    %721 = vst [vmem:[#allocation14 + $0x48] sm:$0xff] %v689
    %722 = vst [vmem:[#allocation14 + $0x50] sm:$0xff] %v690
    %723 = vst [vmem:[#allocation14 + $0x58] sm:$0xff] %v691
    %724 = vst [vmem:[#allocation14 + $0x60] sm:$0xff] %v692
    %725 = vst [vmem:[#allocation14 + $0x68] sm:$0xff] %v693
    %726 = vst [vmem:[#allocation14 + $0x70] sm:$0xff] %v694
    %727 = vst [vmem:[#allocation14 + $0x78] sm:$0xff] %v695
    %728 = vst [vmem:[#allocation14 + $0x80] sm:$0xff] %v696
    %729 = vst [vmem:[#allocation14 + $0x88] sm:$0xff] %v697
    %730 = vst [vmem:[#allocation14 + $0x90] sm:$0xff] %v698
    %731 = vst [vmem:[#allocation14 + $0x98] sm:$0xff] %v699
    %732 = vst [vmem:[#allocation14 + $0xa0] sm:$0xff] %v700
    %733 = vst [vmem:[#allocation14 + $0xa8] sm:$0xff] %v701
    %734 = vst [vmem:[#allocation14 + $0xb0] sm:$0xff] %v702
    %735 = vst [vmem:[#allocation14 + $0xb8] sm:$0xff] %v703
    %736 = vst [vmem:[#allocation14 + $0xc0] sm:$0xff] %v704
    %737 = vst [vmem:[#allocation14 + $0xc8] sm:$0xff] %v705
    %738 = vst [vmem:[#allocation14 + $0xd0] sm:$0xff] %v706
    %739 = vst [vmem:[#allocation14 + $0xd8] sm:$0xff] %v707
    %740 = vst [vmem:[#allocation14 + $0xe0] sm:$0xff] %v708
    %741 = vst [vmem:[#allocation14 + $0xe8] sm:$0xff] %v709
    %742 = vst [vmem:[#allocation14 + $0xf0] sm:$0xff] %v710
    %743 = vst [vmem:[#allocation14 + $0xf8] sm:$0xff] %v711
    %v744 = vpack.c.bf16 %v681, %v680
    %v745 = vpack.c.bf16 %v683, %v682
    %v746 = vpack.c.bf16 %v685, %v684
    %v747 = vpack.c.bf16 %v687, %v686
    %v748 = vpack.c.bf16 %v689, %v688
    %v749 = vpack.c.bf16 %v691, %v690
    %v750 = vpack.c.bf16 %v693, %v692
    %v751 = vpack.c.bf16 %v695, %v694
    %v752 = vpack.c.bf16 %v697, %v696
    %v753 = vpack.c.bf16 %v699, %v698
    %v754 = vpack.c.bf16 %v701, %v700
    %v755 = vpack.c.bf16 %v703, %v702
    %v756 = vpack.c.bf16 %v705, %v704
    %v757 = vpack.c.bf16 %v707, %v706
    %v758 = vpack.c.bf16 %v709, %v708
    %v759 = vpack.c.bf16 %v711, %v710
    %v760 = vld [vmem:[#allocation11] sm:$0xff]
    %v761 = vld [vmem:[#allocation11 + $0x8] sm:$0xf]
    %v762 = vld [vmem:[#allocation11 + $0xc] sm:$0xff]
    %v763 = vld [vmem:[#allocation11 + $0x14] sm:$0xf]
    %v764 = vld [vmem:[#allocation11 + $0x18] sm:$0xff]
    %v765 = vld [vmem:[#allocation11 + $0x20] sm:$0xf]
    %v766 = vld [vmem:[#allocation11 + $0x24] sm:$0xff]
    %v767 = vld [vmem:[#allocation11 + $0x2c] sm:$0xf]
    %v768 = vld [vmem:[#allocation11 + $0x30] sm:$0xff]
    %v769 = vld [vmem:[#allocation11 + $0x38] sm:$0xf]
    %v770 = vld [vmem:[#allocation11 + $0x3c] sm:$0xff]
    %v771 = vld [vmem:[#allocation11 + $0x44] sm:$0xf]
    %v772 = vld [vmem:[#allocation11 + $0x48] sm:$0xff]
    %v773 = vld [vmem:[#allocation11 + $0x50] sm:$0xf]
    %v774 = vld [vmem:[#allocation11 + $0x54] sm:$0xff]
    %v775 = vld [vmem:[#allocation11 + $0x5c] sm:$0xf]
    %v776 = vld [vmem:[#allocation11 + $0x60] sm:$0xff]
    %v777 = vld [vmem:[#allocation11 + $0x68] sm:$0xf]
    %v778 = vld [vmem:[#allocation11 + $0x6c] sm:$0xff]
    %v779 = vld [vmem:[#allocation11 + $0x74] sm:$0xf]
    %v780 = vld [vmem:[#allocation11 + $0x78] sm:$0xff]
    %v781 = vld [vmem:[#allocation11 + $0x80] sm:$0xf]
    %v782 = vld [vmem:[#allocation11 + $0x84] sm:$0xff]
    %v783 = vld [vmem:[#allocation11 + $0x8c] sm:$0xf]
    %v784 = vld [vmem:[#allocation11 + $0x90] sm:$0xff]
    %v785 = vld [vmem:[#allocation11 + $0x98] sm:$0xf]
    %v786 = vld [vmem:[#allocation11 + $0x9c] sm:$0xff]
    %v787 = vld [vmem:[#allocation11 + $0xa4] sm:$0xf]
    %v788 = vld [vmem:[#allocation11 + $0xa8] sm:$0xff]
    %v789 = vld [vmem:[#allocation11 + $0xb0] sm:$0xf]
    %v790 = vld [vmem:[#allocation11 + $0xb4] sm:$0xff]
    %v791 = vld [vmem:[#allocation11 + $0xbc] sm:$0xf]
    %v792 = vld [vmem:[#allocation13] sm:$0x7]
    %v794 = vlaneseq
    %v795 = vshrl.u32 %v794, 7
    %v796 = vsub.s32 0, %v795
    %v797 = vrot.slane %v792, %v796
    %v798 = vlaneseq
    %v799 = vshrl.u32 %v798, 7
    %v800 = vsub.s32 1, %v799
    %v801 = vrot.slane %v792, %v800
    %v802 = vlaneseq
    %v803 = vshrl.u32 %v802, 7
    %v804 = vsub.s32 2, %v803
    %v805 = vrot.slane %v792, %v804
    %v841 = vunpack.c.l.b16 %v760
    %v842 = vunpack.c.h.b16 %v760
    %v843 = vunpack.c.l.b16 %v761
    %v844 = vunpack.c.l.b16 %v762
    %v845 = vunpack.c.h.b16 %v762
    %v846 = vunpack.c.l.b16 %v763
    %v847 = vunpack.c.l.b16 %v764
    %v848 = vunpack.c.h.b16 %v764
    %v849 = vunpack.c.l.b16 %v765
    %v850 = vunpack.c.l.b16 %v766
    %v851 = vunpack.c.h.b16 %v766
    %v852 = vunpack.c.l.b16 %v767
    %v853 = vunpack.c.l.b16 %v768
    %v854 = vunpack.c.h.b16 %v768
    %v855 = vunpack.c.l.b16 %v769
    %v856 = vunpack.c.l.b16 %v770
    %v857 = vunpack.c.h.b16 %v770
    %v858 = vunpack.c.l.b16 %v771
    %v859 = vunpack.c.l.b16 %v772
    %v860 = vunpack.c.h.b16 %v772
    %v861 = vunpack.c.l.b16 %v773
    %v862 = vunpack.c.l.b16 %v774
    %v863 = vunpack.c.h.b16 %v774
    %v864 = vunpack.c.l.b16 %v775
    %v865 = vunpack.c.l.b16 %v776
    %v866 = vunpack.c.h.b16 %v776
    %v867 = vunpack.c.l.b16 %v777
    %v868 = vunpack.c.l.b16 %v778
    %v869 = vunpack.c.h.b16 %v778
    %v870 = vunpack.c.l.b16 %v779
    %v871 = vunpack.c.l.b16 %v780
    %v872 = vunpack.c.h.b16 %v780
    %v873 = vunpack.c.l.b16 %v781
    %v874 = vunpack.c.l.b16 %v782
    %v875 = vunpack.c.h.b16 %v782
    %v876 = vunpack.c.l.b16 %v783
    %v877 = vunpack.c.l.b16 %v784
    %v878 = vunpack.c.h.b16 %v784
    %v879 = vunpack.c.l.b16 %v785
    %v880 = vunpack.c.l.b16 %v786
    %v881 = vunpack.c.h.b16 %v786
    %v882 = vunpack.c.l.b16 %v787
    %v883 = vunpack.c.l.b16 %v788
    %v884 = vunpack.c.h.b16 %v788
    %v885 = vunpack.c.l.b16 %v789
    %v886 = vunpack.c.l.b16 %v790
    %v887 = vunpack.c.h.b16 %v790
    %v888 = vunpack.c.l.b16 %v791
    %v889 = vpack.c.b16 %v844, %v841
    %v890 = vpack.c.b16 %v845, %v842
    %v891 = vpack.c.b16 %v846, %v843
    %v892 = vpack.c.b16 %v850, %v847
    %v893 = vpack.c.b16 %v851, %v848
    %v894 = vpack.c.b16 %v852, %v849
    %v895 = vpack.c.b16 %v856, %v853
    %v896 = vpack.c.b16 %v857, %v854
    %v897 = vpack.c.b16 %v858, %v855
    %v898 = vpack.c.b16 %v862, %v859
    %v899 = vpack.c.b16 %v863, %v860
    %v900 = vpack.c.b16 %v864, %v861
    %v901 = vpack.c.b16 %v868, %v865
    %v902 = vpack.c.b16 %v869, %v866
    %v903 = vpack.c.b16 %v870, %v867
    %v904 = vpack.c.b16 %v874, %v871
    %v905 = vpack.c.b16 %v875, %v872
    %v906 = vpack.c.b16 %v876, %v873
    %v907 = vpack.c.b16 %v880, %v877
    %v908 = vpack.c.b16 %v881, %v878
    %v909 = vpack.c.b16 %v882, %v879
    %v910 = vpack.c.b16 %v886, %v883
    %v911 = vpack.c.b16 %v887, %v884
    %v912 = vpack.c.b16 %v888, %v885
    %937 = vmatprep.subr.bf16.mxu0 %v890
    %938 = vmatpush1.bf16.msra.mxu0 %v889
    %939 = vmatprep.subr.bf16.mxu0 %v893
    %940 = vmatpush1.bf16.msra.mxu0 %v892
    %941 = vmatprep.subr.bf16.mxu0 %v896
    %942 = vmatpush1.bf16.msra.mxu0 %v895
    %943 = vmatprep.subr.bf16.mxu0 %v899
    %944 = vmatpush1.bf16.msra.mxu0 %v898
    %945 = vmatprep.subr.bf16.mxu0 %v902
    %946 = vmatpush1.bf16.msra.mxu0 %v901
    %947 = vmatprep.subr.bf16.mxu0 %v905
    %948 = vmatpush1.bf16.msra.mxu0 %v904
    %949 = vmatprep.subr.bf16.mxu0 %v908
    %950 = vmatpush1.bf16.msra.mxu0 %v907
    %951 = vmatprep.subr.bf16.mxu0 %v911
    %952 = vmatpush1.bf16.msra.mxu0 %v910
    %953 = vmatprep.subr.bf16.mxu0 0
    %954 = vmatpush1.bf16.msra.mxu0 0
    %955 = vmatprep.subr.bf16.mxu0 0
    %956 = vmatpush1.bf16.msra.mxu0 0
    %957 = vmatprep.subr.bf16.mxu0 0
    %958 = vmatpush1.bf16.msra.mxu0 0
    %959 = vmatprep.subr.bf16.mxu0 0
    %960 = vmatpush1.bf16.msra.mxu0 0
    %961 = vmatprep.subr.bf16.mxu0 0
    %962 = vmatpush1.bf16.msra.mxu0 0
    %963 = vmatprep.subr.bf16.mxu0 0
    %964 = vmatpush1.bf16.msra.mxu0 0
    %965 = vmatprep.subr.bf16.mxu0 0
    %966 = vmatpush1.bf16.msra.mxu0 0
    %967 = vmatprep.subr.bf16.mxu0 0
    %968 = vmatpush1.bf16.msra.mxu0 0
    %969 = vmatprep.mubr.bf16.mxu0 0
    %970 = vmatmul.mubr.bf16.gmra.mrb[0].mxu0 %v744
    %v971 = vpop.f32.mrb[0].mxu0
    %v972 = vadd.f32 %v797, %v971
    %v973 = vpop.f32.mrb[0].mxu0
    %v974 = vadd.f32 %v801, %v973
    %v975 = vpop.f32.mrb[0].mxu0
    %v976 = vadd.f32 %v797, %v975
    %v977 = vpop.f32.mrb[0].mxu0
    %v978 = vadd.f32 %v801, %v977
    %979 = vmatprep.mubr.bf16.mxu0 0
    %980 = vmatmul.mubr.bf16.gmra.mrb[0].mxu0 %v745
    %v981 = vpop.f32.mrb[0].mxu0
    %v982 = vadd.f32 %v797, %v981
    %v983 = vpop.f32.mrb[0].mxu0
    %v984 = vadd.f32 %v801, %v983
    %v985 = vpop.f32.mrb[0].mxu0
    %v986 = vadd.f32 %v797, %v985
    %v987 = vpop.f32.mrb[0].mxu0
    %v988 = vadd.f32 %v801, %v987
    %989 = vmatprep.mubr.bf16.mxu0 0
    %990 = vmatmul.mubr.bf16.gmra.mrb[0].mxu0 %v746
    %v991 = vpop.f32.mrb[0].mxu0
    %v992 = vadd.f32 %v797, %v991
    %v993 = vpop.f32.mrb[0].mxu0
    %v994 = vadd.f32 %v801, %v993
    %v995 = vpop.f32.mrb[0].mxu0
    %v996 = vadd.f32 %v797, %v995
    %v997 = vpop.f32.mrb[0].mxu0
    %v998 = vadd.f32 %v801, %v997
    %999 = vmatprep.mubr.bf16.mxu0 0
    %1000 = vmatmul.mubr.bf16.gmra.mrb[0].mxu0 %v747
    %v1001 = vpop.f32.mrb[0].mxu0
    %v1002 = vadd.f32 %v797, %v1001
    %v1003 = vpop.f32.mrb[0].mxu0
    %v1004 = vadd.f32 %v801, %v1003
    %v1005 = vpop.f32.mrb[0].mxu0
    %v1006 = vadd.f32 %v797, %v1005
    %v1007 = vpop.f32.mrb[0].mxu0
    %v1008 = vadd.f32 %v801, %v1007
    %1009 = vmatprep.mubr.bf16.mxu0 0
    %1010 = vmatmul.mubr.bf16.gmra.mrb[0].mxu0 %v748
    %v1011 = vpop.f32.mrb[0].mxu0
    %v1012 = vadd.f32 %v797, %v1011
    %v1013 = vpop.f32.mrb[0].mxu0
    %v1014 = vadd.f32 %v801, %v1013
    %v1015 = vpop.f32.mrb[0].mxu0
    %v1016 = vadd.f32 %v797, %v1015
    %v1017 = vpop.f32.mrb[0].mxu0
    %v1018 = vadd.f32 %v801, %v1017
    %1019 = vmatprep.mubr.bf16.mxu0 0
    %1020 = vmatmul.mubr.bf16.gmra.mrb[0].mxu0 %v749
    %v1021 = vpop.f32.mrb[0].mxu0
    %v1022 = vadd.f32 %v797, %v1021
    %v1023 = vpop.f32.mrb[0].mxu0
    %v1024 = vadd.f32 %v801, %v1023
    %v1025 = vpop.f32.mrb[0].mxu0
    %v1026 = vadd.f32 %v797, %v1025
    %v1027 = vpop.f32.mrb[0].mxu0
    %v1028 = vadd.f32 %v801, %v1027
    %1029 = vmatprep.mubr.bf16.mxu0 0
    %1030 = vmatmul.mubr.bf16.gmra.mrb[0].mxu0 %v750
    %v1031 = vpop.f32.mrb[0].mxu0
    %v1032 = vadd.f32 %v797, %v1031
    %v1033 = vpop.f32.mrb[0].mxu0
    %v1034 = vadd.f32 %v801, %v1033
    %v1035 = vpop.f32.mrb[0].mxu0
    %v1036 = vadd.f32 %v797, %v1035
    %v1037 = vpop.f32.mrb[0].mxu0
    %v1038 = vadd.f32 %v801, %v1037
    %1039 = vmatprep.mubr.bf16.mxu0 0
    %1040 = vmatmul.mubr.bf16.gmra.mrb[0].mxu0 %v751
    %v1041 = vpop.f32.mrb[0].mxu0
    %v1042 = vadd.f32 %v797, %v1041
    %v1043 = vpop.f32.mrb[0].mxu0
    %v1044 = vadd.f32 %v801, %v1043
    %v1045 = vpop.f32.mrb[0].mxu0
    %v1046 = vadd.f32 %v797, %v1045
    %v1047 = vpop.f32.mrb[0].mxu0
    %v1048 = vadd.f32 %v801, %v1047
    %1049 = vmatprep.mubr.bf16.mxu0 0
    %1050 = vmatmul.mubr.bf16.gmra.mrb[0].mxu0 %v752
    %v1051 = vpop.f32.mrb[0].mxu0
    %v1052 = vadd.f32 %v797, %v1051
    %v1053 = vpop.f32.mrb[0].mxu0
    %v1054 = vadd.f32 %v801, %v1053
    %v1055 = vpop.f32.mrb[0].mxu0
    %v1056 = vadd.f32 %v797, %v1055
    %v1057 = vpop.f32.mrb[0].mxu0
    %v1058 = vadd.f32 %v801, %v1057
    %1059 = vmatprep.mubr.bf16.mxu0 0
    %1060 = vmatmul.mubr.bf16.gmra.mrb[0].mxu0 %v753
    %v1061 = vpop.f32.mrb[0].mxu0
    %v1062 = vadd.f32 %v797, %v1061
    %v1063 = vpop.f32.mrb[0].mxu0
    %v1064 = vadd.f32 %v801, %v1063
    %v1065 = vpop.f32.mrb[0].mxu0
    %v1066 = vadd.f32 %v797, %v1065
    %v1067 = vpop.f32.mrb[0].mxu0
    %v1068 = vadd.f32 %v801, %v1067
    %1069 = vmatprep.mubr.bf16.mxu0 0
    %1070 = vmatmul.mubr.bf16.gmra.mrb[0].mxu0 %v754
    %v1071 = vpop.f32.mrb[0].mxu0
    %v1072 = vadd.f32 %v797, %v1071
    %v1073 = vpop.f32.mrb[0].mxu0
    %v1074 = vadd.f32 %v801, %v1073
    %v1075 = vpop.f32.mrb[0].mxu0
    %v1076 = vadd.f32 %v797, %v1075
    %v1077 = vpop.f32.mrb[0].mxu0
    %v1078 = vadd.f32 %v801, %v1077
    %1079 = vmatprep.mubr.bf16.mxu0 0
    %1080 = vmatmul.mubr.bf16.gmra.mrb[0].mxu0 %v755
    %v1081 = vpop.f32.mrb[0].mxu0
    %v1082 = vadd.f32 %v797, %v1081
    %v1083 = vpop.f32.mrb[0].mxu0
    %v1084 = vadd.f32 %v801, %v1083
    %v1085 = vpop.f32.mrb[0].mxu0
    %v1086 = vadd.f32 %v797, %v1085
    %v1087 = vpop.f32.mrb[0].mxu0
    %v1088 = vadd.f32 %v801, %v1087
    %1089 = vmatprep.mubr.bf16.mxu0 0
    %1090 = vmatmul.mubr.bf16.gmra.mrb[0].mxu0 %v756
    %v1091 = vpop.f32.mrb[0].mxu0
    %v1092 = vadd.f32 %v797, %v1091
    %v1093 = vpop.f32.mrb[0].mxu0
    %v1094 = vadd.f32 %v801, %v1093
    %v1095 = vpop.f32.mrb[0].mxu0
    %v1096 = vadd.f32 %v797, %v1095
    %v1097 = vpop.f32.mrb[0].mxu0
    %v1098 = vadd.f32 %v801, %v1097
    %1099 = vmatprep.mubr.bf16.mxu0 0
    %1100 = vmatmul.mubr.bf16.gmra.mrb[0].mxu0 %v757
    %v1101 = vpop.f32.mrb[0].mxu0
    %v1102 = vadd.f32 %v797, %v1101
    %v1103 = vpop.f32.mrb[0].mxu0
    %v1104 = vadd.f32 %v801, %v1103
    %v1105 = vpop.f32.mrb[0].mxu0
    %v1106 = vadd.f32 %v797, %v1105
    %v1107 = vpop.f32.mrb[0].mxu0
    %v1108 = vadd.f32 %v801, %v1107
    %1109 = vmatprep.mubr.bf16.mxu0 0
    %1110 = vmatmul.mubr.bf16.gmra.mrb[0].mxu0 %v758
    %v1111 = vpop.f32.mrb[0].mxu0
    %v1112 = vadd.f32 %v797, %v1111
    %v1113 = vpop.f32.mrb[0].mxu0
    %v1114 = vadd.f32 %v801, %v1113
    %v1115 = vpop.f32.mrb[0].mxu0
    %v1116 = vadd.f32 %v797, %v1115
    %v1117 = vpop.f32.mrb[0].mxu0
    %v1118 = vadd.f32 %v801, %v1117
    %1119 = vmatprep.mubr.bf16.mxu0 0
    %1120 = vmatmul.mubr.bf16.gmra.mrb[0].mxu0 %v759
    %v1121 = vpop.f32.mrb[0].mxu0
    %v1122 = vadd.f32 %v797, %v1121
    %v1123 = vpop.f32.mrb[0].mxu0
    %v1124 = vadd.f32 %v801, %v1123
    %v1125 = vpop.f32.mrb[0].mxu0
    %v1126 = vadd.f32 %v797, %v1125
    %v1127 = vpop.f32.mrb[0].mxu0
    %v1128 = vadd.f32 %v801, %v1127
    %1129 = vdwg.mxu0
    %1130 = vmatprep.subr.bf16.mxu0 0
    %1131 = vmatpush1.bf16.msra.mxu0 %v891
    %1132 = vmatprep.subr.bf16.mxu0 0
    %1133 = vmatpush1.bf16.msra.mxu0 %v894
    %1134 = vmatprep.subr.bf16.mxu0 0
    %1135 = vmatpush1.bf16.msra.mxu0 %v897
    %1136 = vmatprep.subr.bf16.mxu0 0
    %1137 = vmatpush1.bf16.msra.mxu0 %v900
    %1138 = vmatprep.subr.bf16.mxu0 0
    %1139 = vmatpush1.bf16.msra.mxu0 %v903
    %1140 = vmatprep.subr.bf16.mxu0 0
    %1141 = vmatpush1.bf16.msra.mxu0 %v906
    %1142 = vmatprep.subr.bf16.mxu0 0
    %1143 = vmatpush1.bf16.msra.mxu0 %v909
    %1144 = vmatprep.subr.bf16.mxu0 0
    %1145 = vmatpush1.bf16.msra.mxu0 %v912
    %1146 = vmatprep.subr.bf16.mxu0 0
    %1147 = vmatpush1.bf16.msra.mxu0 0
    %1148 = vmatprep.subr.bf16.mxu0 0
    %1149 = vmatpush1.bf16.msra.mxu0 0
    %1150 = vmatprep.subr.bf16.mxu0 0
    %1151 = vmatpush1.bf16.msra.mxu0 0
    %1152 = vmatprep.subr.bf16.mxu0 0
    %1153 = vmatpush1.bf16.msra.mxu0 0
    %1154 = vmatprep.subr.bf16.mxu0 0
    %1155 = vmatpush1.bf16.msra.mxu0 0
    %1156 = vmatprep.subr.bf16.mxu0 0
    %1157 = vmatpush1.bf16.msra.mxu0 0
    %1158 = vmatprep.subr.bf16.mxu0 0
    %1159 = vmatpush1.bf16.msra.mxu0 0
    %1160 = vmatprep.subr.bf16.mxu0 0
    %1161 = vmatpush1.bf16.msra.mxu0 0
    %1162 = vmatprep.mubr.bf16.mxu0 0
    %1163 = vmatmul.mubr.bf16.gmra.mrb[0].mxu0 %v744
    %v1164 = vpop.f32.mrb[0].mxu0
    %v1165 = vadd.f32 %v805, %v1164
    %v1166 = vpop.f32.mrb[0].mxu0
    %v1167 = vpop.f32.mrb[0].mxu0
    %v1168 = vadd.f32 %v805, %v1167
    %v1169 = vpop.f32.mrb[0].mxu0
    %1170 = vmatprep.mubr.bf16.mxu0 0
    %1171 = vmatmul.mubr.bf16.gmra.mrb[0].mxu0 %v745
    %v1172 = vpop.f32.mrb[0].mxu0
    %v1173 = vadd.f32 %v805, %v1172
    %v1174 = vpop.f32.mrb[0].mxu0
    %v1175 = vpop.f32.mrb[0].mxu0
    %v1176 = vadd.f32 %v805, %v1175
    %v1177 = vpop.f32.mrb[0].mxu0
    %1178 = vmatprep.mubr.bf16.mxu0 0
    %1179 = vmatmul.mubr.bf16.gmra.mrb[0].mxu0 %v746
    %v1180 = vpop.f32.mrb[0].mxu0
    %v1181 = vadd.f32 %v805, %v1180
    %v1182 = vpop.f32.mrb[0].mxu0
    %v1183 = vpop.f32.mrb[0].mxu0
    %v1184 = vadd.f32 %v805, %v1183
    %v1185 = vpop.f32.mrb[0].mxu0
    %1186 = vmatprep.mubr.bf16.mxu0 0
    %1187 = vmatmul.mubr.bf16.gmra.mrb[0].mxu0 %v747
    %v1188 = vpop.f32.mrb[0].mxu0
    %v1189 = vadd.f32 %v805, %v1188
    %v1190 = vpop.f32.mrb[0].mxu0
    %v1191 = vpop.f32.mrb[0].mxu0
    %v1192 = vadd.f32 %v805, %v1191
    %v1193 = vpop.f32.mrb[0].mxu0
    %1194 = vmatprep.mubr.bf16.mxu0 0
    %1195 = vmatmul.mubr.bf16.gmra.mrb[0].mxu0 %v748
    %v1196 = vpop.f32.mrb[0].mxu0
    %v1197 = vadd.f32 %v805, %v1196
    %v1198 = vpop.f32.mrb[0].mxu0
    %v1199 = vpop.f32.mrb[0].mxu0
    %v1200 = vadd.f32 %v805, %v1199
    %v1201 = vpop.f32.mrb[0].mxu0
    %1202 = vmatprep.mubr.bf16.mxu0 0
    %1203 = vmatmul.mubr.bf16.gmra.mrb[0].mxu0 %v749
    %v1204 = vpop.f32.mrb[0].mxu0
    %v1205 = vadd.f32 %v805, %v1204
    %v1206 = vpop.f32.mrb[0].mxu0
    %v1207 = vpop.f32.mrb[0].mxu0
    %v1208 = vadd.f32 %v805, %v1207
    %v1209 = vpop.f32.mrb[0].mxu0
    %1210 = vmatprep.mubr.bf16.mxu0 0
    %1211 = vmatmul.mubr.bf16.gmra.mrb[0].mxu0 %v750
    %v1212 = vpop.f32.mrb[0].mxu0
    %v1213 = vadd.f32 %v805, %v1212
    %v1214 = vpop.f32.mrb[0].mxu0
    %v1215 = vpop.f32.mrb[0].mxu0
    %v1216 = vadd.f32 %v805, %v1215
    %v1217 = vpop.f32.mrb[0].mxu0
    %1218 = vmatprep.mubr.bf16.mxu0 0
    %1219 = vmatmul.mubr.bf16.gmra.mrb[0].mxu0 %v751
    %v1220 = vpop.f32.mrb[0].mxu0
    %v1221 = vadd.f32 %v805, %v1220
    %v1222 = vpop.f32.mrb[0].mxu0
    %v1223 = vpop.f32.mrb[0].mxu0
    %v1224 = vadd.f32 %v805, %v1223
    %v1225 = vpop.f32.mrb[0].mxu0
    %1226 = vmatprep.mubr.bf16.mxu0 0
    %1227 = vmatmul.mubr.bf16.gmra.mrb[0].mxu0 %v752
    %v1228 = vpop.f32.mrb[0].mxu0
    %v1229 = vadd.f32 %v805, %v1228
    %v1230 = vpop.f32.mrb[0].mxu0
    %v1231 = vpop.f32.mrb[0].mxu0
    %v1232 = vadd.f32 %v805, %v1231
    %v1233 = vpop.f32.mrb[0].mxu0
    %1234 = vmatprep.mubr.bf16.mxu0 0
    %1235 = vmatmul.mubr.bf16.gmra.mrb[0].mxu0 %v753
    %v1236 = vpop.f32.mrb[0].mxu0
    %v1237 = vadd.f32 %v805, %v1236
    %v1238 = vpop.f32.mrb[0].mxu0
    %v1239 = vpop.f32.mrb[0].mxu0
    %v1240 = vadd.f32 %v805, %v1239
    %v1241 = vpop.f32.mrb[0].mxu0
    %1242 = vmatprep.mubr.bf16.mxu0 0
    %1243 = vmatmul.mubr.bf16.gmra.mrb[0].mxu0 %v754
    %v1244 = vpop.f32.mrb[0].mxu0
    %v1245 = vadd.f32 %v805, %v1244
    %v1246 = vpop.f32.mrb[0].mxu0
    %v1247 = vpop.f32.mrb[0].mxu0
    %v1248 = vadd.f32 %v805, %v1247
    %v1249 = vpop.f32.mrb[0].mxu0
    %1250 = vmatprep.mubr.bf16.mxu0 0
    %1251 = vmatmul.mubr.bf16.gmra.mrb[0].mxu0 %v755
    %v1252 = vpop.f32.mrb[0].mxu0
    %v1253 = vadd.f32 %v805, %v1252
    %v1254 = vpop.f32.mrb[0].mxu0
    %v1255 = vpop.f32.mrb[0].mxu0
    %v1256 = vadd.f32 %v805, %v1255
    %v1257 = vpop.f32.mrb[0].mxu0
    %1258 = vmatprep.mubr.bf16.mxu0 0
    %1259 = vmatmul.mubr.bf16.gmra.mrb[0].mxu0 %v756
    %v1260 = vpop.f32.mrb[0].mxu0
    %v1261 = vadd.f32 %v805, %v1260
    %v1262 = vpop.f32.mrb[0].mxu0
    %v1263 = vpop.f32.mrb[0].mxu0
    %v1264 = vadd.f32 %v805, %v1263
    %v1265 = vpop.f32.mrb[0].mxu0
    %1266 = vmatprep.mubr.bf16.mxu0 0
    %1267 = vmatmul.mubr.bf16.gmra.mrb[0].mxu0 %v757
    %v1268 = vpop.f32.mrb[0].mxu0
    %v1269 = vadd.f32 %v805, %v1268
    %v1270 = vpop.f32.mrb[0].mxu0
    %v1271 = vpop.f32.mrb[0].mxu0
    %v1272 = vadd.f32 %v805, %v1271
    %v1273 = vpop.f32.mrb[0].mxu0
    %1274 = vmatprep.mubr.bf16.mxu0 0
    %1275 = vmatmul.mubr.bf16.gmra.mrb[0].mxu0 %v758
    %v1276 = vpop.f32.mrb[0].mxu0
    %v1277 = vadd.f32 %v805, %v1276
    %v1278 = vpop.f32.mrb[0].mxu0
    %v1279 = vpop.f32.mrb[0].mxu0
    %v1280 = vadd.f32 %v805, %v1279
    %v1281 = vpop.f32.mrb[0].mxu0
    %1282 = vmatprep.mubr.bf16.mxu0 0
    %1283 = vmatmul.mubr.bf16.gmra.mrb[0].mxu0 %v759
    %v1284 = vpop.f32.mrb[0].mxu0
    %v1285 = vadd.f32 %v805, %v1284
    %v1286 = vpop.f32.mrb[0].mxu0
    %v1287 = vpop.f32.mrb[0].mxu0
    %v1288 = vadd.f32 %v805, %v1287
    %v1289 = vpop.f32.mrb[0].mxu0
    %1290 = vdwg.mxu0
    %v1291 = vpack.c.bf16 %v976, %v972
    %v1292 = vpack.c.bf16 %v986, %v982
    %v1293 = vpack.c.bf16 %v996, %v992
    %v1294 = vpack.c.bf16 %v1006, %v1002
    %v1295 = vpack.c.bf16 %v1016, %v1012
    %v1296 = vpack.c.bf16 %v1026, %v1022
    %v1297 = vpack.c.bf16 %v1036, %v1032
    %v1298 = vpack.c.bf16 %v1046, %v1042
    %v1299 = vpack.c.bf16 %v1056, %v1052
    %v1300 = vpack.c.bf16 %v1066, %v1062
    %v1301 = vpack.c.bf16 %v1076, %v1072
    %v1302 = vpack.c.bf16 %v1086, %v1082
    %v1303 = vpack.c.bf16 %v1096, %v1092
    %v1304 = vpack.c.bf16 %v1106, %v1102
    %v1305 = vpack.c.bf16 %v1116, %v1112
    %v1306 = vpack.c.bf16 %v1126, %v1122
    %v1323 = vunpack.c.l.b16 %v1291
    %v1324 = vunpack.c.h.b16 %v1291
    %v1325 = vunpack.c.l.b16 %v1292
    %v1326 = vunpack.c.h.b16 %v1292
    %v1327 = vunpack.c.l.b16 %v1293
    %v1328 = vunpack.c.h.b16 %v1293
    %v1329 = vunpack.c.l.b16 %v1294
    %v1330 = vunpack.c.h.b16 %v1294
    %v1331 = vunpack.c.l.b16 %v1295
    %v1332 = vunpack.c.h.b16 %v1295
    %v1333 = vunpack.c.l.b16 %v1296
    %v1334 = vunpack.c.h.b16 %v1296
    %v1335 = vunpack.c.l.b16 %v1297
    %v1336 = vunpack.c.h.b16 %v1297
    %v1337 = vunpack.c.l.b16 %v1298
    %v1338 = vunpack.c.h.b16 %v1298
    %v1339 = vunpack.c.l.b16 %v1299
    %v1340 = vunpack.c.h.b16 %v1299
    %v1341 = vunpack.c.l.b16 %v1300
    %v1342 = vunpack.c.h.b16 %v1300
    %v1343 = vunpack.c.l.b16 %v1301
    %v1344 = vunpack.c.h.b16 %v1301
    %v1345 = vunpack.c.l.b16 %v1302
    %v1346 = vunpack.c.h.b16 %v1302
    %v1347 = vunpack.c.l.b16 %v1303
    %v1348 = vunpack.c.h.b16 %v1303
    %v1349 = vunpack.c.l.b16 %v1304
    %v1350 = vunpack.c.h.b16 %v1304
    %v1351 = vunpack.c.l.b16 %v1305
    %v1352 = vunpack.c.h.b16 %v1305
    %v1353 = vunpack.c.l.b16 %v1306
    %v1354 = vunpack.c.h.b16 %v1306
    %v1355 = vpack.c.b16 %v1323, %v1323
    %v1356 = vpack.c.b16 %v1324, %v1324
    %v1357 = vpack.c.b16 %v1325, %v1325
    %v1358 = vpack.c.b16 %v1326, %v1326
    %v1359 = vpack.c.b16 %v1327, %v1327
    %v1360 = vpack.c.b16 %v1328, %v1328
    %v1361 = vpack.c.b16 %v1329, %v1329
    %v1362 = vpack.c.b16 %v1330, %v1330
    %v1363 = vpack.c.b16 %v1331, %v1331
    %v1364 = vpack.c.b16 %v1332, %v1332
    %v1365 = vpack.c.b16 %v1333, %v1333
    %v1366 = vpack.c.b16 %v1334, %v1334
    %v1367 = vpack.c.b16 %v1335, %v1335
    %v1368 = vpack.c.b16 %v1336, %v1336
    %v1369 = vpack.c.b16 %v1337, %v1337
    %v1370 = vpack.c.b16 %v1338, %v1338
    %v1371 = vpack.c.b16 %v1339, %v1339
    %v1372 = vpack.c.b16 %v1340, %v1340
    %v1373 = vpack.c.b16 %v1341, %v1341
    %v1374 = vpack.c.b16 %v1342, %v1342
    %v1375 = vpack.c.b16 %v1343, %v1343
    %v1376 = vpack.c.b16 %v1344, %v1344
    %v1377 = vpack.c.b16 %v1345, %v1345
    %v1378 = vpack.c.b16 %v1346, %v1346
    %v1379 = vpack.c.b16 %v1347, %v1347
    %v1380 = vpack.c.b16 %v1348, %v1348
    %v1381 = vpack.c.b16 %v1349, %v1349
    %v1382 = vpack.c.b16 %v1350, %v1350
    %v1383 = vpack.c.b16 %v1351, %v1351
    %v1384 = vpack.c.b16 %v1352, %v1352
    %v1385 = vpack.c.b16 %v1353, %v1353
    %v1386 = vpack.c.b16 %v1354, %v1354
    %1419 = vst [vmem:[#allocation15] sm:$0xf] %v1355
    %1420 = vst [vmem:[#allocation15 + $0x4] sm:$0xf] %v1356
    %1421 = vst [vmem:[#allocation15 + $0x8] sm:$0xf] %v1357
    %1422 = vst [vmem:[#allocation15 + $0xc] sm:$0xf] %v1358
    %1423 = vst [vmem:[#allocation15 + $0x10] sm:$0xf] %v1359
    %1424 = vst [vmem:[#allocation15 + $0x14] sm:$0xf] %v1360
    %1425 = vst [vmem:[#allocation15 + $0x18] sm:$0xf] %v1361
    %1426 = vst [vmem:[#allocation15 + $0x1c] sm:$0xf] %v1362
    %1427 = vst [vmem:[#allocation15 + $0x20] sm:$0xf] %v1363
    %1428 = vst [vmem:[#allocation15 + $0x24] sm:$0xf] %v1364
    %1429 = vst [vmem:[#allocation15 + $0x28] sm:$0xf] %v1365
    %1430 = vst [vmem:[#allocation15 + $0x2c] sm:$0xf] %v1366
    %1431 = vst [vmem:[#allocation15 + $0x30] sm:$0xf] %v1367
    %1432 = vst [vmem:[#allocation15 + $0x34] sm:$0xf] %v1368
    %1433 = vst [vmem:[#allocation15 + $0x38] sm:$0xf] %v1369
    %1434 = vst [vmem:[#allocation15 + $0x3c] sm:$0xf] %v1370
    %1435 = vst [vmem:[#allocation15 + $0x40] sm:$0xf] %v1371
    %1436 = vst [vmem:[#allocation15 + $0x44] sm:$0xf] %v1372
    %1437 = vst [vmem:[#allocation15 + $0x48] sm:$0xf] %v1373
    %1438 = vst [vmem:[#allocation15 + $0x4c] sm:$0xf] %v1374
    %1439 = vst [vmem:[#allocation15 + $0x50] sm:$0xf] %v1375
    %1440 = vst [vmem:[#allocation15 + $0x54] sm:$0xf] %v1376
    %1441 = vst [vmem:[#allocation15 + $0x58] sm:$0xf] %v1377
    %1442 = vst [vmem:[#allocation15 + $0x5c] sm:$0xf] %v1378
    %1443 = vst [vmem:[#allocation15 + $0x60] sm:$0xf] %v1379
    %1444 = vst [vmem:[#allocation15 + $0x64] sm:$0xf] %v1380
    %1445 = vst [vmem:[#allocation15 + $0x68] sm:$0xf] %v1381
    %1446 = vst [vmem:[#allocation15 + $0x6c] sm:$0xf] %v1382
    %1447 = vst [vmem:[#allocation15 + $0x70] sm:$0xf] %v1383
    %1448 = vst [vmem:[#allocation15 + $0x74] sm:$0xf] %v1384
    %1449 = vst [vmem:[#allocation15 + $0x78] sm:$0xf] %v1385
    %1450 = vst [vmem:[#allocation15 + $0x7c] sm:$0xf] %v1386
    %v1451 = vpack.c.bf16 %v978, %v974
    %v1452 = vpack.c.bf16 %v988, %v984
    %v1453 = vpack.c.bf16 %v998, %v994
    %v1454 = vpack.c.bf16 %v1008, %v1004
    %v1455 = vpack.c.bf16 %v1018, %v1014
    %v1456 = vpack.c.bf16 %v1028, %v1024
    %v1457 = vpack.c.bf16 %v1038, %v1034
    %v1458 = vpack.c.bf16 %v1048, %v1044
    %v1459 = vpack.c.bf16 %v1058, %v1054
    %v1460 = vpack.c.bf16 %v1068, %v1064
    %v1461 = vpack.c.bf16 %v1078, %v1074
    %v1462 = vpack.c.bf16 %v1088, %v1084
    %v1463 = vpack.c.bf16 %v1098, %v1094
    %v1464 = vpack.c.bf16 %v1108, %v1104
    %v1465 = vpack.c.bf16 %v1118, %v1114
    %v1466 = vpack.c.bf16 %v1128, %v1124
    %v1483 = vunpack.c.l.b16 %v1451
    %v1484 = vunpack.c.h.b16 %v1451
    %v1485 = vunpack.c.l.b16 %v1452
    %v1486 = vunpack.c.h.b16 %v1452
    %v1487 = vunpack.c.l.b16 %v1453
    %v1488 = vunpack.c.h.b16 %v1453
    %v1489 = vunpack.c.l.b16 %v1454
    %v1490 = vunpack.c.h.b16 %v1454
    %v1491 = vunpack.c.l.b16 %v1455
    %v1492 = vunpack.c.h.b16 %v1455
    %v1493 = vunpack.c.l.b16 %v1456
    %v1494 = vunpack.c.h.b16 %v1456
    %v1495 = vunpack.c.l.b16 %v1457
    %v1496 = vunpack.c.h.b16 %v1457
    %v1497 = vunpack.c.l.b16 %v1458
    %v1498 = vunpack.c.h.b16 %v1458
    %v1499 = vunpack.c.l.b16 %v1459
    %v1500 = vunpack.c.h.b16 %v1459
    %v1501 = vunpack.c.l.b16 %v1460
    %v1502 = vunpack.c.h.b16 %v1460
    %v1503 = vunpack.c.l.b16 %v1461
    %v1504 = vunpack.c.h.b16 %v1461
    %v1505 = vunpack.c.l.b16 %v1462
    %v1506 = vunpack.c.h.b16 %v1462
    %v1507 = vunpack.c.l.b16 %v1463
    %v1508 = vunpack.c.h.b16 %v1463
    %v1509 = vunpack.c.l.b16 %v1464
    %v1510 = vunpack.c.h.b16 %v1464
    %v1511 = vunpack.c.l.b16 %v1465
    %v1512 = vunpack.c.h.b16 %v1465
    %v1513 = vunpack.c.l.b16 %v1466
    %v1514 = vunpack.c.h.b16 %v1466
    %v1515 = vpack.c.b16 %v1483, %v1483
    %v1516 = vpack.c.b16 %v1484, %v1484
    %v1517 = vpack.c.b16 %v1485, %v1485
    %v1518 = vpack.c.b16 %v1486, %v1486
    %v1519 = vpack.c.b16 %v1487, %v1487
    %v1520 = vpack.c.b16 %v1488, %v1488
    %v1521 = vpack.c.b16 %v1489, %v1489
    %v1522 = vpack.c.b16 %v1490, %v1490
    %v1523 = vpack.c.b16 %v1491, %v1491
    %v1524 = vpack.c.b16 %v1492, %v1492
    %v1525 = vpack.c.b16 %v1493, %v1493
    %v1526 = vpack.c.b16 %v1494, %v1494
    %v1527 = vpack.c.b16 %v1495, %v1495
    %v1528 = vpack.c.b16 %v1496, %v1496
    %v1529 = vpack.c.b16 %v1497, %v1497
    %v1530 = vpack.c.b16 %v1498, %v1498
    %v1531 = vpack.c.b16 %v1499, %v1499
    %v1532 = vpack.c.b16 %v1500, %v1500
    %v1533 = vpack.c.b16 %v1501, %v1501
    %v1534 = vpack.c.b16 %v1502, %v1502
    %v1535 = vpack.c.b16 %v1503, %v1503
    %v1536 = vpack.c.b16 %v1504, %v1504
    %v1537 = vpack.c.b16 %v1505, %v1505
    %v1538 = vpack.c.b16 %v1506, %v1506
    %v1539 = vpack.c.b16 %v1507, %v1507
    %v1540 = vpack.c.b16 %v1508, %v1508
    %v1541 = vpack.c.b16 %v1509, %v1509
    %v1542 = vpack.c.b16 %v1510, %v1510
    %v1543 = vpack.c.b16 %v1511, %v1511
    %v1544 = vpack.c.b16 %v1512, %v1512
    %v1545 = vpack.c.b16 %v1513, %v1513
    %v1546 = vpack.c.b16 %v1514, %v1514
    %1579 = vst [vmem:[#allocation17] sm:$0xf] %v1515
    %1580 = vst [vmem:[#allocation17 + $0x4] sm:$0xf] %v1516
    %1581 = vst [vmem:[#allocation17 + $0x8] sm:$0xf] %v1517
    %1582 = vst [vmem:[#allocation17 + $0xc] sm:$0xf] %v1518
    %1583 = vst [vmem:[#allocation17 + $0x10] sm:$0xf] %v1519
    %1584 = vst [vmem:[#allocation17 + $0x14] sm:$0xf] %v1520
    %1585 = vst [vmem:[#allocation17 + $0x18] sm:$0xf] %v1521
    %1586 = vst [vmem:[#allocation17 + $0x1c] sm:$0xf] %v1522
    %1587 = vst [vmem:[#allocation17 + $0x20] sm:$0xf] %v1523
    %1588 = vst [vmem:[#allocation17 + $0x24] sm:$0xf] %v1524
    %1589 = vst [vmem:[#allocation17 + $0x28] sm:$0xf] %v1525
    %1590 = vst [vmem:[#allocation17 + $0x2c] sm:$0xf] %v1526
    %1591 = vst [vmem:[#allocation17 + $0x30] sm:$0xf] %v1527
    %1592 = vst [vmem:[#allocation17 + $0x34] sm:$0xf] %v1528
    %1593 = vst [vmem:[#allocation17 + $0x38] sm:$0xf] %v1529
    %1594 = vst [vmem:[#allocation17 + $0x3c] sm:$0xf] %v1530
    %1595 = vst [vmem:[#allocation17 + $0x40] sm:$0xf] %v1531
    %1596 = vst [vmem:[#allocation17 + $0x44] sm:$0xf] %v1532
    %1597 = vst [vmem:[#allocation17 + $0x48] sm:$0xf] %v1533
    %1598 = vst [vmem:[#allocation17 + $0x4c] sm:$0xf] %v1534
    %1599 = vst [vmem:[#allocation17 + $0x50] sm:$0xf] %v1535
    %1600 = vst [vmem:[#allocation17 + $0x54] sm:$0xf] %v1536
    %1601 = vst [vmem:[#allocation17 + $0x58] sm:$0xf] %v1537
    %1602 = vst [vmem:[#allocation17 + $0x5c] sm:$0xf] %v1538
    %1603 = vst [vmem:[#allocation17 + $0x60] sm:$0xf] %v1539
    %1604 = vst [vmem:[#allocation17 + $0x64] sm:$0xf] %v1540
    %1605 = vst [vmem:[#allocation17 + $0x68] sm:$0xf] %v1541
    %1606 = vst [vmem:[#allocation17 + $0x6c] sm:$0xf] %v1542
    %1607 = vst [vmem:[#allocation17 + $0x70] sm:$0xf] %v1543
    %1608 = vst [vmem:[#allocation17 + $0x74] sm:$0xf] %v1544
    %1609 = vst [vmem:[#allocation17 + $0x78] sm:$0xf] %v1545
    %1610 = vst [vmem:[#allocation17 + $0x7c] sm:$0xf] %v1546
    %v1611 = vpack.c.bf16 %v1168, %v1165
    %v1612 = vpack.c.bf16 %v1176, %v1173
    %v1613 = vpack.c.bf16 %v1184, %v1181
    %v1614 = vpack.c.bf16 %v1192, %v1189
    %v1615 = vpack.c.bf16 %v1200, %v1197
    %v1616 = vpack.c.bf16 %v1208, %v1205
    %v1617 = vpack.c.bf16 %v1216, %v1213
    %v1618 = vpack.c.bf16 %v1224, %v1221
    %v1619 = vpack.c.bf16 %v1232, %v1229
    %v1620 = vpack.c.bf16 %v1240, %v1237
    %v1621 = vpack.c.bf16 %v1248, %v1245
    %v1622 = vpack.c.bf16 %v1256, %v1253
    %v1623 = vpack.c.bf16 %v1264, %v1261
    %v1624 = vpack.c.bf16 %v1272, %v1269
    %v1625 = vpack.c.bf16 %v1280, %v1277
    %v1626 = vpack.c.bf16 %v1288, %v1285
    %v1643 = vunpack.c.l.b16 %v1611
    %v1644 = vunpack.c.h.b16 %v1611
    %v1645 = vunpack.c.l.b16 %v1612
    %v1646 = vunpack.c.h.b16 %v1612
    %v1647 = vunpack.c.l.b16 %v1613
    %v1648 = vunpack.c.h.b16 %v1613
    %v1649 = vunpack.c.l.b16 %v1614
    %v1650 = vunpack.c.h.b16 %v1614
    %v1651 = vunpack.c.l.b16 %v1615
    %v1652 = vunpack.c.h.b16 %v1615
    %v1653 = vunpack.c.l.b16 %v1616
    %v1654 = vunpack.c.h.b16 %v1616
    %v1655 = vunpack.c.l.b16 %v1617
    %v1656 = vunpack.c.h.b16 %v1617
    %v1657 = vunpack.c.l.b16 %v1618
    %v1658 = vunpack.c.h.b16 %v1618
    %v1659 = vunpack.c.l.b16 %v1619
    %v1660 = vunpack.c.h.b16 %v1619
    %v1661 = vunpack.c.l.b16 %v1620
    %v1662 = vunpack.c.h.b16 %v1620
    %v1663 = vunpack.c.l.b16 %v1621
    %v1664 = vunpack.c.h.b16 %v1621
    %v1665 = vunpack.c.l.b16 %v1622
    %v1666 = vunpack.c.h.b16 %v1622
    %v1667 = vunpack.c.l.b16 %v1623
    %v1668 = vunpack.c.h.b16 %v1623
    %v1669 = vunpack.c.l.b16 %v1624
    %v1670 = vunpack.c.h.b16 %v1624
    %v1671 = vunpack.c.l.b16 %v1625
    %v1672 = vunpack.c.h.b16 %v1625
    %v1673 = vunpack.c.l.b16 %v1626
    %v1674 = vunpack.c.h.b16 %v1626
    %v1675 = vpack.c.b16 %v1643, %v1643
    %v1676 = vpack.c.b16 %v1644, %v1644
    %v1677 = vpack.c.b16 %v1645, %v1645
    %v1678 = vpack.c.b16 %v1646, %v1646
    %v1679 = vpack.c.b16 %v1647, %v1647
    %v1680 = vpack.c.b16 %v1648, %v1648
    %v1681 = vpack.c.b16 %v1649, %v1649
    %v1682 = vpack.c.b16 %v1650, %v1650
    %v1683 = vpack.c.b16 %v1651, %v1651
    %v1684 = vpack.c.b16 %v1652, %v1652
    %v1685 = vpack.c.b16 %v1653, %v1653
    %v1686 = vpack.c.b16 %v1654, %v1654
    %v1687 = vpack.c.b16 %v1655, %v1655
    %v1688 = vpack.c.b16 %v1656, %v1656
    %v1689 = vpack.c.b16 %v1657, %v1657
    %v1690 = vpack.c.b16 %v1658, %v1658
    %v1691 = vpack.c.b16 %v1659, %v1659
    %v1692 = vpack.c.b16 %v1660, %v1660
    %v1693 = vpack.c.b16 %v1661, %v1661
    %v1694 = vpack.c.b16 %v1662, %v1662
    %v1695 = vpack.c.b16 %v1663, %v1663
    %v1696 = vpack.c.b16 %v1664, %v1664
    %v1697 = vpack.c.b16 %v1665, %v1665
    %v1698 = vpack.c.b16 %v1666, %v1666
    %v1699 = vpack.c.b16 %v1667, %v1667
    %v1700 = vpack.c.b16 %v1668, %v1668
    %v1701 = vpack.c.b16 %v1669, %v1669
    %v1702 = vpack.c.b16 %v1670, %v1670
    %v1703 = vpack.c.b16 %v1671, %v1671
    %v1704 = vpack.c.b16 %v1672, %v1672
    %v1705 = vpack.c.b16 %v1673, %v1673
    %v1706 = vpack.c.b16 %v1674, %v1674
    %1739 = vst [vmem:[#allocation18] sm:$0xf] %v1675
    %1740 = vst [vmem:[#allocation18 + $0x4] sm:$0xf] %v1676
    %1741 = vst [vmem:[#allocation18 + $0x8] sm:$0xf] %v1677
    %1742 = vst [vmem:[#allocation18 + $0xc] sm:$0xf] %v1678
    %1743 = vst [vmem:[#allocation18 + $0x10] sm:$0xf] %v1679
    %1744 = vst [vmem:[#allocation18 + $0x14] sm:$0xf] %v1680
    %1745 = vst [vmem:[#allocation18 + $0x18] sm:$0xf] %v1681
    %1746 = vst [vmem:[#allocation18 + $0x1c] sm:$0xf] %v1682
    %1747 = vst [vmem:[#allocation18 + $0x20] sm:$0xf] %v1683
    %1748 = vst [vmem:[#allocation18 + $0x24] sm:$0xf] %v1684
    %1749 = vst [vmem:[#allocation18 + $0x28] sm:$0xf] %v1685
    %1750 = vst [vmem:[#allocation18 + $0x2c] sm:$0xf] %v1686
    %1751 = vst [vmem:[#allocation18 + $0x30] sm:$0xf] %v1687
    %1752 = vst [vmem:[#allocation18 + $0x34] sm:$0xf] %v1688
    %1753 = vst [vmem:[#allocation18 + $0x38] sm:$0xf] %v1689
    %1754 = vst [vmem:[#allocation18 + $0x3c] sm:$0xf] %v1690
    %1755 = vst [vmem:[#allocation18 + $0x40] sm:$0xf] %v1691
    %1756 = vst [vmem:[#allocation18 + $0x44] sm:$0xf] %v1692
    %1757 = vst [vmem:[#allocation18 + $0x48] sm:$0xf] %v1693
    %1758 = vst [vmem:[#allocation18 + $0x4c] sm:$0xf] %v1694
    %1759 = vst [vmem:[#allocation18 + $0x50] sm:$0xf] %v1695
    %1760 = vst [vmem:[#allocation18 + $0x54] sm:$0xf] %v1696
    %1761 = vst [vmem:[#allocation18 + $0x58] sm:$0xf] %v1697
    %1762 = vst [vmem:[#allocation18 + $0x5c] sm:$0xf] %v1698
    %1763 = vst [vmem:[#allocation18 + $0x60] sm:$0xf] %v1699
    %1764 = vst [vmem:[#allocation18 + $0x64] sm:$0xf] %v1700
    %1765 = vst [vmem:[#allocation18 + $0x68] sm:$0xf] %v1701
    %1766 = vst [vmem:[#allocation18 + $0x6c] sm:$0xf] %v1702
    %1767 = vst [vmem:[#allocation18 + $0x70] sm:$0xf] %v1703
    %1768 = vst [vmem:[#allocation18 + $0x74] sm:$0xf] %v1704
    %1769 = vst [vmem:[#allocation18 + $0x78] sm:$0xf] %v1705
    %1770 = vst [vmem:[#allocation18 + $0x7c] sm:$0xf] %v1706
    // Predicated region
    $region58: #{nonlocal_net_cost.8} parent=1 // pred_check
      _
    $region59: #{nonlocal_net_cost.8} parent=1 // pred_check_branch
      %1772 = sbr.rel (0) target = $region61
    $region60: #{nonlocal_net_cost.8} parent=1 // pred_region
      %s1774 = ssub.s32 4096, 4096
      %1775 = vsyncadd [#allocation4], %s1774
      %s1776 = sshll.u32 [#allocation14], 4
      %s1777 = int_to_ptr.vmem [resolvable:$true] %s1776
      %1782 = dma.vmem_to_hbm [thread:$0]  %s1777, 4096, %s7, [#allocation4], 128, 128, 8
    $region61: #{nonlocal_net_cost.8} parent=1 // pred_fallthru
      _
    // Predicated region
    $region62: #{nonlocal_net_cost.8} parent=1 // pred_check
      _
    $region63: #{nonlocal_net_cost.8} parent=1 // pred_check_branch
      %1784 = sbr.rel (0) target = $region65
    $region64: #{nonlocal_net_cost.8} parent=1 // pred_region
      %s1786 = ssub.s32 2048, 2048
      %1787 = vsyncadd [#allocation16], %s1786
      %s1788 = sshll.u32 [#allocation15], 4
      %s1789 = int_to_ptr.vmem [resolvable:$true] %s1788
      %1794 = dma.vmem_to_hbm [thread:$0]  %s1789, 2048, %s8, [#allocation16], 64, 64, 4
    $region65: #{nonlocal_net_cost.8} parent=1 // pred_fallthru
      _
    // Predicated region
    $region66: #{nonlocal_net_cost.8} parent=1 // pred_check
      _
    $region67: #{nonlocal_net_cost.8} parent=1 // pred_check_branch
      %1796 = sbr.rel (0) target = $region69
    $region68: #{nonlocal_net_cost.8} parent=1 // pred_region
      %s1798 = ssub.s32 2048, 2048
      %1799 = vsyncadd [#allocation16], %s1798
      %s1800 = sshll.u32 [#allocation17], 4
      %s1801 = int_to_ptr.vmem [resolvable:$true] %s1800
      %1806 = dma.vmem_to_hbm [thread:$0]  %s1801, 2048, %s9, [#allocation16], 64, 64, 4
    $region69: #{nonlocal_net_cost.8} parent=1 // pred_fallthru
      _
    // Predicated region
    $region70: #{nonlocal_net_cost.8} parent=1 // pred_check
      _
    $region71: #{nonlocal_net_cost.8} parent=1 // pred_check_branch
      %1808 = sbr.rel (0) target = $region73
    $region72: #{nonlocal_net_cost.8} parent=1 // pred_region
      %s1810 = ssub.s32 2048, 2048
      %1811 = vsyncadd [#allocation19], %s1810
      %s1812 = sshll.u32 [#allocation18], 4
      %s1813 = int_to_ptr.vmem [resolvable:$true] %s1812
      %1818 = dma.vmem_to_hbm [thread:$0]  %s1813, 2048, %s10, [#allocation19], 64, 64, 4
    $region73: #{nonlocal_net_cost.8} parent=1 // pred_fallthru
      _
    // Predicated region
    $region74: #{nonlocal_net_cost.8} parent=1 // pred_check
      _
    $region75: #{nonlocal_net_cost.8} parent=1 // pred_check_branch
      %1820 = sbr.rel (0) target = $region77
    $region76: #{nonlocal_net_cost.8} parent=1 // pred_region
      %1821 = dma.done [#allocation4], 4096
    $region77: #{nonlocal_net_cost.8} parent=1 // pred_fallthru
      _
    // Predicated region
    $region78: #{nonlocal_net_cost.8} parent=1 // pred_check
      _
    $region79: #{nonlocal_net_cost.8} parent=1 // pred_check_branch
      %1823 = sbr.rel (0) target = $region81
    $region80: #{nonlocal_net_cost.8} parent=1 // pred_region
      %1824 = dma.done [#allocation16], 2048
    $region81: #{nonlocal_net_cost.8} parent=1 // pred_fallthru
      _
    // Predicated region
    $region82: #{nonlocal_net_cost.8} parent=1 // pred_check
      _
    $region83: #{nonlocal_net_cost.8} parent=1 // pred_check_branch
      %1826 = sbr.rel (0) target = $region85
    $region84: #{nonlocal_net_cost.8} parent=1 // pred_region
      %1827 = dma.done [#allocation16], 2048
    $region85: #{nonlocal_net_cost.8} parent=1 // pred_fallthru
      _
    // Predicated region
    $region86: #{nonlocal_net_cost.8} parent=1 // pred_check
      _
    $region87: #{nonlocal_net_cost.8} parent=1 // pred_check_branch
      %1829 = sbr.rel (0) target = $region89
    $region88: #{nonlocal_net_cost.8} parent=1 // pred_region
      %1830 = dma.done [#allocation19], 2048
    $region89: #{nonlocal_net_cost.8} parent=1 // pred_fallthru
      _
    %1831 = vsyncpa [#allocation3], 1
    %1832 = vsyncpa [#allocation6], 1
    %1833 = vsyncpa [#allocation9], 1
    %1834 = vsyncpa [#allocation12], 1
    %1835 = vsyncpa [#allocation4], 1
    %1836 = vsyncpa [#allocation16], 1
    %1837 = vsyncpa [#allocation19], 1

// kernel: nonlocal_net_cost.10
$region0: #{nonlocal_net_cost.10}
  #allocation0 [shape = 'u32[]', space=smem, size = 0x4, offset = 0x4, fixed_abs, tag = 'smem constant byte address 0x4 - core index']
  #allocation1 [shape = 'u32[144,128]{1,0:T(1,128)}', space=vmem, size = 0x12000, scoped, tag = 'internal scratch']
  %s0 = inlined_call_operand.hbm [shape: bf16[256,128], index: 0, kind: input, shape index: {}]
  %s1 = inlined_call_operand.hbm [shape: f32[256,128], index: 1, kind: input, shape index: {}]
  %s2 = inlined_call_operand.hbm [shape: bf16[128,64], index: 2, kind: input, shape index: {}]
  %s3 = inlined_call_operand.hbm [shape: f32[1,64], index: 3, kind: input, shape index: {}]
  %s4 = inlined_call_operand.hbm [shape: f32[1,64], index: 4, kind: input, shape index: {}, may-alias: {4,8}]
  %s5 = inlined_call_operand.hbm [shape: f32[1,64], index: 5, kind: input, shape index: {}, may-alias: {5,9}]
  %s6 = inlined_call_operand.hbm [shape: bf16[64,64], index: 6, kind: input, shape index: {}]
  %s7 = inlined_call_operand.hbm [shape: f32[1,64], index: 7, kind: input, shape index: {}]
  %s8 = inlined_call_operand.hbm [shape: f32[1,64], index: 8, kind: input, shape index: {}, may-alias: {4,8}]
  %s9 = inlined_call_operand.hbm [shape: f32[1,64], index: 9, kind: input, shape index: {}, may-alias: {5,9}]
  %s10 = inlined_call_operand.hbm [shape: bf16[64,128], index: 10, kind: input, shape index: {}]
  %s11 = inlined_call_operand.hbm [shape: f32[1,128], index: 11, kind: input, shape index: {}]
  %s12 = inlined_call_operand.hbm [shape: f32[256,128], index: 12, kind: output, shape index: {}]
  %s13 = sld [smem:[#allocation0]]
  $region106: #{nonlocal_net_cost.10} parent=0
    _
  %s15 = ssub.s32 1, %s13
  %s16 = scalar_select 0, %s15, %s13
  $region1: #{nonlocal_net_cost.10} parent=0
    #allocation2 [shape = 'u8[65536]{0}', space=vmem, size = 0x10000, scoped, tag = 'input window, operand 0, single buffered']
    #allocation3 [shape = 's32[1]{0}', space=sflag, size = 0x4, scoped, tag = 'scoped memory for nonlocal_net_cost.10']
    #allocation4 [shape = 's32[1]{0}', space=sflag, size = 0x4, scoped, tag = 'scoped memory for nonlocal_net_cost.10']
    #allocation5 [shape = 'u8[131072]{0}', space=vmem, size = 0x20000, scoped, tag = 'input window, operand 1, single buffered']
    #allocation6 [shape = 's32[1]{0}', space=sflag, size = 0x4, scoped, tag = 'scoped memory for nonlocal_net_cost.10']
    #allocation7 [shape = 'u8[32768]{0}', space=vmem, size = 0x8000, scoped, tag = 'input window, operand 2, single buffered']
    #allocation8 [shape = 'u8[512]{0}', space=vmem, size = 0x400, scoped, tag = 'input window, operand 3, single buffered']
    #allocation9 [shape = 's32[1]{0}', space=sflag, size = 0x4, scoped, tag = 'scoped memory for nonlocal_net_cost.10']
    #allocation10 [shape = 'u8[512]{0}', space=vmem, size = 0x400, scoped, tag = 'input window, operand 4, single buffered']
    #allocation11 [shape = 'u8[512]{0}', space=vmem, size = 0x400, scoped, tag = 'input window, operand 5, single buffered']
    #allocation12 [shape = 's32[1]{0}', space=sflag, size = 0x4, scoped, tag = 'scoped memory for nonlocal_net_cost.10']
    #allocation13 [shape = 'u8[16384]{0}', space=vmem, size = 0x4000, scoped, tag = 'input window, operand 6, single buffered']
    #allocation14 [shape = 'u8[512]{0}', space=vmem, size = 0x400, scoped, tag = 'input window, operand 7, single buffered']
    #allocation15 [shape = 's32[1]{0}', space=sflag, size = 0x4, scoped, tag = 'scoped memory for nonlocal_net_cost.10']
    #allocation16 [shape = 'u8[512]{0}', space=vmem, size = 0x400, scoped, tag = 'input window, operand 8, single buffered']
    #allocation17 [shape = 'u8[512]{0}', space=vmem, size = 0x400, scoped, tag = 'input window, operand 9, single buffered']
    #allocation18 [shape = 's32[1]{0}', space=sflag, size = 0x4, scoped, tag = 'scoped memory for nonlocal_net_cost.10']
    #allocation19 [shape = 'u8[16384]{0}', space=vmem, size = 0x4000, scoped, tag = 'input window, operand 10, single buffered']
    #allocation20 [shape = 'u8[512]{0}', space=vmem, size = 0x400, scoped, tag = 'input window, operand 11, single buffered']
    #allocation21 [shape = 's32[1]{0}', space=sflag, size = 0x4, scoped, tag = 'scoped memory for nonlocal_net_cost.10']
    #allocation22 [shape = 'u8[131072]{0}', space=vmem, size = 0x20000, scoped, tag = 'output window, operand 0, single buffered']
    %17 = vsyncpa [#allocation3], 0
    %18 = vsyncpa [#allocation6], 0
    %19 = vsyncpa [#allocation9], 0
    %20 = vsyncpa [#allocation12], 0
    %21 = vsyncpa [#allocation15], 0
    %22 = vsyncpa [#allocation18], 0
    %23 = vsyncpa [#allocation21], 0
    %24 = vsyncpa [#allocation4], 0
    // Predicated region
    $region2: #{nonlocal_net_cost.10} parent=1 // pred_check
      _
    $region3: #{nonlocal_net_cost.10} parent=1 // pred_check_branch
      %26 = sbr.rel (0) target = $region5
    $region4: #{nonlocal_net_cost.10} parent=1 // pred_region
      %s28 = ssub.s32 2048, 2048
      %29 = vsyncadd [#allocation3], %s28
      %s30 = sshll.u32 [#allocation2], 4
      %s31 = int_to_ptr.vmem [resolvable:$true] %s30
      %36 = dma.hbm_to_vmem [thread:$0]  %s0, 2048, %s31, [#allocation3], 64, 64, 4
    $region5: #{nonlocal_net_cost.10} parent=1 // pred_fallthru
      _
    // Predicated region
    $region6: #{nonlocal_net_cost.10} parent=1 // pred_check
      _
    $region7: #{nonlocal_net_cost.10} parent=1 // pred_check_branch
      %38 = sbr.rel (0) target = $region9
    $region8: #{nonlocal_net_cost.10} parent=1 // pred_region
      %s40 = ssub.s32 4096, 4096
      %41 = vsyncadd [#allocation6], %s40
      %s42 = sshll.u32 [#allocation5], 4
      %s43 = int_to_ptr.vmem [resolvable:$true] %s42
      %48 = dma.hbm_to_vmem [thread:$0]  %s1, 4096, %s43, [#allocation6], 128, 128, 8
    $region9: #{nonlocal_net_cost.10} parent=1 // pred_fallthru
      _
    // Predicated region
    $region10: #{nonlocal_net_cost.10} parent=1 // pred_check
      _
    $region11: #{nonlocal_net_cost.10} parent=1 // pred_check_branch
      %50 = sbr.rel (0) target = $region13
    $region12: #{nonlocal_net_cost.10} parent=1 // pred_region
      %s52 = ssub.s32 1024, 1024
      %53 = vsyncadd [#allocation6], %s52
      %s54 = sshll.u32 [#allocation7], 4
      %s55 = int_to_ptr.vmem [resolvable:$true] %s54
      %60 = dma.hbm_to_vmem [thread:$0]  %s2, 1024, %s55, [#allocation6], 64, 64, 4
    $region13: #{nonlocal_net_cost.10} parent=1 // pred_fallthru
      _
    // Predicated region
    $region14: #{nonlocal_net_cost.10} parent=1 // pred_check
      _
    $region15: #{nonlocal_net_cost.10} parent=1 // pred_check_branch
      %62 = sbr.rel (0) target = $region17
    $region16: #{nonlocal_net_cost.10} parent=1 // pred_region
      %s64 = ssub.s32 16, 16
      %65 = vsyncadd [#allocation9], %s64
      %s67 = sshll.u32 [#allocation8], 4
      %s68 = int_to_ptr.vmem [resolvable:$true] %s67
      %70 = dma.hbm_to_vmem [thread:$0]  %s3, 16, %s68, [#allocation9]
    $region17: #{nonlocal_net_cost.10} parent=1 // pred_fallthru
      _
    // Predicated region
    $region18: #{nonlocal_net_cost.10} parent=1 // pred_check
      _
    $region19: #{nonlocal_net_cost.10} parent=1 // pred_check_branch
      %72 = sbr.rel (0) target = $region21
    $region20: #{nonlocal_net_cost.10} parent=1 // pred_region
      %s74 = ssub.s32 16, 16
      %75 = vsyncadd [#allocation9], %s74
      %s77 = sshll.u32 [#allocation10], 4
      %s78 = int_to_ptr.vmem [resolvable:$true] %s77
      %80 = dma.hbm_to_vmem [thread:$0]  %s4, 16, %s78, [#allocation9]
    $region21: #{nonlocal_net_cost.10} parent=1 // pred_fallthru
      _
    // Predicated region
    $region22: #{nonlocal_net_cost.10} parent=1 // pred_check
      _
    $region23: #{nonlocal_net_cost.10} parent=1 // pred_check_branch
      %82 = sbr.rel (0) target = $region25
    $region24: #{nonlocal_net_cost.10} parent=1 // pred_region
      %s84 = ssub.s32 16, 16
      %85 = vsyncadd [#allocation12], %s84
      %s87 = sshll.u32 [#allocation11], 4
      %s88 = int_to_ptr.vmem [resolvable:$true] %s87
      %90 = dma.hbm_to_vmem [thread:$0]  %s5, 16, %s88, [#allocation12]
    $region25: #{nonlocal_net_cost.10} parent=1 // pred_fallthru
      _
    // Predicated region
    $region26: #{nonlocal_net_cost.10} parent=1 // pred_check
      _
    $region27: #{nonlocal_net_cost.10} parent=1 // pred_check_branch
      %92 = sbr.rel (0) target = $region29
    $region28: #{nonlocal_net_cost.10} parent=1 // pred_region
      %s94 = ssub.s32 512, 512
      %95 = vsyncadd [#allocation12], %s94
      %s96 = sshll.u32 [#allocation13], 4
      %s97 = int_to_ptr.vmem [resolvable:$true] %s96
      %102 = dma.hbm_to_vmem [thread:$0]  %s6, 512, %s97, [#allocation12], 64, 64, 4
    $region29: #{nonlocal_net_cost.10} parent=1 // pred_fallthru
      _
    // Predicated region
    $region30: #{nonlocal_net_cost.10} parent=1 // pred_check
      _
    $region31: #{nonlocal_net_cost.10} parent=1 // pred_check_branch
      %104 = sbr.rel (0) target = $region33
    $region32: #{nonlocal_net_cost.10} parent=1 // pred_region
      %s106 = ssub.s32 16, 16
      %107 = vsyncadd [#allocation15], %s106
      %s109 = sshll.u32 [#allocation14], 4
      %s110 = int_to_ptr.vmem [resolvable:$true] %s109
      %112 = dma.hbm_to_vmem [thread:$0]  %s7, 16, %s110, [#allocation15]
    $region33: #{nonlocal_net_cost.10} parent=1 // pred_fallthru
      _
    // Predicated region
    $region34: #{nonlocal_net_cost.10} parent=1 // pred_check
      _
    $region35: #{nonlocal_net_cost.10} parent=1 // pred_check_branch
      %114 = sbr.rel (0) target = $region37
    $region36: #{nonlocal_net_cost.10} parent=1 // pred_region
      %s116 = ssub.s32 16, 16
      %117 = vsyncadd [#allocation15], %s116
      %s119 = sshll.u32 [#allocation16], 4
      %s120 = int_to_ptr.vmem [resolvable:$true] %s119
      %122 = dma.hbm_to_vmem [thread:$0]  %s8, 16, %s120, [#allocation15]
    $region37: #{nonlocal_net_cost.10} parent=1 // pred_fallthru
      _
    // Predicated region
    $region38: #{nonlocal_net_cost.10} parent=1 // pred_check
      _
    $region39: #{nonlocal_net_cost.10} parent=1 // pred_check_branch
      %124 = sbr.rel (0) target = $region41
    $region40: #{nonlocal_net_cost.10} parent=1 // pred_region
      %s126 = ssub.s32 16, 16
      %127 = vsyncadd [#allocation18], %s126
      %s129 = sshll.u32 [#allocation17], 4
      %s130 = int_to_ptr.vmem [resolvable:$true] %s129
      %132 = dma.hbm_to_vmem [thread:$0]  %s9, 16, %s130, [#allocation18]
    $region41: #{nonlocal_net_cost.10} parent=1 // pred_fallthru
      _
    // Predicated region
    $region42: #{nonlocal_net_cost.10} parent=1 // pred_check
      _
    $region43: #{nonlocal_net_cost.10} parent=1 // pred_check_branch
      %134 = sbr.rel (0) target = $region45
    $region44: #{nonlocal_net_cost.10} parent=1 // pred_region
      %s136 = ssub.s32 512, 512
      %137 = vsyncadd [#allocation18], %s136
      %s138 = sshll.u32 [#allocation19], 4
      %s139 = int_to_ptr.vmem [resolvable:$true] %s138
      %144 = dma.hbm_to_vmem [thread:$0]  %s10, 512, %s139, [#allocation18], 64, 64, 4
    $region45: #{nonlocal_net_cost.10} parent=1 // pred_fallthru
      _
    // Predicated region
    $region46: #{nonlocal_net_cost.10} parent=1 // pred_check
      _
    $region47: #{nonlocal_net_cost.10} parent=1 // pred_check_branch
      %146 = sbr.rel (0) target = $region49
    $region48: #{nonlocal_net_cost.10} parent=1 // pred_region
      %s148 = ssub.s32 16, 16
      %149 = vsyncadd [#allocation21], %s148
      %s151 = sshll.u32 [#allocation20], 4
      %s152 = int_to_ptr.vmem [resolvable:$true] %s151
      %154 = dma.hbm_to_vmem [thread:$0]  %s11, 16, %s152, [#allocation21]
    $region49: #{nonlocal_net_cost.10} parent=1 // pred_fallthru
      _
    // Predicated region
    $region50: #{nonlocal_net_cost.10} parent=1 // pred_check
      _
    $region51: #{nonlocal_net_cost.10} parent=1 // pred_check_branch
      %156 = sbr.rel (0) target = $region53
    $region52: #{nonlocal_net_cost.10} parent=1 // pred_region
      %157 = dma.done [#allocation3], 2048
    $region53: #{nonlocal_net_cost.10} parent=1 // pred_fallthru
      _
    // Predicated region
    $region54: #{nonlocal_net_cost.10} parent=1 // pred_check
      _
    $region55: #{nonlocal_net_cost.10} parent=1 // pred_check_branch
      %159 = sbr.rel (0) target = $region57
    $region56: #{nonlocal_net_cost.10} parent=1 // pred_region
      %160 = dma.done [#allocation6], 4096
    $region57: #{nonlocal_net_cost.10} parent=1 // pred_fallthru
      _
    // Predicated region
    $region58: #{nonlocal_net_cost.10} parent=1 // pred_check
      _
    $region59: #{nonlocal_net_cost.10} parent=1 // pred_check_branch
      %162 = sbr.rel (0) target = $region61
    $region60: #{nonlocal_net_cost.10} parent=1 // pred_region
      %163 = dma.done [#allocation6], 1024
    $region61: #{nonlocal_net_cost.10} parent=1 // pred_fallthru
      _
    // Predicated region
    $region62: #{nonlocal_net_cost.10} parent=1 // pred_check
      _
    $region63: #{nonlocal_net_cost.10} parent=1 // pred_check_branch
      %165 = sbr.rel (0) target = $region65
    $region64: #{nonlocal_net_cost.10} parent=1 // pred_region
      %166 = dma.done [#allocation9], 16
    $region65: #{nonlocal_net_cost.10} parent=1 // pred_fallthru
      _
    // Predicated region
    $region66: #{nonlocal_net_cost.10} parent=1 // pred_check
      _
    $region67: #{nonlocal_net_cost.10} parent=1 // pred_check_branch
      %168 = sbr.rel (0) target = $region69
    $region68: #{nonlocal_net_cost.10} parent=1 // pred_region
      %169 = dma.done [#allocation9], 16
    $region69: #{nonlocal_net_cost.10} parent=1 // pred_fallthru
      _
    // Predicated region
    $region70: #{nonlocal_net_cost.10} parent=1 // pred_check
      _
    $region71: #{nonlocal_net_cost.10} parent=1 // pred_check_branch
      %171 = sbr.rel (0) target = $region73
    $region72: #{nonlocal_net_cost.10} parent=1 // pred_region
      %172 = dma.done [#allocation12], 16
    $region73: #{nonlocal_net_cost.10} parent=1 // pred_fallthru
      _
    // Predicated region
    $region74: #{nonlocal_net_cost.10} parent=1 // pred_check
      _
    $region75: #{nonlocal_net_cost.10} parent=1 // pred_check_branch
      %174 = sbr.rel (0) target = $region77
    $region76: #{nonlocal_net_cost.10} parent=1 // pred_region
      %175 = dma.done [#allocation12], 512
    $region77: #{nonlocal_net_cost.10} parent=1 // pred_fallthru
      _
    // Predicated region
    $region78: #{nonlocal_net_cost.10} parent=1 // pred_check
      _
    $region79: #{nonlocal_net_cost.10} parent=1 // pred_check_branch
      %177 = sbr.rel (0) target = $region81
    $region80: #{nonlocal_net_cost.10} parent=1 // pred_region
      %178 = dma.done [#allocation15], 16
    $region81: #{nonlocal_net_cost.10} parent=1 // pred_fallthru
      _
    // Predicated region
    $region82: #{nonlocal_net_cost.10} parent=1 // pred_check
      _
    $region83: #{nonlocal_net_cost.10} parent=1 // pred_check_branch
      %180 = sbr.rel (0) target = $region85
    $region84: #{nonlocal_net_cost.10} parent=1 // pred_region
      %181 = dma.done [#allocation15], 16
    $region85: #{nonlocal_net_cost.10} parent=1 // pred_fallthru
      _
    // Predicated region
    $region86: #{nonlocal_net_cost.10} parent=1 // pred_check
      _
    $region87: #{nonlocal_net_cost.10} parent=1 // pred_check_branch
      %183 = sbr.rel (0) target = $region89
    $region88: #{nonlocal_net_cost.10} parent=1 // pred_region
      %184 = dma.done [#allocation18], 16
    $region89: #{nonlocal_net_cost.10} parent=1 // pred_fallthru
      _
    // Predicated region
    $region90: #{nonlocal_net_cost.10} parent=1 // pred_check
      _
    $region91: #{nonlocal_net_cost.10} parent=1 // pred_check_branch
      %186 = sbr.rel (0) target = $region93
    $region92: #{nonlocal_net_cost.10} parent=1 // pred_region
      %187 = dma.done [#allocation18], 512
    $region93: #{nonlocal_net_cost.10} parent=1 // pred_fallthru
      _
    // Predicated region
    $region94: #{nonlocal_net_cost.10} parent=1 // pred_check
      _
    $region95: #{nonlocal_net_cost.10} parent=1 // pred_check_branch
      %189 = sbr.rel (0) target = $region97
    $region96: #{nonlocal_net_cost.10} parent=1 // pred_region
      %190 = dma.done [#allocation21], 16
    $region97: #{nonlocal_net_cost.10} parent=1 // pred_fallthru
      _
    %v192 = vld [vmem:[#allocation2] sm:$0xf]
    %v193 = vld [vmem:[#allocation2 + $0x4] sm:$0xf]
    %v194 = vld [vmem:[#allocation2 + $0x8] sm:$0xf]
    %v195 = vld [vmem:[#allocation2 + $0xc] sm:$0xf]
    %v196 = vld [vmem:[#allocation2 + $0x10] sm:$0xf]
    %v197 = vld [vmem:[#allocation2 + $0x14] sm:$0xf]
    %v198 = vld [vmem:[#allocation2 + $0x18] sm:$0xf]
    %v199 = vld [vmem:[#allocation2 + $0x1c] sm:$0xf]
    %v200 = vld [vmem:[#allocation2 + $0x20] sm:$0xf]
    %v201 = vld [vmem:[#allocation2 + $0x24] sm:$0xf]
    %v202 = vld [vmem:[#allocation2 + $0x28] sm:$0xf]
    %v203 = vld [vmem:[#allocation2 + $0x2c] sm:$0xf]
    %v204 = vld [vmem:[#allocation2 + $0x30] sm:$0xf]
    %v205 = vld [vmem:[#allocation2 + $0x34] sm:$0xf]
    %v206 = vld [vmem:[#allocation2 + $0x38] sm:$0xf]
    %v207 = vld [vmem:[#allocation2 + $0x3c] sm:$0xf]
    %v208 = vld [vmem:[#allocation2 + $0x40] sm:$0xf]
    %v209 = vld [vmem:[#allocation2 + $0x44] sm:$0xf]
    %v210 = vld [vmem:[#allocation2 + $0x48] sm:$0xf]
    %v211 = vld [vmem:[#allocation2 + $0x4c] sm:$0xf]
    %v212 = vld [vmem:[#allocation2 + $0x50] sm:$0xf]
    %v213 = vld [vmem:[#allocation2 + $0x54] sm:$0xf]
    %v214 = vld [vmem:[#allocation2 + $0x58] sm:$0xf]
    %v215 = vld [vmem:[#allocation2 + $0x5c] sm:$0xf]
    %v216 = vld [vmem:[#allocation2 + $0x60] sm:$0xf]
    %v217 = vld [vmem:[#allocation2 + $0x64] sm:$0xf]
    %v218 = vld [vmem:[#allocation2 + $0x68] sm:$0xf]
    %v219 = vld [vmem:[#allocation2 + $0x6c] sm:$0xf]
    %v220 = vld [vmem:[#allocation2 + $0x70] sm:$0xf]
    %v221 = vld [vmem:[#allocation2 + $0x74] sm:$0xf]
    %v222 = vld [vmem:[#allocation2 + $0x78] sm:$0xf]
    %v223 = vld [vmem:[#allocation2 + $0x7c] sm:$0xf]
    %v224 = vld [vmem:[#allocation7] sm:$0xf]
    %v225 = vld [vmem:[#allocation7 + $0x4] sm:$0xf]
    %v226 = vld [vmem:[#allocation7 + $0x8] sm:$0xf]
    %v227 = vld [vmem:[#allocation7 + $0xc] sm:$0xf]
    %v228 = vld [vmem:[#allocation7 + $0x10] sm:$0xf]
    %v229 = vld [vmem:[#allocation7 + $0x14] sm:$0xf]
    %v230 = vld [vmem:[#allocation7 + $0x18] sm:$0xf]
    %v231 = vld [vmem:[#allocation7 + $0x1c] sm:$0xf]
    %v232 = vld [vmem:[#allocation7 + $0x20] sm:$0xf]
    %v233 = vld [vmem:[#allocation7 + $0x24] sm:$0xf]
    %v234 = vld [vmem:[#allocation7 + $0x28] sm:$0xf]
    %v235 = vld [vmem:[#allocation7 + $0x2c] sm:$0xf]
    %v236 = vld [vmem:[#allocation7 + $0x30] sm:$0xf]
    %v237 = vld [vmem:[#allocation7 + $0x34] sm:$0xf]
    %v238 = vld [vmem:[#allocation7 + $0x38] sm:$0xf]
    %v239 = vld [vmem:[#allocation7 + $0x3c] sm:$0xf]
    %v240 = vld [vmem:[#allocation8] sm:$0x1]
    %v242 = vlaneseq
    %v243 = vshrl.u32 %v242, 7
    %v244 = vsub.s32 0, %v243
    %v245 = vrot.slane %v240, %v244
    %v279 = vunpack.c.l.b16 %v192
    %v280 = vunpack.c.l.b16 %v193
    %v281 = vunpack.c.l.b16 %v194
    %v282 = vunpack.c.l.b16 %v195
    %v283 = vunpack.c.l.b16 %v196
    %v284 = vunpack.c.l.b16 %v197
    %v285 = vunpack.c.l.b16 %v198
    %v286 = vunpack.c.l.b16 %v199
    %v287 = vunpack.c.l.b16 %v200
    %v288 = vunpack.c.l.b16 %v201
    %v289 = vunpack.c.l.b16 %v202
    %v290 = vunpack.c.l.b16 %v203
    %v291 = vunpack.c.l.b16 %v204
    %v292 = vunpack.c.l.b16 %v205
    %v293 = vunpack.c.l.b16 %v206
    %v294 = vunpack.c.l.b16 %v207
    %v295 = vunpack.c.l.b16 %v208
    %v296 = vunpack.c.l.b16 %v209
    %v297 = vunpack.c.l.b16 %v210
    %v298 = vunpack.c.l.b16 %v211
    %v299 = vunpack.c.l.b16 %v212
    %v300 = vunpack.c.l.b16 %v213
    %v301 = vunpack.c.l.b16 %v214
    %v302 = vunpack.c.l.b16 %v215
    %v303 = vunpack.c.l.b16 %v216
    %v304 = vunpack.c.l.b16 %v217
    %v305 = vunpack.c.l.b16 %v218
    %v306 = vunpack.c.l.b16 %v219
    %v307 = vunpack.c.l.b16 %v220
    %v308 = vunpack.c.l.b16 %v221
    %v309 = vunpack.c.l.b16 %v222
    %v310 = vunpack.c.l.b16 %v223
    %v311 = vpack.c.b16 %v280, %v279
    %v312 = vpack.c.b16 %v282, %v281
    %v313 = vpack.c.b16 %v284, %v283
    %v314 = vpack.c.b16 %v286, %v285
    %v315 = vpack.c.b16 %v288, %v287
    %v316 = vpack.c.b16 %v290, %v289
    %v317 = vpack.c.b16 %v292, %v291
    %v318 = vpack.c.b16 %v294, %v293
    %v319 = vpack.c.b16 %v296, %v295
    %v320 = vpack.c.b16 %v298, %v297
    %v321 = vpack.c.b16 %v300, %v299
    %v322 = vpack.c.b16 %v302, %v301
    %v323 = vpack.c.b16 %v304, %v303
    %v324 = vpack.c.b16 %v306, %v305
    %v325 = vpack.c.b16 %v308, %v307
    %v326 = vpack.c.b16 %v310, %v309
    %v359 = vunpack.c.l.b16 %v224
    %v360 = vunpack.c.l.b16 %v225
    %v361 = vunpack.c.l.b16 %v226
    %v362 = vunpack.c.l.b16 %v227
    %v363 = vunpack.c.l.b16 %v228
    %v364 = vunpack.c.l.b16 %v229
    %v365 = vunpack.c.l.b16 %v230
    %v366 = vunpack.c.l.b16 %v231
    %v367 = vunpack.c.l.b16 %v232
    %v368 = vunpack.c.l.b16 %v233
    %v369 = vunpack.c.l.b16 %v234
    %v370 = vunpack.c.l.b16 %v235
    %v371 = vunpack.c.l.b16 %v236
    %v372 = vunpack.c.l.b16 %v237
    %v373 = vunpack.c.l.b16 %v238
    %v374 = vunpack.c.l.b16 %v239
    %v375 = vpack.c.b16 %v360, %v359
    %v376 = vpack.c.b16 %v362, %v361
    %v377 = vpack.c.b16 %v364, %v363
    %v378 = vpack.c.b16 %v366, %v365
    %v379 = vpack.c.b16 %v368, %v367
    %v380 = vpack.c.b16 %v370, %v369
    %v381 = vpack.c.b16 %v372, %v371
    %v382 = vpack.c.b16 %v374, %v373
    %391 = vmatprep.subr.bf16.mxu0 0
    %392 = vmatpush1.bf16.msra.mxu0 %v375
    %393 = vmatprep.subr.bf16.mxu0 0
    %394 = vmatpush1.bf16.msra.mxu0 %v376
    %395 = vmatprep.subr.bf16.mxu0 0
    %396 = vmatpush1.bf16.msra.mxu0 %v377
    %397 = vmatprep.subr.bf16.mxu0 0
    %398 = vmatpush1.bf16.msra.mxu0 %v378
    %399 = vmatprep.subr.bf16.mxu0 0
    %400 = vmatpush1.bf16.msra.mxu0 %v379
    %401 = vmatprep.subr.bf16.mxu0 0
    %402 = vmatpush1.bf16.msra.mxu0 %v380
    %403 = vmatprep.subr.bf16.mxu0 0
    %404 = vmatpush1.bf16.msra.mxu0 %v381
    %405 = vmatprep.subr.bf16.mxu0 0
    %406 = vmatpush1.bf16.msra.mxu0 %v382
    %407 = vmatprep.subr.bf16.mxu0 0
    %408 = vmatpush1.bf16.msra.mxu0 0
    %409 = vmatprep.subr.bf16.mxu0 0
    %410 = vmatpush1.bf16.msra.mxu0 0
    %411 = vmatprep.subr.bf16.mxu0 0
    %412 = vmatpush1.bf16.msra.mxu0 0
    %413 = vmatprep.subr.bf16.mxu0 0
    %414 = vmatpush1.bf16.msra.mxu0 0
    %415 = vmatprep.subr.bf16.mxu0 0
    %416 = vmatpush1.bf16.msra.mxu0 0
    %417 = vmatprep.subr.bf16.mxu0 0
    %418 = vmatpush1.bf16.msra.mxu0 0
    %419 = vmatprep.subr.bf16.mxu0 0
    %420 = vmatpush1.bf16.msra.mxu0 0
    %421 = vmatprep.subr.bf16.mxu0 0
    %422 = vmatpush1.bf16.msra.mxu0 0
    %423 = vmatprep.mubr.bf16.mxu0 0
    %424 = vmatmul.mubr.bf16.gmra.mrb[0].mxu0 %v311
    %v425 = vpop.f32.mrb[0].mxu0
    %v426 = vadd.f32 %v245, %v425
    %v427 = vpop.f32.mrb[0].mxu0
    %v428 = vpop.f32.mrb[0].mxu0
    %v429 = vadd.f32 %v245, %v428
    %v430 = vpop.f32.mrb[0].mxu0
    %431 = vmatprep.mubr.bf16.mxu0 0
    %432 = vmatmul.mubr.bf16.gmra.mrb[0].mxu0 %v312
    %v433 = vpop.f32.mrb[0].mxu0
    %v434 = vadd.f32 %v245, %v433
    %v435 = vpop.f32.mrb[0].mxu0
    %v436 = vpop.f32.mrb[0].mxu0
    %v437 = vadd.f32 %v245, %v436
    %v438 = vpop.f32.mrb[0].mxu0
    %439 = vmatprep.mubr.bf16.mxu0 0
    %440 = vmatmul.mubr.bf16.gmra.mrb[0].mxu0 %v313
    %v441 = vpop.f32.mrb[0].mxu0
    %v442 = vadd.f32 %v245, %v441
    %v443 = vpop.f32.mrb[0].mxu0
    %v444 = vpop.f32.mrb[0].mxu0
    %v445 = vadd.f32 %v245, %v444
    %v446 = vpop.f32.mrb[0].mxu0
    %447 = vmatprep.mubr.bf16.mxu0 0
    %448 = vmatmul.mubr.bf16.gmra.mrb[0].mxu0 %v314
    %v449 = vpop.f32.mrb[0].mxu0
    %v450 = vadd.f32 %v245, %v449
    %v451 = vpop.f32.mrb[0].mxu0
    %v452 = vpop.f32.mrb[0].mxu0
    %v453 = vadd.f32 %v245, %v452
    %v454 = vpop.f32.mrb[0].mxu0
    %455 = vmatprep.mubr.bf16.mxu0 0
    %456 = vmatmul.mubr.bf16.gmra.mrb[0].mxu0 %v315
    %v457 = vpop.f32.mrb[0].mxu0
    %v458 = vadd.f32 %v245, %v457
    %v459 = vpop.f32.mrb[0].mxu0
    %v460 = vpop.f32.mrb[0].mxu0
    %v461 = vadd.f32 %v245, %v460
    %v462 = vpop.f32.mrb[0].mxu0
    %463 = vmatprep.mubr.bf16.mxu0 0
    %464 = vmatmul.mubr.bf16.gmra.mrb[0].mxu0 %v316
    %v465 = vpop.f32.mrb[0].mxu0
    %v466 = vadd.f32 %v245, %v465
    %v467 = vpop.f32.mrb[0].mxu0
    %v468 = vpop.f32.mrb[0].mxu0
    %v469 = vadd.f32 %v245, %v468
    %v470 = vpop.f32.mrb[0].mxu0
    %471 = vmatprep.mubr.bf16.mxu0 0
    %472 = vmatmul.mubr.bf16.gmra.mrb[0].mxu0 %v317
    %v473 = vpop.f32.mrb[0].mxu0
    %v474 = vadd.f32 %v245, %v473
    %v475 = vpop.f32.mrb[0].mxu0
    %v476 = vpop.f32.mrb[0].mxu0
    %v477 = vadd.f32 %v245, %v476
    %v478 = vpop.f32.mrb[0].mxu0
    %479 = vmatprep.mubr.bf16.mxu0 0
    %480 = vmatmul.mubr.bf16.gmra.mrb[0].mxu0 %v318
    %v481 = vpop.f32.mrb[0].mxu0
    %v482 = vadd.f32 %v245, %v481
    %v483 = vpop.f32.mrb[0].mxu0
    %v484 = vpop.f32.mrb[0].mxu0
    %v485 = vadd.f32 %v245, %v484
    %v486 = vpop.f32.mrb[0].mxu0
    %487 = vmatprep.mubr.bf16.mxu0 0
    %488 = vmatmul.mubr.bf16.gmra.mrb[0].mxu0 %v319
    %v489 = vpop.f32.mrb[0].mxu0
    %v490 = vadd.f32 %v245, %v489
    %v491 = vpop.f32.mrb[0].mxu0
    %v492 = vpop.f32.mrb[0].mxu0
    %v493 = vadd.f32 %v245, %v492
    %v494 = vpop.f32.mrb[0].mxu0
    %495 = vmatprep.mubr.bf16.mxu0 0
    %496 = vmatmul.mubr.bf16.gmra.mrb[0].mxu0 %v320
    %v497 = vpop.f32.mrb[0].mxu0
    %v498 = vadd.f32 %v245, %v497
    %v499 = vpop.f32.mrb[0].mxu0
    %v500 = vpop.f32.mrb[0].mxu0
    %v501 = vadd.f32 %v245, %v500
    %v502 = vpop.f32.mrb[0].mxu0
    %503 = vmatprep.mubr.bf16.mxu0 0
    %504 = vmatmul.mubr.bf16.gmra.mrb[0].mxu0 %v321
    %v505 = vpop.f32.mrb[0].mxu0
    %v506 = vadd.f32 %v245, %v505
    %v507 = vpop.f32.mrb[0].mxu0
    %v508 = vpop.f32.mrb[0].mxu0
    %v509 = vadd.f32 %v245, %v508
    %v510 = vpop.f32.mrb[0].mxu0
    %511 = vmatprep.mubr.bf16.mxu0 0
    %512 = vmatmul.mubr.bf16.gmra.mrb[0].mxu0 %v322
    %v513 = vpop.f32.mrb[0].mxu0
    %v514 = vadd.f32 %v245, %v513
    %v515 = vpop.f32.mrb[0].mxu0
    %v516 = vpop.f32.mrb[0].mxu0
    %v517 = vadd.f32 %v245, %v516
    %v518 = vpop.f32.mrb[0].mxu0
    %519 = vmatprep.mubr.bf16.mxu0 0
    %520 = vmatmul.mubr.bf16.gmra.mrb[0].mxu0 %v323
    %v521 = vpop.f32.mrb[0].mxu0
    %v522 = vadd.f32 %v245, %v521
    %v523 = vpop.f32.mrb[0].mxu0
    %v524 = vpop.f32.mrb[0].mxu0
    %v525 = vadd.f32 %v245, %v524
    %v526 = vpop.f32.mrb[0].mxu0
    %527 = vmatprep.mubr.bf16.mxu0 0
    %528 = vmatmul.mubr.bf16.gmra.mrb[0].mxu0 %v324
    %v529 = vpop.f32.mrb[0].mxu0
    %v530 = vadd.f32 %v245, %v529
    %v531 = vpop.f32.mrb[0].mxu0
    %v532 = vpop.f32.mrb[0].mxu0
    %v533 = vadd.f32 %v245, %v532
    %v534 = vpop.f32.mrb[0].mxu0
    %535 = vmatprep.mubr.bf16.mxu0 0
    %536 = vmatmul.mubr.bf16.gmra.mrb[0].mxu0 %v325
    %v537 = vpop.f32.mrb[0].mxu0
    %v538 = vadd.f32 %v245, %v537
    %v539 = vpop.f32.mrb[0].mxu0
    %v540 = vpop.f32.mrb[0].mxu0
    %v541 = vadd.f32 %v245, %v540
    %v542 = vpop.f32.mrb[0].mxu0
    %543 = vmatprep.mubr.bf16.mxu0 0
    %544 = vmatmul.mubr.bf16.gmra.mrb[0].mxu0 %v326
    %v545 = vpop.f32.mrb[0].mxu0
    %v546 = vadd.f32 %v245, %v545
    %v547 = vpop.f32.mrb[0].mxu0
    %v548 = vpop.f32.mrb[0].mxu0
    %v549 = vadd.f32 %v245, %v548
    %v550 = vpop.f32.mrb[0].mxu0
    %551 = vdwg.mxu0
    %v552 = vld [vmem:[#allocation10] sm:$0x1]
    %v553 = vld [vmem:[#allocation11] sm:$0x1]
    %554 = vmatprep.subr.mxu0 0.0
    %555 = vmatpush1.msra.mxu0 %v426
    %556 = vmatprep.subr.mxu0 0.0
    %557 = vmatpush1.msra.mxu0 %v429
    %558 = vmatprep.subr.mxu0 0.0
    %559 = vmatpush1.msra.mxu0 %v434
    %560 = vmatprep.subr.mxu0 0.0
    %561 = vmatpush1.msra.mxu0 %v437
    %562 = vmatprep.subr.mxu0 0.0
    %563 = vmatpush1.msra.mxu0 %v442
    %564 = vmatprep.subr.mxu0 0.0
    %565 = vmatpush1.msra.mxu0 %v445
    %566 = vmatprep.subr.mxu0 0.0
    %567 = vmatpush1.msra.mxu0 %v450
    %568 = vmatprep.subr.mxu0 0.0
    %569 = vmatpush1.msra.mxu0 %v453
    %570 = vmatprep.subr.mxu0 0.0
    %571 = vmatpush1.msra.mxu0 %v458
    %572 = vmatprep.subr.mxu0 0.0
    %573 = vmatpush1.msra.mxu0 %v461
    %574 = vmatprep.subr.mxu0 0.0
    %575 = vmatpush1.msra.mxu0 %v466
    %576 = vmatprep.subr.mxu0 0.0
    %577 = vmatpush1.msra.mxu0 %v469
    %578 = vmatprep.subr.mxu0 0.0
    %579 = vmatpush1.msra.mxu0 %v474
    %580 = vmatprep.subr.mxu0 0.0
    %581 = vmatpush1.msra.mxu0 %v477
    %582 = vmatprep.subr.mxu0 0.0
    %583 = vmatpush1.msra.mxu0 %v482
    %584 = vmatprep.subr.mxu0 0.0
    %585 = vmatpush1.msra.mxu0 %v485
    %586 = vmatprep.subr.mxu0 0.0
    %587 = vmatpush1.msra.mxu0 %v490
    %588 = vmatprep.subr.mxu0 0.0
    %589 = vmatpush1.msra.mxu0 %v493
    %590 = vmatprep.subr.mxu0 0.0
    %591 = vmatpush1.msra.mxu0 %v498
    %592 = vmatprep.subr.mxu0 0.0
    %593 = vmatpush1.msra.mxu0 %v501
    %594 = vmatprep.subr.mxu0 0.0
    %595 = vmatpush1.msra.mxu0 %v506
    %596 = vmatprep.subr.mxu0 0.0
    %597 = vmatpush1.msra.mxu0 %v509
    %598 = vmatprep.subr.mxu0 0.0
    %599 = vmatpush1.msra.mxu0 %v514
    %600 = vmatprep.subr.mxu0 0.0
    %601 = vmatpush1.msra.mxu0 %v517
    %602 = vmatprep.subr.mxu0 0.0
    %603 = vmatpush1.msra.mxu0 %v522
    %604 = vmatprep.subr.mxu0 0.0
    %605 = vmatpush1.msra.mxu0 %v525
    %606 = vmatprep.subr.mxu0 0.0
    %607 = vmatpush1.msra.mxu0 %v530
    %608 = vmatprep.subr.mxu0 0.0
    %609 = vmatpush1.msra.mxu0 %v533
    %610 = vmatprep.subr.mxu0 0.0
    %611 = vmatpush1.msra.mxu0 %v538
    %612 = vmatprep.subr.mxu0 0.0
    %613 = vmatpush1.msra.mxu0 %v541
    %614 = vmatprep.subr.mxu0 0.0
    %615 = vmatpush1.msra.mxu0 %v546
    %616 = vmatprep.subr.mxu0 0.0
    %617 = vmatpush1.msra.mxu0 %v549
    %618 = vmatprep.mubr.f32.mxu0 1.0
    %619 = vmatmul.mubr.f32.gmra.mrb[0].mxu0 1.0
    %v620 = vpop.f32.mrb[0].mxu0
    %v621 = vadd.f32 0.0, %v620
    %v622 = vpop.f32.mrb[0].mxu0
    %623 = vdwg.mxu0
    %v624 = vmul.f32 %v621, 0.00390625
    %v625 = vlaneseq
    %v626 = vshrl.u32 %v625, 7
    %v627 = vsub.s32 0, %v626
    %v628 = vrot.slane %v624, %v627
    %v629 = vsub.f32 %v426, %v628
    %v630 = vsub.f32 %v429, %v628
    %v631 = vsub.f32 %v434, %v628
    %v632 = vsub.f32 %v437, %v628
    %v633 = vsub.f32 %v442, %v628
    %v634 = vsub.f32 %v445, %v628
    %v635 = vsub.f32 %v450, %v628
    %v636 = vsub.f32 %v453, %v628
    %v637 = vsub.f32 %v458, %v628
    %v638 = vsub.f32 %v461, %v628
    %v639 = vsub.f32 %v466, %v628
    %v640 = vsub.f32 %v469, %v628
    %v641 = vsub.f32 %v474, %v628
    %v642 = vsub.f32 %v477, %v628
    %v643 = vsub.f32 %v482, %v628
    %v644 = vsub.f32 %v485, %v628
    %v645 = vsub.f32 %v490, %v628
    %v646 = vsub.f32 %v493, %v628
    %v647 = vsub.f32 %v498, %v628
    %v648 = vsub.f32 %v501, %v628
    %v649 = vsub.f32 %v506, %v628
    %v650 = vsub.f32 %v509, %v628
    %v651 = vsub.f32 %v514, %v628
    %v652 = vsub.f32 %v517, %v628
    %v653 = vsub.f32 %v522, %v628
    %v654 = vsub.f32 %v525, %v628
    %v655 = vsub.f32 %v530, %v628
    %v656 = vsub.f32 %v533, %v628
    %v657 = vsub.f32 %v538, %v628
    %v658 = vsub.f32 %v541, %v628
    %v659 = vsub.f32 %v546, %v628
    %v660 = vsub.f32 %v549, %v628
    %v661 = vmul.f32 %v629, %v629
    %v662 = vmul.f32 %v630, %v630
    %v663 = vmul.f32 %v631, %v631
    %v664 = vmul.f32 %v632, %v632
    %v665 = vmul.f32 %v633, %v633
    %v666 = vmul.f32 %v634, %v634
    %v667 = vmul.f32 %v635, %v635
    %v668 = vmul.f32 %v636, %v636
    %v669 = vmul.f32 %v637, %v637
    %v670 = vmul.f32 %v638, %v638
    %v671 = vmul.f32 %v639, %v639
    %v672 = vmul.f32 %v640, %v640
    %v673 = vmul.f32 %v641, %v641
    %v674 = vmul.f32 %v642, %v642
    %v675 = vmul.f32 %v643, %v643
    %v676 = vmul.f32 %v644, %v644
    %v677 = vmul.f32 %v645, %v645
    %v678 = vmul.f32 %v646, %v646
    %v679 = vmul.f32 %v647, %v647
    %v680 = vmul.f32 %v648, %v648
    %v681 = vmul.f32 %v649, %v649
    %v682 = vmul.f32 %v650, %v650
    %v683 = vmul.f32 %v651, %v651
    %v684 = vmul.f32 %v652, %v652
    %v685 = vmul.f32 %v653, %v653
    %v686 = vmul.f32 %v654, %v654
    %v687 = vmul.f32 %v655, %v655
    %v688 = vmul.f32 %v656, %v656
    %v689 = vmul.f32 %v657, %v657
    %v690 = vmul.f32 %v658, %v658
    %v691 = vmul.f32 %v659, %v659
    %v692 = vmul.f32 %v660, %v660
    %693 = vmatprep.subr.mxu0 0.0
    %694 = vmatpush1.msra.mxu0 %v661
    %695 = vmatprep.subr.mxu0 0.0
    %696 = vmatpush1.msra.mxu0 %v662
    %697 = vmatprep.subr.mxu0 0.0
    %698 = vmatpush1.msra.mxu0 %v663
    %699 = vmatprep.subr.mxu0 0.0
    %700 = vmatpush1.msra.mxu0 %v664
    %701 = vmatprep.subr.mxu0 0.0
    %702 = vmatpush1.msra.mxu0 %v665
    %703 = vmatprep.subr.mxu0 0.0
    %704 = vmatpush1.msra.mxu0 %v666
    %705 = vmatprep.subr.mxu0 0.0
    %706 = vmatpush1.msra.mxu0 %v667
    %707 = vmatprep.subr.mxu0 0.0
    %708 = vmatpush1.msra.mxu0 %v668
    %709 = vmatprep.subr.mxu0 0.0
    %710 = vmatpush1.msra.mxu0 %v669
    %711 = vmatprep.subr.mxu0 0.0
    %712 = vmatpush1.msra.mxu0 %v670
    %713 = vmatprep.subr.mxu0 0.0
    %714 = vmatpush1.msra.mxu0 %v671
    %715 = vmatprep.subr.mxu0 0.0
    %716 = vmatpush1.msra.mxu0 %v672
    %717 = vmatprep.subr.mxu0 0.0
    %718 = vmatpush1.msra.mxu0 %v673
    %719 = vmatprep.subr.mxu0 0.0
    %720 = vmatpush1.msra.mxu0 %v674
    %721 = vmatprep.subr.mxu0 0.0
    %722 = vmatpush1.msra.mxu0 %v675
    %723 = vmatprep.subr.mxu0 0.0
    %724 = vmatpush1.msra.mxu0 %v676
    %725 = vmatprep.subr.mxu0 0.0
    %726 = vmatpush1.msra.mxu0 %v677
    %727 = vmatprep.subr.mxu0 0.0
    %728 = vmatpush1.msra.mxu0 %v678
    %729 = vmatprep.subr.mxu0 0.0
    %730 = vmatpush1.msra.mxu0 %v679
    %731 = vmatprep.subr.mxu0 0.0
    %732 = vmatpush1.msra.mxu0 %v680
    %733 = vmatprep.subr.mxu0 0.0
    %734 = vmatpush1.msra.mxu0 %v681
    %735 = vmatprep.subr.mxu0 0.0
    %736 = vmatpush1.msra.mxu0 %v682
    %737 = vmatprep.subr.mxu0 0.0
    %738 = vmatpush1.msra.mxu0 %v683
    %739 = vmatprep.subr.mxu0 0.0
    %740 = vmatpush1.msra.mxu0 %v684
    %741 = vmatprep.subr.mxu0 0.0
    %742 = vmatpush1.msra.mxu0 %v685
    %743 = vmatprep.subr.mxu0 0.0
    %744 = vmatpush1.msra.mxu0 %v686
    %745 = vmatprep.subr.mxu0 0.0
    %746 = vmatpush1.msra.mxu0 %v687
    %747 = vmatprep.subr.mxu0 0.0
    %748 = vmatpush1.msra.mxu0 %v688
    %749 = vmatprep.subr.mxu0 0.0
    %750 = vmatpush1.msra.mxu0 %v689
    %751 = vmatprep.subr.mxu0 0.0
    %752 = vmatpush1.msra.mxu0 %v690
    %753 = vmatprep.subr.mxu0 0.0
    %754 = vmatpush1.msra.mxu0 %v691
    %755 = vmatprep.subr.mxu0 0.0
    %756 = vmatpush1.msra.mxu0 %v692
    %757 = vmatprep.mubr.f32.mxu0 1.0
    %758 = vmatmul.mubr.f32.gmra.mrb[0].mxu0 1.0
    %v759 = vpop.f32.mrb[0].mxu0
    %v760 = vadd.f32 0.0, %v759
    %v761 = vpop.f32.mrb[0].mxu0
    %762 = vdwg.mxu0
    %v763 = vmul.f32 %v760, 0.00390625
    %v764 = vadd.f32 %v763, 1e-05
    %v765 = vrsqrt.pop %v764
    %v766 = vmul.f32 %v552, %v765
    %v768 = vlaneseq
    %v769 = vshrl.u32 %v768, 7
    %v770 = vsub.s32 0, %v769
    %v771 = vrot.slane %v766, %v770
    %v773 = vmul.f32 %v629, %v771
    %v774 = vmul.f32 %v630, %v771
    %v775 = vmul.f32 %v631, %v771
    %v776 = vmul.f32 %v632, %v771
    %v777 = vmul.f32 %v633, %v771
    %v778 = vmul.f32 %v634, %v771
    %v779 = vmul.f32 %v635, %v771
    %v780 = vmul.f32 %v636, %v771
    %v781 = vmul.f32 %v637, %v771
    %v782 = vmul.f32 %v638, %v771
    %v783 = vmul.f32 %v639, %v771
    %v784 = vmul.f32 %v640, %v771
    %v785 = vmul.f32 %v641, %v771
    %v786 = vmul.f32 %v642, %v771
    %v787 = vmul.f32 %v643, %v771
    %v788 = vmul.f32 %v644, %v771
    %v789 = vmul.f32 %v645, %v771
    %v790 = vmul.f32 %v646, %v771
    %v791 = vmul.f32 %v647, %v771
    %v792 = vmul.f32 %v648, %v771
    %v793 = vmul.f32 %v649, %v771
    %v794 = vmul.f32 %v650, %v771
    %v795 = vmul.f32 %v651, %v771
    %v796 = vmul.f32 %v652, %v771
    %v797 = vmul.f32 %v653, %v771
    %v798 = vmul.f32 %v654, %v771
    %v799 = vmul.f32 %v655, %v771
    %v800 = vmul.f32 %v656, %v771
    %v801 = vmul.f32 %v657, %v771
    %v802 = vmul.f32 %v658, %v771
    %v803 = vmul.f32 %v659, %v771
    %v804 = vmul.f32 %v660, %v771
    %v806 = vlaneseq
    %v807 = vshrl.u32 %v806, 7
    %v808 = vsub.s32 0, %v807
    %v809 = vrot.slane %v553, %v808
    %v811 = vadd.f32 %v773, %v809
    %v812 = vadd.f32 %v774, %v809
    %v813 = vadd.f32 %v775, %v809
    %v814 = vadd.f32 %v776, %v809
    %v815 = vadd.f32 %v777, %v809
    %v816 = vadd.f32 %v778, %v809
    %v817 = vadd.f32 %v779, %v809
    %v818 = vadd.f32 %v780, %v809
    %v819 = vadd.f32 %v781, %v809
    %v820 = vadd.f32 %v782, %v809
    %v821 = vadd.f32 %v783, %v809
    %v822 = vadd.f32 %v784, %v809
    %v823 = vadd.f32 %v785, %v809
    %v824 = vadd.f32 %v786, %v809
    %v825 = vadd.f32 %v787, %v809
    %v826 = vadd.f32 %v788, %v809
    %v827 = vadd.f32 %v789, %v809
    %v828 = vadd.f32 %v790, %v809
    %v829 = vadd.f32 %v791, %v809
    %v830 = vadd.f32 %v792, %v809
    %v831 = vadd.f32 %v793, %v809
    %v832 = vadd.f32 %v794, %v809
    %v833 = vadd.f32 %v795, %v809
    %v834 = vadd.f32 %v796, %v809
    %v835 = vadd.f32 %v797, %v809
    %v836 = vadd.f32 %v798, %v809
    %v837 = vadd.f32 %v799, %v809
    %v838 = vadd.f32 %v800, %v809
    %v839 = vadd.f32 %v801, %v809
    %v840 = vadd.f32 %v802, %v809
    %v841 = vadd.f32 %v803, %v809
    %v842 = vadd.f32 %v804, %v809
    %v843 = vmax.f32 %v811, 0.0
    %v844 = vmax.f32 %v812, 0.0
    %v845 = vmax.f32 %v813, 0.0
    %v846 = vmax.f32 %v814, 0.0
    %v847 = vmax.f32 %v815, 0.0
    %v848 = vmax.f32 %v816, 0.0
    %v849 = vmax.f32 %v817, 0.0
    %v850 = vmax.f32 %v818, 0.0
    %v851 = vmax.f32 %v819, 0.0
    %v852 = vmax.f32 %v820, 0.0
    %v853 = vmax.f32 %v821, 0.0
    %v854 = vmax.f32 %v822, 0.0
    %v855 = vmax.f32 %v823, 0.0
    %v856 = vmax.f32 %v824, 0.0
    %v857 = vmax.f32 %v825, 0.0
    %v858 = vmax.f32 %v826, 0.0
    %v859 = vmax.f32 %v827, 0.0
    %v860 = vmax.f32 %v828, 0.0
    %v861 = vmax.f32 %v829, 0.0
    %v862 = vmax.f32 %v830, 0.0
    %v863 = vmax.f32 %v831, 0.0
    %v864 = vmax.f32 %v832, 0.0
    %v865 = vmax.f32 %v833, 0.0
    %v866 = vmax.f32 %v834, 0.0
    %v867 = vmax.f32 %v835, 0.0
    %v868 = vmax.f32 %v836, 0.0
    %v869 = vmax.f32 %v837, 0.0
    %v870 = vmax.f32 %v838, 0.0
    %v871 = vmax.f32 %v839, 0.0
    %v872 = vmax.f32 %v840, 0.0
    %v873 = vmax.f32 %v841, 0.0
    %v874 = vmax.f32 %v842, 0.0
    %v875 = vpack.c.bf16 %v844, %v843
    %v876 = vpack.c.bf16 %v846, %v845
    %v877 = vpack.c.bf16 %v848, %v847
    %v878 = vpack.c.bf16 %v850, %v849
    %v879 = vpack.c.bf16 %v852, %v851
    %v880 = vpack.c.bf16 %v854, %v853
    %v881 = vpack.c.bf16 %v856, %v855
    %v882 = vpack.c.bf16 %v858, %v857
    %v883 = vpack.c.bf16 %v860, %v859
    %v884 = vpack.c.bf16 %v862, %v861
    %v885 = vpack.c.bf16 %v864, %v863
    %v886 = vpack.c.bf16 %v866, %v865
    %v887 = vpack.c.bf16 %v868, %v867
    %v888 = vpack.c.bf16 %v870, %v869
    %v889 = vpack.c.bf16 %v872, %v871
    %v890 = vpack.c.bf16 %v874, %v873
    %v891 = vld [vmem:[#allocation13] sm:$0xf]
    %v892 = vld [vmem:[#allocation13 + $0x4] sm:$0xf]
    %v893 = vld [vmem:[#allocation13 + $0x8] sm:$0xf]
    %v894 = vld [vmem:[#allocation13 + $0xc] sm:$0xf]
    %v895 = vld [vmem:[#allocation13 + $0x10] sm:$0xf]
    %v896 = vld [vmem:[#allocation13 + $0x14] sm:$0xf]
    %v897 = vld [vmem:[#allocation13 + $0x18] sm:$0xf]
    %v898 = vld [vmem:[#allocation13 + $0x1c] sm:$0xf]
    %v899 = vld [vmem:[#allocation14] sm:$0x1]
    %v901 = vlaneseq
    %v902 = vshrl.u32 %v901, 7
    %v903 = vsub.s32 0, %v902
    %v904 = vrot.slane %v899, %v903
    %v914 = vunpack.c.l.b16 %v891
    %v915 = vunpack.c.l.b16 %v892
    %v916 = vunpack.c.l.b16 %v893
    %v917 = vunpack.c.l.b16 %v894
    %v918 = vunpack.c.l.b16 %v895
    %v919 = vunpack.c.l.b16 %v896
    %v920 = vunpack.c.l.b16 %v897
    %v921 = vunpack.c.l.b16 %v898
    %v922 = vpack.c.b16 %v915, %v914
    %v923 = vpack.c.b16 %v917, %v916
    %v924 = vpack.c.b16 %v919, %v918
    %v925 = vpack.c.b16 %v921, %v920
    %vm930 = vcmask 523264
    %v932 = vsel %vm930, %v875, 0
    %v935 = vsel %vm930, %v876, 0
    %v938 = vsel %vm930, %v877, 0
    %v941 = vsel %vm930, %v878, 0
    %v944 = vsel %vm930, %v879, 0
    %v947 = vsel %vm930, %v880, 0
    %v950 = vsel %vm930, %v881, 0
    %v953 = vsel %vm930, %v882, 0
    %v956 = vsel %vm930, %v883, 0
    %v959 = vsel %vm930, %v884, 0
    %v962 = vsel %vm930, %v885, 0
    %v965 = vsel %vm930, %v886, 0
    %v968 = vsel %vm930, %v887, 0
    %v971 = vsel %vm930, %v888, 0
    %v974 = vsel %vm930, %v889, 0
    %v977 = vsel %vm930, %v890, 0
    %979 = vmatprep.subr.bf16.mxu0 0
    %980 = vmatpush1.bf16.msra.mxu0 %v922
    %981 = vmatprep.subr.bf16.mxu0 0
    %982 = vmatpush1.bf16.msra.mxu0 %v923
    %983 = vmatprep.subr.bf16.mxu0 0
    %984 = vmatpush1.bf16.msra.mxu0 %v924
    %985 = vmatprep.subr.bf16.mxu0 0
    %986 = vmatpush1.bf16.msra.mxu0 %v925
    %987 = vmatprep.subr.bf16.mxu0 0
    %988 = vmatpush1.bf16.msra.mxu0 0
    %989 = vmatprep.subr.bf16.mxu0 0
    %990 = vmatpush1.bf16.msra.mxu0 0
    %991 = vmatprep.subr.bf16.mxu0 0
    %992 = vmatpush1.bf16.msra.mxu0 0
    %993 = vmatprep.subr.bf16.mxu0 0
    %994 = vmatpush1.bf16.msra.mxu0 0
    %995 = vmatprep.subr.bf16.mxu0 0
    %996 = vmatpush1.bf16.msra.mxu0 0
    %997 = vmatprep.subr.bf16.mxu0 0
    %998 = vmatpush1.bf16.msra.mxu0 0
    %999 = vmatprep.subr.bf16.mxu0 0
    %1000 = vmatpush1.bf16.msra.mxu0 0
    %1001 = vmatprep.subr.bf16.mxu0 0
    %1002 = vmatpush1.bf16.msra.mxu0 0
    %1003 = vmatprep.subr.bf16.mxu0 0
    %1004 = vmatpush1.bf16.msra.mxu0 0
    %1005 = vmatprep.subr.bf16.mxu0 0
    %1006 = vmatpush1.bf16.msra.mxu0 0
    %1007 = vmatprep.subr.bf16.mxu0 0
    %1008 = vmatpush1.bf16.msra.mxu0 0
    %1009 = vmatprep.subr.bf16.mxu0 0
    %1010 = vmatpush1.bf16.msra.mxu0 0
    %1011 = vmatprep.mubr.bf16.mxu0 0
    %1012 = vmatmul.mubr.bf16.gmra.mrb[0].mxu0 %v932
    %v1013 = vpop.f32.mrb[0].mxu0
    %v1014 = vadd.f32 %v904, %v1013
    %v1015 = vpop.f32.mrb[0].mxu0
    %v1016 = vpop.f32.mrb[0].mxu0
    %v1017 = vadd.f32 %v904, %v1016
    %v1018 = vpop.f32.mrb[0].mxu0
    %1019 = vmatprep.mubr.bf16.mxu0 0
    %1020 = vmatmul.mubr.bf16.gmra.mrb[0].mxu0 %v935
    %v1021 = vpop.f32.mrb[0].mxu0
    %v1022 = vadd.f32 %v904, %v1021
    %v1023 = vpop.f32.mrb[0].mxu0
    %v1024 = vpop.f32.mrb[0].mxu0
    %v1025 = vadd.f32 %v904, %v1024
    %v1026 = vpop.f32.mrb[0].mxu0
    %1027 = vmatprep.mubr.bf16.mxu0 0
    %1028 = vmatmul.mubr.bf16.gmra.mrb[0].mxu0 %v938
    %v1029 = vpop.f32.mrb[0].mxu0
    %v1030 = vadd.f32 %v904, %v1029
    %v1031 = vpop.f32.mrb[0].mxu0
    %v1032 = vpop.f32.mrb[0].mxu0
    %v1033 = vadd.f32 %v904, %v1032
    %v1034 = vpop.f32.mrb[0].mxu0
    %1035 = vmatprep.mubr.bf16.mxu0 0
    %1036 = vmatmul.mubr.bf16.gmra.mrb[0].mxu0 %v941
    %v1037 = vpop.f32.mrb[0].mxu0
    %v1038 = vadd.f32 %v904, %v1037
    %v1039 = vpop.f32.mrb[0].mxu0
    %v1040 = vpop.f32.mrb[0].mxu0
    %v1041 = vadd.f32 %v904, %v1040
    %v1042 = vpop.f32.mrb[0].mxu0
    %1043 = vmatprep.mubr.bf16.mxu0 0
    %1044 = vmatmul.mubr.bf16.gmra.mrb[0].mxu0 %v944
    %v1045 = vpop.f32.mrb[0].mxu0
    %v1046 = vadd.f32 %v904, %v1045
    %v1047 = vpop.f32.mrb[0].mxu0
    %v1048 = vpop.f32.mrb[0].mxu0
    %v1049 = vadd.f32 %v904, %v1048
    %v1050 = vpop.f32.mrb[0].mxu0
    %1051 = vmatprep.mubr.bf16.mxu0 0
    %1052 = vmatmul.mubr.bf16.gmra.mrb[0].mxu0 %v947
    %v1053 = vpop.f32.mrb[0].mxu0
    %v1054 = vadd.f32 %v904, %v1053
    %v1055 = vpop.f32.mrb[0].mxu0
    %v1056 = vpop.f32.mrb[0].mxu0
    %v1057 = vadd.f32 %v904, %v1056
    %v1058 = vpop.f32.mrb[0].mxu0
    %1059 = vmatprep.mubr.bf16.mxu0 0
    %1060 = vmatmul.mubr.bf16.gmra.mrb[0].mxu0 %v950
    %v1061 = vpop.f32.mrb[0].mxu0
    %v1062 = vadd.f32 %v904, %v1061
    %v1063 = vpop.f32.mrb[0].mxu0
    %v1064 = vpop.f32.mrb[0].mxu0
    %v1065 = vadd.f32 %v904, %v1064
    %v1066 = vpop.f32.mrb[0].mxu0
    %1067 = vmatprep.mubr.bf16.mxu0 0
    %1068 = vmatmul.mubr.bf16.gmra.mrb[0].mxu0 %v953
    %v1069 = vpop.f32.mrb[0].mxu0
    %v1070 = vadd.f32 %v904, %v1069
    %v1071 = vpop.f32.mrb[0].mxu0
    %v1072 = vpop.f32.mrb[0].mxu0
    %v1073 = vadd.f32 %v904, %v1072
    %v1074 = vpop.f32.mrb[0].mxu0
    %1075 = vmatprep.mubr.bf16.mxu0 0
    %1076 = vmatmul.mubr.bf16.gmra.mrb[0].mxu0 %v956
    %v1077 = vpop.f32.mrb[0].mxu0
    %v1078 = vadd.f32 %v904, %v1077
    %v1079 = vpop.f32.mrb[0].mxu0
    %v1080 = vpop.f32.mrb[0].mxu0
    %v1081 = vadd.f32 %v904, %v1080
    %v1082 = vpop.f32.mrb[0].mxu0
    %1083 = vmatprep.mubr.bf16.mxu0 0
    %1084 = vmatmul.mubr.bf16.gmra.mrb[0].mxu0 %v959
    %v1085 = vpop.f32.mrb[0].mxu0
    %v1086 = vadd.f32 %v904, %v1085
    %v1087 = vpop.f32.mrb[0].mxu0
    %v1088 = vpop.f32.mrb[0].mxu0
    %v1089 = vadd.f32 %v904, %v1088
    %v1090 = vpop.f32.mrb[0].mxu0
    %1091 = vmatprep.mubr.bf16.mxu0 0
    %1092 = vmatmul.mubr.bf16.gmra.mrb[0].mxu0 %v962
    %v1093 = vpop.f32.mrb[0].mxu0
    %v1094 = vadd.f32 %v904, %v1093
    %v1095 = vpop.f32.mrb[0].mxu0
    %v1096 = vpop.f32.mrb[0].mxu0
    %v1097 = vadd.f32 %v904, %v1096
    %v1098 = vpop.f32.mrb[0].mxu0
    %1099 = vmatprep.mubr.bf16.mxu0 0
    %1100 = vmatmul.mubr.bf16.gmra.mrb[0].mxu0 %v965
    %v1101 = vpop.f32.mrb[0].mxu0
    %v1102 = vadd.f32 %v904, %v1101
    %v1103 = vpop.f32.mrb[0].mxu0
    %v1104 = vpop.f32.mrb[0].mxu0
    %v1105 = vadd.f32 %v904, %v1104
    %v1106 = vpop.f32.mrb[0].mxu0
    %1107 = vmatprep.mubr.bf16.mxu0 0
    %1108 = vmatmul.mubr.bf16.gmra.mrb[0].mxu0 %v968
    %v1109 = vpop.f32.mrb[0].mxu0
    %v1110 = vadd.f32 %v904, %v1109
    %v1111 = vpop.f32.mrb[0].mxu0
    %v1112 = vpop.f32.mrb[0].mxu0
    %v1113 = vadd.f32 %v904, %v1112
    %v1114 = vpop.f32.mrb[0].mxu0
    %1115 = vmatprep.mubr.bf16.mxu0 0
    %1116 = vmatmul.mubr.bf16.gmra.mrb[0].mxu0 %v971
    %v1117 = vpop.f32.mrb[0].mxu0
    %v1118 = vadd.f32 %v904, %v1117
    %v1119 = vpop.f32.mrb[0].mxu0
    %v1120 = vpop.f32.mrb[0].mxu0
    %v1121 = vadd.f32 %v904, %v1120
    %v1122 = vpop.f32.mrb[0].mxu0
    %1123 = vmatprep.mubr.bf16.mxu0 0
    %1124 = vmatmul.mubr.bf16.gmra.mrb[0].mxu0 %v974
    %v1125 = vpop.f32.mrb[0].mxu0
    %v1126 = vadd.f32 %v904, %v1125
    %v1127 = vpop.f32.mrb[0].mxu0
    %v1128 = vpop.f32.mrb[0].mxu0
    %v1129 = vadd.f32 %v904, %v1128
    %v1130 = vpop.f32.mrb[0].mxu0
    %1131 = vmatprep.mubr.bf16.mxu0 0
    %1132 = vmatmul.mubr.bf16.gmra.mrb[0].mxu0 %v977
    %v1133 = vpop.f32.mrb[0].mxu0
    %v1134 = vadd.f32 %v904, %v1133
    %v1135 = vpop.f32.mrb[0].mxu0
    %v1136 = vpop.f32.mrb[0].mxu0
    %v1137 = vadd.f32 %v904, %v1136
    %v1138 = vpop.f32.mrb[0].mxu0
    %1139 = vdwg.mxu0
    %v1140 = vld [vmem:[#allocation16] sm:$0x1]
    %v1141 = vld [vmem:[#allocation17] sm:$0x1]
    %1142 = vmatprep.subr.mxu0 0.0
    %1143 = vmatpush1.msra.mxu0 %v1014
    %1144 = vmatprep.subr.mxu0 0.0
    %1145 = vmatpush1.msra.mxu0 %v1017
    %1146 = vmatprep.subr.mxu0 0.0
    %1147 = vmatpush1.msra.mxu0 %v1022
    %1148 = vmatprep.subr.mxu0 0.0
    %1149 = vmatpush1.msra.mxu0 %v1025
    %1150 = vmatprep.subr.mxu0 0.0
    %1151 = vmatpush1.msra.mxu0 %v1030
    %1152 = vmatprep.subr.mxu0 0.0
    %1153 = vmatpush1.msra.mxu0 %v1033
    %1154 = vmatprep.subr.mxu0 0.0
    %1155 = vmatpush1.msra.mxu0 %v1038
    %1156 = vmatprep.subr.mxu0 0.0
    %1157 = vmatpush1.msra.mxu0 %v1041
    %1158 = vmatprep.subr.mxu0 0.0
    %1159 = vmatpush1.msra.mxu0 %v1046
    %1160 = vmatprep.subr.mxu0 0.0
    %1161 = vmatpush1.msra.mxu0 %v1049
    %1162 = vmatprep.subr.mxu0 0.0
    %1163 = vmatpush1.msra.mxu0 %v1054
    %1164 = vmatprep.subr.mxu0 0.0
    %1165 = vmatpush1.msra.mxu0 %v1057
    %1166 = vmatprep.subr.mxu0 0.0
    %1167 = vmatpush1.msra.mxu0 %v1062
    %1168 = vmatprep.subr.mxu0 0.0
    %1169 = vmatpush1.msra.mxu0 %v1065
    %1170 = vmatprep.subr.mxu0 0.0
    %1171 = vmatpush1.msra.mxu0 %v1070
    %1172 = vmatprep.subr.mxu0 0.0
    %1173 = vmatpush1.msra.mxu0 %v1073
    %1174 = vmatprep.subr.mxu0 0.0
    %1175 = vmatpush1.msra.mxu0 %v1078
    %1176 = vmatprep.subr.mxu0 0.0
    %1177 = vmatpush1.msra.mxu0 %v1081
    %1178 = vmatprep.subr.mxu0 0.0
    %1179 = vmatpush1.msra.mxu0 %v1086
    %1180 = vmatprep.subr.mxu0 0.0
    %1181 = vmatpush1.msra.mxu0 %v1089
    %1182 = vmatprep.subr.mxu0 0.0
    %1183 = vmatpush1.msra.mxu0 %v1094
    %1184 = vmatprep.subr.mxu0 0.0
    %1185 = vmatpush1.msra.mxu0 %v1097
    %1186 = vmatprep.subr.mxu0 0.0
    %1187 = vmatpush1.msra.mxu0 %v1102
    %1188 = vmatprep.subr.mxu0 0.0
    %1189 = vmatpush1.msra.mxu0 %v1105
    %1190 = vmatprep.subr.mxu0 0.0
    %1191 = vmatpush1.msra.mxu0 %v1110
    %1192 = vmatprep.subr.mxu0 0.0
    %1193 = vmatpush1.msra.mxu0 %v1113
    %1194 = vmatprep.subr.mxu0 0.0
    %1195 = vmatpush1.msra.mxu0 %v1118
    %1196 = vmatprep.subr.mxu0 0.0
    %1197 = vmatpush1.msra.mxu0 %v1121
    %1198 = vmatprep.subr.mxu0 0.0
    %1199 = vmatpush1.msra.mxu0 %v1126
    %1200 = vmatprep.subr.mxu0 0.0
    %1201 = vmatpush1.msra.mxu0 %v1129
    %1202 = vmatprep.subr.mxu0 0.0
    %1203 = vmatpush1.msra.mxu0 %v1134
    %1204 = vmatprep.subr.mxu0 0.0
    %1205 = vmatpush1.msra.mxu0 %v1137
    %1206 = vmatprep.mubr.f32.mxu0 1.0
    %1207 = vmatmul.mubr.f32.gmra.mrb[0].mxu0 1.0
    %v1208 = vpop.f32.mrb[0].mxu0
    %v1209 = vadd.f32 0.0, %v1208
    %v1210 = vpop.f32.mrb[0].mxu0
    %1211 = vdwg.mxu0
    %v1212 = vmul.f32 %v1209, 0.00390625
    %v1213 = vlaneseq
    %v1214 = vshrl.u32 %v1213, 7
    %v1215 = vsub.s32 0, %v1214
    %v1216 = vrot.slane %v1212, %v1215
    %v1217 = vsub.f32 %v1014, %v1216
    %v1218 = vsub.f32 %v1017, %v1216
    %v1219 = vsub.f32 %v1022, %v1216
    %v1220 = vsub.f32 %v1025, %v1216
    %v1221 = vsub.f32 %v1030, %v1216
    %v1222 = vsub.f32 %v1033, %v1216
    %v1223 = vsub.f32 %v1038, %v1216
    %v1224 = vsub.f32 %v1041, %v1216
    %v1225 = vsub.f32 %v1046, %v1216
    %v1226 = vsub.f32 %v1049, %v1216
    %v1227 = vsub.f32 %v1054, %v1216
    %v1228 = vsub.f32 %v1057, %v1216
    %v1229 = vsub.f32 %v1062, %v1216
    %v1230 = vsub.f32 %v1065, %v1216
    %v1231 = vsub.f32 %v1070, %v1216
    %v1232 = vsub.f32 %v1073, %v1216
    %v1233 = vsub.f32 %v1078, %v1216
    %v1234 = vsub.f32 %v1081, %v1216
    %v1235 = vsub.f32 %v1086, %v1216
    %v1236 = vsub.f32 %v1089, %v1216
    %v1237 = vsub.f32 %v1094, %v1216
    %v1238 = vsub.f32 %v1097, %v1216
    %v1239 = vsub.f32 %v1102, %v1216
    %v1240 = vsub.f32 %v1105, %v1216
    %v1241 = vsub.f32 %v1110, %v1216
    %v1242 = vsub.f32 %v1113, %v1216
    %v1243 = vsub.f32 %v1118, %v1216
    %v1244 = vsub.f32 %v1121, %v1216
    %v1245 = vsub.f32 %v1126, %v1216
    %v1246 = vsub.f32 %v1129, %v1216
    %v1247 = vsub.f32 %v1134, %v1216
    %v1248 = vsub.f32 %v1137, %v1216
    %v1249 = vmul.f32 %v1217, %v1217
    %v1250 = vmul.f32 %v1218, %v1218
    %v1251 = vmul.f32 %v1219, %v1219
    %v1252 = vmul.f32 %v1220, %v1220
    %v1253 = vmul.f32 %v1221, %v1221
    %v1254 = vmul.f32 %v1222, %v1222
    %v1255 = vmul.f32 %v1223, %v1223
    %v1256 = vmul.f32 %v1224, %v1224
    %v1257 = vmul.f32 %v1225, %v1225
    %v1258 = vmul.f32 %v1226, %v1226
    %v1259 = vmul.f32 %v1227, %v1227
    %v1260 = vmul.f32 %v1228, %v1228
    %v1261 = vmul.f32 %v1229, %v1229
    %v1262 = vmul.f32 %v1230, %v1230
    %v1263 = vmul.f32 %v1231, %v1231
    %v1264 = vmul.f32 %v1232, %v1232
    %v1265 = vmul.f32 %v1233, %v1233
    %v1266 = vmul.f32 %v1234, %v1234
    %v1267 = vmul.f32 %v1235, %v1235
    %v1268 = vmul.f32 %v1236, %v1236
    %v1269 = vmul.f32 %v1237, %v1237
    %v1270 = vmul.f32 %v1238, %v1238
    %v1271 = vmul.f32 %v1239, %v1239
    %v1272 = vmul.f32 %v1240, %v1240
    %v1273 = vmul.f32 %v1241, %v1241
    %v1274 = vmul.f32 %v1242, %v1242
    %v1275 = vmul.f32 %v1243, %v1243
    %v1276 = vmul.f32 %v1244, %v1244
    %v1277 = vmul.f32 %v1245, %v1245
    %v1278 = vmul.f32 %v1246, %v1246
    %v1279 = vmul.f32 %v1247, %v1247
    %v1280 = vmul.f32 %v1248, %v1248
    %1281 = vmatprep.subr.mxu0 0.0
    %1282 = vmatpush1.msra.mxu0 %v1249
    %1283 = vmatprep.subr.mxu0 0.0
    %1284 = vmatpush1.msra.mxu0 %v1250
    %1285 = vmatprep.subr.mxu0 0.0
    %1286 = vmatpush1.msra.mxu0 %v1251
    %1287 = vmatprep.subr.mxu0 0.0
    %1288 = vmatpush1.msra.mxu0 %v1252
    %1289 = vmatprep.subr.mxu0 0.0
    %1290 = vmatpush1.msra.mxu0 %v1253
    %1291 = vmatprep.subr.mxu0 0.0
    %1292 = vmatpush1.msra.mxu0 %v1254
    %1293 = vmatprep.subr.mxu0 0.0
    %1294 = vmatpush1.msra.mxu0 %v1255
    %1295 = vmatprep.subr.mxu0 0.0
    %1296 = vmatpush1.msra.mxu0 %v1256
    %1297 = vmatprep.subr.mxu0 0.0
    %1298 = vmatpush1.msra.mxu0 %v1257
    %1299 = vmatprep.subr.mxu0 0.0
    %1300 = vmatpush1.msra.mxu0 %v1258
    %1301 = vmatprep.subr.mxu0 0.0
    %1302 = vmatpush1.msra.mxu0 %v1259
    %1303 = vmatprep.subr.mxu0 0.0
    %1304 = vmatpush1.msra.mxu0 %v1260
    %1305 = vmatprep.subr.mxu0 0.0
    %1306 = vmatpush1.msra.mxu0 %v1261
    %1307 = vmatprep.subr.mxu0 0.0
    %1308 = vmatpush1.msra.mxu0 %v1262
    %1309 = vmatprep.subr.mxu0 0.0
    %1310 = vmatpush1.msra.mxu0 %v1263
    %1311 = vmatprep.subr.mxu0 0.0
    %1312 = vmatpush1.msra.mxu0 %v1264
    %1313 = vmatprep.subr.mxu0 0.0
    %1314 = vmatpush1.msra.mxu0 %v1265
    %1315 = vmatprep.subr.mxu0 0.0
    %1316 = vmatpush1.msra.mxu0 %v1266
    %1317 = vmatprep.subr.mxu0 0.0
    %1318 = vmatpush1.msra.mxu0 %v1267
    %1319 = vmatprep.subr.mxu0 0.0
    %1320 = vmatpush1.msra.mxu0 %v1268
    %1321 = vmatprep.subr.mxu0 0.0
    %1322 = vmatpush1.msra.mxu0 %v1269
    %1323 = vmatprep.subr.mxu0 0.0
    %1324 = vmatpush1.msra.mxu0 %v1270
    %1325 = vmatprep.subr.mxu0 0.0
    %1326 = vmatpush1.msra.mxu0 %v1271
    %1327 = vmatprep.subr.mxu0 0.0
    %1328 = vmatpush1.msra.mxu0 %v1272
    %1329 = vmatprep.subr.mxu0 0.0
    %1330 = vmatpush1.msra.mxu0 %v1273
    %1331 = vmatprep.subr.mxu0 0.0
    %1332 = vmatpush1.msra.mxu0 %v1274
    %1333 = vmatprep.subr.mxu0 0.0
    %1334 = vmatpush1.msra.mxu0 %v1275
    %1335 = vmatprep.subr.mxu0 0.0
    %1336 = vmatpush1.msra.mxu0 %v1276
    %1337 = vmatprep.subr.mxu0 0.0
    %1338 = vmatpush1.msra.mxu0 %v1277
    %1339 = vmatprep.subr.mxu0 0.0
    %1340 = vmatpush1.msra.mxu0 %v1278
    %1341 = vmatprep.subr.mxu0 0.0
    %1342 = vmatpush1.msra.mxu0 %v1279
    %1343 = vmatprep.subr.mxu0 0.0
    %1344 = vmatpush1.msra.mxu0 %v1280
    %1345 = vmatprep.mubr.f32.mxu0 1.0
    %1346 = vmatmul.mubr.f32.gmra.mrb[0].mxu0 1.0
    %v1347 = vpop.f32.mrb[0].mxu0
    %v1348 = vadd.f32 0.0, %v1347
    %v1349 = vpop.f32.mrb[0].mxu0
    %1350 = vdwg.mxu0
    %v1351 = vmul.f32 %v1348, 0.00390625
    %v1352 = vadd.f32 %v1351, 1e-05
    %v1353 = vrsqrt.pop %v1352
    %v1354 = vmul.f32 %v1140, %v1353
    %v1356 = vlaneseq
    %v1357 = vshrl.u32 %v1356, 7
    %v1358 = vsub.s32 0, %v1357
    %v1359 = vrot.slane %v1354, %v1358
    %v1361 = vmul.f32 %v1217, %v1359
    %v1362 = vmul.f32 %v1218, %v1359
    %v1363 = vmul.f32 %v1219, %v1359
    %v1364 = vmul.f32 %v1220, %v1359
    %v1365 = vmul.f32 %v1221, %v1359
    %v1366 = vmul.f32 %v1222, %v1359
    %v1367 = vmul.f32 %v1223, %v1359
    %v1368 = vmul.f32 %v1224, %v1359
    %v1369 = vmul.f32 %v1225, %v1359
    %v1370 = vmul.f32 %v1226, %v1359
    %v1371 = vmul.f32 %v1227, %v1359
    %v1372 = vmul.f32 %v1228, %v1359
    %v1373 = vmul.f32 %v1229, %v1359
    %v1374 = vmul.f32 %v1230, %v1359
    %v1375 = vmul.f32 %v1231, %v1359
    %v1376 = vmul.f32 %v1232, %v1359
    %v1377 = vmul.f32 %v1233, %v1359
    %v1378 = vmul.f32 %v1234, %v1359
    %v1379 = vmul.f32 %v1235, %v1359
    %v1380 = vmul.f32 %v1236, %v1359
    %v1381 = vmul.f32 %v1237, %v1359
    %v1382 = vmul.f32 %v1238, %v1359
    %v1383 = vmul.f32 %v1239, %v1359
    %v1384 = vmul.f32 %v1240, %v1359
    %v1385 = vmul.f32 %v1241, %v1359
    %v1386 = vmul.f32 %v1242, %v1359
    %v1387 = vmul.f32 %v1243, %v1359
    %v1388 = vmul.f32 %v1244, %v1359
    %v1389 = vmul.f32 %v1245, %v1359
    %v1390 = vmul.f32 %v1246, %v1359
    %v1391 = vmul.f32 %v1247, %v1359
    %v1392 = vmul.f32 %v1248, %v1359
    %v1394 = vlaneseq
    %v1395 = vshrl.u32 %v1394, 7
    %v1396 = vsub.s32 0, %v1395
    %v1397 = vrot.slane %v1141, %v1396
    %v1399 = vadd.f32 %v1361, %v1397
    %v1400 = vadd.f32 %v1362, %v1397
    %v1401 = vadd.f32 %v1363, %v1397
    %v1402 = vadd.f32 %v1364, %v1397
    %v1403 = vadd.f32 %v1365, %v1397
    %v1404 = vadd.f32 %v1366, %v1397
    %v1405 = vadd.f32 %v1367, %v1397
    %v1406 = vadd.f32 %v1368, %v1397
    %v1407 = vadd.f32 %v1369, %v1397
    %v1408 = vadd.f32 %v1370, %v1397
    %v1409 = vadd.f32 %v1371, %v1397
    %v1410 = vadd.f32 %v1372, %v1397
    %v1411 = vadd.f32 %v1373, %v1397
    %v1412 = vadd.f32 %v1374, %v1397
    %v1413 = vadd.f32 %v1375, %v1397
    %v1414 = vadd.f32 %v1376, %v1397
    %v1415 = vadd.f32 %v1377, %v1397
    %v1416 = vadd.f32 %v1378, %v1397
    %v1417 = vadd.f32 %v1379, %v1397
    %v1418 = vadd.f32 %v1380, %v1397
    %v1419 = vadd.f32 %v1381, %v1397
    %v1420 = vadd.f32 %v1382, %v1397
    %v1421 = vadd.f32 %v1383, %v1397
    %v1422 = vadd.f32 %v1384, %v1397
    %v1423 = vadd.f32 %v1385, %v1397
    %v1424 = vadd.f32 %v1386, %v1397
    %v1425 = vadd.f32 %v1387, %v1397
    %v1426 = vadd.f32 %v1388, %v1397
    %v1427 = vadd.f32 %v1389, %v1397
    %v1428 = vadd.f32 %v1390, %v1397
    %v1429 = vadd.f32 %v1391, %v1397
    %v1430 = vadd.f32 %v1392, %v1397
    %v1431 = vmax.f32 %v1399, 0.0
    %v1432 = vmax.f32 %v1400, 0.0
    %v1433 = vmax.f32 %v1401, 0.0
    %v1434 = vmax.f32 %v1402, 0.0
    %v1435 = vmax.f32 %v1403, 0.0
    %v1436 = vmax.f32 %v1404, 0.0
    %v1437 = vmax.f32 %v1405, 0.0
    %v1438 = vmax.f32 %v1406, 0.0
    %v1439 = vmax.f32 %v1407, 0.0
    %v1440 = vmax.f32 %v1408, 0.0
    %v1441 = vmax.f32 %v1409, 0.0
    %v1442 = vmax.f32 %v1410, 0.0
    %v1443 = vmax.f32 %v1411, 0.0
    %v1444 = vmax.f32 %v1412, 0.0
    %v1445 = vmax.f32 %v1413, 0.0
    %v1446 = vmax.f32 %v1414, 0.0
    %v1447 = vmax.f32 %v1415, 0.0
    %v1448 = vmax.f32 %v1416, 0.0
    %v1449 = vmax.f32 %v1417, 0.0
    %v1450 = vmax.f32 %v1418, 0.0
    %v1451 = vmax.f32 %v1419, 0.0
    %v1452 = vmax.f32 %v1420, 0.0
    %v1453 = vmax.f32 %v1421, 0.0
    %v1454 = vmax.f32 %v1422, 0.0
    %v1455 = vmax.f32 %v1423, 0.0
    %v1456 = vmax.f32 %v1424, 0.0
    %v1457 = vmax.f32 %v1425, 0.0
    %v1458 = vmax.f32 %v1426, 0.0
    %v1459 = vmax.f32 %v1427, 0.0
    %v1460 = vmax.f32 %v1428, 0.0
    %v1461 = vmax.f32 %v1429, 0.0
    %v1462 = vmax.f32 %v1430, 0.0
    %v1463 = vld [vmem:[#allocation5] sm:$0xff]
    %v1464 = vld [vmem:[#allocation5 + $0x8] sm:$0xff]
    %v1465 = vld [vmem:[#allocation5 + $0x10] sm:$0xff]
    %v1466 = vld [vmem:[#allocation5 + $0x18] sm:$0xff]
    %v1467 = vld [vmem:[#allocation5 + $0x20] sm:$0xff]
    %v1468 = vld [vmem:[#allocation5 + $0x28] sm:$0xff]
    %v1469 = vld [vmem:[#allocation5 + $0x30] sm:$0xff]
    %v1470 = vld [vmem:[#allocation5 + $0x38] sm:$0xff]
    %v1471 = vld [vmem:[#allocation5 + $0x40] sm:$0xff]
    %v1472 = vld [vmem:[#allocation5 + $0x48] sm:$0xff]
    %v1473 = vld [vmem:[#allocation5 + $0x50] sm:$0xff]
    %v1474 = vld [vmem:[#allocation5 + $0x58] sm:$0xff]
    %v1475 = vld [vmem:[#allocation5 + $0x60] sm:$0xff]
    %v1476 = vld [vmem:[#allocation5 + $0x68] sm:$0xff]
    %v1477 = vld [vmem:[#allocation5 + $0x70] sm:$0xff]
    %v1478 = vld [vmem:[#allocation5 + $0x78] sm:$0xff]
    %v1479 = vld [vmem:[#allocation5 + $0x80] sm:$0xff]
    %v1480 = vld [vmem:[#allocation5 + $0x88] sm:$0xff]
    %v1481 = vld [vmem:[#allocation5 + $0x90] sm:$0xff]
    %v1482 = vld [vmem:[#allocation5 + $0x98] sm:$0xff]
    %v1483 = vld [vmem:[#allocation5 + $0xa0] sm:$0xff]
    %v1484 = vld [vmem:[#allocation5 + $0xa8] sm:$0xff]
    %v1485 = vld [vmem:[#allocation5 + $0xb0] sm:$0xff]
    %v1486 = vld [vmem:[#allocation5 + $0xb8] sm:$0xff]
    %v1487 = vld [vmem:[#allocation5 + $0xc0] sm:$0xff]
    %v1488 = vld [vmem:[#allocation5 + $0xc8] sm:$0xff]
    %v1489 = vld [vmem:[#allocation5 + $0xd0] sm:$0xff]
    %v1490 = vld [vmem:[#allocation5 + $0xd8] sm:$0xff]
    %v1491 = vld [vmem:[#allocation5 + $0xe0] sm:$0xff]
    %v1492 = vld [vmem:[#allocation5 + $0xe8] sm:$0xff]
    %v1493 = vld [vmem:[#allocation5 + $0xf0] sm:$0xff]
    %v1494 = vld [vmem:[#allocation5 + $0xf8] sm:$0xff]
    %v1495 = vpack.c.bf16 %v1432, %v1431
    %v1496 = vpack.c.bf16 %v1434, %v1433
    %v1497 = vpack.c.bf16 %v1436, %v1435
    %v1498 = vpack.c.bf16 %v1438, %v1437
    %v1499 = vpack.c.bf16 %v1440, %v1439
    %v1500 = vpack.c.bf16 %v1442, %v1441
    %v1501 = vpack.c.bf16 %v1444, %v1443
    %v1502 = vpack.c.bf16 %v1446, %v1445
    %v1503 = vpack.c.bf16 %v1448, %v1447
    %v1504 = vpack.c.bf16 %v1450, %v1449
    %v1505 = vpack.c.bf16 %v1452, %v1451
    %v1506 = vpack.c.bf16 %v1454, %v1453
    %v1507 = vpack.c.bf16 %v1456, %v1455
    %v1508 = vpack.c.bf16 %v1458, %v1457
    %v1509 = vpack.c.bf16 %v1460, %v1459
    %v1510 = vpack.c.bf16 %v1462, %v1461
    %v1511 = vld [vmem:[#allocation19] sm:$0xf]
    %v1512 = vld [vmem:[#allocation19 + $0x4] sm:$0xf]
    %v1513 = vld [vmem:[#allocation19 + $0x8] sm:$0xf]
    %v1514 = vld [vmem:[#allocation19 + $0xc] sm:$0xf]
    %v1515 = vld [vmem:[#allocation19 + $0x10] sm:$0xf]
    %v1516 = vld [vmem:[#allocation19 + $0x14] sm:$0xf]
    %v1517 = vld [vmem:[#allocation19 + $0x18] sm:$0xf]
    %v1518 = vld [vmem:[#allocation19 + $0x1c] sm:$0xf]
    %v1527 = vunpack.c.l.b16 %v1511
    %v1528 = vunpack.c.l.b16 %v1512
    %v1529 = vunpack.c.l.b16 %v1513
    %v1530 = vunpack.c.l.b16 %v1514
    %v1531 = vunpack.c.l.b16 %v1515
    %v1532 = vunpack.c.l.b16 %v1516
    %v1533 = vunpack.c.l.b16 %v1517
    %v1534 = vunpack.c.l.b16 %v1518
    %v1535 = vpack.c.b16 %v1528, %v1527
    %v1536 = vpack.c.b16 %v1530, %v1529
    %v1537 = vpack.c.b16 %v1532, %v1531
    %v1538 = vpack.c.b16 %v1534, %v1533
    %v1544 = vsel %vm930, %v1495, 0
    %v1547 = vsel %vm930, %v1496, 0
    %v1550 = vsel %vm930, %v1497, 0
    %v1553 = vsel %vm930, %v1498, 0
    %v1556 = vsel %vm930, %v1499, 0
    %v1559 = vsel %vm930, %v1500, 0
    %v1562 = vsel %vm930, %v1501, 0
    %v1565 = vsel %vm930, %v1502, 0
    %v1568 = vsel %vm930, %v1503, 0
    %v1571 = vsel %vm930, %v1504, 0
    %v1574 = vsel %vm930, %v1505, 0
    %v1577 = vsel %vm930, %v1506, 0
    %v1580 = vsel %vm930, %v1507, 0
    %v1583 = vsel %vm930, %v1508, 0
    %v1586 = vsel %vm930, %v1509, 0
    %v1589 = vsel %vm930, %v1510, 0
    %1591 = vmatprep.subr.bf16.mxu0 0
    %1592 = vmatpush1.bf16.msra.mxu0 %v1535
    %1593 = vmatprep.subr.bf16.mxu0 0
    %1594 = vmatpush1.bf16.msra.mxu0 %v1536
    %1595 = vmatprep.subr.bf16.mxu0 0
    %1596 = vmatpush1.bf16.msra.mxu0 %v1537
    %1597 = vmatprep.subr.bf16.mxu0 0
    %1598 = vmatpush1.bf16.msra.mxu0 %v1538
    %1599 = vmatprep.subr.bf16.mxu0 0
    %1600 = vmatpush1.bf16.msra.mxu0 0
    %1601 = vmatprep.subr.bf16.mxu0 0
    %1602 = vmatpush1.bf16.msra.mxu0 0
    %1603 = vmatprep.subr.bf16.mxu0 0
    %1604 = vmatpush1.bf16.msra.mxu0 0
    %1605 = vmatprep.subr.bf16.mxu0 0
    %1606 = vmatpush1.bf16.msra.mxu0 0
    %1607 = vmatprep.subr.bf16.mxu0 0
    %1608 = vmatpush1.bf16.msra.mxu0 0
    %1609 = vmatprep.subr.bf16.mxu0 0
    %1610 = vmatpush1.bf16.msra.mxu0 0
    %1611 = vmatprep.subr.bf16.mxu0 0
    %1612 = vmatpush1.bf16.msra.mxu0 0
    %1613 = vmatprep.subr.bf16.mxu0 0
    %1614 = vmatpush1.bf16.msra.mxu0 0
    %1615 = vmatprep.subr.bf16.mxu0 0
    %1616 = vmatpush1.bf16.msra.mxu0 0
    %1617 = vmatprep.subr.bf16.mxu0 0
    %1618 = vmatpush1.bf16.msra.mxu0 0
    %1619 = vmatprep.subr.bf16.mxu0 0
    %1620 = vmatpush1.bf16.msra.mxu0 0
    %1621 = vmatprep.subr.bf16.mxu0 0
    %1622 = vmatpush1.bf16.msra.mxu0 0
    %1623 = vmatprep.mubr.bf16.mxu0 0
    %1624 = vmatmul.mubr.bf16.gmra.mrb[0].mxu0 %v1544
    %v1625 = vpop.f32.mrb[0].mxu0
    %v1626 = vadd.f32 0.0, %v1625
    %v1627 = vpop.f32.mrb[0].mxu0
    %v1628 = vpop.f32.mrb[0].mxu0
    %v1629 = vadd.f32 0.0, %v1628
    %v1630 = vpop.f32.mrb[0].mxu0
    %1631 = vmatprep.mubr.bf16.mxu0 0
    %1632 = vmatmul.mubr.bf16.gmra.mrb[0].mxu0 %v1547
    %v1633 = vpop.f32.mrb[0].mxu0
    %v1634 = vadd.f32 0.0, %v1633
    %v1635 = vpop.f32.mrb[0].mxu0
    %v1636 = vpop.f32.mrb[0].mxu0
    %v1637 = vadd.f32 0.0, %v1636
    %v1638 = vpop.f32.mrb[0].mxu0
    %1639 = vmatprep.mubr.bf16.mxu0 0
    %1640 = vmatmul.mubr.bf16.gmra.mrb[0].mxu0 %v1550
    %v1641 = vpop.f32.mrb[0].mxu0
    %v1642 = vadd.f32 0.0, %v1641
    %v1643 = vpop.f32.mrb[0].mxu0
    %v1644 = vpop.f32.mrb[0].mxu0
    %v1645 = vadd.f32 0.0, %v1644
    %v1646 = vpop.f32.mrb[0].mxu0
    %1647 = vmatprep.mubr.bf16.mxu0 0
    %1648 = vmatmul.mubr.bf16.gmra.mrb[0].mxu0 %v1553
    %v1649 = vpop.f32.mrb[0].mxu0
    %v1650 = vadd.f32 0.0, %v1649
    %v1651 = vpop.f32.mrb[0].mxu0
    %v1652 = vpop.f32.mrb[0].mxu0
    %v1653 = vadd.f32 0.0, %v1652
    %v1654 = vpop.f32.mrb[0].mxu0
    %1655 = vmatprep.mubr.bf16.mxu0 0
    %1656 = vmatmul.mubr.bf16.gmra.mrb[0].mxu0 %v1556
    %v1657 = vpop.f32.mrb[0].mxu0
    %v1658 = vadd.f32 0.0, %v1657
    %v1659 = vpop.f32.mrb[0].mxu0
    %v1660 = vpop.f32.mrb[0].mxu0
    %v1661 = vadd.f32 0.0, %v1660
    %v1662 = vpop.f32.mrb[0].mxu0
    %1663 = vmatprep.mubr.bf16.mxu0 0
    %1664 = vmatmul.mubr.bf16.gmra.mrb[0].mxu0 %v1559
    %v1665 = vpop.f32.mrb[0].mxu0
    %v1666 = vadd.f32 0.0, %v1665
    %v1667 = vpop.f32.mrb[0].mxu0
    %v1668 = vpop.f32.mrb[0].mxu0
    %v1669 = vadd.f32 0.0, %v1668
    %v1670 = vpop.f32.mrb[0].mxu0
    %1671 = vmatprep.mubr.bf16.mxu0 0
    %1672 = vmatmul.mubr.bf16.gmra.mrb[0].mxu0 %v1562
    %v1673 = vpop.f32.mrb[0].mxu0
    %v1674 = vadd.f32 0.0, %v1673
    %v1675 = vpop.f32.mrb[0].mxu0
    %v1676 = vpop.f32.mrb[0].mxu0
    %v1677 = vadd.f32 0.0, %v1676
    %v1678 = vpop.f32.mrb[0].mxu0
    %1679 = vmatprep.mubr.bf16.mxu0 0
    %1680 = vmatmul.mubr.bf16.gmra.mrb[0].mxu0 %v1565
    %v1681 = vpop.f32.mrb[0].mxu0
    %v1682 = vadd.f32 0.0, %v1681
    %v1683 = vpop.f32.mrb[0].mxu0
    %v1684 = vpop.f32.mrb[0].mxu0
    %v1685 = vadd.f32 0.0, %v1684
    %v1686 = vpop.f32.mrb[0].mxu0
    %1687 = vmatprep.mubr.bf16.mxu0 0
    %1688 = vmatmul.mubr.bf16.gmra.mrb[0].mxu0 %v1568
    %v1689 = vpop.f32.mrb[0].mxu0
    %v1690 = vadd.f32 0.0, %v1689
    %v1691 = vpop.f32.mrb[0].mxu0
    %v1692 = vpop.f32.mrb[0].mxu0
    %v1693 = vadd.f32 0.0, %v1692
    %v1694 = vpop.f32.mrb[0].mxu0
    %1695 = vmatprep.mubr.bf16.mxu0 0
    %1696 = vmatmul.mubr.bf16.gmra.mrb[0].mxu0 %v1571
    %v1697 = vpop.f32.mrb[0].mxu0
    %v1698 = vadd.f32 0.0, %v1697
    %v1699 = vpop.f32.mrb[0].mxu0
    %v1700 = vpop.f32.mrb[0].mxu0
    %v1701 = vadd.f32 0.0, %v1700
    %v1702 = vpop.f32.mrb[0].mxu0
    %1703 = vmatprep.mubr.bf16.mxu0 0
    %1704 = vmatmul.mubr.bf16.gmra.mrb[0].mxu0 %v1574
    %v1705 = vpop.f32.mrb[0].mxu0
    %v1706 = vadd.f32 0.0, %v1705
    %v1707 = vpop.f32.mrb[0].mxu0
    %v1708 = vpop.f32.mrb[0].mxu0
    %v1709 = vadd.f32 0.0, %v1708
    %v1710 = vpop.f32.mrb[0].mxu0
    %1711 = vmatprep.mubr.bf16.mxu0 0
    %1712 = vmatmul.mubr.bf16.gmra.mrb[0].mxu0 %v1577
    %v1713 = vpop.f32.mrb[0].mxu0
    %v1714 = vadd.f32 0.0, %v1713
    %v1715 = vpop.f32.mrb[0].mxu0
    %v1716 = vpop.f32.mrb[0].mxu0
    %v1717 = vadd.f32 0.0, %v1716
    %v1718 = vpop.f32.mrb[0].mxu0
    %1719 = vmatprep.mubr.bf16.mxu0 0
    %1720 = vmatmul.mubr.bf16.gmra.mrb[0].mxu0 %v1580
    %v1721 = vpop.f32.mrb[0].mxu0
    %v1722 = vadd.f32 0.0, %v1721
    %v1723 = vpop.f32.mrb[0].mxu0
    %v1724 = vpop.f32.mrb[0].mxu0
    %v1725 = vadd.f32 0.0, %v1724
    %v1726 = vpop.f32.mrb[0].mxu0
    %1727 = vmatprep.mubr.bf16.mxu0 0
    %1728 = vmatmul.mubr.bf16.gmra.mrb[0].mxu0 %v1583
    %v1729 = vpop.f32.mrb[0].mxu0
    %v1730 = vadd.f32 0.0, %v1729
    %v1731 = vpop.f32.mrb[0].mxu0
    %v1732 = vpop.f32.mrb[0].mxu0
    %v1733 = vadd.f32 0.0, %v1732
    %v1734 = vpop.f32.mrb[0].mxu0
    %1735 = vmatprep.mubr.bf16.mxu0 0
    %1736 = vmatmul.mubr.bf16.gmra.mrb[0].mxu0 %v1586
    %v1737 = vpop.f32.mrb[0].mxu0
    %v1738 = vadd.f32 0.0, %v1737
    %v1739 = vpop.f32.mrb[0].mxu0
    %v1740 = vpop.f32.mrb[0].mxu0
    %v1741 = vadd.f32 0.0, %v1740
    %v1742 = vpop.f32.mrb[0].mxu0
    %1743 = vmatprep.mubr.bf16.mxu0 0
    %1744 = vmatmul.mubr.bf16.gmra.mrb[0].mxu0 %v1589
    %v1745 = vpop.f32.mrb[0].mxu0
    %v1746 = vadd.f32 0.0, %v1745
    %v1747 = vpop.f32.mrb[0].mxu0
    %v1748 = vpop.f32.mrb[0].mxu0
    %v1749 = vadd.f32 0.0, %v1748
    %v1750 = vpop.f32.mrb[0].mxu0
    %1751 = vdwg.mxu0
    %v1752 = vadd.f32 %v1463, %v1626
    %v1753 = vadd.f32 %v1464, %v1629
    %v1754 = vadd.f32 %v1465, %v1634
    %v1755 = vadd.f32 %v1466, %v1637
    %v1756 = vadd.f32 %v1467, %v1642
    %v1757 = vadd.f32 %v1468, %v1645
    %v1758 = vadd.f32 %v1469, %v1650
    %v1759 = vadd.f32 %v1470, %v1653
    %v1760 = vadd.f32 %v1471, %v1658
    %v1761 = vadd.f32 %v1472, %v1661
    %v1762 = vadd.f32 %v1473, %v1666
    %v1763 = vadd.f32 %v1474, %v1669
    %v1764 = vadd.f32 %v1475, %v1674
    %v1765 = vadd.f32 %v1476, %v1677
    %v1766 = vadd.f32 %v1477, %v1682
    %v1767 = vadd.f32 %v1478, %v1685
    %v1768 = vadd.f32 %v1479, %v1690
    %v1769 = vadd.f32 %v1480, %v1693
    %v1770 = vadd.f32 %v1481, %v1698
    %v1771 = vadd.f32 %v1482, %v1701
    %v1772 = vadd.f32 %v1483, %v1706
    %v1773 = vadd.f32 %v1484, %v1709
    %v1774 = vadd.f32 %v1485, %v1714
    %v1775 = vadd.f32 %v1486, %v1717
    %v1776 = vadd.f32 %v1487, %v1722
    %v1777 = vadd.f32 %v1488, %v1725
    %v1778 = vadd.f32 %v1489, %v1730
    %v1779 = vadd.f32 %v1490, %v1733
    %v1780 = vadd.f32 %v1491, %v1738
    %v1781 = vadd.f32 %v1492, %v1741
    %v1782 = vadd.f32 %v1493, %v1746
    %v1783 = vadd.f32 %v1494, %v1749
    %v1784 = vld [vmem:[#allocation20] sm:$0x1]
    %v1786 = vlaneseq
    %v1787 = vshrl.u32 %v1786, 7
    %v1788 = vsub.s32 0, %v1787
    %v1789 = vrot.slane %v1784, %v1788
    %v1791 = vadd.f32 %v1752, %v1789
    %v1792 = vadd.f32 %v1753, %v1789
    %v1793 = vadd.f32 %v1754, %v1789
    %v1794 = vadd.f32 %v1755, %v1789
    %v1795 = vadd.f32 %v1756, %v1789
    %v1796 = vadd.f32 %v1757, %v1789
    %v1797 = vadd.f32 %v1758, %v1789
    %v1798 = vadd.f32 %v1759, %v1789
    %v1799 = vadd.f32 %v1760, %v1789
    %v1800 = vadd.f32 %v1761, %v1789
    %v1801 = vadd.f32 %v1762, %v1789
    %v1802 = vadd.f32 %v1763, %v1789
    %v1803 = vadd.f32 %v1764, %v1789
    %v1804 = vadd.f32 %v1765, %v1789
    %v1805 = vadd.f32 %v1766, %v1789
    %v1806 = vadd.f32 %v1767, %v1789
    %v1807 = vadd.f32 %v1768, %v1789
    %v1808 = vadd.f32 %v1769, %v1789
    %v1809 = vadd.f32 %v1770, %v1789
    %v1810 = vadd.f32 %v1771, %v1789
    %v1811 = vadd.f32 %v1772, %v1789
    %v1812 = vadd.f32 %v1773, %v1789
    %v1813 = vadd.f32 %v1774, %v1789
    %v1814 = vadd.f32 %v1775, %v1789
    %v1815 = vadd.f32 %v1776, %v1789
    %v1816 = vadd.f32 %v1777, %v1789
    %v1817 = vadd.f32 %v1778, %v1789
    %v1818 = vadd.f32 %v1779, %v1789
    %v1819 = vadd.f32 %v1780, %v1789
    %v1820 = vadd.f32 %v1781, %v1789
    %v1821 = vadd.f32 %v1782, %v1789
    %v1822 = vadd.f32 %v1783, %v1789
    %1823 = vst [vmem:[#allocation22] sm:$0xff] %v1791
    %1824 = vst [vmem:[#allocation22 + $0x8] sm:$0xff] %v1792
    %1825 = vst [vmem:[#allocation22 + $0x10] sm:$0xff] %v1793
    %1826 = vst [vmem:[#allocation22 + $0x18] sm:$0xff] %v1794
    %1827 = vst [vmem:[#allocation22 + $0x20] sm:$0xff] %v1795
    %1828 = vst [vmem:[#allocation22 + $0x28] sm:$0xff] %v1796
    %1829 = vst [vmem:[#allocation22 + $0x30] sm:$0xff] %v1797
    %1830 = vst [vmem:[#allocation22 + $0x38] sm:$0xff] %v1798
    %1831 = vst [vmem:[#allocation22 + $0x40] sm:$0xff] %v1799
    %1832 = vst [vmem:[#allocation22 + $0x48] sm:$0xff] %v1800
    %1833 = vst [vmem:[#allocation22 + $0x50] sm:$0xff] %v1801
    %1834 = vst [vmem:[#allocation22 + $0x58] sm:$0xff] %v1802
    %1835 = vst [vmem:[#allocation22 + $0x60] sm:$0xff] %v1803
    %1836 = vst [vmem:[#allocation22 + $0x68] sm:$0xff] %v1804
    %1837 = vst [vmem:[#allocation22 + $0x70] sm:$0xff] %v1805
    %1838 = vst [vmem:[#allocation22 + $0x78] sm:$0xff] %v1806
    %1839 = vst [vmem:[#allocation22 + $0x80] sm:$0xff] %v1807
    %1840 = vst [vmem:[#allocation22 + $0x88] sm:$0xff] %v1808
    %1841 = vst [vmem:[#allocation22 + $0x90] sm:$0xff] %v1809
    %1842 = vst [vmem:[#allocation22 + $0x98] sm:$0xff] %v1810
    %1843 = vst [vmem:[#allocation22 + $0xa0] sm:$0xff] %v1811
    %1844 = vst [vmem:[#allocation22 + $0xa8] sm:$0xff] %v1812
    %1845 = vst [vmem:[#allocation22 + $0xb0] sm:$0xff] %v1813
    %1846 = vst [vmem:[#allocation22 + $0xb8] sm:$0xff] %v1814
    %1847 = vst [vmem:[#allocation22 + $0xc0] sm:$0xff] %v1815
    %1848 = vst [vmem:[#allocation22 + $0xc8] sm:$0xff] %v1816
    %1849 = vst [vmem:[#allocation22 + $0xd0] sm:$0xff] %v1817
    %1850 = vst [vmem:[#allocation22 + $0xd8] sm:$0xff] %v1818
    %1851 = vst [vmem:[#allocation22 + $0xe0] sm:$0xff] %v1819
    %1852 = vst [vmem:[#allocation22 + $0xe8] sm:$0xff] %v1820
    %1853 = vst [vmem:[#allocation22 + $0xf0] sm:$0xff] %v1821
    %1854 = vst [vmem:[#allocation22 + $0xf8] sm:$0xff] %v1822
    // Predicated region
    $region98: #{nonlocal_net_cost.10} parent=1 // pred_check
      _
    $region99: #{nonlocal_net_cost.10} parent=1 // pred_check_branch
      %1856 = sbr.rel (0) target = $region101
    $region100: #{nonlocal_net_cost.10} parent=1 // pred_region
      %s1858 = ssub.s32 4096, 4096
      %1859 = vsyncadd [#allocation4], %s1858
      %s1860 = sshll.u32 [#allocation22], 4
      %s1861 = int_to_ptr.vmem [resolvable:$true] %s1860
      %1866 = dma.vmem_to_hbm [thread:$0]  %s1861, 4096, %s12, [#allocation4], 128, 128, 8
    $region101: #{nonlocal_net_cost.10} parent=1 // pred_fallthru
      _
    // Predicated region
    $region102: #{nonlocal_net_cost.10} parent=1 // pred_check
      _
    $region103: #{nonlocal_net_cost.10} parent=1 // pred_check_branch
      %1868 = sbr.rel (0) target = $region105
    $region104: #{nonlocal_net_cost.10} parent=1 // pred_region
      %1869 = dma.done [#allocation4], 4096
    $region105: #{nonlocal_net_cost.10} parent=1 // pred_fallthru
      _
    %1870 = vsyncpa [#allocation3], 1
    %1871 = vsyncpa [#allocation6], 1
    %1872 = vsyncpa [#allocation9], 1
    %1873 = vsyncpa [#allocation12], 1
    %1874 = vsyncpa [#allocation15], 1
    %1875 = vsyncpa [#allocation18], 1
    %1876 = vsyncpa [#allocation21], 1
    %1877 = vsyncpa [#allocation4], 1

// kernel: nonlocal_net_cost.12
$region0: #{nonlocal_net_cost.12}
  #allocation0 [shape = 'u32[]', space=smem, size = 0x4, offset = 0x4, fixed_abs, tag = 'smem constant byte address 0x4 - core index']
  #allocation1 [shape = 'u32[144,128]{1,0:T(1,128)}', space=vmem, size = 0x12000, scoped, tag = 'internal scratch']
  %s0 = inlined_call_operand.hbm [shape: bf16[2,128,128], index: 0, kind: input, shape index: {}]
  %s1 = inlined_call_operand.hbm [shape: bf16[2,128,128], index: 1, kind: input, shape index: {}]
  %s2 = inlined_call_operand.hbm [shape: bf16[2,128,128], index: 2, kind: input, shape index: {}]
  %s3 = inlined_call_operand.hbm [shape: bf16[2,128,128], index: 3, kind: input, shape index: {}]
  %s4 = inlined_call_operand.hbm [shape: bf16[2,128,128], index: 4, kind: output, shape index: {}]
  %s5 = sld [smem:[#allocation0]]
  $region65: #{nonlocal_net_cost.12} parent=0
    _
  %s7 = ssub.s32 1, %s5
  %s8 = scalar_select 0, %s7, %s5
  $region1: #{nonlocal_net_cost.12} parent=0
    #allocation2 [shape = 'u8[65536]{0}', space=vmem, size = 0x10000, scoped, tag = 'input window, operand 0']
    #allocation3 [shape = 's32[2]{0}', space=sflag, size = 0x8, scoped, tag = 'scoped memory for nonlocal_net_cost.12']
    #allocation4 [shape = 's32[2]{0}', space=sflag, size = 0x8, scoped, tag = 'scoped memory for nonlocal_net_cost.12']
    #allocation5 [shape = 'u8[65536]{0}', space=vmem, size = 0x10000, scoped, tag = 'input window, operand 1']
    #allocation6 [shape = 's32[2]{0}', space=sflag, size = 0x8, scoped, tag = 'scoped memory for nonlocal_net_cost.12']
    #allocation7 [shape = 'u8[65536]{0}', space=vmem, size = 0x10000, scoped, tag = 'input window, operand 2']
    #allocation8 [shape = 'u8[65536]{0}', space=vmem, size = 0x10000, scoped, tag = 'input window, operand 3']
    #allocation9 [shape = 's32[2]{0}', space=sflag, size = 0x8, scoped, tag = 'scoped memory for nonlocal_net_cost.12']
    #allocation10 [shape = 'u8[65536]{0}', space=vmem, size = 0x10000, scoped, tag = 'output window, operand 0']
    %9 = vsyncpa [#allocation3], 0
    %s10 = scalar_lea.sflag [#allocation3], 1
    %11 = vsyncpa %s10, 0
    %12 = vsyncpa [#allocation6], 0
    %s13 = scalar_lea.sflag [#allocation6], 1
    %14 = vsyncpa %s13, 0
    %15 = vsyncpa [#allocation9], 0
    %s16 = scalar_lea.sflag [#allocation9], 1
    %17 = vsyncpa %s16, 0
    %18 = vsyncpa [#allocation4], 0
    %s19 = scalar_lea.sflag [#allocation4], 1
    %20 = vsyncpa %s19, 0
    loop: start=0, step=1, limit=4
    $region2: #{nonlocal_net_cost.12} parent=1 // loop_pre_header
      _
    $region3: #{nonlocal_net_cost.12} parent=1 // loop_header
      %s22 = sphi 0, %s26
      %p23 = scmp.ge.s32.totalorder %s22, 4
      %s29 = sphi 0, %s41
      %s30 = sphi 0, %s37
      %s31 = sphi 0, %s29
      %s32 = sphi 0, %s30
      %s33 = sphi 0, %s31
      %s34 = sphi 0, %s32
      %s46 = sphi 0, %s48
      %s49 = sphi 0, %s46
      %s50 = sphi 0, %s49
      %s66 = sphi 0, %s50
      %s72 = sphi 0, %s74
      %s75 = sphi 0, %s72
      %s76 = sphi 0, %s75
      %s92 = sphi 0, %s76
      %s98 = sphi 0, %s100
      %s101 = sphi 0, %s98
      %s102 = sphi 0, %s101
      %s118 = sphi 0, %s102
      %s126 = sphi 0, %s128
      %s129 = sphi 0, %s126
      %s130 = sphi 0, %s129
      %s146 = sphi 0, %s130
      %s154 = sphi 0, %s156
      %s157 = sphi 0, %s154
      %s158 = sphi 0, %s157
      %s174 = sphi 0, %s158
    $region4: #{nonlocal_net_cost.12} parent=1 // loop_header_branch
      %25 = sbr.rel (%p23) target = $region8
    $region5: #{nonlocal_net_cost.12} parent=1 // loop_body
      %s27 = ssub.s32 %s22, 1
      %s28 = ssub.s32 %s22, 2
      %s35 = sadd.s32 1, %s30
      %p36 = scmp.ge.s32.totalorder %s35, 1
      %s37 = scalar_select %p36, 0, %s35
      %s38 = sadd.s32 1, %s29
      %s39 = scalar_select %p36, %s38, %s29
      %p40 = scmp.ge.s32.totalorder %s39, 2
      %s41 = scalar_select %p40, 0, %s39
      %s42 = ssub.s32 %s29, %s41
      %s43 = ssub.s32 %s30, %s37
      %s44 = sor.u32 %s42, %s43
      %p45 = scmp.eq.s32.totalorder %s44, 0
      %s47 = sadd.s32 %s46, 1
      %s48 = scalar_select %p45, %s46, %s47
      %p51 = pneg %p45
      %p52 = scmp.eq.s32.totalorder %s22, 1
      %p53 = por %p51, %p52
      %p54 = scmp.ne.s32.totalorder %s46, %s49
      %p55 = scmp.eq.s32.totalorder %s22, 0
      %p56 = por %p54, %p55
      %p57 = scmp.ne.s32.totalorder %s46, %s49
      %p58 = scmp.eq.s32.totalorder %s27, 1
      %p59 = por %p57, %p58
      %p60 = scmp.ne.s32.totalorder %s49, %s50
      %p61 = scmp.eq.s32.totalorder %s27, 0
      %p62 = por %p60, %p61
      %p63 = scmp.ne.s32.totalorder %s49, %s50
      %p64 = scmp.eq.s32.totalorder %s28, 1
      %p65 = por %p63, %p64
      %p67 = scmp.ne.s32.totalorder %s50, %s66
      %p68 = scmp.eq.s32.totalorder %s28, 0
      %p69 = por %p67, %p68
      %s70 = ssub.s32 %s29, %s41
      %p71 = scmp.eq.s32.totalorder %s70, 0
      %s73 = sadd.s32 %s72, 1
      %s74 = scalar_select %p71, %s72, %s73
      %p77 = pneg %p71
      %p78 = scmp.eq.s32.totalorder %s22, 1
      %p79 = por %p77, %p78
      %p80 = scmp.ne.s32.totalorder %s72, %s75
      %p81 = scmp.eq.s32.totalorder %s22, 0
      %p82 = por %p80, %p81
      %p83 = scmp.ne.s32.totalorder %s72, %s75
      %p84 = scmp.eq.s32.totalorder %s27, 1
      %p85 = por %p83, %p84
      %p86 = scmp.ne.s32.totalorder %s75, %s76
      %p87 = scmp.eq.s32.totalorder %s27, 0
      %p88 = por %p86, %p87
      %p89 = scmp.ne.s32.totalorder %s75, %s76
      %p90 = scmp.eq.s32.totalorder %s28, 1
      %p91 = por %p89, %p90
      %p93 = scmp.ne.s32.totalorder %s76, %s92
      %p94 = scmp.eq.s32.totalorder %s28, 0
      %p95 = por %p93, %p94
      %s96 = ssub.s32 %s29, %s41
      %p97 = scmp.eq.s32.totalorder %s96, 0
      %s99 = sadd.s32 %s98, 1
      %s100 = scalar_select %p97, %s98, %s99
      %p103 = pneg %p97
      %p104 = scmp.eq.s32.totalorder %s22, 1
      %p105 = por %p103, %p104
      %p106 = scmp.ne.s32.totalorder %s98, %s101
      %p107 = scmp.eq.s32.totalorder %s22, 0
      %p108 = por %p106, %p107
      %p109 = scmp.ne.s32.totalorder %s98, %s101
      %p110 = scmp.eq.s32.totalorder %s27, 1
      %p111 = por %p109, %p110
      %p112 = scmp.ne.s32.totalorder %s101, %s102
      %p113 = scmp.eq.s32.totalorder %s27, 0
      %p114 = por %p112, %p113
      %p115 = scmp.ne.s32.totalorder %s101, %s102
      %p116 = scmp.eq.s32.totalorder %s28, 1
      %p117 = por %p115, %p116
      %p119 = scmp.ne.s32.totalorder %s102, %s118
      %p120 = scmp.eq.s32.totalorder %s28, 0
      %p121 = por %p119, %p120
      %s122 = ssub.s32 %s29, %s41
      %s123 = ssub.s32 %s30, %s37
      %s124 = sor.u32 %s122, %s123
      %p125 = scmp.eq.s32.totalorder %s124, 0
      %s127 = sadd.s32 %s126, 1
      %s128 = scalar_select %p125, %s126, %s127
      %p131 = pneg %p125
      %p132 = scmp.eq.s32.totalorder %s22, 1
      %p133 = por %p131, %p132
      %p134 = scmp.ne.s32.totalorder %s126, %s129
      %p135 = scmp.eq.s32.totalorder %s22, 0
      %p136 = por %p134, %p135
      %p137 = scmp.ne.s32.totalorder %s126, %s129
      %p138 = scmp.eq.s32.totalorder %s27, 1
      %p139 = por %p137, %p138
      %p140 = scmp.ne.s32.totalorder %s129, %s130
      %p141 = scmp.eq.s32.totalorder %s27, 0
      %p142 = por %p140, %p141
      %p143 = scmp.ne.s32.totalorder %s129, %s130
      %p144 = scmp.eq.s32.totalorder %s28, 1
      %p145 = por %p143, %p144
      %p147 = scmp.ne.s32.totalorder %s130, %s146
      %p148 = scmp.eq.s32.totalorder %s28, 0
      %p149 = por %p147, %p148
      %s150 = ssub.s32 %s29, %s41
      %s151 = ssub.s32 %s30, %s37
      %s152 = sor.u32 %s150, %s151
      %p153 = scmp.eq.s32.totalorder %s152, 0
      %s155 = sadd.s32 %s154, 1
      %s156 = scalar_select %p153, %s154, %s155
      %p159 = pneg %p153
      %p160 = scmp.eq.s32.totalorder %s22, 1
      %p161 = por %p159, %p160
      %p162 = scmp.ne.s32.totalorder %s154, %s157
      %p163 = scmp.eq.s32.totalorder %s22, 0
      %p164 = por %p162, %p163
      %p165 = scmp.ne.s32.totalorder %s154, %s157
      %p166 = scmp.eq.s32.totalorder %s27, 1
      %p167 = por %p165, %p166
      %p168 = scmp.ne.s32.totalorder %s157, %s158
      %p169 = scmp.eq.s32.totalorder %s27, 0
      %p170 = por %p168, %p169
      %p171 = scmp.ne.s32.totalorder %s157, %s158
      %p172 = scmp.eq.s32.totalorder %s28, 1
      %p173 = por %p171, %p172
      %p175 = scmp.ne.s32.totalorder %s158, %s174
      %p176 = scmp.eq.s32.totalorder %s28, 0
      %p177 = por %p175, %p176
      %p178 = scmp.le.s32.totalorder 1, %s22
      %p179 = scmp.lt.s32.totalorder %s22, 3
      %p180 = pnand %p178, %p179
      %p181 = pneg %p180
      // Predicated region
      $region9: #{nonlocal_net_cost.12} parent=5 // pred_check
        _
      $region10: #{nonlocal_net_cost.12} parent=5 // pred_check_branch
        %183 = sbr.rel (%p180) target = $region12
      $region11: #{nonlocal_net_cost.12} parent=5 // pred_region
        %s184 = ssub.s32 %s22, 1
      $region12: #{nonlocal_net_cost.12} parent=5 // pred_fallthru
        _
      %p185 = scmp.lt.s32.totalorder %s22, 2
      // Predicated region
      $region13: #{nonlocal_net_cost.12} parent=5 // pred_check
        %p186 = pneg %p185
      $region14: #{nonlocal_net_cost.12} parent=5 // pred_check_branch
        %188 = sbr.rel (%p186) target = $region16
      $region15: #{nonlocal_net_cost.12} parent=5 // pred_region
        // Predicated region
        $region17: #{nonlocal_net_cost.12} parent=15 // pred_check
          %p189 = pneg %p56
        $region18: #{nonlocal_net_cost.12} parent=15 // pred_check_branch
          %191 = sbr.rel (%p189) target = $region20
        $region19: #{nonlocal_net_cost.12} parent=15 // pred_region
          %s192 = sand.u32 %s46, 1
          %s193 = scalar_lea.sflag [#allocation3], %s192
          %s194 = sand.u32 %s46, 1
          %s195 = smul.addr %s194, 64
          %s196 = scalar_lea.vmem [#allocation2], %s195
          %s197 = smul.u32 16, %s30
          %s199 = ssub.s32 1024, 1024
          %200 = vsyncadd %s193, %s199
          %s201 = smul.addr %s29, 16
          %s202 = sadd.s32 %s197, %s201
          %s203 = smul.addr %s202, 64
          %s204 = scalar_lea.hbm %s0, %s203
          %s205 = sshll.u32 %s196, 4
          %s206 = int_to_ptr.vmem [resolvable:$true] %s205
          %211 = dma.hbm_to_vmem [thread:$0]  %s204, 1024, %s206, %s193, 64, 64, 4
        $region20: #{nonlocal_net_cost.12} parent=15 // pred_fallthru
          _
        // Predicated region
        $region21: #{nonlocal_net_cost.12} parent=15 // pred_check
          %p212 = pneg %p82
        $region22: #{nonlocal_net_cost.12} parent=15 // pred_check_branch
          %214 = sbr.rel (%p212) target = $region24
        $region23: #{nonlocal_net_cost.12} parent=15 // pred_region
          %s215 = sand.u32 %s22, 1
          %s216 = scalar_lea.sflag [#allocation6], %s215
          %s217 = sand.u32 %s72, 1
          %s218 = smul.addr %s217, 64
          %s219 = scalar_lea.vmem [#allocation5], %s218
          %s221 = ssub.s32 1024, 1024
          %222 = vsyncadd %s216, %s221
          %s223 = smul.addr %s29, 16
          %s224 = smul.addr %s223, 64
          %s225 = scalar_lea.hbm %s1, %s224
          %s226 = sshll.u32 %s219, 4
          %s227 = int_to_ptr.vmem [resolvable:$true] %s226
          %232 = dma.hbm_to_vmem [thread:$0]  %s225, 1024, %s227, %s216, 64, 64, 4
        $region24: #{nonlocal_net_cost.12} parent=15 // pred_fallthru
          _
        // Predicated region
        $region25: #{nonlocal_net_cost.12} parent=15 // pred_check
          %p233 = pneg %p108
        $region26: #{nonlocal_net_cost.12} parent=15 // pred_check_branch
          %235 = sbr.rel (%p233) target = $region28
        $region27: #{nonlocal_net_cost.12} parent=15 // pred_region
          %s236 = sand.u32 %s22, 1
          %s237 = scalar_lea.sflag [#allocation6], %s236
          %s238 = sand.u32 %s98, 1
          %s239 = smul.addr %s238, 64
          %s240 = scalar_lea.vmem [#allocation7], %s239
          %s242 = ssub.s32 1024, 1024
          %243 = vsyncadd %s237, %s242
          %s244 = smul.addr %s29, 16
          %s245 = smul.addr %s244, 64
          %s246 = scalar_lea.hbm %s2, %s245
          %s247 = sshll.u32 %s240, 4
          %s248 = int_to_ptr.vmem [resolvable:$true] %s247
          %253 = dma.hbm_to_vmem [thread:$0]  %s246, 1024, %s248, %s237, 64, 64, 4
        $region28: #{nonlocal_net_cost.12} parent=15 // pred_fallthru
          _
        // Predicated region
        $region29: #{nonlocal_net_cost.12} parent=15 // pred_check
          %p254 = pneg %p136
        $region30: #{nonlocal_net_cost.12} parent=15 // pred_check_branch
          %256 = sbr.rel (%p254) target = $region32
        $region31: #{nonlocal_net_cost.12} parent=15 // pred_region
          %s257 = sand.u32 %s126, 1
          %s258 = scalar_lea.sflag [#allocation9], %s257
          %s259 = sand.u32 %s126, 1
          %s260 = smul.addr %s259, 64
          %s261 = scalar_lea.vmem [#allocation8], %s260
          %s262 = smul.u32 16, %s30
          %s264 = ssub.s32 1024, 1024
          %265 = vsyncadd %s258, %s264
          %s266 = smul.addr %s29, 16
          %s267 = sadd.s32 %s262, %s266
          %s268 = smul.addr %s267, 64
          %s269 = scalar_lea.hbm %s3, %s268
          %s270 = sshll.u32 %s261, 4
          %s271 = int_to_ptr.vmem [resolvable:$true] %s270
          %276 = dma.hbm_to_vmem [thread:$0]  %s269, 1024, %s271, %s258, 64, 64, 4
        $region32: #{nonlocal_net_cost.12} parent=15 // pred_fallthru
          _
      $region16: #{nonlocal_net_cost.12} parent=5 // pred_fallthru
        _
      %p277 = scmp.le.s32.totalorder 1, %s22
      %p278 = scmp.lt.s32.totalorder %s22, 3
      %p279 = pnand %p277, %p278
      %p280 = pneg %p279
      // Predicated region
      $region33: #{nonlocal_net_cost.12} parent=5 // pred_check
        _
      $region34: #{nonlocal_net_cost.12} parent=5 // pred_check_branch
        %282 = sbr.rel (%p279) target = $region36
      $region35: #{nonlocal_net_cost.12} parent=5 // pred_region
        %s283 = ssub.s32 %s22, 1
        %s284 = sand.u32 %s49, 1
        %s285 = scalar_lea.sflag [#allocation3], %s284
        %s286 = sand.u32 %s49, 1
        %s287 = smul.addr %s286, 64
        %s288 = scalar_lea.vmem [#allocation2], %s287
        // Predicated region
        $region37: #{nonlocal_net_cost.12} parent=35 // pred_check
          %p289 = pneg %p62
        $region38: #{nonlocal_net_cost.12} parent=35 // pred_check_branch
          %291 = sbr.rel (%p289) target = $region40
        $region39: #{nonlocal_net_cost.12} parent=35 // pred_region
          %292 = dma.done %s285, 1024
        $region40: #{nonlocal_net_cost.12} parent=35 // pred_fallthru
          _
        %s293 = sand.u32 %s27, 1
        %s294 = scalar_lea.sflag [#allocation6], %s293
        %s295 = sand.u32 %s75, 1
        %s296 = smul.addr %s295, 64
        %s297 = scalar_lea.vmem [#allocation5], %s296
        // Predicated region
        $region41: #{nonlocal_net_cost.12} parent=35 // pred_check
          %p298 = pneg %p88
        $region42: #{nonlocal_net_cost.12} parent=35 // pred_check_branch
          %300 = sbr.rel (%p298) target = $region44
        $region43: #{nonlocal_net_cost.12} parent=35 // pred_region
          %301 = dma.done %s294, 1024
        $region44: #{nonlocal_net_cost.12} parent=35 // pred_fallthru
          _
        %s302 = sand.u32 %s27, 1
        %s303 = scalar_lea.sflag [#allocation6], %s302
        %s304 = sand.u32 %s101, 1
        %s305 = smul.addr %s304, 64
        %s306 = scalar_lea.vmem [#allocation7], %s305
        // Predicated region
        $region45: #{nonlocal_net_cost.12} parent=35 // pred_check
          %p307 = pneg %p114
        $region46: #{nonlocal_net_cost.12} parent=35 // pred_check_branch
          %309 = sbr.rel (%p307) target = $region48
        $region47: #{nonlocal_net_cost.12} parent=35 // pred_region
          %310 = dma.done %s303, 1024
        $region48: #{nonlocal_net_cost.12} parent=35 // pred_fallthru
          _
        %s311 = sand.u32 %s129, 1
        %s312 = scalar_lea.sflag [#allocation9], %s311
        %s313 = sand.u32 %s129, 1
        %s314 = smul.addr %s313, 64
        %s315 = scalar_lea.vmem [#allocation8], %s314
        // Predicated region
        $region49: #{nonlocal_net_cost.12} parent=35 // pred_check
          %p316 = pneg %p142
        $region50: #{nonlocal_net_cost.12} parent=35 // pred_check_branch
          %318 = sbr.rel (%p316) target = $region52
        $region51: #{nonlocal_net_cost.12} parent=35 // pred_region
          %319 = dma.done %s312, 1024
        $region52: #{nonlocal_net_cost.12} parent=35 // pred_fallthru
          _
        %s320 = sand.u32 %s49, 1
        %s321 = scalar_lea.sflag [#allocation3], %s320
        %s322 = sand.u32 %s49, 1
        %s323 = smul.addr %s322, 64
        %s324 = scalar_lea.vmem [#allocation2], %s323
        %p325 = pneg %p62
        %p326 = pneg %p59
        %s327 = sand.u32 %s27, 1
        %s328 = scalar_lea.sflag [#allocation6], %s327
        %s329 = sand.u32 %s75, 1
        %s330 = smul.addr %s329, 64
        %s331 = scalar_lea.vmem [#allocation5], %s330
        %p332 = pneg %p88
        %p333 = pneg %p85
        %s334 = sand.u32 %s27, 1
        %s335 = scalar_lea.sflag [#allocation6], %s334
        %s336 = sand.u32 %s101, 1
        %s337 = smul.addr %s336, 64
        %s338 = scalar_lea.vmem [#allocation7], %s337
        %p339 = pneg %p114
        %p340 = pneg %p111
        %s341 = sand.u32 %s129, 1
        %s342 = scalar_lea.sflag [#allocation9], %s341
        %s343 = sand.u32 %s129, 1
        %s344 = smul.addr %s343, 64
        %s345 = scalar_lea.vmem [#allocation8], %s344
        %p346 = pneg %p142
        %p347 = pneg %p139
        %p348 = pneg %p170
        %p349 = pneg %p167
        %s350 = sand.u32 %s157, 1
        %s351 = scalar_lea.sflag [#allocation4], %s350
        %s352 = sand.u32 %s157, 1
        %s353 = smul.addr %s352, 64
        %s354 = scalar_lea.vmem [#allocation10], %s353
        %s355 = smul.u32 16, %s32
        %s356 = smul.u32 16, %s32
        %s357 = smul.u32 16, %s32
        %v359 = vld [vmem:[%s288] sm:$0xf]
        %v360 = vld [vmem:[%s288 + $0x4] sm:$0xf]
        %v361 = vld [vmem:[%s288 + $0x8] sm:$0xf]
        %v362 = vld [vmem:[%s288 + $0xc] sm:$0xf]
        %v363 = vld [vmem:[%s288 + $0x10] sm:$0xf]
        %v364 = vld [vmem:[%s288 + $0x14] sm:$0xf]
        %v365 = vld [vmem:[%s288 + $0x18] sm:$0xf]
        %v366 = vld [vmem:[%s288 + $0x1c] sm:$0xf]
        %v367 = vld [vmem:[%s288 + $0x20] sm:$0xf]
        %v368 = vld [vmem:[%s288 + $0x24] sm:$0xf]
        %v369 = vld [vmem:[%s288 + $0x28] sm:$0xf]
        %v370 = vld [vmem:[%s288 + $0x2c] sm:$0xf]
        %v371 = vld [vmem:[%s288 + $0x30] sm:$0xf]
        %v372 = vld [vmem:[%s288 + $0x34] sm:$0xf]
        %v373 = vld [vmem:[%s288 + $0x38] sm:$0xf]
        %v374 = vld [vmem:[%s288 + $0x3c] sm:$0xf]
        %v375 = vld [vmem:[%s297] sm:$0xf]
        %v376 = vld [vmem:[%s297 + $0x4] sm:$0xf]
        %v377 = vld [vmem:[%s297 + $0x8] sm:$0xf]
        %v378 = vld [vmem:[%s297 + $0xc] sm:$0xf]
        %v379 = vld [vmem:[%s297 + $0x10] sm:$0xf]
        %v380 = vld [vmem:[%s297 + $0x14] sm:$0xf]
        %v381 = vld [vmem:[%s297 + $0x18] sm:$0xf]
        %v382 = vld [vmem:[%s297 + $0x1c] sm:$0xf]
        %v383 = vld [vmem:[%s297 + $0x20] sm:$0xf]
        %v384 = vld [vmem:[%s297 + $0x24] sm:$0xf]
        %v385 = vld [vmem:[%s297 + $0x28] sm:$0xf]
        %v386 = vld [vmem:[%s297 + $0x2c] sm:$0xf]
        %v387 = vld [vmem:[%s297 + $0x30] sm:$0xf]
        %v388 = vld [vmem:[%s297 + $0x34] sm:$0xf]
        %v389 = vld [vmem:[%s297 + $0x38] sm:$0xf]
        %v390 = vld [vmem:[%s297 + $0x3c] sm:$0xf]
        %v407 = vunpack.c.l.b16 %v359
        %v408 = vunpack.c.l.b16 %v360
        %v409 = vunpack.c.l.b16 %v361
        %v410 = vunpack.c.l.b16 %v362
        %v411 = vunpack.c.l.b16 %v363
        %v412 = vunpack.c.l.b16 %v364
        %v413 = vunpack.c.l.b16 %v365
        %v414 = vunpack.c.l.b16 %v366
        %v415 = vunpack.c.l.b16 %v367
        %v416 = vunpack.c.l.b16 %v368
        %v417 = vunpack.c.l.b16 %v369
        %v418 = vunpack.c.l.b16 %v370
        %v419 = vunpack.c.l.b16 %v371
        %v420 = vunpack.c.l.b16 %v372
        %v421 = vunpack.c.l.b16 %v373
        %v422 = vunpack.c.l.b16 %v374
        %v423 = vpack.c.b16 %v408, %v407
        %v424 = vpack.c.b16 %v410, %v409
        %v425 = vpack.c.b16 %v412, %v411
        %v426 = vpack.c.b16 %v414, %v413
        %v427 = vpack.c.b16 %v416, %v415
        %v428 = vpack.c.b16 %v418, %v417
        %v429 = vpack.c.b16 %v420, %v419
        %v430 = vpack.c.b16 %v422, %v421
        %v455 = vunpack.c.l.b16 %v375
        %v456 = vunpack.c.l.b16 %v376
        %v457 = vunpack.c.l.b16 %v377
        %v458 = vunpack.c.l.b16 %v378
        %v459 = vunpack.c.l.b16 %v379
        %v460 = vunpack.c.l.b16 %v380
        %v461 = vunpack.c.l.b16 %v381
        %v462 = vunpack.c.l.b16 %v382
        %v463 = vunpack.c.l.b16 %v383
        %v464 = vunpack.c.l.b16 %v384
        %v465 = vunpack.c.l.b16 %v385
        %v466 = vunpack.c.l.b16 %v386
        %v467 = vunpack.c.l.b16 %v387
        %v468 = vunpack.c.l.b16 %v388
        %v469 = vunpack.c.l.b16 %v389
        %v470 = vunpack.c.l.b16 %v390
        %v471 = vpack.c.b16 %v456, %v455
        %v472 = vpack.c.b16 %v458, %v457
        %v473 = vpack.c.b16 %v460, %v459
        %v474 = vpack.c.b16 %v462, %v461
        %v475 = vpack.c.b16 %v464, %v463
        %v476 = vpack.c.b16 %v466, %v465
        %v477 = vpack.c.b16 %v468, %v467
        %v478 = vpack.c.b16 %v470, %v469
        %487 = vmatprep.subr.bf16.mxu0 0
        %488 = vmatpush1.bf16.xpose.msra.mxu0 %v471
        %489 = vmatprep.subr.bf16.mxu0 0
        %490 = vmatpush1.bf16.xpose.msra.mxu0 %v472
        %491 = vmatprep.subr.bf16.mxu0 0
        %492 = vmatpush1.bf16.xpose.msra.mxu0 %v473
        %493 = vmatprep.subr.bf16.mxu0 0
        %494 = vmatpush1.bf16.xpose.msra.mxu0 %v474
        %495 = vmatprep.subr.bf16.mxu0 0
        %496 = vmatpush1.bf16.xpose.msra.mxu0 %v475
        %497 = vmatprep.subr.bf16.mxu0 0
        %498 = vmatpush1.bf16.xpose.msra.mxu0 %v476
        %499 = vmatprep.subr.bf16.mxu0 0
        %500 = vmatpush1.bf16.xpose.msra.mxu0 %v477
        %501 = vmatprep.subr.bf16.mxu0 0
        %502 = vmatpush1.bf16.xpose.msra.mxu0 %v478
        %503 = vmatprep.subr.bf16.mxu0 0
        %504 = vmatpush1.bf16.xpose.msra.mxu0 0
        %505 = vmatprep.subr.bf16.mxu0 0
        %506 = vmatpush1.bf16.xpose.msra.mxu0 0
        %507 = vmatprep.subr.bf16.mxu0 0
        %508 = vmatpush1.bf16.xpose.msra.mxu0 0
        %509 = vmatprep.subr.bf16.mxu0 0
        %510 = vmatpush1.bf16.xpose.msra.mxu0 0
        %511 = vmatprep.subr.bf16.mxu0 0
        %512 = vmatpush1.bf16.xpose.msra.mxu0 0
        %513 = vmatprep.subr.bf16.mxu0 0
        %514 = vmatpush1.bf16.xpose.msra.mxu0 0
        %515 = vmatprep.subr.bf16.mxu0 0
        %516 = vmatpush1.bf16.xpose.msra.mxu0 0
        %517 = vmatprep.subr.bf16.mxu0 0
        %518 = vmatpush1.bf16.xpose.msra.mxu0 0
        %519 = vmatprep.mubr.bf16.mxu0 0
        %520 = vmatmul.mubr.bf16.gmra.mrb[0].mxu0 %v423
        %v521 = vpop.f32.mrb[0].mxu0
        %v522 = vadd.f32 0.0, %v521
        %v523 = vpop.f32.mrb[0].mxu0
        %v524 = vpop.f32.mrb[0].mxu0
        %v525 = vadd.f32 0.0, %v524
        %v526 = vpop.f32.mrb[0].mxu0
        %527 = vmatprep.mubr.bf16.mxu0 0
        %528 = vmatmul.mubr.bf16.gmra.mrb[0].mxu0 %v424
        %v529 = vpop.f32.mrb[0].mxu0
        %v530 = vadd.f32 0.0, %v529
        %v531 = vpop.f32.mrb[0].mxu0
        %v532 = vpop.f32.mrb[0].mxu0
        %v533 = vadd.f32 0.0, %v532
        %v534 = vpop.f32.mrb[0].mxu0
        %535 = vmatprep.mubr.bf16.mxu0 0
        %536 = vmatmul.mubr.bf16.gmra.mrb[0].mxu0 %v425
        %v537 = vpop.f32.mrb[0].mxu0
        %v538 = vadd.f32 0.0, %v537
        %v539 = vpop.f32.mrb[0].mxu0
        %v540 = vpop.f32.mrb[0].mxu0
        %v541 = vadd.f32 0.0, %v540
        %v542 = vpop.f32.mrb[0].mxu0
        %543 = vmatprep.mubr.bf16.mxu0 0
        %544 = vmatmul.mubr.bf16.gmra.mrb[0].mxu0 %v426
        %v545 = vpop.f32.mrb[0].mxu0
        %v546 = vadd.f32 0.0, %v545
        %v547 = vpop.f32.mrb[0].mxu0
        %v548 = vpop.f32.mrb[0].mxu0
        %v549 = vadd.f32 0.0, %v548
        %v550 = vpop.f32.mrb[0].mxu0
        %551 = vmatprep.mubr.bf16.mxu0 0
        %552 = vmatmul.mubr.bf16.gmra.mrb[0].mxu0 %v427
        %v553 = vpop.f32.mrb[0].mxu0
        %v554 = vadd.f32 0.0, %v553
        %v555 = vpop.f32.mrb[0].mxu0
        %v556 = vpop.f32.mrb[0].mxu0
        %v557 = vadd.f32 0.0, %v556
        %v558 = vpop.f32.mrb[0].mxu0
        %559 = vmatprep.mubr.bf16.mxu0 0
        %560 = vmatmul.mubr.bf16.gmra.mrb[0].mxu0 %v428
        %v561 = vpop.f32.mrb[0].mxu0
        %v562 = vadd.f32 0.0, %v561
        %v563 = vpop.f32.mrb[0].mxu0
        %v564 = vpop.f32.mrb[0].mxu0
        %v565 = vadd.f32 0.0, %v564
        %v566 = vpop.f32.mrb[0].mxu0
        %567 = vmatprep.mubr.bf16.mxu0 0
        %568 = vmatmul.mubr.bf16.gmra.mrb[0].mxu0 %v429
        %v569 = vpop.f32.mrb[0].mxu0
        %v570 = vadd.f32 0.0, %v569
        %v571 = vpop.f32.mrb[0].mxu0
        %v572 = vpop.f32.mrb[0].mxu0
        %v573 = vadd.f32 0.0, %v572
        %v574 = vpop.f32.mrb[0].mxu0
        %575 = vmatprep.mubr.bf16.mxu0 0
        %576 = vmatmul.mubr.bf16.gmra.mrb[0].mxu0 %v430
        %v577 = vpop.f32.mrb[0].mxu0
        %v578 = vadd.f32 0.0, %v577
        %v579 = vpop.f32.mrb[0].mxu0
        %v580 = vpop.f32.mrb[0].mxu0
        %v581 = vadd.f32 0.0, %v580
        %v582 = vpop.f32.mrb[0].mxu0
        %583 = vdwg.mxu0
        %v584 = vld [vmem:[%s315] sm:$0xf]
        %v585 = vld [vmem:[%s315 + $0x4] sm:$0xf]
        %v586 = vld [vmem:[%s315 + $0x8] sm:$0xf]
        %v587 = vld [vmem:[%s315 + $0xc] sm:$0xf]
        %v588 = vld [vmem:[%s315 + $0x10] sm:$0xf]
        %v589 = vld [vmem:[%s315 + $0x14] sm:$0xf]
        %v590 = vld [vmem:[%s315 + $0x18] sm:$0xf]
        %v591 = vld [vmem:[%s315 + $0x1c] sm:$0xf]
        %v592 = vld [vmem:[%s315 + $0x20] sm:$0xf]
        %v593 = vld [vmem:[%s315 + $0x24] sm:$0xf]
        %v594 = vld [vmem:[%s315 + $0x28] sm:$0xf]
        %v595 = vld [vmem:[%s315 + $0x2c] sm:$0xf]
        %v596 = vld [vmem:[%s315 + $0x30] sm:$0xf]
        %v597 = vld [vmem:[%s315 + $0x34] sm:$0xf]
        %v598 = vld [vmem:[%s315 + $0x38] sm:$0xf]
        %v599 = vld [vmem:[%s315 + $0x3c] sm:$0xf]
        %v600 = vunpack.c.l.bf16 %v584
        %v601 = vunpack.c.l.bf16 %v585
        %v602 = vunpack.c.l.bf16 %v586
        %v603 = vunpack.c.l.bf16 %v587
        %v604 = vunpack.c.l.bf16 %v588
        %v605 = vunpack.c.l.bf16 %v589
        %v606 = vunpack.c.l.bf16 %v590
        %v607 = vunpack.c.l.bf16 %v591
        %v608 = vunpack.c.l.bf16 %v592
        %v609 = vunpack.c.l.bf16 %v593
        %v610 = vunpack.c.l.bf16 %v594
        %v611 = vunpack.c.l.bf16 %v595
        %v612 = vunpack.c.l.bf16 %v596
        %v613 = vunpack.c.l.bf16 %v597
        %v614 = vunpack.c.l.bf16 %v598
        %v615 = vunpack.c.l.bf16 %v599
        %v616 = vmul.f32 %v600, %v522
        %v617 = vmul.f32 %v601, %v525
        %v618 = vmul.f32 %v602, %v530
        %v619 = vmul.f32 %v603, %v533
        %v620 = vmul.f32 %v604, %v538
        %v621 = vmul.f32 %v605, %v541
        %v622 = vmul.f32 %v606, %v546
        %v623 = vmul.f32 %v607, %v549
        %v624 = vmul.f32 %v608, %v554
        %v625 = vmul.f32 %v609, %v557
        %v626 = vmul.f32 %v610, %v562
        %v627 = vmul.f32 %v611, %v565
        %v628 = vmul.f32 %v612, %v570
        %v629 = vmul.f32 %v613, %v573
        %v630 = vmul.f32 %v614, %v578
        %v631 = vmul.f32 %v615, %v581
        %632 = vmax.xlane.f32.xlu0 %v616
        %v633 = vpop.xlane.xlu0 %632
        %634 = vmax.xlane.f32.xlu0 %v617
        %v635 = vpop.xlane.xlu0 %634
        %636 = vmax.xlane.f32.xlu0 %v618
        %v637 = vpop.xlane.xlu0 %636
        %638 = vmax.xlane.f32.xlu0 %v619
        %v639 = vpop.xlane.xlu0 %638
        %640 = vmax.xlane.f32.xlu0 %v620
        %v641 = vpop.xlane.xlu0 %640
        %642 = vmax.xlane.f32.xlu0 %v621
        %v643 = vpop.xlane.xlu0 %642
        %644 = vmax.xlane.f32.xlu0 %v622
        %v645 = vpop.xlane.xlu0 %644
        %646 = vmax.xlane.f32.xlu0 %v623
        %v647 = vpop.xlane.xlu0 %646
        %648 = vmax.xlane.f32.xlu0 %v624
        %v649 = vpop.xlane.xlu0 %648
        %650 = vmax.xlane.f32.xlu0 %v625
        %v651 = vpop.xlane.xlu0 %650
        %652 = vmax.xlane.f32.xlu0 %v626
        %v653 = vpop.xlane.xlu0 %652
        %654 = vmax.xlane.f32.xlu0 %v627
        %v655 = vpop.xlane.xlu0 %654
        %656 = vmax.xlane.f32.xlu0 %v628
        %v657 = vpop.xlane.xlu0 %656
        %658 = vmax.xlane.f32.xlu0 %v629
        %v659 = vpop.xlane.xlu0 %658
        %660 = vmax.xlane.f32.xlu0 %v630
        %v661 = vpop.xlane.xlu0 %660
        %662 = vmax.xlane.f32.xlu0 %v631
        %v663 = vpop.xlane.xlu0 %662
        %v664 = vsub.f32 %v616, %v633
        %v665 = vsub.f32 %v617, %v635
        %v666 = vsub.f32 %v618, %v637
        %v667 = vsub.f32 %v619, %v639
        %v668 = vsub.f32 %v620, %v641
        %v669 = vsub.f32 %v621, %v643
        %v670 = vsub.f32 %v622, %v645
        %v671 = vsub.f32 %v623, %v647
        %v672 = vsub.f32 %v624, %v649
        %v673 = vsub.f32 %v625, %v651
        %v674 = vsub.f32 %v626, %v653
        %v675 = vsub.f32 %v627, %v655
        %v676 = vsub.f32 %v628, %v657
        %v677 = vsub.f32 %v629, %v659
        %v678 = vsub.f32 %v630, %v661
        %v679 = vsub.f32 %v631, %v663
        %v680 = vmul.f32 %v664, 1.442695
        %v681 = vpow.pop %v680
        %v682 = vmul.f32 %v665, 1.442695
        %v683 = vpow.pop %v682
        %v684 = vmul.f32 %v666, 1.442695
        %v685 = vpow.pop %v684
        %v686 = vmul.f32 %v667, 1.442695
        %v687 = vpow.pop %v686
        %v688 = vmul.f32 %v668, 1.442695
        %v689 = vpow.pop %v688
        %v690 = vmul.f32 %v669, 1.442695
        %v691 = vpow.pop %v690
        %v692 = vmul.f32 %v670, 1.442695
        %v693 = vpow.pop %v692
        %v694 = vmul.f32 %v671, 1.442695
        %v695 = vpow.pop %v694
        %v696 = vmul.f32 %v672, 1.442695
        %v697 = vpow.pop %v696
        %v698 = vmul.f32 %v673, 1.442695
        %v699 = vpow.pop %v698
        %v700 = vmul.f32 %v674, 1.442695
        %v701 = vpow.pop %v700
        %v702 = vmul.f32 %v675, 1.442695
        %v703 = vpow.pop %v702
        %v704 = vmul.f32 %v676, 1.442695
        %v705 = vpow.pop %v704
        %v706 = vmul.f32 %v677, 1.442695
        %v707 = vpow.pop %v706
        %v708 = vmul.f32 %v678, 1.442695
        %v709 = vpow.pop %v708
        %v710 = vmul.f32 %v679, 1.442695
        %v711 = vpow.pop %v710
        %712 = vadd.xlane.f32.xlu0 %v681
        %v713 = vpop.xlane.xlu0 %712
        %714 = vadd.xlane.f32.xlu0 %v683
        %v715 = vpop.xlane.xlu0 %714
        %716 = vadd.xlane.f32.xlu0 %v685
        %v717 = vpop.xlane.xlu0 %716
        %718 = vadd.xlane.f32.xlu0 %v687
        %v719 = vpop.xlane.xlu0 %718
        %720 = vadd.xlane.f32.xlu0 %v689
        %v721 = vpop.xlane.xlu0 %720
        %722 = vadd.xlane.f32.xlu0 %v691
        %v723 = vpop.xlane.xlu0 %722
        %724 = vadd.xlane.f32.xlu0 %v693
        %v725 = vpop.xlane.xlu0 %724
        %726 = vadd.xlane.f32.xlu0 %v695
        %v727 = vpop.xlane.xlu0 %726
        %728 = vadd.xlane.f32.xlu0 %v697
        %v729 = vpop.xlane.xlu0 %728
        %730 = vadd.xlane.f32.xlu0 %v699
        %v731 = vpop.xlane.xlu0 %730
        %732 = vadd.xlane.f32.xlu0 %v701
        %v733 = vpop.xlane.xlu0 %732
        %734 = vadd.xlane.f32.xlu0 %v703
        %v735 = vpop.xlane.xlu0 %734
        %736 = vadd.xlane.f32.xlu0 %v705
        %v737 = vpop.xlane.xlu0 %736
        %738 = vadd.xlane.f32.xlu0 %v707
        %v739 = vpop.xlane.xlu0 %738
        %740 = vadd.xlane.f32.xlu0 %v709
        %v741 = vpop.xlane.xlu0 %740
        %742 = vadd.xlane.f32.xlu0 %v711
        %v743 = vpop.xlane.xlu0 %742
        %v744 = vrcp.pop %v713
        %v745 = vrcp.pop %v715
        %v746 = vrcp.pop %v717
        %v747 = vrcp.pop %v719
        %v748 = vrcp.pop %v721
        %v749 = vrcp.pop %v723
        %v750 = vrcp.pop %v725
        %v751 = vrcp.pop %v727
        %v752 = vrcp.pop %v729
        %v753 = vrcp.pop %v731
        %v754 = vrcp.pop %v733
        %v755 = vrcp.pop %v735
        %v756 = vrcp.pop %v737
        %v757 = vrcp.pop %v739
        %v758 = vrcp.pop %v741
        %v759 = vrcp.pop %v743
        %v760 = vmul.f32 %v681, %v744
        %v761 = vmul.f32 %v683, %v745
        %v762 = vmul.f32 %v685, %v746
        %v763 = vmul.f32 %v687, %v747
        %v764 = vmul.f32 %v689, %v748
        %v765 = vmul.f32 %v691, %v749
        %v766 = vmul.f32 %v693, %v750
        %v767 = vmul.f32 %v695, %v751
        %v768 = vmul.f32 %v697, %v752
        %v769 = vmul.f32 %v699, %v753
        %v770 = vmul.f32 %v701, %v754
        %v771 = vmul.f32 %v703, %v755
        %v772 = vmul.f32 %v705, %v756
        %v773 = vmul.f32 %v707, %v757
        %v774 = vmul.f32 %v709, %v758
        %v775 = vmul.f32 %v711, %v759
        %v776 = vpack.c.bf16 %v761, %v760
        %v777 = vpack.c.bf16 %v763, %v762
        %v778 = vpack.c.bf16 %v765, %v764
        %v779 = vpack.c.bf16 %v767, %v766
        %v780 = vpack.c.bf16 %v769, %v768
        %v781 = vpack.c.bf16 %v771, %v770
        %v782 = vpack.c.bf16 %v773, %v772
        %v783 = vpack.c.bf16 %v775, %v774
        %v784 = vld [vmem:[%s306] sm:$0xf]
        %v785 = vld [vmem:[%s306 + $0x4] sm:$0xf]
        %v786 = vld [vmem:[%s306 + $0x8] sm:$0xf]
        %v787 = vld [vmem:[%s306 + $0xc] sm:$0xf]
        %v788 = vld [vmem:[%s306 + $0x10] sm:$0xf]
        %v789 = vld [vmem:[%s306 + $0x14] sm:$0xf]
        %v790 = vld [vmem:[%s306 + $0x18] sm:$0xf]
        %v791 = vld [vmem:[%s306 + $0x1c] sm:$0xf]
        %v792 = vld [vmem:[%s306 + $0x20] sm:$0xf]
        %v793 = vld [vmem:[%s306 + $0x24] sm:$0xf]
        %v794 = vld [vmem:[%s306 + $0x28] sm:$0xf]
        %v795 = vld [vmem:[%s306 + $0x2c] sm:$0xf]
        %v796 = vld [vmem:[%s306 + $0x30] sm:$0xf]
        %v797 = vld [vmem:[%s306 + $0x34] sm:$0xf]
        %v798 = vld [vmem:[%s306 + $0x38] sm:$0xf]
        %v799 = vld [vmem:[%s306 + $0x3c] sm:$0xf]
        %v816 = vunpack.c.l.b16 %v784
        %v817 = vunpack.c.l.b16 %v785
        %v818 = vunpack.c.l.b16 %v786
        %v819 = vunpack.c.l.b16 %v787
        %v820 = vunpack.c.l.b16 %v788
        %v821 = vunpack.c.l.b16 %v789
        %v822 = vunpack.c.l.b16 %v790
        %v823 = vunpack.c.l.b16 %v791
        %v824 = vunpack.c.l.b16 %v792
        %v825 = vunpack.c.l.b16 %v793
        %v826 = vunpack.c.l.b16 %v794
        %v827 = vunpack.c.l.b16 %v795
        %v828 = vunpack.c.l.b16 %v796
        %v829 = vunpack.c.l.b16 %v797
        %v830 = vunpack.c.l.b16 %v798
        %v831 = vunpack.c.l.b16 %v799
        %v832 = vpack.c.b16 %v817, %v816
        %v833 = vpack.c.b16 %v819, %v818
        %v834 = vpack.c.b16 %v821, %v820
        %v835 = vpack.c.b16 %v823, %v822
        %v836 = vpack.c.b16 %v825, %v824
        %v837 = vpack.c.b16 %v827, %v826
        %v838 = vpack.c.b16 %v829, %v828
        %v839 = vpack.c.b16 %v831, %v830
        %848 = vmatprep.subr.bf16.mxu0 0
        %849 = vmatpush1.bf16.msra.mxu0 %v832
        %850 = vmatprep.subr.bf16.mxu0 0
        %851 = vmatpush1.bf16.msra.mxu0 %v833
        %852 = vmatprep.subr.bf16.mxu0 0
        %853 = vmatpush1.bf16.msra.mxu0 %v834
        %854 = vmatprep.subr.bf16.mxu0 0
        %855 = vmatpush1.bf16.msra.mxu0 %v835
        %856 = vmatprep.subr.bf16.mxu0 0
        %857 = vmatpush1.bf16.msra.mxu0 %v836
        %858 = vmatprep.subr.bf16.mxu0 0
        %859 = vmatpush1.bf16.msra.mxu0 %v837
        %860 = vmatprep.subr.bf16.mxu0 0
        %861 = vmatpush1.bf16.msra.mxu0 %v838
        %862 = vmatprep.subr.bf16.mxu0 0
        %863 = vmatpush1.bf16.msra.mxu0 %v839
        %864 = vmatprep.subr.bf16.mxu0 0
        %865 = vmatpush1.bf16.msra.mxu0 0
        %866 = vmatprep.subr.bf16.mxu0 0
        %867 = vmatpush1.bf16.msra.mxu0 0
        %868 = vmatprep.subr.bf16.mxu0 0
        %869 = vmatpush1.bf16.msra.mxu0 0
        %870 = vmatprep.subr.bf16.mxu0 0
        %871 = vmatpush1.bf16.msra.mxu0 0
        %872 = vmatprep.subr.bf16.mxu0 0
        %873 = vmatpush1.bf16.msra.mxu0 0
        %874 = vmatprep.subr.bf16.mxu0 0
        %875 = vmatpush1.bf16.msra.mxu0 0
        %876 = vmatprep.subr.bf16.mxu0 0
        %877 = vmatpush1.bf16.msra.mxu0 0
        %878 = vmatprep.subr.bf16.mxu0 0
        %879 = vmatpush1.bf16.msra.mxu0 0
        %880 = vmatprep.mubr.bf16.mxu0 0
        %881 = vmatmul.mubr.bf16.gmra.mrb[0].mxu0 %v776
        %v882 = vpop.f32.mrb[0].mxu0
        %v883 = vadd.f32 0.0, %v882
        %v884 = vpop.f32.mrb[0].mxu0
        %v885 = vpop.f32.mrb[0].mxu0
        %v886 = vadd.f32 0.0, %v885
        %v887 = vpop.f32.mrb[0].mxu0
        %888 = vmatprep.mubr.bf16.mxu0 0
        %889 = vmatmul.mubr.bf16.gmra.mrb[0].mxu0 %v777
        %v890 = vpop.f32.mrb[0].mxu0
        %v891 = vadd.f32 0.0, %v890
        %v892 = vpop.f32.mrb[0].mxu0
        %v893 = vpop.f32.mrb[0].mxu0
        %v894 = vadd.f32 0.0, %v893
        %v895 = vpop.f32.mrb[0].mxu0
        %896 = vmatprep.mubr.bf16.mxu0 0
        %897 = vmatmul.mubr.bf16.gmra.mrb[0].mxu0 %v778
        %v898 = vpop.f32.mrb[0].mxu0
        %v899 = vadd.f32 0.0, %v898
        %v900 = vpop.f32.mrb[0].mxu0
        %v901 = vpop.f32.mrb[0].mxu0
        %v902 = vadd.f32 0.0, %v901
        %v903 = vpop.f32.mrb[0].mxu0
        %904 = vmatprep.mubr.bf16.mxu0 0
        %905 = vmatmul.mubr.bf16.gmra.mrb[0].mxu0 %v779
        %v906 = vpop.f32.mrb[0].mxu0
        %v907 = vadd.f32 0.0, %v906
        %v908 = vpop.f32.mrb[0].mxu0
        %v909 = vpop.f32.mrb[0].mxu0
        %v910 = vadd.f32 0.0, %v909
        %v911 = vpop.f32.mrb[0].mxu0
        %912 = vmatprep.mubr.bf16.mxu0 0
        %913 = vmatmul.mubr.bf16.gmra.mrb[0].mxu0 %v780
        %v914 = vpop.f32.mrb[0].mxu0
        %v915 = vadd.f32 0.0, %v914
        %v916 = vpop.f32.mrb[0].mxu0
        %v917 = vpop.f32.mrb[0].mxu0
        %v918 = vadd.f32 0.0, %v917
        %v919 = vpop.f32.mrb[0].mxu0
        %920 = vmatprep.mubr.bf16.mxu0 0
        %921 = vmatmul.mubr.bf16.gmra.mrb[0].mxu0 %v781
        %v922 = vpop.f32.mrb[0].mxu0
        %v923 = vadd.f32 0.0, %v922
        %v924 = vpop.f32.mrb[0].mxu0
        %v925 = vpop.f32.mrb[0].mxu0
        %v926 = vadd.f32 0.0, %v925
        %v927 = vpop.f32.mrb[0].mxu0
        %928 = vmatprep.mubr.bf16.mxu0 0
        %929 = vmatmul.mubr.bf16.gmra.mrb[0].mxu0 %v782
        %v930 = vpop.f32.mrb[0].mxu0
        %v931 = vadd.f32 0.0, %v930
        %v932 = vpop.f32.mrb[0].mxu0
        %v933 = vpop.f32.mrb[0].mxu0
        %v934 = vadd.f32 0.0, %v933
        %v935 = vpop.f32.mrb[0].mxu0
        %936 = vmatprep.mubr.bf16.mxu0 0
        %937 = vmatmul.mubr.bf16.gmra.mrb[0].mxu0 %v783
        %v938 = vpop.f32.mrb[0].mxu0
        %v939 = vadd.f32 0.0, %v938
        %v940 = vpop.f32.mrb[0].mxu0
        %v941 = vpop.f32.mrb[0].mxu0
        %v942 = vadd.f32 0.0, %v941
        %v943 = vpop.f32.mrb[0].mxu0
        %944 = vdwg.mxu0
        %v945 = vpack.c.bf16 %v886, %v883
        %v946 = vpack.c.bf16 %v894, %v891
        %v947 = vpack.c.bf16 %v902, %v899
        %v948 = vpack.c.bf16 %v910, %v907
        %v949 = vpack.c.bf16 %v918, %v915
        %v950 = vpack.c.bf16 %v926, %v923
        %v951 = vpack.c.bf16 %v934, %v931
        %v952 = vpack.c.bf16 %v942, %v939
        %v961 = vunpack.c.l.b16 %v945
        %v962 = vunpack.c.h.b16 %v945
        %v963 = vunpack.c.l.b16 %v946
        %v964 = vunpack.c.h.b16 %v946
        %v965 = vunpack.c.l.b16 %v947
        %v966 = vunpack.c.h.b16 %v947
        %v967 = vunpack.c.l.b16 %v948
        %v968 = vunpack.c.h.b16 %v948
        %v969 = vunpack.c.l.b16 %v949
        %v970 = vunpack.c.h.b16 %v949
        %v971 = vunpack.c.l.b16 %v950
        %v972 = vunpack.c.h.b16 %v950
        %v973 = vunpack.c.l.b16 %v951
        %v974 = vunpack.c.h.b16 %v951
        %v975 = vunpack.c.l.b16 %v952
        %v976 = vunpack.c.h.b16 %v952
        %v977 = vpack.c.b16 %v961, %v961
        %v978 = vpack.c.b16 %v962, %v962
        %v979 = vpack.c.b16 %v963, %v963
        %v980 = vpack.c.b16 %v964, %v964
        %v981 = vpack.c.b16 %v965, %v965
        %v982 = vpack.c.b16 %v966, %v966
        %v983 = vpack.c.b16 %v967, %v967
        %v984 = vpack.c.b16 %v968, %v968
        %v985 = vpack.c.b16 %v969, %v969
        %v986 = vpack.c.b16 %v970, %v970
        %v987 = vpack.c.b16 %v971, %v971
        %v988 = vpack.c.b16 %v972, %v972
        %v989 = vpack.c.b16 %v973, %v973
        %v990 = vpack.c.b16 %v974, %v974
        %v991 = vpack.c.b16 %v975, %v975
        %v992 = vpack.c.b16 %v976, %v976
        %1009 = vst [vmem:[%s354] sm:$0xf] %v977
        %1010 = vst [vmem:[%s354 + $0x4] sm:$0xf] %v978
        %1011 = vst [vmem:[%s354 + $0x8] sm:$0xf] %v979
        %1012 = vst [vmem:[%s354 + $0xc] sm:$0xf] %v980
        %1013 = vst [vmem:[%s354 + $0x10] sm:$0xf] %v981
        %1014 = vst [vmem:[%s354 + $0x14] sm:$0xf] %v982
        %1015 = vst [vmem:[%s354 + $0x18] sm:$0xf] %v983
        %1016 = vst [vmem:[%s354 + $0x1c] sm:$0xf] %v984
        %1017 = vst [vmem:[%s354 + $0x20] sm:$0xf] %v985
        %1018 = vst [vmem:[%s354 + $0x24] sm:$0xf] %v986
        %1019 = vst [vmem:[%s354 + $0x28] sm:$0xf] %v987
        %1020 = vst [vmem:[%s354 + $0x2c] sm:$0xf] %v988
        %1021 = vst [vmem:[%s354 + $0x30] sm:$0xf] %v989
        %1022 = vst [vmem:[%s354 + $0x34] sm:$0xf] %v990
        %1023 = vst [vmem:[%s354 + $0x38] sm:$0xf] %v991
        %1024 = vst [vmem:[%s354 + $0x3c] sm:$0xf] %v992
        %s1025 = sand.u32 %s157, 1
        %s1026 = scalar_lea.sflag [#allocation4], %s1025
        %s1027 = sand.u32 %s157, 1
        %s1028 = smul.addr %s1027, 64
        %s1029 = scalar_lea.vmem [#allocation10], %s1028
        // Predicated region
        $region53: #{nonlocal_net_cost.12} parent=35 // pred_check
          %p1030 = pneg %p167
        $region54: #{nonlocal_net_cost.12} parent=35 // pred_check_branch
          %1032 = sbr.rel (%p1030) target = $region56
        $region55: #{nonlocal_net_cost.12} parent=35 // pred_region
          %s1033 = smul.u32 16, %s32
          %s1035 = ssub.s32 1024, 1024
          %1036 = vsyncadd %s1026, %s1035
          %s1037 = smul.addr %s31, 16
          %s1038 = sadd.s32 %s1033, %s1037
          %s1039 = smul.addr %s1038, 64
          %s1040 = scalar_lea.hbm %s4, %s1039
          %s1041 = sshll.u32 %s1029, 4
          %s1042 = int_to_ptr.vmem [resolvable:$true] %s1041
          %1047 = dma.vmem_to_hbm [thread:$0]  %s1042, 1024, %s1040, %s1026, 64, 64, 4
        $region56: #{nonlocal_net_cost.12} parent=35 // pred_fallthru
          _
      $region36: #{nonlocal_net_cost.12} parent=5 // pred_fallthru
        _
      %p1048 = scmp.le.s32.totalorder 2, %s22
      // Predicated region
      $region57: #{nonlocal_net_cost.12} parent=5 // pred_check
        %p1049 = pneg %p1048
      $region58: #{nonlocal_net_cost.12} parent=5 // pred_check_branch
        %1051 = sbr.rel (%p1049) target = $region60
      $region59: #{nonlocal_net_cost.12} parent=5 // pred_region
        %s1052 = ssub.s32 %s22, 2
        // Predicated region
        $region61: #{nonlocal_net_cost.12} parent=59 // pred_check
          %p1053 = pneg %p173
        $region62: #{nonlocal_net_cost.12} parent=59 // pred_check_branch
          %1055 = sbr.rel (%p1053) target = $region64
        $region63: #{nonlocal_net_cost.12} parent=59 // pred_region
          %s1056 = sand.u32 %s158, 1
          %s1057 = scalar_lea.sflag [#allocation4], %s1056
          %s1058 = sand.u32 %s158, 1
          %s1059 = smul.addr %s1058, 64
          %s1060 = scalar_lea.vmem [#allocation10], %s1059
          %1061 = dma.done %s1057, 1024
        $region64: #{nonlocal_net_cost.12} parent=59 // pred_fallthru
          _
      $region60: #{nonlocal_net_cost.12} parent=5 // pred_fallthru
        _
    $region6: #{nonlocal_net_cost.12} parent=1 // loop_footer
      %s26 = sadd.s32 1, %s22
    $region7: #{nonlocal_net_cost.12} parent=1 // loop_footer_branch
      %21 = sbr.rel target = $region3
    $region8: #{nonlocal_net_cost.12} parent=1 // loop_exit
      _
    %1062 = vsyncpa [#allocation3], 1
    %s1063 = scalar_lea.sflag [#allocation3], 1
    %1064 = vsyncpa %s1063, 1
    %1065 = vsyncpa [#allocation6], 1
    %s1066 = scalar_lea.sflag [#allocation6], 1
    %1067 = vsyncpa %s1066, 1
    %1068 = vsyncpa [#allocation9], 1
    %s1069 = scalar_lea.sflag [#allocation9], 1
    %1070 = vsyncpa %s1069, 1
    %1071 = vsyncpa [#allocation4], 1
    %s1072 = scalar_lea.sflag [#allocation4], 1
    %1073 = vsyncpa %s1072, 1

// kernel: nonlocal_net_cost.11
$region0: #{nonlocal_net_cost.11}
  #allocation0 [shape = 'u32[]', space=smem, size = 0x4, offset = 0x4, fixed_abs, tag = 'smem constant byte address 0x4 - core index']
  #allocation1 [shape = 'u32[144,128]{1,0:T(1,128)}', space=vmem, size = 0x12000, scoped, tag = 'internal scratch']
  %s0 = inlined_call_operand.hbm [shape: f32[256,128], index: 0, kind: input, shape index: {}]
  %s1 = inlined_call_operand.hbm [shape: bf16[128,128], index: 1, kind: input, shape index: {}]
  %s2 = inlined_call_operand.hbm [shape: f32[1,128], index: 2, kind: input, shape index: {}]
  %s3 = inlined_call_operand.hbm [shape: f32[1,128], index: 3, kind: input, shape index: {}]
  %s4 = inlined_call_operand.hbm [shape: f32[1,128], index: 4, kind: input, shape index: {}]
  %s5 = inlined_call_operand.hbm [shape: bf16[128,384], index: 5, kind: input, shape index: {}]
  %s6 = inlined_call_operand.hbm [shape: f32[1,384], index: 6, kind: input, shape index: {}]
  %s7 = inlined_call_operand.hbm [shape: f32[256,128], index: 7, kind: output, shape index: {0}]
  %s8 = inlined_call_operand.hbm [shape: bf16[256,128], index: 8, kind: output, shape index: {1}]
  %s9 = inlined_call_operand.hbm [shape: bf16[256,128], index: 9, kind: output, shape index: {2}]
  %s10 = inlined_call_operand.hbm [shape: bf16[256,128], index: 10, kind: output, shape index: {3}]
  %11 = xla_tuple %s7, %s8, %s9, %s10
  %s12 = sld [smem:[#allocation0]]
  $region90: #{nonlocal_net_cost.11} parent=0
    _
  %s14 = ssub.s32 1, %s12
  %s15 = scalar_select 0, %s14, %s12
  $region1: #{nonlocal_net_cost.11} parent=0
    #allocation2 [shape = 'u8[131072]{0}', space=vmem, size = 0x20000, scoped, tag = 'input window, operand 0, single buffered']
    #allocation3 [shape = 's32[1]{0}', space=sflag, size = 0x4, scoped, tag = 'scoped memory for nonlocal_net_cost.11']
    #allocation4 [shape = 's32[1]{0}', space=sflag, size = 0x4, scoped, tag = 'scoped memory for nonlocal_net_cost.11']
    #allocation5 [shape = 'u8[32768]{0}', space=vmem, size = 0x8000, scoped, tag = 'input window, operand 1, single buffered']
    #allocation6 [shape = 's32[1]{0}', space=sflag, size = 0x4, scoped, tag = 'scoped memory for nonlocal_net_cost.11']
    #allocation7 [shape = 'u8[512]{0}', space=vmem, size = 0x400, scoped, tag = 'input window, operand 2, single buffered']
    #allocation8 [shape = 'u8[512]{0}', space=vmem, size = 0x400, scoped, tag = 'input window, operand 3, single buffered']
    #allocation9 [shape = 's32[1]{0}', space=sflag, size = 0x4, scoped, tag = 'scoped memory for nonlocal_net_cost.11']
    #allocation10 [shape = 'u8[512]{0}', space=vmem, size = 0x400, scoped, tag = 'input window, operand 4, single buffered']
    #allocation11 [shape = 'u8[98304]{0}', space=vmem, size = 0x18000, scoped, tag = 'input window, operand 5, single buffered']
    #allocation12 [shape = 's32[1]{0}', space=sflag, size = 0x4, scoped, tag = 'scoped memory for nonlocal_net_cost.11']
    #allocation13 [shape = 'u8[1536]{0}', space=vmem, size = 0x800, scoped, tag = 'input window, operand 6, single buffered']
    #allocation14 [shape = 'u8[131072]{0}', space=vmem, size = 0x20000, scoped, tag = 'output window, operand 0, single buffered']
    #allocation15 [shape = 'u8[65536]{0}', space=vmem, size = 0x10000, scoped, tag = 'output window, operand 1, single buffered']
    #allocation16 [shape = 's32[1]{0}', space=sflag, size = 0x4, scoped, tag = 'scoped memory for nonlocal_net_cost.11']
    #allocation17 [shape = 'u8[65536]{0}', space=vmem, size = 0x10000, scoped, tag = 'output window, operand 2, single buffered']
    #allocation18 [shape = 'u8[65536]{0}', space=vmem, size = 0x10000, scoped, tag = 'output window, operand 3, single buffered']
    #allocation19 [shape = 's32[1]{0}', space=sflag, size = 0x4, scoped, tag = 'scoped memory for nonlocal_net_cost.11']
    %16 = vsyncpa [#allocation3], 0
    %17 = vsyncpa [#allocation6], 0
    %18 = vsyncpa [#allocation9], 0
    %19 = vsyncpa [#allocation12], 0
    %20 = vsyncpa [#allocation4], 0
    %21 = vsyncpa [#allocation16], 0
    %22 = vsyncpa [#allocation19], 0
    // Predicated region
    $region2: #{nonlocal_net_cost.11} parent=1 // pred_check
      _
    $region3: #{nonlocal_net_cost.11} parent=1 // pred_check_branch
      %24 = sbr.rel (0) target = $region5
    $region4: #{nonlocal_net_cost.11} parent=1 // pred_region
      %s26 = ssub.s32 4096, 4096
      %27 = vsyncadd [#allocation3], %s26
      %s28 = sshll.u32 [#allocation2], 4
      %s29 = int_to_ptr.vmem [resolvable:$true] %s28
      %34 = dma.hbm_to_vmem [thread:$0]  %s0, 4096, %s29, [#allocation3], 128, 128, 8
    $region5: #{nonlocal_net_cost.11} parent=1 // pred_fallthru
      _
    // Predicated region
    $region6: #{nonlocal_net_cost.11} parent=1 // pred_check
      _
    $region7: #{nonlocal_net_cost.11} parent=1 // pred_check_branch
      %36 = sbr.rel (0) target = $region9
    $region8: #{nonlocal_net_cost.11} parent=1 // pred_region
      %s38 = ssub.s32 1024, 1024
      %39 = vsyncadd [#allocation6], %s38
      %s40 = sshll.u32 [#allocation5], 4
      %s41 = int_to_ptr.vmem [resolvable:$true] %s40
      %46 = dma.hbm_to_vmem [thread:$0]  %s1, 1024, %s41, [#allocation6], 64, 64, 4
    $region9: #{nonlocal_net_cost.11} parent=1 // pred_fallthru
      _
    // Predicated region
    $region10: #{nonlocal_net_cost.11} parent=1 // pred_check
      _
    $region11: #{nonlocal_net_cost.11} parent=1 // pred_check_branch
      %48 = sbr.rel (0) target = $region13
    $region12: #{nonlocal_net_cost.11} parent=1 // pred_region
      %s50 = ssub.s32 16, 16
      %51 = vsyncadd [#allocation6], %s50
      %s53 = sshll.u32 [#allocation7], 4
      %s54 = int_to_ptr.vmem [resolvable:$true] %s53
      %56 = dma.hbm_to_vmem [thread:$0]  %s2, 16, %s54, [#allocation6]
    $region13: #{nonlocal_net_cost.11} parent=1 // pred_fallthru
      _
    // Predicated region
    $region14: #{nonlocal_net_cost.11} parent=1 // pred_check
      _
    $region15: #{nonlocal_net_cost.11} parent=1 // pred_check_branch
      %58 = sbr.rel (0) target = $region17
    $region16: #{nonlocal_net_cost.11} parent=1 // pred_region
      %s60 = ssub.s32 16, 16
      %61 = vsyncadd [#allocation9], %s60
      %s63 = sshll.u32 [#allocation8], 4
      %s64 = int_to_ptr.vmem [resolvable:$true] %s63
      %66 = dma.hbm_to_vmem [thread:$0]  %s3, 16, %s64, [#allocation9]
    $region17: #{nonlocal_net_cost.11} parent=1 // pred_fallthru
      _
    // Predicated region
    $region18: #{nonlocal_net_cost.11} parent=1 // pred_check
      _
    $region19: #{nonlocal_net_cost.11} parent=1 // pred_check_branch
      %68 = sbr.rel (0) target = $region21
    $region20: #{nonlocal_net_cost.11} parent=1 // pred_region
      %s70 = ssub.s32 16, 16
      %71 = vsyncadd [#allocation9], %s70
      %s73 = sshll.u32 [#allocation10], 4
      %s74 = int_to_ptr.vmem [resolvable:$true] %s73
      %76 = dma.hbm_to_vmem [thread:$0]  %s4, 16, %s74, [#allocation9]
    $region21: #{nonlocal_net_cost.11} parent=1 // pred_fallthru
      _
    // Predicated region
    $region22: #{nonlocal_net_cost.11} parent=1 // pred_check
      _
    $region23: #{nonlocal_net_cost.11} parent=1 // pred_check_branch
      %78 = sbr.rel (0) target = $region25
    $region24: #{nonlocal_net_cost.11} parent=1 // pred_region
      %s80 = ssub.s32 3072, 3072
      %81 = vsyncadd [#allocation12], %s80
      %s82 = sshll.u32 [#allocation11], 4
      %s83 = int_to_ptr.vmem [resolvable:$true] %s82
      %88 = dma.hbm_to_vmem [thread:$0]  %s5, 3072, %s83, [#allocation12], 192, 192, 12
    $region25: #{nonlocal_net_cost.11} parent=1 // pred_fallthru
      _
    // Predicated region
    $region26: #{nonlocal_net_cost.11} parent=1 // pred_check
      _
    $region27: #{nonlocal_net_cost.11} parent=1 // pred_check_branch
      %90 = sbr.rel (0) target = $region29
    $region28: #{nonlocal_net_cost.11} parent=1 // pred_region
      %s92 = ssub.s32 48, 48
      %93 = vsyncadd [#allocation12], %s92
      %s95 = sshll.u32 [#allocation13], 4
      %s96 = int_to_ptr.vmem [resolvable:$true] %s95
      %98 = dma.hbm_to_vmem [thread:$0]  %s6, 48, %s96, [#allocation12]
    $region29: #{nonlocal_net_cost.11} parent=1 // pred_fallthru
      _
    // Predicated region
    $region30: #{nonlocal_net_cost.11} parent=1 // pred_check
      _
    $region31: #{nonlocal_net_cost.11} parent=1 // pred_check_branch
      %100 = sbr.rel (0) target = $region33
    $region32: #{nonlocal_net_cost.11} parent=1 // pred_region
      %101 = dma.done [#allocation3], 4096
    $region33: #{nonlocal_net_cost.11} parent=1 // pred_fallthru
      _
    // Predicated region
    $region34: #{nonlocal_net_cost.11} parent=1 // pred_check
      _
    $region35: #{nonlocal_net_cost.11} parent=1 // pred_check_branch
      %103 = sbr.rel (0) target = $region37
    $region36: #{nonlocal_net_cost.11} parent=1 // pred_region
      %104 = dma.done [#allocation6], 1024
    $region37: #{nonlocal_net_cost.11} parent=1 // pred_fallthru
      _
    // Predicated region
    $region38: #{nonlocal_net_cost.11} parent=1 // pred_check
      _
    $region39: #{nonlocal_net_cost.11} parent=1 // pred_check_branch
      %106 = sbr.rel (0) target = $region41
    $region40: #{nonlocal_net_cost.11} parent=1 // pred_region
      %107 = dma.done [#allocation6], 16
    $region41: #{nonlocal_net_cost.11} parent=1 // pred_fallthru
      _
    // Predicated region
    $region42: #{nonlocal_net_cost.11} parent=1 // pred_check
      _
    $region43: #{nonlocal_net_cost.11} parent=1 // pred_check_branch
      %109 = sbr.rel (0) target = $region45
    $region44: #{nonlocal_net_cost.11} parent=1 // pred_region
      %110 = dma.done [#allocation9], 16
    $region45: #{nonlocal_net_cost.11} parent=1 // pred_fallthru
      _
    // Predicated region
    $region46: #{nonlocal_net_cost.11} parent=1 // pred_check
      _
    $region47: #{nonlocal_net_cost.11} parent=1 // pred_check_branch
      %112 = sbr.rel (0) target = $region49
    $region48: #{nonlocal_net_cost.11} parent=1 // pred_region
      %113 = dma.done [#allocation9], 16
    $region49: #{nonlocal_net_cost.11} parent=1 // pred_fallthru
      _
    // Predicated region
    $region50: #{nonlocal_net_cost.11} parent=1 // pred_check
      _
    $region51: #{nonlocal_net_cost.11} parent=1 // pred_check_branch
      %115 = sbr.rel (0) target = $region53
    $region52: #{nonlocal_net_cost.11} parent=1 // pred_region
      %116 = dma.done [#allocation12], 3072
    $region53: #{nonlocal_net_cost.11} parent=1 // pred_fallthru
      _
    // Predicated region
    $region54: #{nonlocal_net_cost.11} parent=1 // pred_check
      _
    $region55: #{nonlocal_net_cost.11} parent=1 // pred_check_branch
      %118 = sbr.rel (0) target = $region57
    $region56: #{nonlocal_net_cost.11} parent=1 // pred_region
      %119 = dma.done [#allocation12], 48
    $region57: #{nonlocal_net_cost.11} parent=1 // pred_fallthru
      _
    %v121 = vld [vmem:[#allocation2] sm:$0xff]
    %v122 = vld [vmem:[#allocation2 + $0x8] sm:$0xff]
    %v123 = vld [vmem:[#allocation2 + $0x10] sm:$0xff]
    %v124 = vld [vmem:[#allocation2 + $0x18] sm:$0xff]
    %v125 = vld [vmem:[#allocation2 + $0x20] sm:$0xff]
    %v126 = vld [vmem:[#allocation2 + $0x28] sm:$0xff]
    %v127 = vld [vmem:[#allocation2 + $0x30] sm:$0xff]
    %v128 = vld [vmem:[#allocation2 + $0x38] sm:$0xff]
    %v129 = vld [vmem:[#allocation2 + $0x40] sm:$0xff]
    %v130 = vld [vmem:[#allocation2 + $0x48] sm:$0xff]
    %v131 = vld [vmem:[#allocation2 + $0x50] sm:$0xff]
    %v132 = vld [vmem:[#allocation2 + $0x58] sm:$0xff]
    %v133 = vld [vmem:[#allocation2 + $0x60] sm:$0xff]
    %v134 = vld [vmem:[#allocation2 + $0x68] sm:$0xff]
    %v135 = vld [vmem:[#allocation2 + $0x70] sm:$0xff]
    %v136 = vld [vmem:[#allocation2 + $0x78] sm:$0xff]
    %v137 = vld [vmem:[#allocation2 + $0x80] sm:$0xff]
    %v138 = vld [vmem:[#allocation2 + $0x88] sm:$0xff]
    %v139 = vld [vmem:[#allocation2 + $0x90] sm:$0xff]
    %v140 = vld [vmem:[#allocation2 + $0x98] sm:$0xff]
    %v141 = vld [vmem:[#allocation2 + $0xa0] sm:$0xff]
    %v142 = vld [vmem:[#allocation2 + $0xa8] sm:$0xff]
    %v143 = vld [vmem:[#allocation2 + $0xb0] sm:$0xff]
    %v144 = vld [vmem:[#allocation2 + $0xb8] sm:$0xff]
    %v145 = vld [vmem:[#allocation2 + $0xc0] sm:$0xff]
    %v146 = vld [vmem:[#allocation2 + $0xc8] sm:$0xff]
    %v147 = vld [vmem:[#allocation2 + $0xd0] sm:$0xff]
    %v148 = vld [vmem:[#allocation2 + $0xd8] sm:$0xff]
    %v149 = vld [vmem:[#allocation2 + $0xe0] sm:$0xff]
    %v150 = vld [vmem:[#allocation2 + $0xe8] sm:$0xff]
    %v151 = vld [vmem:[#allocation2 + $0xf0] sm:$0xff]
    %v152 = vld [vmem:[#allocation2 + $0xf8] sm:$0xff]
    %v153 = vpack.c.bf16 %v122, %v121
    %v154 = vpack.c.bf16 %v124, %v123
    %v155 = vpack.c.bf16 %v126, %v125
    %v156 = vpack.c.bf16 %v128, %v127
    %v157 = vpack.c.bf16 %v130, %v129
    %v158 = vpack.c.bf16 %v132, %v131
    %v159 = vpack.c.bf16 %v134, %v133
    %v160 = vpack.c.bf16 %v136, %v135
    %v161 = vpack.c.bf16 %v138, %v137
    %v162 = vpack.c.bf16 %v140, %v139
    %v163 = vpack.c.bf16 %v142, %v141
    %v164 = vpack.c.bf16 %v144, %v143
    %v165 = vpack.c.bf16 %v146, %v145
    %v166 = vpack.c.bf16 %v148, %v147
    %v167 = vpack.c.bf16 %v150, %v149
    %v168 = vpack.c.bf16 %v152, %v151
    %v169 = vld [vmem:[#allocation5] sm:$0xf]
    %v170 = vld [vmem:[#allocation5 + $0x4] sm:$0xf]
    %v171 = vld [vmem:[#allocation5 + $0x8] sm:$0xf]
    %v172 = vld [vmem:[#allocation5 + $0xc] sm:$0xf]
    %v173 = vld [vmem:[#allocation5 + $0x10] sm:$0xf]
    %v174 = vld [vmem:[#allocation5 + $0x14] sm:$0xf]
    %v175 = vld [vmem:[#allocation5 + $0x18] sm:$0xf]
    %v176 = vld [vmem:[#allocation5 + $0x1c] sm:$0xf]
    %v177 = vld [vmem:[#allocation5 + $0x20] sm:$0xf]
    %v178 = vld [vmem:[#allocation5 + $0x24] sm:$0xf]
    %v179 = vld [vmem:[#allocation5 + $0x28] sm:$0xf]
    %v180 = vld [vmem:[#allocation5 + $0x2c] sm:$0xf]
    %v181 = vld [vmem:[#allocation5 + $0x30] sm:$0xf]
    %v182 = vld [vmem:[#allocation5 + $0x34] sm:$0xf]
    %v183 = vld [vmem:[#allocation5 + $0x38] sm:$0xf]
    %v184 = vld [vmem:[#allocation5 + $0x3c] sm:$0xf]
    %v185 = vld [vmem:[#allocation7] sm:$0x1]
    %v187 = vlaneseq
    %v188 = vshrl.u32 %v187, 7
    %v189 = vsub.s32 0, %v188
    %v190 = vrot.slane %v185, %v189
    %v208 = vunpack.c.l.b16 %v169
    %v209 = vunpack.c.l.b16 %v170
    %v210 = vunpack.c.l.b16 %v171
    %v211 = vunpack.c.l.b16 %v172
    %v212 = vunpack.c.l.b16 %v173
    %v213 = vunpack.c.l.b16 %v174
    %v214 = vunpack.c.l.b16 %v175
    %v215 = vunpack.c.l.b16 %v176
    %v216 = vunpack.c.l.b16 %v177
    %v217 = vunpack.c.l.b16 %v178
    %v218 = vunpack.c.l.b16 %v179
    %v219 = vunpack.c.l.b16 %v180
    %v220 = vunpack.c.l.b16 %v181
    %v221 = vunpack.c.l.b16 %v182
    %v222 = vunpack.c.l.b16 %v183
    %v223 = vunpack.c.l.b16 %v184
    %v224 = vpack.c.b16 %v209, %v208
    %v225 = vpack.c.b16 %v211, %v210
    %v226 = vpack.c.b16 %v213, %v212
    %v227 = vpack.c.b16 %v215, %v214
    %v228 = vpack.c.b16 %v217, %v216
    %v229 = vpack.c.b16 %v219, %v218
    %v230 = vpack.c.b16 %v221, %v220
    %v231 = vpack.c.b16 %v223, %v222
    %240 = vmatprep.subr.bf16.mxu0 0
    %241 = vmatpush1.bf16.msra.mxu0 %v224
    %242 = vmatprep.subr.bf16.mxu0 0
    %243 = vmatpush1.bf16.msra.mxu0 %v225
    %244 = vmatprep.subr.bf16.mxu0 0
    %245 = vmatpush1.bf16.msra.mxu0 %v226
    %246 = vmatprep.subr.bf16.mxu0 0
    %247 = vmatpush1.bf16.msra.mxu0 %v227
    %248 = vmatprep.subr.bf16.mxu0 0
    %249 = vmatpush1.bf16.msra.mxu0 %v228
    %250 = vmatprep.subr.bf16.mxu0 0
    %251 = vmatpush1.bf16.msra.mxu0 %v229
    %252 = vmatprep.subr.bf16.mxu0 0
    %253 = vmatpush1.bf16.msra.mxu0 %v230
    %254 = vmatprep.subr.bf16.mxu0 0
    %255 = vmatpush1.bf16.msra.mxu0 %v231
    %256 = vmatprep.subr.bf16.mxu0 0
    %257 = vmatpush1.bf16.msra.mxu0 0
    %258 = vmatprep.subr.bf16.mxu0 0
    %259 = vmatpush1.bf16.msra.mxu0 0
    %260 = vmatprep.subr.bf16.mxu0 0
    %261 = vmatpush1.bf16.msra.mxu0 0
    %262 = vmatprep.subr.bf16.mxu0 0
    %263 = vmatpush1.bf16.msra.mxu0 0
    %264 = vmatprep.subr.bf16.mxu0 0
    %265 = vmatpush1.bf16.msra.mxu0 0
    %266 = vmatprep.subr.bf16.mxu0 0
    %267 = vmatpush1.bf16.msra.mxu0 0
    %268 = vmatprep.subr.bf16.mxu0 0
    %269 = vmatpush1.bf16.msra.mxu0 0
    %270 = vmatprep.subr.bf16.mxu0 0
    %271 = vmatpush1.bf16.msra.mxu0 0
    %272 = vmatprep.mubr.bf16.mxu0 0
    %273 = vmatmul.mubr.bf16.gmra.mrb[0].mxu0 %v153
    %v274 = vpop.f32.mrb[0].mxu0
    %v275 = vadd.f32 %v190, %v274
    %v276 = vpop.f32.mrb[0].mxu0
    %v277 = vpop.f32.mrb[0].mxu0
    %v278 = vadd.f32 %v190, %v277
    %v279 = vpop.f32.mrb[0].mxu0
    %280 = vmatprep.mubr.bf16.mxu0 0
    %281 = vmatmul.mubr.bf16.gmra.mrb[0].mxu0 %v154
    %v282 = vpop.f32.mrb[0].mxu0
    %v283 = vadd.f32 %v190, %v282
    %v284 = vpop.f32.mrb[0].mxu0
    %v285 = vpop.f32.mrb[0].mxu0
    %v286 = vadd.f32 %v190, %v285
    %v287 = vpop.f32.mrb[0].mxu0
    %288 = vmatprep.mubr.bf16.mxu0 0
    %289 = vmatmul.mubr.bf16.gmra.mrb[0].mxu0 %v155
    %v290 = vpop.f32.mrb[0].mxu0
    %v291 = vadd.f32 %v190, %v290
    %v292 = vpop.f32.mrb[0].mxu0
    %v293 = vpop.f32.mrb[0].mxu0
    %v294 = vadd.f32 %v190, %v293
    %v295 = vpop.f32.mrb[0].mxu0
    %296 = vmatprep.mubr.bf16.mxu0 0
    %297 = vmatmul.mubr.bf16.gmra.mrb[0].mxu0 %v156
    %v298 = vpop.f32.mrb[0].mxu0
    %v299 = vadd.f32 %v190, %v298
    %v300 = vpop.f32.mrb[0].mxu0
    %v301 = vpop.f32.mrb[0].mxu0
    %v302 = vadd.f32 %v190, %v301
    %v303 = vpop.f32.mrb[0].mxu0
    %304 = vmatprep.mubr.bf16.mxu0 0
    %305 = vmatmul.mubr.bf16.gmra.mrb[0].mxu0 %v157
    %v306 = vpop.f32.mrb[0].mxu0
    %v307 = vadd.f32 %v190, %v306
    %v308 = vpop.f32.mrb[0].mxu0
    %v309 = vpop.f32.mrb[0].mxu0
    %v310 = vadd.f32 %v190, %v309
    %v311 = vpop.f32.mrb[0].mxu0
    %312 = vmatprep.mubr.bf16.mxu0 0
    %313 = vmatmul.mubr.bf16.gmra.mrb[0].mxu0 %v158
    %v314 = vpop.f32.mrb[0].mxu0
    %v315 = vadd.f32 %v190, %v314
    %v316 = vpop.f32.mrb[0].mxu0
    %v317 = vpop.f32.mrb[0].mxu0
    %v318 = vadd.f32 %v190, %v317
    %v319 = vpop.f32.mrb[0].mxu0
    %320 = vmatprep.mubr.bf16.mxu0 0
    %321 = vmatmul.mubr.bf16.gmra.mrb[0].mxu0 %v159
    %v322 = vpop.f32.mrb[0].mxu0
    %v323 = vadd.f32 %v190, %v322
    %v324 = vpop.f32.mrb[0].mxu0
    %v325 = vpop.f32.mrb[0].mxu0
    %v326 = vadd.f32 %v190, %v325
    %v327 = vpop.f32.mrb[0].mxu0
    %328 = vmatprep.mubr.bf16.mxu0 0
    %329 = vmatmul.mubr.bf16.gmra.mrb[0].mxu0 %v160
    %v330 = vpop.f32.mrb[0].mxu0
    %v331 = vadd.f32 %v190, %v330
    %v332 = vpop.f32.mrb[0].mxu0
    %v333 = vpop.f32.mrb[0].mxu0
    %v334 = vadd.f32 %v190, %v333
    %v335 = vpop.f32.mrb[0].mxu0
    %336 = vmatprep.mubr.bf16.mxu0 0
    %337 = vmatmul.mubr.bf16.gmra.mrb[0].mxu0 %v161
    %v338 = vpop.f32.mrb[0].mxu0
    %v339 = vadd.f32 %v190, %v338
    %v340 = vpop.f32.mrb[0].mxu0
    %v341 = vpop.f32.mrb[0].mxu0
    %v342 = vadd.f32 %v190, %v341
    %v343 = vpop.f32.mrb[0].mxu0
    %344 = vmatprep.mubr.bf16.mxu0 0
    %345 = vmatmul.mubr.bf16.gmra.mrb[0].mxu0 %v162
    %v346 = vpop.f32.mrb[0].mxu0
    %v347 = vadd.f32 %v190, %v346
    %v348 = vpop.f32.mrb[0].mxu0
    %v349 = vpop.f32.mrb[0].mxu0
    %v350 = vadd.f32 %v190, %v349
    %v351 = vpop.f32.mrb[0].mxu0
    %352 = vmatprep.mubr.bf16.mxu0 0
    %353 = vmatmul.mubr.bf16.gmra.mrb[0].mxu0 %v163
    %v354 = vpop.f32.mrb[0].mxu0
    %v355 = vadd.f32 %v190, %v354
    %v356 = vpop.f32.mrb[0].mxu0
    %v357 = vpop.f32.mrb[0].mxu0
    %v358 = vadd.f32 %v190, %v357
    %v359 = vpop.f32.mrb[0].mxu0
    %360 = vmatprep.mubr.bf16.mxu0 0
    %361 = vmatmul.mubr.bf16.gmra.mrb[0].mxu0 %v164
    %v362 = vpop.f32.mrb[0].mxu0
    %v363 = vadd.f32 %v190, %v362
    %v364 = vpop.f32.mrb[0].mxu0
    %v365 = vpop.f32.mrb[0].mxu0
    %v366 = vadd.f32 %v190, %v365
    %v367 = vpop.f32.mrb[0].mxu0
    %368 = vmatprep.mubr.bf16.mxu0 0
    %369 = vmatmul.mubr.bf16.gmra.mrb[0].mxu0 %v165
    %v370 = vpop.f32.mrb[0].mxu0
    %v371 = vadd.f32 %v190, %v370
    %v372 = vpop.f32.mrb[0].mxu0
    %v373 = vpop.f32.mrb[0].mxu0
    %v374 = vadd.f32 %v190, %v373
    %v375 = vpop.f32.mrb[0].mxu0
    %376 = vmatprep.mubr.bf16.mxu0 0
    %377 = vmatmul.mubr.bf16.gmra.mrb[0].mxu0 %v166
    %v378 = vpop.f32.mrb[0].mxu0
    %v379 = vadd.f32 %v190, %v378
    %v380 = vpop.f32.mrb[0].mxu0
    %v381 = vpop.f32.mrb[0].mxu0
    %v382 = vadd.f32 %v190, %v381
    %v383 = vpop.f32.mrb[0].mxu0
    %384 = vmatprep.mubr.bf16.mxu0 0
    %385 = vmatmul.mubr.bf16.gmra.mrb[0].mxu0 %v167
    %v386 = vpop.f32.mrb[0].mxu0
    %v387 = vadd.f32 %v190, %v386
    %v388 = vpop.f32.mrb[0].mxu0
    %v389 = vpop.f32.mrb[0].mxu0
    %v390 = vadd.f32 %v190, %v389
    %v391 = vpop.f32.mrb[0].mxu0
    %392 = vmatprep.mubr.bf16.mxu0 0
    %393 = vmatmul.mubr.bf16.gmra.mrb[0].mxu0 %v168
    %v394 = vpop.f32.mrb[0].mxu0
    %v395 = vadd.f32 %v190, %v394
    %v396 = vpop.f32.mrb[0].mxu0
    %v397 = vpop.f32.mrb[0].mxu0
    %v398 = vadd.f32 %v190, %v397
    %v399 = vpop.f32.mrb[0].mxu0
    %400 = vdwg.mxu0
    %v401 = vld [vmem:[#allocation8] sm:$0x1]
    %v402 = vld [vmem:[#allocation10] sm:$0x1]
    %403 = vmatprep.subr.mxu0 0.0
    %404 = vmatpush1.msra.mxu0 %v275
    %405 = vmatprep.subr.mxu0 0.0
    %406 = vmatpush1.msra.mxu0 %v278
    %407 = vmatprep.subr.mxu0 0.0
    %408 = vmatpush1.msra.mxu0 %v283
    %409 = vmatprep.subr.mxu0 0.0
    %410 = vmatpush1.msra.mxu0 %v286
    %411 = vmatprep.subr.mxu0 0.0
    %412 = vmatpush1.msra.mxu0 %v291
    %413 = vmatprep.subr.mxu0 0.0
    %414 = vmatpush1.msra.mxu0 %v294
    %415 = vmatprep.subr.mxu0 0.0
    %416 = vmatpush1.msra.mxu0 %v299
    %417 = vmatprep.subr.mxu0 0.0
    %418 = vmatpush1.msra.mxu0 %v302
    %419 = vmatprep.subr.mxu0 0.0
    %420 = vmatpush1.msra.mxu0 %v307
    %421 = vmatprep.subr.mxu0 0.0
    %422 = vmatpush1.msra.mxu0 %v310
    %423 = vmatprep.subr.mxu0 0.0
    %424 = vmatpush1.msra.mxu0 %v315
    %425 = vmatprep.subr.mxu0 0.0
    %426 = vmatpush1.msra.mxu0 %v318
    %427 = vmatprep.subr.mxu0 0.0
    %428 = vmatpush1.msra.mxu0 %v323
    %429 = vmatprep.subr.mxu0 0.0
    %430 = vmatpush1.msra.mxu0 %v326
    %431 = vmatprep.subr.mxu0 0.0
    %432 = vmatpush1.msra.mxu0 %v331
    %433 = vmatprep.subr.mxu0 0.0
    %434 = vmatpush1.msra.mxu0 %v334
    %435 = vmatprep.subr.mxu0 0.0
    %436 = vmatpush1.msra.mxu0 %v339
    %437 = vmatprep.subr.mxu0 0.0
    %438 = vmatpush1.msra.mxu0 %v342
    %439 = vmatprep.subr.mxu0 0.0
    %440 = vmatpush1.msra.mxu0 %v347
    %441 = vmatprep.subr.mxu0 0.0
    %442 = vmatpush1.msra.mxu0 %v350
    %443 = vmatprep.subr.mxu0 0.0
    %444 = vmatpush1.msra.mxu0 %v355
    %445 = vmatprep.subr.mxu0 0.0
    %446 = vmatpush1.msra.mxu0 %v358
    %447 = vmatprep.subr.mxu0 0.0
    %448 = vmatpush1.msra.mxu0 %v363
    %449 = vmatprep.subr.mxu0 0.0
    %450 = vmatpush1.msra.mxu0 %v366
    %451 = vmatprep.subr.mxu0 0.0
    %452 = vmatpush1.msra.mxu0 %v371
    %453 = vmatprep.subr.mxu0 0.0
    %454 = vmatpush1.msra.mxu0 %v374
    %455 = vmatprep.subr.mxu0 0.0
    %456 = vmatpush1.msra.mxu0 %v379
    %457 = vmatprep.subr.mxu0 0.0
    %458 = vmatpush1.msra.mxu0 %v382
    %459 = vmatprep.subr.mxu0 0.0
    %460 = vmatpush1.msra.mxu0 %v387
    %461 = vmatprep.subr.mxu0 0.0
    %462 = vmatpush1.msra.mxu0 %v390
    %463 = vmatprep.subr.mxu0 0.0
    %464 = vmatpush1.msra.mxu0 %v395
    %465 = vmatprep.subr.mxu0 0.0
    %466 = vmatpush1.msra.mxu0 %v398
    %467 = vmatprep.mubr.f32.mxu0 1.0
    %468 = vmatmul.mubr.f32.gmra.mrb[0].mxu0 1.0
    %v469 = vpop.f32.mrb[0].mxu0
    %v470 = vadd.f32 0.0, %v469
    %v471 = vpop.f32.mrb[0].mxu0
    %472 = vdwg.mxu0
    %v473 = vmul.f32 %v470, 0.00390625
    %v474 = vlaneseq
    %v475 = vshrl.u32 %v474, 7
    %v476 = vsub.s32 0, %v475
    %v477 = vrot.slane %v473, %v476
    %v478 = vsub.f32 %v275, %v477
    %v479 = vsub.f32 %v278, %v477
    %v480 = vsub.f32 %v283, %v477
    %v481 = vsub.f32 %v286, %v477
    %v482 = vsub.f32 %v291, %v477
    %v483 = vsub.f32 %v294, %v477
    %v484 = vsub.f32 %v299, %v477
    %v485 = vsub.f32 %v302, %v477
    %v486 = vsub.f32 %v307, %v477
    %v487 = vsub.f32 %v310, %v477
    %v488 = vsub.f32 %v315, %v477
    %v489 = vsub.f32 %v318, %v477
    %v490 = vsub.f32 %v323, %v477
    %v491 = vsub.f32 %v326, %v477
    %v492 = vsub.f32 %v331, %v477
    %v493 = vsub.f32 %v334, %v477
    %v494 = vsub.f32 %v339, %v477
    %v495 = vsub.f32 %v342, %v477
    %v496 = vsub.f32 %v347, %v477
    %v497 = vsub.f32 %v350, %v477
    %v498 = vsub.f32 %v355, %v477
    %v499 = vsub.f32 %v358, %v477
    %v500 = vsub.f32 %v363, %v477
    %v501 = vsub.f32 %v366, %v477
    %v502 = vsub.f32 %v371, %v477
    %v503 = vsub.f32 %v374, %v477
    %v504 = vsub.f32 %v379, %v477
    %v505 = vsub.f32 %v382, %v477
    %v506 = vsub.f32 %v387, %v477
    %v507 = vsub.f32 %v390, %v477
    %v508 = vsub.f32 %v395, %v477
    %v509 = vsub.f32 %v398, %v477
    %v510 = vmul.f32 %v478, %v478
    %v511 = vmul.f32 %v479, %v479
    %v512 = vmul.f32 %v480, %v480
    %v513 = vmul.f32 %v481, %v481
    %v514 = vmul.f32 %v482, %v482
    %v515 = vmul.f32 %v483, %v483
    %v516 = vmul.f32 %v484, %v484
    %v517 = vmul.f32 %v485, %v485
    %v518 = vmul.f32 %v486, %v486
    %v519 = vmul.f32 %v487, %v487
    %v520 = vmul.f32 %v488, %v488
    %v521 = vmul.f32 %v489, %v489
    %v522 = vmul.f32 %v490, %v490
    %v523 = vmul.f32 %v491, %v491
    %v524 = vmul.f32 %v492, %v492
    %v525 = vmul.f32 %v493, %v493
    %v526 = vmul.f32 %v494, %v494
    %v527 = vmul.f32 %v495, %v495
    %v528 = vmul.f32 %v496, %v496
    %v529 = vmul.f32 %v497, %v497
    %v530 = vmul.f32 %v498, %v498
    %v531 = vmul.f32 %v499, %v499
    %v532 = vmul.f32 %v500, %v500
    %v533 = vmul.f32 %v501, %v501
    %v534 = vmul.f32 %v502, %v502
    %v535 = vmul.f32 %v503, %v503
    %v536 = vmul.f32 %v504, %v504
    %v537 = vmul.f32 %v505, %v505
    %v538 = vmul.f32 %v506, %v506
    %v539 = vmul.f32 %v507, %v507
    %v540 = vmul.f32 %v508, %v508
    %v541 = vmul.f32 %v509, %v509
    %542 = vmatprep.subr.mxu0 0.0
    %543 = vmatpush1.msra.mxu0 %v510
    %544 = vmatprep.subr.mxu0 0.0
    %545 = vmatpush1.msra.mxu0 %v511
    %546 = vmatprep.subr.mxu0 0.0
    %547 = vmatpush1.msra.mxu0 %v512
    %548 = vmatprep.subr.mxu0 0.0
    %549 = vmatpush1.msra.mxu0 %v513
    %550 = vmatprep.subr.mxu0 0.0
    %551 = vmatpush1.msra.mxu0 %v514
    %552 = vmatprep.subr.mxu0 0.0
    %553 = vmatpush1.msra.mxu0 %v515
    %554 = vmatprep.subr.mxu0 0.0
    %555 = vmatpush1.msra.mxu0 %v516
    %556 = vmatprep.subr.mxu0 0.0
    %557 = vmatpush1.msra.mxu0 %v517
    %558 = vmatprep.subr.mxu0 0.0
    %559 = vmatpush1.msra.mxu0 %v518
    %560 = vmatprep.subr.mxu0 0.0
    %561 = vmatpush1.msra.mxu0 %v519
    %562 = vmatprep.subr.mxu0 0.0
    %563 = vmatpush1.msra.mxu0 %v520
    %564 = vmatprep.subr.mxu0 0.0
    %565 = vmatpush1.msra.mxu0 %v521
    %566 = vmatprep.subr.mxu0 0.0
    %567 = vmatpush1.msra.mxu0 %v522
    %568 = vmatprep.subr.mxu0 0.0
    %569 = vmatpush1.msra.mxu0 %v523
    %570 = vmatprep.subr.mxu0 0.0
    %571 = vmatpush1.msra.mxu0 %v524
    %572 = vmatprep.subr.mxu0 0.0
    %573 = vmatpush1.msra.mxu0 %v525
    %574 = vmatprep.subr.mxu0 0.0
    %575 = vmatpush1.msra.mxu0 %v526
    %576 = vmatprep.subr.mxu0 0.0
    %577 = vmatpush1.msra.mxu0 %v527
    %578 = vmatprep.subr.mxu0 0.0
    %579 = vmatpush1.msra.mxu0 %v528
    %580 = vmatprep.subr.mxu0 0.0
    %581 = vmatpush1.msra.mxu0 %v529
    %582 = vmatprep.subr.mxu0 0.0
    %583 = vmatpush1.msra.mxu0 %v530
    %584 = vmatprep.subr.mxu0 0.0
    %585 = vmatpush1.msra.mxu0 %v531
    %586 = vmatprep.subr.mxu0 0.0
    %587 = vmatpush1.msra.mxu0 %v532
    %588 = vmatprep.subr.mxu0 0.0
    %589 = vmatpush1.msra.mxu0 %v533
    %590 = vmatprep.subr.mxu0 0.0
    %591 = vmatpush1.msra.mxu0 %v534
    %592 = vmatprep.subr.mxu0 0.0
    %593 = vmatpush1.msra.mxu0 %v535
    %594 = vmatprep.subr.mxu0 0.0
    %595 = vmatpush1.msra.mxu0 %v536
    %596 = vmatprep.subr.mxu0 0.0
    %597 = vmatpush1.msra.mxu0 %v537
    %598 = vmatprep.subr.mxu0 0.0
    %599 = vmatpush1.msra.mxu0 %v538
    %600 = vmatprep.subr.mxu0 0.0
    %601 = vmatpush1.msra.mxu0 %v539
    %602 = vmatprep.subr.mxu0 0.0
    %603 = vmatpush1.msra.mxu0 %v540
    %604 = vmatprep.subr.mxu0 0.0
    %605 = vmatpush1.msra.mxu0 %v541
    %606 = vmatprep.mubr.f32.mxu0 1.0
    %607 = vmatmul.mubr.f32.gmra.mrb[0].mxu0 1.0
    %v608 = vpop.f32.mrb[0].mxu0
    %v609 = vadd.f32 0.0, %v608
    %v610 = vpop.f32.mrb[0].mxu0
    %611 = vdwg.mxu0
    %v612 = vmul.f32 %v609, 0.00390625
    %v613 = vadd.f32 %v612, 1e-05
    %v614 = vrsqrt.pop %v613
    %v615 = vmul.f32 %v401, %v614
    %v617 = vlaneseq
    %v618 = vshrl.u32 %v617, 7
    %v619 = vsub.s32 0, %v618
    %v620 = vrot.slane %v615, %v619
    %v622 = vmul.f32 %v478, %v620
    %v623 = vmul.f32 %v479, %v620
    %v624 = vmul.f32 %v480, %v620
    %v625 = vmul.f32 %v481, %v620
    %v626 = vmul.f32 %v482, %v620
    %v627 = vmul.f32 %v483, %v620
    %v628 = vmul.f32 %v484, %v620
    %v629 = vmul.f32 %v485, %v620
    %v630 = vmul.f32 %v486, %v620
    %v631 = vmul.f32 %v487, %v620
    %v632 = vmul.f32 %v488, %v620
    %v633 = vmul.f32 %v489, %v620
    %v634 = vmul.f32 %v490, %v620
    %v635 = vmul.f32 %v491, %v620
    %v636 = vmul.f32 %v492, %v620
    %v637 = vmul.f32 %v493, %v620
    %v638 = vmul.f32 %v494, %v620
    %v639 = vmul.f32 %v495, %v620
    %v640 = vmul.f32 %v496, %v620
    %v641 = vmul.f32 %v497, %v620
    %v642 = vmul.f32 %v498, %v620
    %v643 = vmul.f32 %v499, %v620
    %v644 = vmul.f32 %v500, %v620
    %v645 = vmul.f32 %v501, %v620
    %v646 = vmul.f32 %v502, %v620
    %v647 = vmul.f32 %v503, %v620
    %v648 = vmul.f32 %v504, %v620
    %v649 = vmul.f32 %v505, %v620
    %v650 = vmul.f32 %v506, %v620
    %v651 = vmul.f32 %v507, %v620
    %v652 = vmul.f32 %v508, %v620
    %v653 = vmul.f32 %v509, %v620
    %v655 = vlaneseq
    %v656 = vshrl.u32 %v655, 7
    %v657 = vsub.s32 0, %v656
    %v658 = vrot.slane %v402, %v657
    %v660 = vadd.f32 %v622, %v658
    %v661 = vadd.f32 %v623, %v658
    %v662 = vadd.f32 %v624, %v658
    %v663 = vadd.f32 %v625, %v658
    %v664 = vadd.f32 %v626, %v658
    %v665 = vadd.f32 %v627, %v658
    %v666 = vadd.f32 %v628, %v658
    %v667 = vadd.f32 %v629, %v658
    %v668 = vadd.f32 %v630, %v658
    %v669 = vadd.f32 %v631, %v658
    %v670 = vadd.f32 %v632, %v658
    %v671 = vadd.f32 %v633, %v658
    %v672 = vadd.f32 %v634, %v658
    %v673 = vadd.f32 %v635, %v658
    %v674 = vadd.f32 %v636, %v658
    %v675 = vadd.f32 %v637, %v658
    %v676 = vadd.f32 %v638, %v658
    %v677 = vadd.f32 %v639, %v658
    %v678 = vadd.f32 %v640, %v658
    %v679 = vadd.f32 %v641, %v658
    %v680 = vadd.f32 %v642, %v658
    %v681 = vadd.f32 %v643, %v658
    %v682 = vadd.f32 %v644, %v658
    %v683 = vadd.f32 %v645, %v658
    %v684 = vadd.f32 %v646, %v658
    %v685 = vadd.f32 %v647, %v658
    %v686 = vadd.f32 %v648, %v658
    %v687 = vadd.f32 %v649, %v658
    %v688 = vadd.f32 %v650, %v658
    %v689 = vadd.f32 %v651, %v658
    %v690 = vadd.f32 %v652, %v658
    %v691 = vadd.f32 %v653, %v658
    %v692 = vmax.f32 %v660, 0.0
    %v693 = vmax.f32 %v661, 0.0
    %v694 = vmax.f32 %v662, 0.0
    %v695 = vmax.f32 %v663, 0.0
    %v696 = vmax.f32 %v664, 0.0
    %v697 = vmax.f32 %v665, 0.0
    %v698 = vmax.f32 %v666, 0.0
    %v699 = vmax.f32 %v667, 0.0
    %v700 = vmax.f32 %v668, 0.0
    %v701 = vmax.f32 %v669, 0.0
    %v702 = vmax.f32 %v670, 0.0
    %v703 = vmax.f32 %v671, 0.0
    %v704 = vmax.f32 %v672, 0.0
    %v705 = vmax.f32 %v673, 0.0
    %v706 = vmax.f32 %v674, 0.0
    %v707 = vmax.f32 %v675, 0.0
    %v708 = vmax.f32 %v676, 0.0
    %v709 = vmax.f32 %v677, 0.0
    %v710 = vmax.f32 %v678, 0.0
    %v711 = vmax.f32 %v679, 0.0
    %v712 = vmax.f32 %v680, 0.0
    %v713 = vmax.f32 %v681, 0.0
    %v714 = vmax.f32 %v682, 0.0
    %v715 = vmax.f32 %v683, 0.0
    %v716 = vmax.f32 %v684, 0.0
    %v717 = vmax.f32 %v685, 0.0
    %v718 = vmax.f32 %v686, 0.0
    %v719 = vmax.f32 %v687, 0.0
    %v720 = vmax.f32 %v688, 0.0
    %v721 = vmax.f32 %v689, 0.0
    %v722 = vmax.f32 %v690, 0.0
    %v723 = vmax.f32 %v691, 0.0
    %724 = vst [vmem:[#allocation14] sm:$0xff] %v692
    %725 = vst [vmem:[#allocation14 + $0x8] sm:$0xff] %v693
    %726 = vst [vmem:[#allocation14 + $0x10] sm:$0xff] %v694
    %727 = vst [vmem:[#allocation14 + $0x18] sm:$0xff] %v695
    %728 = vst [vmem:[#allocation14 + $0x20] sm:$0xff] %v696
    %729 = vst [vmem:[#allocation14 + $0x28] sm:$0xff] %v697
    %730 = vst [vmem:[#allocation14 + $0x30] sm:$0xff] %v698
    %731 = vst [vmem:[#allocation14 + $0x38] sm:$0xff] %v699
    %732 = vst [vmem:[#allocation14 + $0x40] sm:$0xff] %v700
    %733 = vst [vmem:[#allocation14 + $0x48] sm:$0xff] %v701
    %734 = vst [vmem:[#allocation14 + $0x50] sm:$0xff] %v702
    %735 = vst [vmem:[#allocation14 + $0x58] sm:$0xff] %v703
    %736 = vst [vmem:[#allocation14 + $0x60] sm:$0xff] %v704
    %737 = vst [vmem:[#allocation14 + $0x68] sm:$0xff] %v705
    %738 = vst [vmem:[#allocation14 + $0x70] sm:$0xff] %v706
    %739 = vst [vmem:[#allocation14 + $0x78] sm:$0xff] %v707
    %740 = vst [vmem:[#allocation14 + $0x80] sm:$0xff] %v708
    %741 = vst [vmem:[#allocation14 + $0x88] sm:$0xff] %v709
    %742 = vst [vmem:[#allocation14 + $0x90] sm:$0xff] %v710
    %743 = vst [vmem:[#allocation14 + $0x98] sm:$0xff] %v711
    %744 = vst [vmem:[#allocation14 + $0xa0] sm:$0xff] %v712
    %745 = vst [vmem:[#allocation14 + $0xa8] sm:$0xff] %v713
    %746 = vst [vmem:[#allocation14 + $0xb0] sm:$0xff] %v714
    %747 = vst [vmem:[#allocation14 + $0xb8] sm:$0xff] %v715
    %748 = vst [vmem:[#allocation14 + $0xc0] sm:$0xff] %v716
    %749 = vst [vmem:[#allocation14 + $0xc8] sm:$0xff] %v717
    %750 = vst [vmem:[#allocation14 + $0xd0] sm:$0xff] %v718
    %751 = vst [vmem:[#allocation14 + $0xd8] sm:$0xff] %v719
    %752 = vst [vmem:[#allocation14 + $0xe0] sm:$0xff] %v720
    %753 = vst [vmem:[#allocation14 + $0xe8] sm:$0xff] %v721
    %754 = vst [vmem:[#allocation14 + $0xf0] sm:$0xff] %v722
    %755 = vst [vmem:[#allocation14 + $0xf8] sm:$0xff] %v723
    %v756 = vpack.c.bf16 %v693, %v692
    %v757 = vpack.c.bf16 %v695, %v694
    %v758 = vpack.c.bf16 %v697, %v696
    %v759 = vpack.c.bf16 %v699, %v698
    %v760 = vpack.c.bf16 %v701, %v700
    %v761 = vpack.c.bf16 %v703, %v702
    %v762 = vpack.c.bf16 %v705, %v704
    %v763 = vpack.c.bf16 %v707, %v706
    %v764 = vpack.c.bf16 %v709, %v708
    %v765 = vpack.c.bf16 %v711, %v710
    %v766 = vpack.c.bf16 %v713, %v712
    %v767 = vpack.c.bf16 %v715, %v714
    %v768 = vpack.c.bf16 %v717, %v716
    %v769 = vpack.c.bf16 %v719, %v718
    %v770 = vpack.c.bf16 %v721, %v720
    %v771 = vpack.c.bf16 %v723, %v722
    %v772 = vld [vmem:[#allocation11] sm:$0xff]
    %v773 = vld [vmem:[#allocation11 + $0x8] sm:$0xf]
    %v774 = vld [vmem:[#allocation11 + $0xc] sm:$0xff]
    %v775 = vld [vmem:[#allocation11 + $0x14] sm:$0xf]
    %v776 = vld [vmem:[#allocation11 + $0x18] sm:$0xff]
    %v777 = vld [vmem:[#allocation11 + $0x20] sm:$0xf]
    %v778 = vld [vmem:[#allocation11 + $0x24] sm:$0xff]
    %v779 = vld [vmem:[#allocation11 + $0x2c] sm:$0xf]
    %v780 = vld [vmem:[#allocation11 + $0x30] sm:$0xff]
    %v781 = vld [vmem:[#allocation11 + $0x38] sm:$0xf]
    %v782 = vld [vmem:[#allocation11 + $0x3c] sm:$0xff]
    %v783 = vld [vmem:[#allocation11 + $0x44] sm:$0xf]
    %v784 = vld [vmem:[#allocation11 + $0x48] sm:$0xff]
    %v785 = vld [vmem:[#allocation11 + $0x50] sm:$0xf]
    %v786 = vld [vmem:[#allocation11 + $0x54] sm:$0xff]
    %v787 = vld [vmem:[#allocation11 + $0x5c] sm:$0xf]
    %v788 = vld [vmem:[#allocation11 + $0x60] sm:$0xff]
    %v789 = vld [vmem:[#allocation11 + $0x68] sm:$0xf]
    %v790 = vld [vmem:[#allocation11 + $0x6c] sm:$0xff]
    %v791 = vld [vmem:[#allocation11 + $0x74] sm:$0xf]
    %v792 = vld [vmem:[#allocation11 + $0x78] sm:$0xff]
    %v793 = vld [vmem:[#allocation11 + $0x80] sm:$0xf]
    %v794 = vld [vmem:[#allocation11 + $0x84] sm:$0xff]
    %v795 = vld [vmem:[#allocation11 + $0x8c] sm:$0xf]
    %v796 = vld [vmem:[#allocation11 + $0x90] sm:$0xff]
    %v797 = vld [vmem:[#allocation11 + $0x98] sm:$0xf]
    %v798 = vld [vmem:[#allocation11 + $0x9c] sm:$0xff]
    %v799 = vld [vmem:[#allocation11 + $0xa4] sm:$0xf]
    %v800 = vld [vmem:[#allocation11 + $0xa8] sm:$0xff]
    %v801 = vld [vmem:[#allocation11 + $0xb0] sm:$0xf]
    %v802 = vld [vmem:[#allocation11 + $0xb4] sm:$0xff]
    %v803 = vld [vmem:[#allocation11 + $0xbc] sm:$0xf]
    %v804 = vld [vmem:[#allocation13] sm:$0x7]
    %v806 = vlaneseq
    %v807 = vshrl.u32 %v806, 7
    %v808 = vsub.s32 0, %v807
    %v809 = vrot.slane %v804, %v808
    %v810 = vlaneseq
    %v811 = vshrl.u32 %v810, 7
    %v812 = vsub.s32 1, %v811
    %v813 = vrot.slane %v804, %v812
    %v814 = vlaneseq
    %v815 = vshrl.u32 %v814, 7
    %v816 = vsub.s32 2, %v815
    %v817 = vrot.slane %v804, %v816
    %v853 = vunpack.c.l.b16 %v772
    %v854 = vunpack.c.h.b16 %v772
    %v855 = vunpack.c.l.b16 %v773
    %v856 = vunpack.c.l.b16 %v774
    %v857 = vunpack.c.h.b16 %v774
    %v858 = vunpack.c.l.b16 %v775
    %v859 = vunpack.c.l.b16 %v776
    %v860 = vunpack.c.h.b16 %v776
    %v861 = vunpack.c.l.b16 %v777
    %v862 = vunpack.c.l.b16 %v778
    %v863 = vunpack.c.h.b16 %v778
    %v864 = vunpack.c.l.b16 %v779
    %v865 = vunpack.c.l.b16 %v780
    %v866 = vunpack.c.h.b16 %v780
    %v867 = vunpack.c.l.b16 %v781
    %v868 = vunpack.c.l.b16 %v782
    %v869 = vunpack.c.h.b16 %v782
    %v870 = vunpack.c.l.b16 %v783
    %v871 = vunpack.c.l.b16 %v784
    %v872 = vunpack.c.h.b16 %v784
    %v873 = vunpack.c.l.b16 %v785
    %v874 = vunpack.c.l.b16 %v786
    %v875 = vunpack.c.h.b16 %v786
    %v876 = vunpack.c.l.b16 %v787
    %v877 = vunpack.c.l.b16 %v788
    %v878 = vunpack.c.h.b16 %v788
    %v879 = vunpack.c.l.b16 %v789
    %v880 = vunpack.c.l.b16 %v790
    %v881 = vunpack.c.h.b16 %v790
    %v882 = vunpack.c.l.b16 %v791
    %v883 = vunpack.c.l.b16 %v792
    %v884 = vunpack.c.h.b16 %v792
    %v885 = vunpack.c.l.b16 %v793
    %v886 = vunpack.c.l.b16 %v794
    %v887 = vunpack.c.h.b16 %v794
    %v888 = vunpack.c.l.b16 %v795
    %v889 = vunpack.c.l.b16 %v796
    %v890 = vunpack.c.h.b16 %v796
    %v891 = vunpack.c.l.b16 %v797
    %v892 = vunpack.c.l.b16 %v798
    %v893 = vunpack.c.h.b16 %v798
    %v894 = vunpack.c.l.b16 %v799
    %v895 = vunpack.c.l.b16 %v800
    %v896 = vunpack.c.h.b16 %v800
    %v897 = vunpack.c.l.b16 %v801
    %v898 = vunpack.c.l.b16 %v802
    %v899 = vunpack.c.h.b16 %v802
    %v900 = vunpack.c.l.b16 %v803
    %v901 = vpack.c.b16 %v856, %v853
    %v902 = vpack.c.b16 %v857, %v854
    %v903 = vpack.c.b16 %v858, %v855
    %v904 = vpack.c.b16 %v862, %v859
    %v905 = vpack.c.b16 %v863, %v860
    %v906 = vpack.c.b16 %v864, %v861
    %v907 = vpack.c.b16 %v868, %v865
    %v908 = vpack.c.b16 %v869, %v866
    %v909 = vpack.c.b16 %v870, %v867
    %v910 = vpack.c.b16 %v874, %v871
    %v911 = vpack.c.b16 %v875, %v872
    %v912 = vpack.c.b16 %v876, %v873
    %v913 = vpack.c.b16 %v880, %v877
    %v914 = vpack.c.b16 %v881, %v878
    %v915 = vpack.c.b16 %v882, %v879
    %v916 = vpack.c.b16 %v886, %v883
    %v917 = vpack.c.b16 %v887, %v884
    %v918 = vpack.c.b16 %v888, %v885
    %v919 = vpack.c.b16 %v892, %v889
    %v920 = vpack.c.b16 %v893, %v890
    %v921 = vpack.c.b16 %v894, %v891
    %v922 = vpack.c.b16 %v898, %v895
    %v923 = vpack.c.b16 %v899, %v896
    %v924 = vpack.c.b16 %v900, %v897
    %949 = vmatprep.subr.bf16.mxu0 %v902
    %950 = vmatpush1.bf16.msra.mxu0 %v901
    %951 = vmatprep.subr.bf16.mxu0 %v905
    %952 = vmatpush1.bf16.msra.mxu0 %v904
    %953 = vmatprep.subr.bf16.mxu0 %v908
    %954 = vmatpush1.bf16.msra.mxu0 %v907
    %955 = vmatprep.subr.bf16.mxu0 %v911
    %956 = vmatpush1.bf16.msra.mxu0 %v910
    %957 = vmatprep.subr.bf16.mxu0 %v914
    %958 = vmatpush1.bf16.msra.mxu0 %v913
    %959 = vmatprep.subr.bf16.mxu0 %v917
    %960 = vmatpush1.bf16.msra.mxu0 %v916
    %961 = vmatprep.subr.bf16.mxu0 %v920
    %962 = vmatpush1.bf16.msra.mxu0 %v919
    %963 = vmatprep.subr.bf16.mxu0 %v923
    %964 = vmatpush1.bf16.msra.mxu0 %v922
    %965 = vmatprep.subr.bf16.mxu0 0
    %966 = vmatpush1.bf16.msra.mxu0 0
    %967 = vmatprep.subr.bf16.mxu0 0
    %968 = vmatpush1.bf16.msra.mxu0 0
    %969 = vmatprep.subr.bf16.mxu0 0
    %970 = vmatpush1.bf16.msra.mxu0 0
    %971 = vmatprep.subr.bf16.mxu0 0
    %972 = vmatpush1.bf16.msra.mxu0 0
    %973 = vmatprep.subr.bf16.mxu0 0
    %974 = vmatpush1.bf16.msra.mxu0 0
    %975 = vmatprep.subr.bf16.mxu0 0
    %976 = vmatpush1.bf16.msra.mxu0 0
    %977 = vmatprep.subr.bf16.mxu0 0
    %978 = vmatpush1.bf16.msra.mxu0 0
    %979 = vmatprep.subr.bf16.mxu0 0
    %980 = vmatpush1.bf16.msra.mxu0 0
    %981 = vmatprep.mubr.bf16.mxu0 0
    %982 = vmatmul.mubr.bf16.gmra.mrb[0].mxu0 %v756
    %v983 = vpop.f32.mrb[0].mxu0
    %v984 = vadd.f32 %v809, %v983
    %v985 = vpop.f32.mrb[0].mxu0
    %v986 = vadd.f32 %v813, %v985
    %v987 = vpop.f32.mrb[0].mxu0
    %v988 = vadd.f32 %v809, %v987
    %v989 = vpop.f32.mrb[0].mxu0
    %v990 = vadd.f32 %v813, %v989
    %991 = vmatprep.mubr.bf16.mxu0 0
    %992 = vmatmul.mubr.bf16.gmra.mrb[0].mxu0 %v757
    %v993 = vpop.f32.mrb[0].mxu0
    %v994 = vadd.f32 %v809, %v993
    %v995 = vpop.f32.mrb[0].mxu0
    %v996 = vadd.f32 %v813, %v995
    %v997 = vpop.f32.mrb[0].mxu0
    %v998 = vadd.f32 %v809, %v997
    %v999 = vpop.f32.mrb[0].mxu0
    %v1000 = vadd.f32 %v813, %v999
    %1001 = vmatprep.mubr.bf16.mxu0 0
    %1002 = vmatmul.mubr.bf16.gmra.mrb[0].mxu0 %v758
    %v1003 = vpop.f32.mrb[0].mxu0
    %v1004 = vadd.f32 %v809, %v1003
    %v1005 = vpop.f32.mrb[0].mxu0
    %v1006 = vadd.f32 %v813, %v1005
    %v1007 = vpop.f32.mrb[0].mxu0
    %v1008 = vadd.f32 %v809, %v1007
    %v1009 = vpop.f32.mrb[0].mxu0
    %v1010 = vadd.f32 %v813, %v1009
    %1011 = vmatprep.mubr.bf16.mxu0 0
    %1012 = vmatmul.mubr.bf16.gmra.mrb[0].mxu0 %v759
    %v1013 = vpop.f32.mrb[0].mxu0
    %v1014 = vadd.f32 %v809, %v1013
    %v1015 = vpop.f32.mrb[0].mxu0
    %v1016 = vadd.f32 %v813, %v1015
    %v1017 = vpop.f32.mrb[0].mxu0
    %v1018 = vadd.f32 %v809, %v1017
    %v1019 = vpop.f32.mrb[0].mxu0
    %v1020 = vadd.f32 %v813, %v1019
    %1021 = vmatprep.mubr.bf16.mxu0 0
    %1022 = vmatmul.mubr.bf16.gmra.mrb[0].mxu0 %v760
    %v1023 = vpop.f32.mrb[0].mxu0
    %v1024 = vadd.f32 %v809, %v1023
    %v1025 = vpop.f32.mrb[0].mxu0
    %v1026 = vadd.f32 %v813, %v1025
    %v1027 = vpop.f32.mrb[0].mxu0
    %v1028 = vadd.f32 %v809, %v1027
    %v1029 = vpop.f32.mrb[0].mxu0
    %v1030 = vadd.f32 %v813, %v1029
    %1031 = vmatprep.mubr.bf16.mxu0 0
    %1032 = vmatmul.mubr.bf16.gmra.mrb[0].mxu0 %v761
    %v1033 = vpop.f32.mrb[0].mxu0
    %v1034 = vadd.f32 %v809, %v1033
    %v1035 = vpop.f32.mrb[0].mxu0
    %v1036 = vadd.f32 %v813, %v1035
    %v1037 = vpop.f32.mrb[0].mxu0
    %v1038 = vadd.f32 %v809, %v1037
    %v1039 = vpop.f32.mrb[0].mxu0
    %v1040 = vadd.f32 %v813, %v1039
    %1041 = vmatprep.mubr.bf16.mxu0 0
    %1042 = vmatmul.mubr.bf16.gmra.mrb[0].mxu0 %v762
    %v1043 = vpop.f32.mrb[0].mxu0
    %v1044 = vadd.f32 %v809, %v1043
    %v1045 = vpop.f32.mrb[0].mxu0
    %v1046 = vadd.f32 %v813, %v1045
    %v1047 = vpop.f32.mrb[0].mxu0
    %v1048 = vadd.f32 %v809, %v1047
    %v1049 = vpop.f32.mrb[0].mxu0
    %v1050 = vadd.f32 %v813, %v1049
    %1051 = vmatprep.mubr.bf16.mxu0 0
    %1052 = vmatmul.mubr.bf16.gmra.mrb[0].mxu0 %v763
    %v1053 = vpop.f32.mrb[0].mxu0
    %v1054 = vadd.f32 %v809, %v1053
    %v1055 = vpop.f32.mrb[0].mxu0
    %v1056 = vadd.f32 %v813, %v1055
    %v1057 = vpop.f32.mrb[0].mxu0
    %v1058 = vadd.f32 %v809, %v1057
    %v1059 = vpop.f32.mrb[0].mxu0
    %v1060 = vadd.f32 %v813, %v1059
    %1061 = vmatprep.mubr.bf16.mxu0 0
    %1062 = vmatmul.mubr.bf16.gmra.mrb[0].mxu0 %v764
    %v1063 = vpop.f32.mrb[0].mxu0
    %v1064 = vadd.f32 %v809, %v1063
    %v1065 = vpop.f32.mrb[0].mxu0
    %v1066 = vadd.f32 %v813, %v1065
    %v1067 = vpop.f32.mrb[0].mxu0
    %v1068 = vadd.f32 %v809, %v1067
    %v1069 = vpop.f32.mrb[0].mxu0
    %v1070 = vadd.f32 %v813, %v1069
    %1071 = vmatprep.mubr.bf16.mxu0 0
    %1072 = vmatmul.mubr.bf16.gmra.mrb[0].mxu0 %v765
    %v1073 = vpop.f32.mrb[0].mxu0
    %v1074 = vadd.f32 %v809, %v1073
    %v1075 = vpop.f32.mrb[0].mxu0
    %v1076 = vadd.f32 %v813, %v1075
    %v1077 = vpop.f32.mrb[0].mxu0
    %v1078 = vadd.f32 %v809, %v1077
    %v1079 = vpop.f32.mrb[0].mxu0
    %v1080 = vadd.f32 %v813, %v1079
    %1081 = vmatprep.mubr.bf16.mxu0 0
    %1082 = vmatmul.mubr.bf16.gmra.mrb[0].mxu0 %v766
    %v1083 = vpop.f32.mrb[0].mxu0
    %v1084 = vadd.f32 %v809, %v1083
    %v1085 = vpop.f32.mrb[0].mxu0
    %v1086 = vadd.f32 %v813, %v1085
    %v1087 = vpop.f32.mrb[0].mxu0
    %v1088 = vadd.f32 %v809, %v1087
    %v1089 = vpop.f32.mrb[0].mxu0
    %v1090 = vadd.f32 %v813, %v1089
    %1091 = vmatprep.mubr.bf16.mxu0 0
    %1092 = vmatmul.mubr.bf16.gmra.mrb[0].mxu0 %v767
    %v1093 = vpop.f32.mrb[0].mxu0
    %v1094 = vadd.f32 %v809, %v1093
    %v1095 = vpop.f32.mrb[0].mxu0
    %v1096 = vadd.f32 %v813, %v1095
    %v1097 = vpop.f32.mrb[0].mxu0
    %v1098 = vadd.f32 %v809, %v1097
    %v1099 = vpop.f32.mrb[0].mxu0
    %v1100 = vadd.f32 %v813, %v1099
    %1101 = vmatprep.mubr.bf16.mxu0 0
    %1102 = vmatmul.mubr.bf16.gmra.mrb[0].mxu0 %v768
    %v1103 = vpop.f32.mrb[0].mxu0
    %v1104 = vadd.f32 %v809, %v1103
    %v1105 = vpop.f32.mrb[0].mxu0
    %v1106 = vadd.f32 %v813, %v1105
    %v1107 = vpop.f32.mrb[0].mxu0
    %v1108 = vadd.f32 %v809, %v1107
    %v1109 = vpop.f32.mrb[0].mxu0
    %v1110 = vadd.f32 %v813, %v1109
    %1111 = vmatprep.mubr.bf16.mxu0 0
    %1112 = vmatmul.mubr.bf16.gmra.mrb[0].mxu0 %v769
    %v1113 = vpop.f32.mrb[0].mxu0
    %v1114 = vadd.f32 %v809, %v1113
    %v1115 = vpop.f32.mrb[0].mxu0
    %v1116 = vadd.f32 %v813, %v1115
    %v1117 = vpop.f32.mrb[0].mxu0
    %v1118 = vadd.f32 %v809, %v1117
    %v1119 = vpop.f32.mrb[0].mxu0
    %v1120 = vadd.f32 %v813, %v1119
    %1121 = vmatprep.mubr.bf16.mxu0 0
    %1122 = vmatmul.mubr.bf16.gmra.mrb[0].mxu0 %v770
    %v1123 = vpop.f32.mrb[0].mxu0
    %v1124 = vadd.f32 %v809, %v1123
    %v1125 = vpop.f32.mrb[0].mxu0
    %v1126 = vadd.f32 %v813, %v1125
    %v1127 = vpop.f32.mrb[0].mxu0
    %v1128 = vadd.f32 %v809, %v1127
    %v1129 = vpop.f32.mrb[0].mxu0
    %v1130 = vadd.f32 %v813, %v1129
    %1131 = vmatprep.mubr.bf16.mxu0 0
    %1132 = vmatmul.mubr.bf16.gmra.mrb[0].mxu0 %v771
    %v1133 = vpop.f32.mrb[0].mxu0
    %v1134 = vadd.f32 %v809, %v1133
    %v1135 = vpop.f32.mrb[0].mxu0
    %v1136 = vadd.f32 %v813, %v1135
    %v1137 = vpop.f32.mrb[0].mxu0
    %v1138 = vadd.f32 %v809, %v1137
    %v1139 = vpop.f32.mrb[0].mxu0
    %v1140 = vadd.f32 %v813, %v1139
    %1141 = vdwg.mxu0
    %1142 = vmatprep.subr.bf16.mxu0 0
    %1143 = vmatpush1.bf16.msra.mxu0 %v903
    %1144 = vmatprep.subr.bf16.mxu0 0
    %1145 = vmatpush1.bf16.msra.mxu0 %v906
    %1146 = vmatprep.subr.bf16.mxu0 0
    %1147 = vmatpush1.bf16.msra.mxu0 %v909
    %1148 = vmatprep.subr.bf16.mxu0 0
    %1149 = vmatpush1.bf16.msra.mxu0 %v912
    %1150 = vmatprep.subr.bf16.mxu0 0
    %1151 = vmatpush1.bf16.msra.mxu0 %v915
    %1152 = vmatprep.subr.bf16.mxu0 0
    %1153 = vmatpush1.bf16.msra.mxu0 %v918
    %1154 = vmatprep.subr.bf16.mxu0 0
    %1155 = vmatpush1.bf16.msra.mxu0 %v921
    %1156 = vmatprep.subr.bf16.mxu0 0
    %1157 = vmatpush1.bf16.msra.mxu0 %v924
    %1158 = vmatprep.subr.bf16.mxu0 0
    %1159 = vmatpush1.bf16.msra.mxu0 0
    %1160 = vmatprep.subr.bf16.mxu0 0
    %1161 = vmatpush1.bf16.msra.mxu0 0
    %1162 = vmatprep.subr.bf16.mxu0 0
    %1163 = vmatpush1.bf16.msra.mxu0 0
    %1164 = vmatprep.subr.bf16.mxu0 0
    %1165 = vmatpush1.bf16.msra.mxu0 0
    %1166 = vmatprep.subr.bf16.mxu0 0
    %1167 = vmatpush1.bf16.msra.mxu0 0
    %1168 = vmatprep.subr.bf16.mxu0 0
    %1169 = vmatpush1.bf16.msra.mxu0 0
    %1170 = vmatprep.subr.bf16.mxu0 0
    %1171 = vmatpush1.bf16.msra.mxu0 0
    %1172 = vmatprep.subr.bf16.mxu0 0
    %1173 = vmatpush1.bf16.msra.mxu0 0
    %1174 = vmatprep.mubr.bf16.mxu0 0
    %1175 = vmatmul.mubr.bf16.gmra.mrb[0].mxu0 %v756
    %v1176 = vpop.f32.mrb[0].mxu0
    %v1177 = vadd.f32 %v817, %v1176
    %v1178 = vpop.f32.mrb[0].mxu0
    %v1179 = vpop.f32.mrb[0].mxu0
    %v1180 = vadd.f32 %v817, %v1179
    %v1181 = vpop.f32.mrb[0].mxu0
    %1182 = vmatprep.mubr.bf16.mxu0 0
    %1183 = vmatmul.mubr.bf16.gmra.mrb[0].mxu0 %v757
    %v1184 = vpop.f32.mrb[0].mxu0
    %v1185 = vadd.f32 %v817, %v1184
    %v1186 = vpop.f32.mrb[0].mxu0
    %v1187 = vpop.f32.mrb[0].mxu0
    %v1188 = vadd.f32 %v817, %v1187
    %v1189 = vpop.f32.mrb[0].mxu0
    %1190 = vmatprep.mubr.bf16.mxu0 0
    %1191 = vmatmul.mubr.bf16.gmra.mrb[0].mxu0 %v758
    %v1192 = vpop.f32.mrb[0].mxu0
    %v1193 = vadd.f32 %v817, %v1192
    %v1194 = vpop.f32.mrb[0].mxu0
    %v1195 = vpop.f32.mrb[0].mxu0
    %v1196 = vadd.f32 %v817, %v1195
    %v1197 = vpop.f32.mrb[0].mxu0
    %1198 = vmatprep.mubr.bf16.mxu0 0
    %1199 = vmatmul.mubr.bf16.gmra.mrb[0].mxu0 %v759
    %v1200 = vpop.f32.mrb[0].mxu0
    %v1201 = vadd.f32 %v817, %v1200
    %v1202 = vpop.f32.mrb[0].mxu0
    %v1203 = vpop.f32.mrb[0].mxu0
    %v1204 = vadd.f32 %v817, %v1203
    %v1205 = vpop.f32.mrb[0].mxu0
    %1206 = vmatprep.mubr.bf16.mxu0 0
    %1207 = vmatmul.mubr.bf16.gmra.mrb[0].mxu0 %v760
    %v1208 = vpop.f32.mrb[0].mxu0
    %v1209 = vadd.f32 %v817, %v1208
    %v1210 = vpop.f32.mrb[0].mxu0
    %v1211 = vpop.f32.mrb[0].mxu0
    %v1212 = vadd.f32 %v817, %v1211
    %v1213 = vpop.f32.mrb[0].mxu0
    %1214 = vmatprep.mubr.bf16.mxu0 0
    %1215 = vmatmul.mubr.bf16.gmra.mrb[0].mxu0 %v761
    %v1216 = vpop.f32.mrb[0].mxu0
    %v1217 = vadd.f32 %v817, %v1216
    %v1218 = vpop.f32.mrb[0].mxu0
    %v1219 = vpop.f32.mrb[0].mxu0
    %v1220 = vadd.f32 %v817, %v1219
    %v1221 = vpop.f32.mrb[0].mxu0
    %1222 = vmatprep.mubr.bf16.mxu0 0
    %1223 = vmatmul.mubr.bf16.gmra.mrb[0].mxu0 %v762
    %v1224 = vpop.f32.mrb[0].mxu0
    %v1225 = vadd.f32 %v817, %v1224
    %v1226 = vpop.f32.mrb[0].mxu0
    %v1227 = vpop.f32.mrb[0].mxu0
    %v1228 = vadd.f32 %v817, %v1227
    %v1229 = vpop.f32.mrb[0].mxu0
    %1230 = vmatprep.mubr.bf16.mxu0 0
    %1231 = vmatmul.mubr.bf16.gmra.mrb[0].mxu0 %v763
    %v1232 = vpop.f32.mrb[0].mxu0
    %v1233 = vadd.f32 %v817, %v1232
    %v1234 = vpop.f32.mrb[0].mxu0
    %v1235 = vpop.f32.mrb[0].mxu0
    %v1236 = vadd.f32 %v817, %v1235
    %v1237 = vpop.f32.mrb[0].mxu0
    %1238 = vmatprep.mubr.bf16.mxu0 0
    %1239 = vmatmul.mubr.bf16.gmra.mrb[0].mxu0 %v764
    %v1240 = vpop.f32.mrb[0].mxu0
    %v1241 = vadd.f32 %v817, %v1240
    %v1242 = vpop.f32.mrb[0].mxu0
    %v1243 = vpop.f32.mrb[0].mxu0
    %v1244 = vadd.f32 %v817, %v1243
    %v1245 = vpop.f32.mrb[0].mxu0
    %1246 = vmatprep.mubr.bf16.mxu0 0
    %1247 = vmatmul.mubr.bf16.gmra.mrb[0].mxu0 %v765
    %v1248 = vpop.f32.mrb[0].mxu0
    %v1249 = vadd.f32 %v817, %v1248
    %v1250 = vpop.f32.mrb[0].mxu0
    %v1251 = vpop.f32.mrb[0].mxu0
    %v1252 = vadd.f32 %v817, %v1251
    %v1253 = vpop.f32.mrb[0].mxu0
    %1254 = vmatprep.mubr.bf16.mxu0 0
    %1255 = vmatmul.mubr.bf16.gmra.mrb[0].mxu0 %v766
    %v1256 = vpop.f32.mrb[0].mxu0
    %v1257 = vadd.f32 %v817, %v1256
    %v1258 = vpop.f32.mrb[0].mxu0
    %v1259 = vpop.f32.mrb[0].mxu0
    %v1260 = vadd.f32 %v817, %v1259
    %v1261 = vpop.f32.mrb[0].mxu0
    %1262 = vmatprep.mubr.bf16.mxu0 0
    %1263 = vmatmul.mubr.bf16.gmra.mrb[0].mxu0 %v767
    %v1264 = vpop.f32.mrb[0].mxu0
    %v1265 = vadd.f32 %v817, %v1264
    %v1266 = vpop.f32.mrb[0].mxu0
    %v1267 = vpop.f32.mrb[0].mxu0
    %v1268 = vadd.f32 %v817, %v1267
    %v1269 = vpop.f32.mrb[0].mxu0
    %1270 = vmatprep.mubr.bf16.mxu0 0
    %1271 = vmatmul.mubr.bf16.gmra.mrb[0].mxu0 %v768
    %v1272 = vpop.f32.mrb[0].mxu0
    %v1273 = vadd.f32 %v817, %v1272
    %v1274 = vpop.f32.mrb[0].mxu0
    %v1275 = vpop.f32.mrb[0].mxu0
    %v1276 = vadd.f32 %v817, %v1275
    %v1277 = vpop.f32.mrb[0].mxu0
    %1278 = vmatprep.mubr.bf16.mxu0 0
    %1279 = vmatmul.mubr.bf16.gmra.mrb[0].mxu0 %v769
    %v1280 = vpop.f32.mrb[0].mxu0
    %v1281 = vadd.f32 %v817, %v1280
    %v1282 = vpop.f32.mrb[0].mxu0
    %v1283 = vpop.f32.mrb[0].mxu0
    %v1284 = vadd.f32 %v817, %v1283
    %v1285 = vpop.f32.mrb[0].mxu0
    %1286 = vmatprep.mubr.bf16.mxu0 0
    %1287 = vmatmul.mubr.bf16.gmra.mrb[0].mxu0 %v770
    %v1288 = vpop.f32.mrb[0].mxu0
    %v1289 = vadd.f32 %v817, %v1288
    %v1290 = vpop.f32.mrb[0].mxu0
    %v1291 = vpop.f32.mrb[0].mxu0
    %v1292 = vadd.f32 %v817, %v1291
    %v1293 = vpop.f32.mrb[0].mxu0
    %1294 = vmatprep.mubr.bf16.mxu0 0
    %1295 = vmatmul.mubr.bf16.gmra.mrb[0].mxu0 %v771
    %v1296 = vpop.f32.mrb[0].mxu0
    %v1297 = vadd.f32 %v817, %v1296
    %v1298 = vpop.f32.mrb[0].mxu0
    %v1299 = vpop.f32.mrb[0].mxu0
    %v1300 = vadd.f32 %v817, %v1299
    %v1301 = vpop.f32.mrb[0].mxu0
    %1302 = vdwg.mxu0
    %v1303 = vpack.c.bf16 %v988, %v984
    %v1304 = vpack.c.bf16 %v998, %v994
    %v1305 = vpack.c.bf16 %v1008, %v1004
    %v1306 = vpack.c.bf16 %v1018, %v1014
    %v1307 = vpack.c.bf16 %v1028, %v1024
    %v1308 = vpack.c.bf16 %v1038, %v1034
    %v1309 = vpack.c.bf16 %v1048, %v1044
    %v1310 = vpack.c.bf16 %v1058, %v1054
    %v1311 = vpack.c.bf16 %v1068, %v1064
    %v1312 = vpack.c.bf16 %v1078, %v1074
    %v1313 = vpack.c.bf16 %v1088, %v1084
    %v1314 = vpack.c.bf16 %v1098, %v1094
    %v1315 = vpack.c.bf16 %v1108, %v1104
    %v1316 = vpack.c.bf16 %v1118, %v1114
    %v1317 = vpack.c.bf16 %v1128, %v1124
    %v1318 = vpack.c.bf16 %v1138, %v1134
    %v1335 = vunpack.c.l.b16 %v1303
    %v1336 = vunpack.c.h.b16 %v1303
    %v1337 = vunpack.c.l.b16 %v1304
    %v1338 = vunpack.c.h.b16 %v1304
    %v1339 = vunpack.c.l.b16 %v1305
    %v1340 = vunpack.c.h.b16 %v1305
    %v1341 = vunpack.c.l.b16 %v1306
    %v1342 = vunpack.c.h.b16 %v1306
    %v1343 = vunpack.c.l.b16 %v1307
    %v1344 = vunpack.c.h.b16 %v1307
    %v1345 = vunpack.c.l.b16 %v1308
    %v1346 = vunpack.c.h.b16 %v1308
    %v1347 = vunpack.c.l.b16 %v1309
    %v1348 = vunpack.c.h.b16 %v1309
    %v1349 = vunpack.c.l.b16 %v1310
    %v1350 = vunpack.c.h.b16 %v1310
    %v1351 = vunpack.c.l.b16 %v1311
    %v1352 = vunpack.c.h.b16 %v1311
    %v1353 = vunpack.c.l.b16 %v1312
    %v1354 = vunpack.c.h.b16 %v1312
    %v1355 = vunpack.c.l.b16 %v1313
    %v1356 = vunpack.c.h.b16 %v1313
    %v1357 = vunpack.c.l.b16 %v1314
    %v1358 = vunpack.c.h.b16 %v1314
    %v1359 = vunpack.c.l.b16 %v1315
    %v1360 = vunpack.c.h.b16 %v1315
    %v1361 = vunpack.c.l.b16 %v1316
    %v1362 = vunpack.c.h.b16 %v1316
    %v1363 = vunpack.c.l.b16 %v1317
    %v1364 = vunpack.c.h.b16 %v1317
    %v1365 = vunpack.c.l.b16 %v1318
    %v1366 = vunpack.c.h.b16 %v1318
    %v1367 = vpack.c.b16 %v1335, %v1335
    %v1368 = vpack.c.b16 %v1336, %v1336
    %v1369 = vpack.c.b16 %v1337, %v1337
    %v1370 = vpack.c.b16 %v1338, %v1338
    %v1371 = vpack.c.b16 %v1339, %v1339
    %v1372 = vpack.c.b16 %v1340, %v1340
    %v1373 = vpack.c.b16 %v1341, %v1341
    %v1374 = vpack.c.b16 %v1342, %v1342
    %v1375 = vpack.c.b16 %v1343, %v1343
    %v1376 = vpack.c.b16 %v1344, %v1344
    %v1377 = vpack.c.b16 %v1345, %v1345
    %v1378 = vpack.c.b16 %v1346, %v1346
    %v1379 = vpack.c.b16 %v1347, %v1347
    %v1380 = vpack.c.b16 %v1348, %v1348
    %v1381 = vpack.c.b16 %v1349, %v1349
    %v1382 = vpack.c.b16 %v1350, %v1350
    %v1383 = vpack.c.b16 %v1351, %v1351
    %v1384 = vpack.c.b16 %v1352, %v1352
    %v1385 = vpack.c.b16 %v1353, %v1353
    %v1386 = vpack.c.b16 %v1354, %v1354
    %v1387 = vpack.c.b16 %v1355, %v1355
    %v1388 = vpack.c.b16 %v1356, %v1356
    %v1389 = vpack.c.b16 %v1357, %v1357
    %v1390 = vpack.c.b16 %v1358, %v1358
    %v1391 = vpack.c.b16 %v1359, %v1359
    %v1392 = vpack.c.b16 %v1360, %v1360
    %v1393 = vpack.c.b16 %v1361, %v1361
    %v1394 = vpack.c.b16 %v1362, %v1362
    %v1395 = vpack.c.b16 %v1363, %v1363
    %v1396 = vpack.c.b16 %v1364, %v1364
    %v1397 = vpack.c.b16 %v1365, %v1365
    %v1398 = vpack.c.b16 %v1366, %v1366
    %1431 = vst [vmem:[#allocation15] sm:$0xf] %v1367
    %1432 = vst [vmem:[#allocation15 + $0x4] sm:$0xf] %v1368
    %1433 = vst [vmem:[#allocation15 + $0x8] sm:$0xf] %v1369
    %1434 = vst [vmem:[#allocation15 + $0xc] sm:$0xf] %v1370
    %1435 = vst [vmem:[#allocation15 + $0x10] sm:$0xf] %v1371
    %1436 = vst [vmem:[#allocation15 + $0x14] sm:$0xf] %v1372
    %1437 = vst [vmem:[#allocation15 + $0x18] sm:$0xf] %v1373
    %1438 = vst [vmem:[#allocation15 + $0x1c] sm:$0xf] %v1374
    %1439 = vst [vmem:[#allocation15 + $0x20] sm:$0xf] %v1375
    %1440 = vst [vmem:[#allocation15 + $0x24] sm:$0xf] %v1376
    %1441 = vst [vmem:[#allocation15 + $0x28] sm:$0xf] %v1377
    %1442 = vst [vmem:[#allocation15 + $0x2c] sm:$0xf] %v1378
    %1443 = vst [vmem:[#allocation15 + $0x30] sm:$0xf] %v1379
    %1444 = vst [vmem:[#allocation15 + $0x34] sm:$0xf] %v1380
    %1445 = vst [vmem:[#allocation15 + $0x38] sm:$0xf] %v1381
    %1446 = vst [vmem:[#allocation15 + $0x3c] sm:$0xf] %v1382
    %1447 = vst [vmem:[#allocation15 + $0x40] sm:$0xf] %v1383
    %1448 = vst [vmem:[#allocation15 + $0x44] sm:$0xf] %v1384
    %1449 = vst [vmem:[#allocation15 + $0x48] sm:$0xf] %v1385
    %1450 = vst [vmem:[#allocation15 + $0x4c] sm:$0xf] %v1386
    %1451 = vst [vmem:[#allocation15 + $0x50] sm:$0xf] %v1387
    %1452 = vst [vmem:[#allocation15 + $0x54] sm:$0xf] %v1388
    %1453 = vst [vmem:[#allocation15 + $0x58] sm:$0xf] %v1389
    %1454 = vst [vmem:[#allocation15 + $0x5c] sm:$0xf] %v1390
    %1455 = vst [vmem:[#allocation15 + $0x60] sm:$0xf] %v1391
    %1456 = vst [vmem:[#allocation15 + $0x64] sm:$0xf] %v1392
    %1457 = vst [vmem:[#allocation15 + $0x68] sm:$0xf] %v1393
    %1458 = vst [vmem:[#allocation15 + $0x6c] sm:$0xf] %v1394
    %1459 = vst [vmem:[#allocation15 + $0x70] sm:$0xf] %v1395
    %1460 = vst [vmem:[#allocation15 + $0x74] sm:$0xf] %v1396
    %1461 = vst [vmem:[#allocation15 + $0x78] sm:$0xf] %v1397
    %1462 = vst [vmem:[#allocation15 + $0x7c] sm:$0xf] %v1398
    %v1463 = vpack.c.bf16 %v990, %v986
    %v1464 = vpack.c.bf16 %v1000, %v996
    %v1465 = vpack.c.bf16 %v1010, %v1006
    %v1466 = vpack.c.bf16 %v1020, %v1016
    %v1467 = vpack.c.bf16 %v1030, %v1026
    %v1468 = vpack.c.bf16 %v1040, %v1036
    %v1469 = vpack.c.bf16 %v1050, %v1046
    %v1470 = vpack.c.bf16 %v1060, %v1056
    %v1471 = vpack.c.bf16 %v1070, %v1066
    %v1472 = vpack.c.bf16 %v1080, %v1076
    %v1473 = vpack.c.bf16 %v1090, %v1086
    %v1474 = vpack.c.bf16 %v1100, %v1096
    %v1475 = vpack.c.bf16 %v1110, %v1106
    %v1476 = vpack.c.bf16 %v1120, %v1116
    %v1477 = vpack.c.bf16 %v1130, %v1126
    %v1478 = vpack.c.bf16 %v1140, %v1136
    %v1495 = vunpack.c.l.b16 %v1463
    %v1496 = vunpack.c.h.b16 %v1463
    %v1497 = vunpack.c.l.b16 %v1464
    %v1498 = vunpack.c.h.b16 %v1464
    %v1499 = vunpack.c.l.b16 %v1465
    %v1500 = vunpack.c.h.b16 %v1465
    %v1501 = vunpack.c.l.b16 %v1466
    %v1502 = vunpack.c.h.b16 %v1466
    %v1503 = vunpack.c.l.b16 %v1467
    %v1504 = vunpack.c.h.b16 %v1467
    %v1505 = vunpack.c.l.b16 %v1468
    %v1506 = vunpack.c.h.b16 %v1468
    %v1507 = vunpack.c.l.b16 %v1469
    %v1508 = vunpack.c.h.b16 %v1469
    %v1509 = vunpack.c.l.b16 %v1470
    %v1510 = vunpack.c.h.b16 %v1470
    %v1511 = vunpack.c.l.b16 %v1471
    %v1512 = vunpack.c.h.b16 %v1471
    %v1513 = vunpack.c.l.b16 %v1472
    %v1514 = vunpack.c.h.b16 %v1472
    %v1515 = vunpack.c.l.b16 %v1473
    %v1516 = vunpack.c.h.b16 %v1473
    %v1517 = vunpack.c.l.b16 %v1474
    %v1518 = vunpack.c.h.b16 %v1474
    %v1519 = vunpack.c.l.b16 %v1475
    %v1520 = vunpack.c.h.b16 %v1475
    %v1521 = vunpack.c.l.b16 %v1476
    %v1522 = vunpack.c.h.b16 %v1476
    %v1523 = vunpack.c.l.b16 %v1477
    %v1524 = vunpack.c.h.b16 %v1477
    %v1525 = vunpack.c.l.b16 %v1478
    %v1526 = vunpack.c.h.b16 %v1478
    %v1527 = vpack.c.b16 %v1495, %v1495
    %v1528 = vpack.c.b16 %v1496, %v1496
    %v1529 = vpack.c.b16 %v1497, %v1497
    %v1530 = vpack.c.b16 %v1498, %v1498
    %v1531 = vpack.c.b16 %v1499, %v1499
    %v1532 = vpack.c.b16 %v1500, %v1500
    %v1533 = vpack.c.b16 %v1501, %v1501
    %v1534 = vpack.c.b16 %v1502, %v1502
    %v1535 = vpack.c.b16 %v1503, %v1503
    %v1536 = vpack.c.b16 %v1504, %v1504
    %v1537 = vpack.c.b16 %v1505, %v1505
    %v1538 = vpack.c.b16 %v1506, %v1506
    %v1539 = vpack.c.b16 %v1507, %v1507
    %v1540 = vpack.c.b16 %v1508, %v1508
    %v1541 = vpack.c.b16 %v1509, %v1509
    %v1542 = vpack.c.b16 %v1510, %v1510
    %v1543 = vpack.c.b16 %v1511, %v1511
    %v1544 = vpack.c.b16 %v1512, %v1512
    %v1545 = vpack.c.b16 %v1513, %v1513
    %v1546 = vpack.c.b16 %v1514, %v1514
    %v1547 = vpack.c.b16 %v1515, %v1515
    %v1548 = vpack.c.b16 %v1516, %v1516
    %v1549 = vpack.c.b16 %v1517, %v1517
    %v1550 = vpack.c.b16 %v1518, %v1518
    %v1551 = vpack.c.b16 %v1519, %v1519
    %v1552 = vpack.c.b16 %v1520, %v1520
    %v1553 = vpack.c.b16 %v1521, %v1521
    %v1554 = vpack.c.b16 %v1522, %v1522
    %v1555 = vpack.c.b16 %v1523, %v1523
    %v1556 = vpack.c.b16 %v1524, %v1524
    %v1557 = vpack.c.b16 %v1525, %v1525
    %v1558 = vpack.c.b16 %v1526, %v1526
    %1591 = vst [vmem:[#allocation17] sm:$0xf] %v1527
    %1592 = vst [vmem:[#allocation17 + $0x4] sm:$0xf] %v1528
    %1593 = vst [vmem:[#allocation17 + $0x8] sm:$0xf] %v1529
    %1594 = vst [vmem:[#allocation17 + $0xc] sm:$0xf] %v1530
    %1595 = vst [vmem:[#allocation17 + $0x10] sm:$0xf] %v1531
    %1596 = vst [vmem:[#allocation17 + $0x14] sm:$0xf] %v1532
    %1597 = vst [vmem:[#allocation17 + $0x18] sm:$0xf] %v1533
    %1598 = vst [vmem:[#allocation17 + $0x1c] sm:$0xf] %v1534
    %1599 = vst [vmem:[#allocation17 + $0x20] sm:$0xf] %v1535
    %1600 = vst [vmem:[#allocation17 + $0x24] sm:$0xf] %v1536
    %1601 = vst [vmem:[#allocation17 + $0x28] sm:$0xf] %v1537
    %1602 = vst [vmem:[#allocation17 + $0x2c] sm:$0xf] %v1538
    %1603 = vst [vmem:[#allocation17 + $0x30] sm:$0xf] %v1539
    %1604 = vst [vmem:[#allocation17 + $0x34] sm:$0xf] %v1540
    %1605 = vst [vmem:[#allocation17 + $0x38] sm:$0xf] %v1541
    %1606 = vst [vmem:[#allocation17 + $0x3c] sm:$0xf] %v1542
    %1607 = vst [vmem:[#allocation17 + $0x40] sm:$0xf] %v1543
    %1608 = vst [vmem:[#allocation17 + $0x44] sm:$0xf] %v1544
    %1609 = vst [vmem:[#allocation17 + $0x48] sm:$0xf] %v1545
    %1610 = vst [vmem:[#allocation17 + $0x4c] sm:$0xf] %v1546
    %1611 = vst [vmem:[#allocation17 + $0x50] sm:$0xf] %v1547
    %1612 = vst [vmem:[#allocation17 + $0x54] sm:$0xf] %v1548
    %1613 = vst [vmem:[#allocation17 + $0x58] sm:$0xf] %v1549
    %1614 = vst [vmem:[#allocation17 + $0x5c] sm:$0xf] %v1550
    %1615 = vst [vmem:[#allocation17 + $0x60] sm:$0xf] %v1551
    %1616 = vst [vmem:[#allocation17 + $0x64] sm:$0xf] %v1552
    %1617 = vst [vmem:[#allocation17 + $0x68] sm:$0xf] %v1553
    %1618 = vst [vmem:[#allocation17 + $0x6c] sm:$0xf] %v1554
    %1619 = vst [vmem:[#allocation17 + $0x70] sm:$0xf] %v1555
    %1620 = vst [vmem:[#allocation17 + $0x74] sm:$0xf] %v1556
    %1621 = vst [vmem:[#allocation17 + $0x78] sm:$0xf] %v1557
    %1622 = vst [vmem:[#allocation17 + $0x7c] sm:$0xf] %v1558
    %v1623 = vpack.c.bf16 %v1180, %v1177
    %v1624 = vpack.c.bf16 %v1188, %v1185
    %v1625 = vpack.c.bf16 %v1196, %v1193
    %v1626 = vpack.c.bf16 %v1204, %v1201
    %v1627 = vpack.c.bf16 %v1212, %v1209
    %v1628 = vpack.c.bf16 %v1220, %v1217
    %v1629 = vpack.c.bf16 %v1228, %v1225
    %v1630 = vpack.c.bf16 %v1236, %v1233
    %v1631 = vpack.c.bf16 %v1244, %v1241
    %v1632 = vpack.c.bf16 %v1252, %v1249
    %v1633 = vpack.c.bf16 %v1260, %v1257
    %v1634 = vpack.c.bf16 %v1268, %v1265
    %v1635 = vpack.c.bf16 %v1276, %v1273
    %v1636 = vpack.c.bf16 %v1284, %v1281
    %v1637 = vpack.c.bf16 %v1292, %v1289
    %v1638 = vpack.c.bf16 %v1300, %v1297
    %v1655 = vunpack.c.l.b16 %v1623
    %v1656 = vunpack.c.h.b16 %v1623
    %v1657 = vunpack.c.l.b16 %v1624
    %v1658 = vunpack.c.h.b16 %v1624
    %v1659 = vunpack.c.l.b16 %v1625
    %v1660 = vunpack.c.h.b16 %v1625
    %v1661 = vunpack.c.l.b16 %v1626
    %v1662 = vunpack.c.h.b16 %v1626
    %v1663 = vunpack.c.l.b16 %v1627
    %v1664 = vunpack.c.h.b16 %v1627
    %v1665 = vunpack.c.l.b16 %v1628
    %v1666 = vunpack.c.h.b16 %v1628
    %v1667 = vunpack.c.l.b16 %v1629
    %v1668 = vunpack.c.h.b16 %v1629
    %v1669 = vunpack.c.l.b16 %v1630
    %v1670 = vunpack.c.h.b16 %v1630
    %v1671 = vunpack.c.l.b16 %v1631
    %v1672 = vunpack.c.h.b16 %v1631
    %v1673 = vunpack.c.l.b16 %v1632
    %v1674 = vunpack.c.h.b16 %v1632
    %v1675 = vunpack.c.l.b16 %v1633
    %v1676 = vunpack.c.h.b16 %v1633
    %v1677 = vunpack.c.l.b16 %v1634
    %v1678 = vunpack.c.h.b16 %v1634
    %v1679 = vunpack.c.l.b16 %v1635
    %v1680 = vunpack.c.h.b16 %v1635
    %v1681 = vunpack.c.l.b16 %v1636
    %v1682 = vunpack.c.h.b16 %v1636
    %v1683 = vunpack.c.l.b16 %v1637
    %v1684 = vunpack.c.h.b16 %v1637
    %v1685 = vunpack.c.l.b16 %v1638
    %v1686 = vunpack.c.h.b16 %v1638
    %v1687 = vpack.c.b16 %v1655, %v1655
    %v1688 = vpack.c.b16 %v1656, %v1656
    %v1689 = vpack.c.b16 %v1657, %v1657
    %v1690 = vpack.c.b16 %v1658, %v1658
    %v1691 = vpack.c.b16 %v1659, %v1659
    %v1692 = vpack.c.b16 %v1660, %v1660
    %v1693 = vpack.c.b16 %v1661, %v1661
    %v1694 = vpack.c.b16 %v1662, %v1662
    %v1695 = vpack.c.b16 %v1663, %v1663
    %v1696 = vpack.c.b16 %v1664, %v1664
    %v1697 = vpack.c.b16 %v1665, %v1665
    %v1698 = vpack.c.b16 %v1666, %v1666
    %v1699 = vpack.c.b16 %v1667, %v1667
    %v1700 = vpack.c.b16 %v1668, %v1668
    %v1701 = vpack.c.b16 %v1669, %v1669
    %v1702 = vpack.c.b16 %v1670, %v1670
    %v1703 = vpack.c.b16 %v1671, %v1671
    %v1704 = vpack.c.b16 %v1672, %v1672
    %v1705 = vpack.c.b16 %v1673, %v1673
    %v1706 = vpack.c.b16 %v1674, %v1674
    %v1707 = vpack.c.b16 %v1675, %v1675
    %v1708 = vpack.c.b16 %v1676, %v1676
    %v1709 = vpack.c.b16 %v1677, %v1677
    %v1710 = vpack.c.b16 %v1678, %v1678
    %v1711 = vpack.c.b16 %v1679, %v1679
    %v1712 = vpack.c.b16 %v1680, %v1680
    %v1713 = vpack.c.b16 %v1681, %v1681
    %v1714 = vpack.c.b16 %v1682, %v1682
    %v1715 = vpack.c.b16 %v1683, %v1683
    %v1716 = vpack.c.b16 %v1684, %v1684
    %v1717 = vpack.c.b16 %v1685, %v1685
    %v1718 = vpack.c.b16 %v1686, %v1686
    %1751 = vst [vmem:[#allocation18] sm:$0xf] %v1687
    %1752 = vst [vmem:[#allocation18 + $0x4] sm:$0xf] %v1688
    %1753 = vst [vmem:[#allocation18 + $0x8] sm:$0xf] %v1689
    %1754 = vst [vmem:[#allocation18 + $0xc] sm:$0xf] %v1690
    %1755 = vst [vmem:[#allocation18 + $0x10] sm:$0xf] %v1691
    %1756 = vst [vmem:[#allocation18 + $0x14] sm:$0xf] %v1692
    %1757 = vst [vmem:[#allocation18 + $0x18] sm:$0xf] %v1693
    %1758 = vst [vmem:[#allocation18 + $0x1c] sm:$0xf] %v1694
    %1759 = vst [vmem:[#allocation18 + $0x20] sm:$0xf] %v1695
    %1760 = vst [vmem:[#allocation18 + $0x24] sm:$0xf] %v1696
    %1761 = vst [vmem:[#allocation18 + $0x28] sm:$0xf] %v1697
    %1762 = vst [vmem:[#allocation18 + $0x2c] sm:$0xf] %v1698
    %1763 = vst [vmem:[#allocation18 + $0x30] sm:$0xf] %v1699
    %1764 = vst [vmem:[#allocation18 + $0x34] sm:$0xf] %v1700
    %1765 = vst [vmem:[#allocation18 + $0x38] sm:$0xf] %v1701
    %1766 = vst [vmem:[#allocation18 + $0x3c] sm:$0xf] %v1702
    %1767 = vst [vmem:[#allocation18 + $0x40] sm:$0xf] %v1703
    %1768 = vst [vmem:[#allocation18 + $0x44] sm:$0xf] %v1704
    %1769 = vst [vmem:[#allocation18 + $0x48] sm:$0xf] %v1705
    %1770 = vst [vmem:[#allocation18 + $0x4c] sm:$0xf] %v1706
    %1771 = vst [vmem:[#allocation18 + $0x50] sm:$0xf] %v1707
    %1772 = vst [vmem:[#allocation18 + $0x54] sm:$0xf] %v1708
    %1773 = vst [vmem:[#allocation18 + $0x58] sm:$0xf] %v1709
    %1774 = vst [vmem:[#allocation18 + $0x5c] sm:$0xf] %v1710
    %1775 = vst [vmem:[#allocation18 + $0x60] sm:$0xf] %v1711
    %1776 = vst [vmem:[#allocation18 + $0x64] sm:$0xf] %v1712
    %1777 = vst [vmem:[#allocation18 + $0x68] sm:$0xf] %v1713
    %1778 = vst [vmem:[#allocation18 + $0x6c] sm:$0xf] %v1714
    %1779 = vst [vmem:[#allocation18 + $0x70] sm:$0xf] %v1715
    %1780 = vst [vmem:[#allocation18 + $0x74] sm:$0xf] %v1716
    %1781 = vst [vmem:[#allocation18 + $0x78] sm:$0xf] %v1717
    %1782 = vst [vmem:[#allocation18 + $0x7c] sm:$0xf] %v1718
    // Predicated region
    $region58: #{nonlocal_net_cost.11} parent=1 // pred_check
      _
    $region59: #{nonlocal_net_cost.11} parent=1 // pred_check_branch
      %1784 = sbr.rel (0) target = $region61
    $region60: #{nonlocal_net_cost.11} parent=1 // pred_region
      %s1786 = ssub.s32 4096, 4096
      %1787 = vsyncadd [#allocation4], %s1786
      %s1788 = sshll.u32 [#allocation14], 4
      %s1789 = int_to_ptr.vmem [resolvable:$true] %s1788
      %1794 = dma.vmem_to_hbm [thread:$0]  %s1789, 4096, %s7, [#allocation4], 128, 128, 8
    $region61: #{nonlocal_net_cost.11} parent=1 // pred_fallthru
      _
    // Predicated region
    $region62: #{nonlocal_net_cost.11} parent=1 // pred_check
      _
    $region63: #{nonlocal_net_cost.11} parent=1 // pred_check_branch
      %1796 = sbr.rel (0) target = $region65
    $region64: #{nonlocal_net_cost.11} parent=1 // pred_region
      %s1798 = ssub.s32 2048, 2048
      %1799 = vsyncadd [#allocation16], %s1798
      %s1800 = sshll.u32 [#allocation15], 4
      %s1801 = int_to_ptr.vmem [resolvable:$true] %s1800
      %1806 = dma.vmem_to_hbm [thread:$0]  %s1801, 2048, %s8, [#allocation16], 64, 64, 4
    $region65: #{nonlocal_net_cost.11} parent=1 // pred_fallthru
      _
    // Predicated region
    $region66: #{nonlocal_net_cost.11} parent=1 // pred_check
      _
    $region67: #{nonlocal_net_cost.11} parent=1 // pred_check_branch
      %1808 = sbr.rel (0) target = $region69
    $region68: #{nonlocal_net_cost.11} parent=1 // pred_region
      %s1810 = ssub.s32 2048, 2048
      %1811 = vsyncadd [#allocation16], %s1810
      %s1812 = sshll.u32 [#allocation17], 4
      %s1813 = int_to_ptr.vmem [resolvable:$true] %s1812
      %1818 = dma.vmem_to_hbm [thread:$0]  %s1813, 2048, %s9, [#allocation16], 64, 64, 4
    $region69: #{nonlocal_net_cost.11} parent=1 // pred_fallthru
      _
    // Predicated region
    $region70: #{nonlocal_net_cost.11} parent=1 // pred_check
      _
    $region71: #{nonlocal_net_cost.11} parent=1 // pred_check_branch
      %1820 = sbr.rel (0) target = $region73
    $region72: #{nonlocal_net_cost.11} parent=1 // pred_region
      %s1822 = ssub.s32 2048, 2048
      %1823 = vsyncadd [#allocation19], %s1822
      %s1824 = sshll.u32 [#allocation18], 4
      %s1825 = int_to_ptr.vmem [resolvable:$true] %s1824
      %1830 = dma.vmem_to_hbm [thread:$0]  %s1825, 2048, %s10, [#allocation19], 64, 64, 4
    $region73: #{nonlocal_net_cost.11} parent=1 // pred_fallthru
      _
    // Predicated region
    $region74: #{nonlocal_net_cost.11} parent=1 // pred_check
      _
    $region75: #{nonlocal_net_cost.11} parent=1 // pred_check_branch
      %1832 = sbr.rel (0) target = $region77
    $region76: #{nonlocal_net_cost.11} parent=1 // pred_region
      %1833 = dma.done [#allocation4], 4096
    $region77: #{nonlocal_net_cost.11} parent=1 // pred_fallthru
      _
    // Predicated region
    $region78: #{nonlocal_net_cost.11} parent=1 // pred_check
      _
    $region79: #{nonlocal_net_cost.11} parent=1 // pred_check_branch
      %1835 = sbr.rel (0) target = $region81
    $region80: #{nonlocal_net_cost.11} parent=1 // pred_region
      %1836 = dma.done [#allocation16], 2048
    $region81: #{nonlocal_net_cost.11} parent=1 // pred_fallthru
      _
    // Predicated region
    $region82: #{nonlocal_net_cost.11} parent=1 // pred_check
      _
    $region83: #{nonlocal_net_cost.11} parent=1 // pred_check_branch
      %1838 = sbr.rel (0) target = $region85
    $region84: #{nonlocal_net_cost.11} parent=1 // pred_region
      %1839 = dma.done [#allocation16], 2048
    $region85: #{nonlocal_net_cost.11} parent=1 // pred_fallthru
      _
    // Predicated region
    $region86: #{nonlocal_net_cost.11} parent=1 // pred_check
      _
    $region87: #{nonlocal_net_cost.11} parent=1 // pred_check_branch
      %1841 = sbr.rel (0) target = $region89
    $region88: #{nonlocal_net_cost.11} parent=1 // pred_region
      %1842 = dma.done [#allocation19], 2048
    $region89: #{nonlocal_net_cost.11} parent=1 // pred_fallthru
      _
    %1843 = vsyncpa [#allocation3], 1
    %1844 = vsyncpa [#allocation6], 1
    %1845 = vsyncpa [#allocation9], 1
    %1846 = vsyncpa [#allocation12], 1
    %1847 = vsyncpa [#allocation4], 1
    %1848 = vsyncpa [#allocation16], 1
    %1849 = vsyncpa [#allocation19], 1

</llo_original>
